<compile_context>
chip_gen: v6e
topology: v6e:2x2x1
jax: 0.10.0
libtpu: 0.0.40
codegen_flags: <defaults>
</compile_context>

<pallas_src>
import functools

import jax
import jax.numpy as jnp
from jax import lax
from jax.experimental import pallas as pl
from jax.experimental.pallas import tpu as pltpu

LEAKY_SLOPE = 0.01      # torch.nn.LeakyReLU default
K = 5                   # kernel_size of every CausalBlock
DILS = (1, 2, 4, 8)     # 2**dilation for blocks 1..4
_LANE = 128


def _leaky(x):
    return jnp.where(x > 0, x, LEAKY_SLOPE * x)


def _round_up(n, m):
    return -(-n // m) * m


# ------------------------------------ wrapper ------------------------------------
def usrl_forward(x, params):
    """Unsupervised USRL forward = Encoder forward.  x: [B, electrode, L] (NCL)."""
    B, cin0, L0 = x.shape

    # static per-block channel config pulled from param shapes
    names = ("block1", "block2", "block3", "block4")
    chans = []
    for n in names:
        w1, _, w2, _, _, _ = params[n]
        chans.append((w1.shape[1], w1.shape[2], w2.shape[2]))   # (Cin, Cmid, Cout)
    (_, c1m, c1), (_, c2m, c2), (_, c3m, c3), (_, c4m, c4) = chans
    pad_c = max(c1m, c1, c2m, c2, c3m, c3, c4m, c4)

    dil1 = DILS[0]
    l1_1 = L0 + (K - 1) * dil1                     # block-1 conv-1 output length
    l1_rows = _round_up(l1_1, 8)                   # sublane-aligned row count
    c_im = _round_up((K + 1) * cin0, _LANE)        # lane-padded im2col width (+ spare-lane x)

    # ---------------- wrapper-side precompute (plain XLA, tiny) ----------------
    x_cl = jnp.transpose(x, (0, 2, 1))                                   # [B, L0, Cin0]
    xpad = jnp.pad(x_cl, ((0, 0), ((K - 1) * 2 * dil1, 0), (0, 0)))      # causal left pad
    taps = [xpad[:, k * dil1:k * dil1 + l1_1, :] for k in range(K)]      # im2col pieces
    x_sp = jnp.pad(x_cl, ((0, 0), (0, l1_1 - L0), (0, 0)))               # raw x -> spare lanes
    x_im = jnp.concatenate(taps + [x_sp], axis=-1)                       # [B, l1_1, (K+1)*Cin0]
    x_im = jnp.pad(x_im, ((0, 0), (0, l1_rows - l1_1),
                          (0, c_im - (K + 1) * cin0))).astype(jnp.bfloat16)

    # one bf16 weight slab per block: rows = [w1 (im2col) | w2 (im2col) | ws]
    def _slab(p, w1_rows=None):
        w1, _, w2, _, ws, _ = p
        kc, ci, cm = w1.shape
        w1f = w1.reshape(kc * ci, cm)
        if w1_rows is not None:                    # zero rows so spare/pad lanes contribute 0
            w1f = jnp.pad(w1f, ((0, w1_rows - kc * ci), (0, 0)))
        w2f = w2.reshape(kc * cm, w2.shape[2])
        return jnp.concatenate([w1f, w2f, ws], axis=0).astype(jnp.bfloat16)

    slabs = [_slab(params["block1"], w1_rows=c_im),
             _slab(params["block2"]),
             _slab(params["block3"]),
             _slab(params["block4"])]

    # one f32 bias slab: rows (b1, b2, bs) x 4 blocks, lane-padded to pad_c
    bias_rows = []
    for n in names:
        _, b1, _, b2, _, bs = params[n]
        for b in (b1, b2, bs):
            bias_rows.append(jnp.pad(b, (0, pad_c - b.shape[0])))
    bias_slab = jnp.stack(bias_rows).astype(jnp.float32)                 # [12, pad_c]

    # precomputed even-row selector for MaxPool1d(2): sel[r, c] = (c == 2r)
    # kept f32 so pooling stays exact (MXU is idle here, the extra passes are free)
    sel = (jnp.arange(L0)[None, :] == 2 * jnp.arange(L0 // 2)[:, None]).astype(jnp.float32)

    # ---------------------------------- kernel ----------------------------------
    def _maxpool2(h, sel_ref):
        """nn.MaxPool1d(2) over time: exact f32 pairwise max + one selection matmul."""
        L = h.shape[0]
        h_next = jnp.concatenate([h[1:], h[:1]], axis=0)   # roll(-1) along sublanes
        hmax = jnp.maximum(h, h_next)                       # exact f32 pairwise max
        return jnp.dot(sel_ref[0:L // 2, 0:L], hmax, preferred_element_type=jnp.float32)

    def _block(xf, w_ref, b1, b2, bs, *, dil, lin, cin, cmid, cout):
        """Generic CausalBlock(skip=True), channel-last.  xf: [lin, cin] f32."""
        pad = (K - 1) * 2 * dil                    # reference padding1D: (K-1)*2**(dil_param+1)
        l1 = lin + (K - 1) * dil
        xb = xf.astype(jnp.bfloat16)               # bf16-first: cast once, shuffle in bf16
        xp = jnp.concatenate([jnp.zeros((pad, cin), jnp.bfloat16), xb], axis=0)

        # conv1 (dilated, causal)
        if cin % _LANE == 0:                       # lane-aligned pieces -> single im2col matmul
            im = jnp.concatenate([xp[k * dil:k * dil + l1, :] for k in range(K)], axis=-1)
            h = jnp.dot(im, w_ref[0:K * cin, :], preferred_element_type=jnp.float32)
        else:                                      # sub-128-lane pieces -> K per-tap matmuls
            h = jnp.zeros((l1, cmid), jnp.float32)
            for k in range(K):
                h = h + jnp.dot(xp[k * dil:k * dil + l1, :],
                                w_ref[k * cin:(k + 1) * cin, :],
                                preferred_element_type=jnp.float32)
        h = _leaky(h + b1)
        hb = h.astype(jnp.bfloat16)

        # conv2 (dilated, causal)
        off2 = K * cin
        if cmid % _LANE == 0:
            im2 = jnp.concatenate([hb[k * dil:k * dil + lin, :] for k in range(K)], axis=-1)
            o = jnp.dot(im2, w_ref[off2:off2 + K * cmid, :], preferred_element_type=jnp.float32)
        else:
            o = jnp.zeros((lin, cout), jnp.float32)
            for k in range(K):
                o = o + jnp.dot(hb[k * dil:k * dil + lin, :],
                                w_ref[off2 + k * cmid:off2 + (k + 1) * cmid, :],
                                preferred_element_type=jnp.float32)
        o = _leaky(o + b2)

        # 1x1 skip conv on the un-padded input
        offs = off2 + K * cmid
        return o + jnp.dot(xb, w_ref[offs:offs + cin, :],
                           preferred_element_type=jnp.float32) + bs

    def kernel(x_im_ref, w1_ref, w2_ref, w3_ref, w4_ref, bias_ref, sel_ref, out_ref):
        def brow(idx, c):
            return bias_ref[idx:idx + 1, 0:c]      # [1, c] broadcastable bias row

        # ---- Block 1 (dil=1): wrapper pre-built lane-dense im2col ----
        x_im = x_im_ref[0]                                            # [l1_rows, c_im] bf16
        h1 = jnp.dot(x_im, w1_ref[0:c_im, :], preferred_element_type=jnp.float32)
        h1 = _leaky(h1 + brow(0, c1m))
        h1b = h1.astype(jnp.bfloat16)
        o = jnp.zeros((L0, c1), jnp.float32)
        for k in range(K):                                            # per-tap conv2 (sub-128 lanes)
            o = o + jnp.dot(h1b[k * dil1:k * dil1 + L0, :],
                            w1_ref[c_im + k * c1m:c_im + (k + 1) * c1m, :],
                            preferred_element_type=jnp.float32)
        o = _leaky(o + brow(1, c1))
        xb1 = x_im[0:L0, K * cin0:(K + 1) * cin0]                      # raw x from spare lanes
        offs1 = c_im + K * c1m
        o = o + jnp.dot(xb1, w1_ref[offs1:offs1 + cin0, :],
                        preferred_element_type=jnp.float32) + brow(2, c1)
        h = _maxpool2(o, sel_ref)                                      # [L0/2, c1]

        # ---- Block 2 (dil=2) ----
        h = _block(h, w2_ref, brow(3, c2m), brow(4, c2), brow(5, c2),
                   dil=DILS[1], lin=L0 // 2, cin=c1, cmid=c2m, cout=c2)
        h = _maxpool2(h, sel_ref)                                      # [L0/4, c2]

        # ---- Block 3 (dil=4) ----
        h = _block(h, w3_ref, brow(6, c3m), brow(7, c3), brow(8, c3),
                   dil=DILS[2], lin=L0 // 4, cin=c2, cmid=c3m, cout=c3)
        h = _maxpool2(h, sel_ref)                                      # [L0/8, c3]

        # ---- Block 4 (dil=8) ----
        h = _block(h, w4_ref, brow(9, c4m), brow(10, c4), brow(11, c4),
                   dil=DILS[3], lin=L0 // 8, cin=c3, cmid=c4m, cout=c4)

        # AdaptiveMaxPool1d(1): global max over time
        out_ref[0] = jnp.max(h, axis=0, keepdims=True)

    in_specs = [pl.BlockSpec((1, l1_rows, c_im), lambda b: (b, 0, 0))]
    in_specs += [pl.BlockSpec(s.shape, lambda b: (0, 0)) for s in slabs]
    in_specs += [pl.BlockSpec(bias_slab.shape, lambda b: (0, 0)),
                 pl.BlockSpec(sel.shape, lambda b: (0, 0))]

    out = pl.pallas_call(
        kernel,
        out_shape=jax.ShapeDtypeStruct((B, 1, c4), jnp.float32),
        grid=(B,),
        in_specs=in_specs,
        out_specs=pl.BlockSpec((1, 1, c4), lambda b: (b, 0, 0)),
        compiler_params=pltpu.CompilerParams(dimension_semantics=("parallel",)),
    )(x_im, *slabs, bias_slab, sel)
    return out[:, 0, :]                                                # [B, out_channels]


# ----------------------- deterministic parameter init -----------------------
def init_block_params(key, Cin, Cmid, Cout, Kc=K):
    # weight_norm at PyTorch init time is an identity reparametrization, so
    # plain deterministic weights reproduce the semantics exactly.
    k1, k2, k3, k4, k5, k6 = jax.random.split(key, 6)
    w1 = jax.random.normal(k1, (Kc, Cin, Cmid), jnp.float32) / jnp.sqrt(Cin * Kc)
    b1 = jax.random.normal(k2, (Cmid,), jnp.float32) * 0.05
    w2 = jax.random.normal(k3, (Kc, Cmid, Cout), jnp.float32) / jnp.sqrt(Cmid * Kc)
    b2 = jax.random.normal(k4, (Cout,), jnp.float32) * 0.05
    ws = jax.random.normal(k5, (Cin, Cout), jnp.float32) / jnp.sqrt(Cin)
    bs = jax.random.normal(k6, (Cout,), jnp.float32) * 0.05
    return (w1, b1, w2, b2, ws, bs)


def init_usrl_params(key, electrode, out_channels):
    k1, k2, k3, k4 = jax.random.split(key, 4)
    return {
        "block1": init_block_params(k1, electrode, 64, 64),
        "block2": init_block_params(k2, 64, 128, 128),
        "block3": init_block_params(k3, 128, 256, 256),
        "block4": init_block_params(k4, 256, out_channels, out_channels),
    }


# ----------------------------- pure-JAX reference ---------------------------
def _ref_conv1d(x, w, b, dil):
    # x: [B, Cin, L], w stored as [K, Cin, Cout] -> OIH
    w_oih = jnp.transpose(w, (2, 1, 0))
    out = lax.conv_general_dilated(
        x, w_oih, window_strides=(1,), padding="VALID", rhs_dilation=(dil,),
        dimension_numbers=("NCH", "OIH", "NCH"))
    return out + b[None, :, None]


def _ref_block(x, p, dil_param, global_pool=False):
    w1, b1, w2, b2, ws, bs = p
    dil = 2 ** dil_param
    pad = (K - 1) * 2 ** (dil_param + 1)
    xp = jnp.pad(x, ((0, 0), (0, 0), (pad, 0)))
    h = _leaky(_ref_conv1d(xp, w1, b1, dil))
    o = _leaky(_ref_conv1d(h, w2, b2, dil))
    o = o + jnp.einsum("co,bcl->bol", ws, x) + bs[None, :, None]
    return jnp.max(o, axis=-1) if global_pool else o


def _ref_maxpool2(x):
    B, C, L = x.shape
    return jnp.max(x.reshape(B, C, L // 2, 2), axis=-1)


def usrl_reference(x, params):
    h = _ref_block(x, params["block1"], 0)
    h = _ref_maxpool2(h)
    h = _ref_block(h, params["block2"], 1)
    h = _ref_maxpool2(h)
    h = _ref_block(h, params["block3"], 2)
    h = _ref_maxpool2(h)
    return _ref_block(h, params["block4"], 3, global_pool=True)


# ------------------------------------ main -----------------------------------
if __name__ == "__main__":
    B, ELECTRODE, T, OUT_CHANNELS = 2, 4, 128, 32

    key = jax.random.PRNGKey(0)
    kx, kp = jax.random.split(key)
    x = jax.random.normal(kx, (B, ELECTRODE, T), jnp.float32)
    params = init_usrl_params(kp, ELECTRODE, OUT_CHANNELS)

    fwd = jax.jit(functools.partial(usrl_forward, params=params))
    out = jax.block_until_ready(fwd(x))

    ref = jax.block_until_ready(usrl_reference(x, params))
    assert out.shape == (B, OUT_CHANNELS), out.shape
    # bf16 MXU operands vs f32 reference across 4 stacked blocks.
    assert jnp.allclose(out, ref, rtol=5e-2, atol=1e-1), float(
        jnp.max(jnp.abs(out - ref)))

    print("KERNEL_OK")
</pallas_src>

<mosaic_0001>
module attributes {stable_mosaic.version = 11 : i64} {
  func.func @kernel(%arg0: i32, %arg1: memref<1x136x128xbf16, #tpu.memory_space<vmem>>, %arg2: memref<452x64xbf16, #tpu.memory_space<vmem>>, %arg3: memref<1024x128xbf16, #tpu.memory_space<vmem>>, %arg4: memref<2048x256xbf16, #tpu.memory_space<vmem>>, %arg5: memref<1696x32xbf16, #tpu.memory_space<vmem>>, %arg6: memref<12x256xf32, #tpu.memory_space<vmem>>, %arg7: memref<64x128xf32, #tpu.memory_space<vmem>>, %arg8: memref<1x1x32xf32, #tpu.memory_space<vmem>>) attributes {dimension_semantics = [#tpu.dimension_semantics<parallel>], iteration_bounds = array<i64: 2>, scalar_prefetch = 0 : i64, scratch_operands = 0 : i64, tpu.core_type = #tpu.core_type<tc>, window_params = [{transform_indices = @transform_0, window_bounds = array<i64: 1, 136, 128>}, {pipeline_mode = #tpu.pipeline_mode<synchronous>, transform_indices = @transform_1, window_bounds = array<i64: 452, 64>}, {pipeline_mode = #tpu.pipeline_mode<synchronous>, transform_indices = @transform_2, window_bounds = array<i64: 1024, 128>}, {pipeline_mode = #tpu.pipeline_mode<synchronous>, transform_indices = @transform_3, window_bounds = array<i64: 2048, 256>}, {pipeline_mode = #tpu.pipeline_mode<synchronous>, transform_indices = @transform_4, window_bounds = array<i64: 1696, 32>}, {pipeline_mode = #tpu.pipeline_mode<synchronous>, transform_indices = @transform_5, window_bounds = array<i64: 12, 256>}, {pipeline_mode = #tpu.pipeline_mode<synchronous>, transform_indices = @transform_6, window_bounds = array<i64: 64, 128>}, {transform_indices = @transform_7, window_bounds = array<i64: 1, 1, 32>}]} {
    %c0 = arith.constant 0 : index
    %c0_0 = arith.constant 0 : index
    %c0_1 = arith.constant 0 : index
    %0 = vector.load %arg1[%c0, %c0_0, %c0_1] : memref<1x136x128xbf16, #tpu.memory_space<vmem>>, vector<1x136x128xbf16>
    %1 = vector.shape_cast %0 : vector<1x136x128xbf16> to vector<136x128xbf16>
    %c0_2 = arith.constant 0 : index
    %c0_3 = arith.constant 0 : index
    %2 = vector.load %arg2[%c0_2, %c0_3] : memref<452x64xbf16, #tpu.memory_space<vmem>>, vector<128x64xbf16>
    %cst = arith.constant dense<0.000000e+00> : vector<136x64xf32>
    %3 = tpu.matmul %1, %2, %cst {dimension_numbers = #tpu.dot_dimension_numbers<[1], [0], [0], [1], [0, 0, 1, 1], [], []>} : vector<136x128xbf16>, vector<128x64xbf16>, vector<136x64xf32> -> vector<136x64xf32>
    %c0_4 = arith.constant 0 : index
    %c0_5 = arith.constant 0 : index
    %4 = vector.load %arg6[%c0_4, %c0_5] : memref<12x256xf32, #tpu.memory_space<vmem>>, vector<1x64xf32>
    %5 = vector.broadcast %4 : vector<1x64xf32> to vector<136x64xf32>
    %6 = arith.addf %3, %5 : vector<136x64xf32>
    %cst_6 = arith.constant 0.000000e+00 : f32
    %7 = vector.broadcast %cst_6 : f32 to vector<136x64xf32>
    %8 = arith.cmpf ogt, %6, %7 : vector<136x64xf32>
    %cst_7 = arith.constant 0.00999999977 : f32
    %9 = vector.broadcast %cst_7 : f32 to vector<136x64xf32>
    %10 = arith.mulf %9, %6 : vector<136x64xf32>
    %11 = arith.select %8, %6, %10 : vector<136x64xi1>, vector<136x64xf32>
    %12 = arith.truncf %11 : vector<136x64xf32> to vector<136x64xbf16>
    %cst_8 = arith.constant 0.000000e+00 : f32
    %13 = vector.broadcast %cst_8 : f32 to vector<128x64xf32>
    %14 = vector.extract_strided_slice %12 {offsets = [0, 0], sizes = [128, 64], strides = [1, 1]} : vector<136x64xbf16> to vector<128x64xbf16>
    %c128 = arith.constant 128 : index
    %c0_9 = arith.constant 0 : index
    %15 = vector.load %arg2[%c128, %c0_9] : memref<452x64xbf16, #tpu.memory_space<vmem>>, vector<64x64xbf16>
    %cst_10 = arith.constant dense<0.000000e+00> : vector<128x64xf32>
    %16 = tpu.matmul %14, %15, %cst_10 {dimension_numbers = #tpu.dot_dimension_numbers<[1], [0], [0], [1], [0, 0, 1, 1], [], []>} : vector<128x64xbf16>, vector<64x64xbf16>, vector<128x64xf32> -> vector<128x64xf32>
    %17 = arith.addf %13, %16 : vector<128x64xf32>
    %18 = vector.extract_strided_slice %12 {offsets = [1, 0], sizes = [128, 64], strides = [1, 1]} : vector<136x64xbf16> to vector<128x64xbf16>
    %c192 = arith.constant 192 : index
    %c0_11 = arith.constant 0 : index
    %19 = vector.load %arg2[%c192, %c0_11] : memref<452x64xbf16, #tpu.memory_space<vmem>>, vector<64x64xbf16>
    %cst_12 = arith.constant dense<0.000000e+00> : vector<128x64xf32>
    %20 = tpu.matmul %18, %19, %cst_12 {dimension_numbers = #tpu.dot_dimension_numbers<[1], [0], [0], [1], [0, 0, 1, 1], [], []>} : vector<128x64xbf16>, vector<64x64xbf16>, vector<128x64xf32> -> vector<128x64xf32>
    %21 = arith.addf %17, %20 : vector<128x64xf32>
    %22 = vector.extract_strided_slice %12 {offsets = [2, 0], sizes = [128, 64], strides = [1, 1]} : vector<136x64xbf16> to vector<128x64xbf16>
    %c256 = arith.constant 256 : index
    %c0_13 = arith.constant 0 : index
    %23 = vector.load %arg2[%c256, %c0_13] : memref<452x64xbf16, #tpu.memory_space<vmem>>, vector<64x64xbf16>
    %cst_14 = arith.constant dense<0.000000e+00> : vector<128x64xf32>
    %24 = tpu.matmul %22, %23, %cst_14 {dimension_numbers = #tpu.dot_dimension_numbers<[1], [0], [0], [1], [0, 0, 1, 1], [], []>} : vector<128x64xbf16>, vector<64x64xbf16>, vector<128x64xf32> -> vector<128x64xf32>
    %25 = arith.addf %21, %24 : vector<128x64xf32>
    %26 = vector.extract_strided_slice %12 {offsets = [3, 0], sizes = [128, 64], strides = [1, 1]} : vector<136x64xbf16> to vector<128x64xbf16>
    %c320 = arith.constant 320 : index
    %c0_15 = arith.constant 0 : index
    %27 = vector.load %arg2[%c320, %c0_15] : memref<452x64xbf16, #tpu.memory_space<vmem>>, vector<64x64xbf16>
    %cst_16 = arith.constant dense<0.000000e+00> : vector<128x64xf32>
    %28 = tpu.matmul %26, %27, %cst_16 {dimension_numbers = #tpu.dot_dimension_numbers<[1], [0], [0], [1], [0, 0, 1, 1], [], []>} : vector<128x64xbf16>, vector<64x64xbf16>, vector<128x64xf32> -> vector<128x64xf32>
    %29 = arith.addf %25, %28 : vector<128x64xf32>
    %30 = vector.extract_strided_slice %12 {offsets = [4, 0], sizes = [128, 64], strides = [1, 1]} : vector<136x64xbf16> to vector<128x64xbf16>
    %c384 = arith.constant 384 : index
    %c0_17 = arith.constant 0 : index
    %31 = vector.load %arg2[%c384, %c0_17] : memref<452x64xbf16, #tpu.memory_space<vmem>>, vector<64x64xbf16>
    %cst_18 = arith.constant dense<0.000000e+00> : vector<128x64xf32>
    %32 = tpu.matmul %30, %31, %cst_18 {dimension_numbers = #tpu.dot_dimension_numbers<[1], [0], [0], [1], [0, 0, 1, 1], [], []>} : vector<128x64xbf16>, vector<64x64xbf16>, vector<128x64xf32> -> vector<128x64xf32>
    %33 = arith.addf %29, %32 : vector<128x64xf32>
    %c1 = arith.constant 1 : index
    %c0_19 = arith.constant 0 : index
    %34 = vector.load %arg6[%c1, %c0_19] : memref<12x256xf32, #tpu.memory_space<vmem>>, vector<1x64xf32>
    %35 = vector.broadcast %34 : vector<1x64xf32> to vector<128x64xf32>
    %36 = arith.addf %33, %35 : vector<128x64xf32>
    %cst_20 = arith.constant 0.000000e+00 : f32
    %37 = vector.broadcast %cst_20 : f32 to vector<128x64xf32>
    %38 = arith.cmpf ogt, %36, %37 : vector<128x64xf32>
    %cst_21 = arith.constant 0.00999999977 : f32
    %39 = vector.broadcast %cst_21 : f32 to vector<128x64xf32>
    %40 = arith.mulf %39, %36 : vector<128x64xf32>
    %41 = arith.select %38, %36, %40 : vector<128x64xi1>, vector<128x64xf32>
    %42 = vector.extract_strided_slice %1 {offsets = [0, 20], sizes = [128, 4], strides = [1, 1]} : vector<136x128xbf16> to vector<128x4xbf16>
    %c448 = arith.constant 448 : index
    %c0_22 = arith.constant 0 : index
    %43 = vector.load %arg2[%c448, %c0_22] : memref<452x64xbf16, #tpu.memory_space<vmem>>, vector<4x64xbf16>
    %cst_23 = arith.constant dense<0.000000e+00> : vector<128x64xf32>
    %44 = tpu.matmul %42, %43, %cst_23 {dimension_numbers = #tpu.dot_dimension_numbers<[1], [0], [0], [1], [0, 0, 1, 1], [], []>} : vector<128x4xbf16>, vector<4x64xbf16>, vector<128x64xf32> -> vector<128x64xf32>
    %45 = arith.addf %41, %44 : vector<128x64xf32>
    %c2 = arith.constant 2 : index
    %c0_24 = arith.constant 0 : index
    %46 = vector.load %arg6[%c2, %c0_24] : memref<12x256xf32, #tpu.memory_space<vmem>>, vector<1x64xf32>
    %47 = vector.broadcast %46 : vector<1x64xf32> to vector<128x64xf32>
    %48 = arith.addf %45, %47 : vector<128x64xf32>
    %49 = vector.extract_strided_slice %48 {offsets = [1, 0], sizes = [127, 64], strides = [1, 1]} : vector<128x64xf32> to vector<127x64xf32>
    %50 = vector.extract_strided_slice %48 {offsets = [0, 0], sizes = [1, 64], strides = [1, 1]} : vector<128x64xf32> to vector<1x64xf32>
    %51 = tpu.concatenate %49, %50 in 0 : vector<127x64xf32>, vector<1x64xf32> -> vector<128x64xf32>
    %52 = arith.maximumf %48, %51 : vector<128x64xf32>
    %c0_25 = arith.constant 0 : index
    %c0_26 = arith.constant 0 : index
    %53 = vector.load %arg7[%c0_25, %c0_26] : memref<64x128xf32, #tpu.memory_space<vmem>>, vector<64x128xf32>
    %cst_27 = arith.constant dense<0.000000e+00> : vector<64x64xf32>
    %54 = tpu.matmul %53, %52, %cst_27 {dimension_numbers = #tpu.dot_dimension_numbers<[1], [0], [0], [1], [0, 0, 1, 1], [], []>} : vector<64x128xf32>, vector<128x64xf32>, vector<64x64xf32> -> vector<64x64xf32>
    %c3 = arith.constant 3 : index
    %c0_28 = arith.constant 0 : index
    %55 = vector.load %arg6[%c3, %c0_28] : memref<12x256xf32, #tpu.memory_space<vmem>>, vector<1x128xf32>
    %c4 = arith.constant 4 : index
    %c0_29 = arith.constant 0 : index
    %56 = vector.load %arg6[%c4, %c0_29] : memref<12x256xf32, #tpu.memory_space<vmem>>, vector<1x128xf32>
    %c5 = arith.constant 5 : index
    %c0_30 = arith.constant 0 : index
    %57 = vector.load %arg6[%c5, %c0_30] : memref<12x256xf32, #tpu.memory_space<vmem>>, vector<1x128xf32>
    %58 = arith.truncf %54 : vector<64x64xf32> to vector<64x64xbf16>
    %cst_31 = arith.constant 0.000000e+00 : bf16
    %59 = vector.broadcast %cst_31 : bf16 to vector<16x64xbf16>
    %60 = tpu.concatenate %59, %58 in 0 : vector<16x64xbf16>, vector<64x64xbf16> -> vector<80x64xbf16>
    %cst_32 = arith.constant 0.000000e+00 : f32
    %61 = vector.broadcast %cst_32 : f32 to vector<72x128xf32>
    %62 = vector.extract_strided_slice %60 {offsets = [0, 0], sizes = [72, 64], strides = [1, 1]} : vector<80x64xbf16> to vector<72x64xbf16>
    %c0_33 = arith.constant 0 : index
    %c0_34 = arith.constant 0 : index
    %63 = vector.load %arg3[%c0_33, %c0_34] : memref<1024x128xbf16, #tpu.memory_space<vmem>>, vector<64x128xbf16>
    %cst_35 = arith.constant dense<0.000000e+00> : vector<72x128xf32>
    %64 = tpu.matmul %62, %63, %cst_35 {dimension_numbers = #tpu.dot_dimension_numbers<[1], [0], [0], [1], [0, 0, 1, 1], [], []>} : vector<72x64xbf16>, vector<64x128xbf16>, vector<72x128xf32> -> vector<72x128xf32>
    %65 = arith.addf %61, %64 : vector<72x128xf32>
    %66 = vector.extract_strided_slice %60 {offsets = [2, 0], sizes = [72, 64], strides = [1, 1]} : vector<80x64xbf16> to vector<72x64xbf16>
    %c64 = arith.constant 64 : index
    %c0_36 = arith.constant 0 : index
    %67 = vector.load %arg3[%c64, %c0_36] : memref<1024x128xbf16, #tpu.memory_space<vmem>>, vector<64x128xbf16>
    %cst_37 = arith.constant dense<0.000000e+00> : vector<72x128xf32>
    %68 = tpu.matmul %66, %67, %cst_37 {dimension_numbers = #tpu.dot_dimension_numbers<[1], [0], [0], [1], [0, 0, 1, 1], [], []>} : vector<72x64xbf16>, vector<64x128xbf16>, vector<72x128xf32> -> vector<72x128xf32>
    %69 = arith.addf %65, %68 : vector<72x128xf32>
    %70 = vector.extract_strided_slice %60 {offsets = [4, 0], sizes = [72, 64], strides = [1, 1]} : vector<80x64xbf16> to vector<72x64xbf16>
    %c128_38 = arith.constant 128 : index
    %c0_39 = arith.constant 0 : index
    %71 = vector.load %arg3[%c128_38, %c0_39] : memref<1024x128xbf16, #tpu.memory_space<vmem>>, vector<64x128xbf16>
    %cst_40 = arith.constant dense<0.000000e+00> : vector<72x128xf32>
    %72 = tpu.matmul %70, %71, %cst_40 {dimension_numbers = #tpu.dot_dimension_numbers<[1], [0], [0], [1], [0, 0, 1, 1], [], []>} : vector<72x64xbf16>, vector<64x128xbf16>, vector<72x128xf32> -> vector<72x128xf32>
    %73 = arith.addf %69, %72 : vector<72x128xf32>
    %74 = vector.extract_strided_slice %60 {offsets = [6, 0], sizes = [72, 64], strides = [1, 1]} : vector<80x64xbf16> to vector<72x64xbf16>
    %c192_41 = arith.constant 192 : index
    %c0_42 = arith.constant 0 : index
    %75 = vector.load %arg3[%c192_41, %c0_42] : memref<1024x128xbf16, #tpu.memory_space<vmem>>, vector<64x128xbf16>
    %cst_43 = arith.constant dense<0.000000e+00> : vector<72x128xf32>
    %76 = tpu.matmul %74, %75, %cst_43 {dimension_numbers = #tpu.dot_dimension_numbers<[1], [0], [0], [1], [0, 0, 1, 1], [], []>} : vector<72x64xbf16>, vector<64x128xbf16>, vector<72x128xf32> -> vector<72x128xf32>
    %77 = arith.addf %73, %76 : vector<72x128xf32>
    %78 = vector.extract_strided_slice %60 {offsets = [8, 0], sizes = [72, 64], strides = [1, 1]} : vector<80x64xbf16> to vector<72x64xbf16>
    %c256_44 = arith.constant 256 : index
    %c0_45 = arith.constant 0 : index
    %79 = vector.load %arg3[%c256_44, %c0_45] : memref<1024x128xbf16, #tpu.memory_space<vmem>>, vector<64x128xbf16>
    %cst_46 = arith.constant dense<0.000000e+00> : vector<72x128xf32>
    %80 = tpu.matmul %78, %79, %cst_46 {dimension_numbers = #tpu.dot_dimension_numbers<[1], [0], [0], [1], [0, 0, 1, 1], [], []>} : vector<72x64xbf16>, vector<64x128xbf16>, vector<72x128xf32> -> vector<72x128xf32>
    %81 = arith.addf %77, %80 : vector<72x128xf32>
    %82 = vector.broadcast %55 : vector<1x128xf32> to vector<72x128xf32>
    %83 = arith.addf %81, %82 : vector<72x128xf32>
    %cst_47 = arith.constant 0.000000e+00 : f32
    %84 = vector.broadcast %cst_47 : f32 to vector<72x128xf32>
    %85 = arith.cmpf ogt, %83, %84 : vector<72x128xf32>
    %cst_48 = arith.constant 0.00999999977 : f32
    %86 = vector.broadcast %cst_48 : f32 to vector<72x128xf32>
    %87 = arith.mulf %86, %83 : vector<72x128xf32>
    %88 = arith.select %85, %83, %87 : vector<72x128xi1>, vector<72x128xf32>
    %89 = arith.truncf %88 : vector<72x128xf32> to vector<72x128xbf16>
    %90 = vector.extract_strided_slice %89 {offsets = [0, 0], sizes = [64, 128], strides = [1, 1]} : vector<72x128xbf16> to vector<64x128xbf16>
    %91 = vector.extract_strided_slice %89 {offsets = [2, 0], sizes = [64, 128], strides = [1, 1]} : vector<72x128xbf16> to vector<64x128xbf16>
    %92 = vector.extract_strided_slice %89 {offsets = [4, 0], sizes = [64, 128], strides = [1, 1]} : vector<72x128xbf16> to vector<64x128xbf16>
    %93 = vector.extract_strided_slice %89 {offsets = [6, 0], sizes = [64, 128], strides = [1, 1]} : vector<72x128xbf16> to vector<64x128xbf16>
    %94 = vector.extract_strided_slice %89 {offsets = [8, 0], sizes = [64, 128], strides = [1, 1]} : vector<72x128xbf16> to vector<64x128xbf16>
    %95 = tpu.concatenate %90, %91, %92, %93, %94 in 1 : vector<64x128xbf16>, vector<64x128xbf16>, vector<64x128xbf16>, vector<64x128xbf16>, vector<64x128xbf16> -> vector<64x640xbf16>
    %c320_49 = arith.constant 320 : index
    %c0_50 = arith.constant 0 : index
    %96 = vector.load %arg3[%c320_49, %c0_50] : memref<1024x128xbf16, #tpu.memory_space<vmem>>, vector<640x128xbf16>
    %cst_51 = arith.constant dense<0.000000e+00> : vector<64x128xf32>
    %97 = tpu.matmul %95, %96, %cst_51 {dimension_numbers = #tpu.dot_dimension_numbers<[1], [0], [0], [1], [0, 0, 1, 1], [], []>} : vector<64x640xbf16>, vector<640x128xbf16>, vector<64x128xf32> -> vector<64x128xf32>
    %98 = vector.broadcast %56 : vector<1x128xf32> to vector<64x128xf32>
    %99 = arith.addf %97, %98 : vector<64x128xf32>
    %cst_52 = arith.constant 0.000000e+00 : f32
    %100 = vector.broadcast %cst_52 : f32 to vector<64x128xf32>
    %101 = arith.cmpf ogt, %99, %100 : vector<64x128xf32>
    %cst_53 = arith.constant 0.00999999977 : f32
    %102 = vector.broadcast %cst_53 : f32 to vector<64x128xf32>
    %103 = arith.mulf %102, %99 : vector<64x128xf32>
    %104 = arith.select %101, %99, %103 : vector<64x128xi1>, vector<64x128xf32>
    %c960 = arith.constant 960 : index
    %c0_54 = arith.constant 0 : index
    %105 = vector.load %arg3[%c960, %c0_54] : memref<1024x128xbf16, #tpu.memory_space<vmem>>, vector<64x128xbf16>
    %cst_55 = arith.constant dense<0.000000e+00> : vector<64x128xf32>
    %106 = tpu.matmul %58, %105, %cst_55 {dimension_numbers = #tpu.dot_dimension_numbers<[1], [0], [0], [1], [0, 0, 1, 1], [], []>} : vector<64x64xbf16>, vector<64x128xbf16>, vector<64x128xf32> -> vector<64x128xf32>
    %107 = arith.addf %104, %106 : vector<64x128xf32>
    %108 = vector.broadcast %57 : vector<1x128xf32> to vector<64x128xf32>
    %109 = arith.addf %107, %108 : vector<64x128xf32>
    %110 = vector.extract_strided_slice %109 {offsets = [1, 0], sizes = [63, 128], strides = [1, 1]} : vector<64x128xf32> to vector<63x128xf32>
    %111 = vector.extract_strided_slice %109 {offsets = [0, 0], sizes = [1, 128], strides = [1, 1]} : vector<64x128xf32> to vector<1x128xf32>
    %112 = tpu.concatenate %110, %111 in 0 : vector<63x128xf32>, vector<1x128xf32> -> vector<64x128xf32>
    %113 = arith.maximumf %109, %112 : vector<64x128xf32>
    %c0_56 = arith.constant 0 : index
    %c0_57 = arith.constant 0 : index
    %114 = vector.load %arg7[%c0_56, %c0_57] : memref<64x128xf32, #tpu.memory_space<vmem>>, vector<32x64xf32>
    %cst_58 = arith.constant dense<0.000000e+00> : vector<32x128xf32>
    %115 = tpu.matmul %114, %113, %cst_58 {dimension_numbers = #tpu.dot_dimension_numbers<[1], [0], [0], [1], [0, 0, 1, 1], [], []>} : vector<32x64xf32>, vector<64x128xf32>, vector<32x128xf32> -> vector<32x128xf32>
    %c6 = arith.constant 6 : index
    %c0_59 = arith.constant 0 : index
    %116 = vector.load %arg6[%c6, %c0_59] : memref<12x256xf32, #tpu.memory_space<vmem>>, vector<1x256xf32>
    %c7 = arith.constant 7 : index
    %c0_60 = arith.constant 0 : index
    %117 = vector.load %arg6[%c7, %c0_60] : memref<12x256xf32, #tpu.memory_space<vmem>>, vector<1x256xf32>
    %c8 = arith.constant 8 : index
    %c0_61 = arith.constant 0 : index
    %118 = vector.load %arg6[%c8, %c0_61] : memref<12x256xf32, #tpu.memory_space<vmem>>, vector<1x256xf32>
    %119 = arith.truncf %115 : vector<32x128xf32> to vector<32x128xbf16>
    %cst_62 = arith.constant 0.000000e+00 : bf16
    %120 = vector.broadcast %cst_62 : bf16 to vector<32x128xbf16>
    %121 = tpu.concatenate %120, %119 in 0 : vector<32x128xbf16>, vector<32x128xbf16> -> vector<64x128xbf16>
    %122 = vector.extract_strided_slice %121 {offsets = [0, 0], sizes = [48, 128], strides = [1, 1]} : vector<64x128xbf16> to vector<48x128xbf16>
    %123 = vector.extract_strided_slice %121 {offsets = [4, 0], sizes = [48, 128], strides = [1, 1]} : vector<64x128xbf16> to vector<48x128xbf16>
    %124 = vector.extract_strided_slice %121 {offsets = [8, 0], sizes = [48, 128], strides = [1, 1]} : vector<64x128xbf16> to vector<48x128xbf16>
    %125 = vector.extract_strided_slice %121 {offsets = [12, 0], sizes = [48, 128], strides = [1, 1]} : vector<64x128xbf16> to vector<48x128xbf16>
    %126 = vector.extract_strided_slice %121 {offsets = [16, 0], sizes = [48, 128], strides = [1, 1]} : vector<64x128xbf16> to vector<48x128xbf16>
    %127 = tpu.concatenate %122, %123, %124, %125, %126 in 1 : vector<48x128xbf16>, vector<48x128xbf16>, vector<48x128xbf16>, vector<48x128xbf16>, vector<48x128xbf16> -> vector<48x640xbf16>
    %c0_63 = arith.constant 0 : index
    %c0_64 = arith.constant 0 : index
    %128 = vector.load %arg4[%c0_63, %c0_64] : memref<2048x256xbf16, #tpu.memory_space<vmem>>, vector<640x256xbf16>
    %cst_65 = arith.constant dense<0.000000e+00> : vector<48x256xf32>
    %129 = tpu.matmul %127, %128, %cst_65 {dimension_numbers = #tpu.dot_dimension_numbers<[1], [0], [0], [1], [0, 0, 1, 1], [], []>} : vector<48x640xbf16>, vector<640x256xbf16>, vector<48x256xf32> -> vector<48x256xf32>
    %130 = vector.broadcast %116 : vector<1x256xf32> to vector<48x256xf32>
    %131 = arith.addf %129, %130 : vector<48x256xf32>
    %cst_66 = arith.constant 0.000000e+00 : f32
    %132 = vector.broadcast %cst_66 : f32 to vector<48x256xf32>
    %133 = arith.cmpf ogt, %131, %132 : vector<48x256xf32>
    %cst_67 = arith.constant 0.00999999977 : f32
    %134 = vector.broadcast %cst_67 : f32 to vector<48x256xf32>
    %135 = arith.mulf %134, %131 : vector<48x256xf32>
    %136 = arith.select %133, %131, %135 : vector<48x256xi1>, vector<48x256xf32>
    %137 = arith.truncf %136 : vector<48x256xf32> to vector<48x256xbf16>
    %138 = vector.extract_strided_slice %137 {offsets = [0, 0], sizes = [32, 256], strides = [1, 1]} : vector<48x256xbf16> to vector<32x256xbf16>
    %139 = vector.extract_strided_slice %137 {offsets = [4, 0], sizes = [32, 256], strides = [1, 1]} : vector<48x256xbf16> to vector<32x256xbf16>
    %140 = vector.extract_strided_slice %137 {offsets = [8, 0], sizes = [32, 256], strides = [1, 1]} : vector<48x256xbf16> to vector<32x256xbf16>
    %141 = vector.extract_strided_slice %137 {offsets = [12, 0], sizes = [32, 256], strides = [1, 1]} : vector<48x256xbf16> to vector<32x256xbf16>
    %142 = vector.extract_strided_slice %137 {offsets = [16, 0], sizes = [32, 256], strides = [1, 1]} : vector<48x256xbf16> to vector<32x256xbf16>
    %143 = tpu.concatenate %138, %139, %140, %141, %142 in 1 : vector<32x256xbf16>, vector<32x256xbf16>, vector<32x256xbf16>, vector<32x256xbf16>, vector<32x256xbf16> -> vector<32x1280xbf16>
    %c640 = arith.constant 640 : index
    %c0_68 = arith.constant 0 : index
    %144 = vector.load %arg4[%c640, %c0_68] : memref<2048x256xbf16, #tpu.memory_space<vmem>>, vector<1280x256xbf16>
    %cst_69 = arith.constant dense<0.000000e+00> : vector<32x256xf32>
    %145 = tpu.matmul %143, %144, %cst_69 {dimension_numbers = #tpu.dot_dimension_numbers<[1], [0], [0], [1], [0, 0, 1, 1], [], []>} : vector<32x1280xbf16>, vector<1280x256xbf16>, vector<32x256xf32> -> vector<32x256xf32>
    %146 = vector.broadcast %117 : vector<1x256xf32> to vector<32x256xf32>
    %147 = arith.addf %145, %146 : vector<32x256xf32>
    %cst_70 = arith.constant 0.000000e+00 : f32
    %148 = vector.broadcast %cst_70 : f32 to vector<32x256xf32>
    %149 = arith.cmpf ogt, %147, %148 : vector<32x256xf32>
    %cst_71 = arith.constant 0.00999999977 : f32
    %150 = vector.broadcast %cst_71 : f32 to vector<32x256xf32>
    %151 = arith.mulf %150, %147 : vector<32x256xf32>
    %152 = arith.select %149, %147, %151 : vector<32x256xi1>, vector<32x256xf32>
    %c1920 = arith.constant 1920 : index
    %c0_72 = arith.constant 0 : index
    %153 = vector.load %arg4[%c1920, %c0_72] : memref<2048x256xbf16, #tpu.memory_space<vmem>>, vector<128x256xbf16>
    %cst_73 = arith.constant dense<0.000000e+00> : vector<32x256xf32>
    %154 = tpu.matmul %119, %153, %cst_73 {dimension_numbers = #tpu.dot_dimension_numbers<[1], [0], [0], [1], [0, 0, 1, 1], [], []>} : vector<32x128xbf16>, vector<128x256xbf16>, vector<32x256xf32> -> vector<32x256xf32>
    %155 = arith.addf %152, %154 : vector<32x256xf32>
    %156 = vector.broadcast %118 : vector<1x256xf32> to vector<32x256xf32>
    %157 = arith.addf %155, %156 : vector<32x256xf32>
    %158 = vector.extract_strided_slice %157 {offsets = [1, 0], sizes = [31, 256], strides = [1, 1]} : vector<32x256xf32> to vector<31x256xf32>
    %159 = vector.extract_strided_slice %157 {offsets = [0, 0], sizes = [1, 256], strides = [1, 1]} : vector<32x256xf32> to vector<1x256xf32>
    %160 = tpu.concatenate %158, %159 in 0 : vector<31x256xf32>, vector<1x256xf32> -> vector<32x256xf32>
    %161 = arith.maximumf %157, %160 : vector<32x256xf32>
    %c0_74 = arith.constant 0 : index
    %c0_75 = arith.constant 0 : index
    %162 = vector.load %arg7[%c0_74, %c0_75] : memref<64x128xf32, #tpu.memory_space<vmem>>, vector<16x32xf32>
    %cst_76 = arith.constant dense<0.000000e+00> : vector<16x256xf32>
    %163 = tpu.matmul %162, %161, %cst_76 {dimension_numbers = #tpu.dot_dimension_numbers<[1], [0], [0], [1], [0, 0, 1, 1], [], []>} : vector<16x32xf32>, vector<32x256xf32>, vector<16x256xf32> -> vector<16x256xf32>
    %c9 = arith.constant 9 : index
    %c0_77 = arith.constant 0 : index
    %164 = vector.load %arg6[%c9, %c0_77] : memref<12x256xf32, #tpu.memory_space<vmem>>, vector<1x32xf32>
    %c10 = arith.constant 10 : index
    %c0_78 = arith.constant 0 : index
    %165 = vector.load %arg6[%c10, %c0_78] : memref<12x256xf32, #tpu.memory_space<vmem>>, vector<1x32xf32>
    %c11 = arith.constant 11 : index
    %c0_79 = arith.constant 0 : index
    %166 = vector.load %arg6[%c11, %c0_79] : memref<12x256xf32, #tpu.memory_space<vmem>>, vector<1x32xf32>
    %167 = arith.truncf %163 : vector<16x256xf32> to vector<16x256xbf16>
    %cst_80 = arith.constant 0.000000e+00 : bf16
    %168 = vector.broadcast %cst_80 : bf16 to vector<64x256xbf16>
    %169 = tpu.concatenate %168, %167 in 0 : vector<64x256xbf16>, vector<16x256xbf16> -> vector<80x256xbf16>
    %170 = vector.extract_strided_slice %169 {offsets = [0, 0], sizes = [48, 256], strides = [1, 1]} : vector<80x256xbf16> to vector<48x256xbf16>
    %171 = vector.extract_strided_slice %169 {offsets = [8, 0], sizes = [48, 256], strides = [1, 1]} : vector<80x256xbf16> to vector<48x256xbf16>
    %172 = vector.extract_strided_slice %169 {offsets = [16, 0], sizes = [48, 256], strides = [1, 1]} : vector<80x256xbf16> to vector<48x256xbf16>
    %173 = vector.extract_strided_slice %169 {offsets = [24, 0], sizes = [48, 256], strides = [1, 1]} : vector<80x256xbf16> to vector<48x256xbf16>
    %174 = vector.extract_strided_slice %169 {offsets = [32, 0], sizes = [48, 256], strides = [1, 1]} : vector<80x256xbf16> to vector<48x256xbf16>
    %175 = tpu.concatenate %170, %171, %172, %173, %174 in 1 : vector<48x256xbf16>, vector<48x256xbf16>, vector<48x256xbf16>, vector<48x256xbf16>, vector<48x256xbf16> -> vector<48x1280xbf16>
    %c0_81 = arith.constant 0 : index
    %c0_82 = arith.constant 0 : index
    %176 = vector.load %arg5[%c0_81, %c0_82] : memref<1696x32xbf16, #tpu.memory_space<vmem>>, vector<1280x32xbf16>
    %cst_83 = arith.constant dense<0.000000e+00> : vector<48x32xf32>
    %177 = tpu.matmul %175, %176, %cst_83 {dimension_numbers = #tpu.dot_dimension_numbers<[1], [0], [0], [1], [0, 0, 1, 1], [], []>} : vector<48x1280xbf16>, vector<1280x32xbf16>, vector<48x32xf32> -> vector<48x32xf32>
    %178 = vector.broadcast %164 : vector<1x32xf32> to vector<48x32xf32>
    %179 = arith.addf %177, %178 : vector<48x32xf32>
    %cst_84 = arith.constant 0.000000e+00 : f32
    %180 = vector.broadcast %cst_84 : f32 to vector<48x32xf32>
    %181 = arith.cmpf ogt, %179, %180 : vector<48x32xf32>
    %cst_85 = arith.constant 0.00999999977 : f32
    %182 = vector.broadcast %cst_85 : f32 to vector<48x32xf32>
    %183 = arith.mulf %182, %179 : vector<48x32xf32>
    %184 = arith.select %181, %179, %183 : vector<48x32xi1>, vector<48x32xf32>
    %185 = arith.truncf %184 : vector<48x32xf32> to vector<48x32xbf16>
    %cst_86 = arith.constant 0.000000e+00 : f32
    %186 = vector.broadcast %cst_86 : f32 to vector<16x32xf32>
    %187 = vector.extract_strided_slice %185 {offsets = [0, 0], sizes = [16, 32], strides = [1, 1]} : vector<48x32xbf16> to vector<16x32xbf16>
    %c1280 = arith.constant 1280 : index
    %c0_87 = arith.constant 0 : index
    %188 = vector.load %arg5[%c1280, %c0_87] : memref<1696x32xbf16, #tpu.memory_space<vmem>>, vector<32x32xbf16>
    %cst_88 = arith.constant dense<0.000000e+00> : vector<16x32xf32>
    %189 = tpu.matmul %187, %188, %cst_88 {dimension_numbers = #tpu.dot_dimension_numbers<[1], [0], [0], [1], [0, 0, 1, 1], [], []>} : vector<16x32xbf16>, vector<32x32xbf16>, vector<16x32xf32> -> vector<16x32xf32>
    %190 = arith.addf %186, %189 : vector<16x32xf32>
    %191 = vector.extract_strided_slice %185 {offsets = [8, 0], sizes = [16, 32], strides = [1, 1]} : vector<48x32xbf16> to vector<16x32xbf16>
    %c1312 = arith.constant 1312 : index
    %c0_89 = arith.constant 0 : index
    %192 = vector.load %arg5[%c1312, %c0_89] : memref<1696x32xbf16, #tpu.memory_space<vmem>>, vector<32x32xbf16>
    %cst_90 = arith.constant dense<0.000000e+00> : vector<16x32xf32>
    %193 = tpu.matmul %191, %192, %cst_90 {dimension_numbers = #tpu.dot_dimension_numbers<[1], [0], [0], [1], [0, 0, 1, 1], [], []>} : vector<16x32xbf16>, vector<32x32xbf16>, vector<16x32xf32> -> vector<16x32xf32>
    %194 = arith.addf %190, %193 : vector<16x32xf32>
    %195 = vector.extract_strided_slice %185 {offsets = [16, 0], sizes = [16, 32], strides = [1, 1]} : vector<48x32xbf16> to vector<16x32xbf16>
    %c1344 = arith.constant 1344 : index
    %c0_91 = arith.constant 0 : index
    %196 = vector.load %arg5[%c1344, %c0_91] : memref<1696x32xbf16, #tpu.memory_space<vmem>>, vector<32x32xbf16>
    %cst_92 = arith.constant dense<0.000000e+00> : vector<16x32xf32>
    %197 = tpu.matmul %195, %196, %cst_92 {dimension_numbers = #tpu.dot_dimension_numbers<[1], [0], [0], [1], [0, 0, 1, 1], [], []>} : vector<16x32xbf16>, vector<32x32xbf16>, vector<16x32xf32> -> vector<16x32xf32>
    %198 = arith.addf %194, %197 : vector<16x32xf32>
    %199 = vector.extract_strided_slice %185 {offsets = [24, 0], sizes = [16, 32], strides = [1, 1]} : vector<48x32xbf16> to vector<16x32xbf16>
    %c1376 = arith.constant 1376 : index
    %c0_93 = arith.constant 0 : index
    %200 = vector.load %arg5[%c1376, %c0_93] : memref<1696x32xbf16, #tpu.memory_space<vmem>>, vector<32x32xbf16>
    %cst_94 = arith.constant dense<0.000000e+00> : vector<16x32xf32>
    %201 = tpu.matmul %199, %200, %cst_94 {dimension_numbers = #tpu.dot_dimension_numbers<[1], [0], [0], [1], [0, 0, 1, 1], [], []>} : vector<16x32xbf16>, vector<32x32xbf16>, vector<16x32xf32> -> vector<16x32xf32>
    %202 = arith.addf %198, %201 : vector<16x32xf32>
    %203 = vector.extract_strided_slice %185 {offsets = [32, 0], sizes = [16, 32], strides = [1, 1]} : vector<48x32xbf16> to vector<16x32xbf16>
    %c1408 = arith.constant 1408 : index
    %c0_95 = arith.constant 0 : index
    %204 = vector.load %arg5[%c1408, %c0_95] : memref<1696x32xbf16, #tpu.memory_space<vmem>>, vector<32x32xbf16>
    %cst_96 = arith.constant dense<0.000000e+00> : vector<16x32xf32>
    %205 = tpu.matmul %203, %204, %cst_96 {dimension_numbers = #tpu.dot_dimension_numbers<[1], [0], [0], [1], [0, 0, 1, 1], [], []>} : vector<16x32xbf16>, vector<32x32xbf16>, vector<16x32xf32> -> vector<16x32xf32>
    %206 = arith.addf %202, %205 : vector<16x32xf32>
    %207 = vector.broadcast %165 : vector<1x32xf32> to vector<16x32xf32>
    %208 = arith.addf %206, %207 : vector<16x32xf32>
    %cst_97 = arith.constant 0.000000e+00 : f32
    %209 = vector.broadcast %cst_97 : f32 to vector<16x32xf32>
    %210 = arith.cmpf ogt, %208, %209 : vector<16x32xf32>
    %cst_98 = arith.constant 0.00999999977 : f32
    %211 = vector.broadcast %cst_98 : f32 to vector<16x32xf32>
    %212 = arith.mulf %211, %208 : vector<16x32xf32>
    %213 = arith.select %210, %208, %212 : vector<16x32xi1>, vector<16x32xf32>
    %c1440 = arith.constant 1440 : index
    %c0_99 = arith.constant 0 : index
    %214 = vector.load %arg5[%c1440, %c0_99] : memref<1696x32xbf16, #tpu.memory_space<vmem>>, vector<256x32xbf16>
    %cst_100 = arith.constant dense<0.000000e+00> : vector<16x32xf32>
    %215 = tpu.matmul %167, %214, %cst_100 {dimension_numbers = #tpu.dot_dimension_numbers<[1], [0], [0], [1], [0, 0, 1, 1], [], []>} : vector<16x256xbf16>, vector<256x32xbf16>, vector<16x32xf32> -> vector<16x32xf32>
    %216 = arith.addf %213, %215 : vector<16x32xf32>
    %217 = vector.broadcast %166 : vector<1x32xf32> to vector<16x32xf32>
    %218 = arith.addf %216, %217 : vector<16x32xf32>
    %cst_101 = arith.constant dense<0xFF800000> : vector<32xf32>
    %219 = vector.multi_reduction <maximumf>, %218, %cst_101 [0] : vector<16x32xf32> to vector<32xf32>
    %220 = vector.shape_cast %219 : vector<32xf32> to vector<1x32xf32>
    %c0_102 = arith.constant 0 : index
    %c0_103 = arith.constant 0 : index
    %c0_104 = arith.constant 0 : index
    %221 = vector.load %arg8[%c0_102, %c0_103, %c0_104] : memref<1x1x32xf32, #tpu.memory_space<vmem>>, vector<1x1x32xf32>
    %222 = vector.shape_cast %221 : vector<1x1x32xf32> to vector<1x32xf32>
    %223 = vector.shape_cast %220 : vector<1x32xf32> to vector<1x1x32xf32>
    tpu.vector_store %arg8[%c0_102, %c0_103, %c0_104], %223 {strides = array<i32>} : memref<1x1x32xf32, #tpu.memory_space<vmem>>, vector<1x1x32xf32>,
    return
  }
  func.func @transform_0(%arg0: i32) -> (i32, i32, i32) {
    %c0_i32 = arith.constant 0 : i32
    %c0_i32_0 = arith.constant 0 : i32
    %c0_i32_1 = arith.constant 0 : i32
    return %arg0, %c0_i32, %c0_i32_0 : i32, i32, i32
  }
  func.func @transform_1(%arg0: i32) -> (i32, i32) {
    %c0_i32 = arith.constant 0 : i32
    %c0_i32_0 = arith.constant 0 : i32
    %c0_i32_1 = arith.constant 0 : i32
    return %c0_i32, %c0_i32_0 : i32, i32
  }
  func.func @transform_2(%arg0: i32) -> (i32, i32) {
    %c0_i32 = arith.constant 0 : i32
    %c0_i32_0 = arith.constant 0 : i32
    %c0_i32_1 = arith.constant 0 : i32
    return %c0_i32, %c0_i32_0 : i32, i32
  }
  func.func @transform_3(%arg0: i32) -> (i32, i32) {
    %c0_i32 = arith.constant 0 : i32
    %c0_i32_0 = arith.constant 0 : i32
    %c0_i32_1 = arith.constant 0 : i32
    return %c0_i32, %c0_i32_0 : i32, i32
  }
  func.func @transform_4(%arg0: i32) -> (i32, i32) {
    %c0_i32 = arith.constant 0 : i32
    %c0_i32_0 = arith.constant 0 : i32
    %c0_i32_1 = arith.constant 0 : i32
    return %c0_i32, %c0_i32_0 : i32, i32
  }
  func.func @transform_5(%arg0: i32) -> (i32, i32) {
    %c0_i32 = arith.constant 0 : i32
    %c0_i32_0 = arith.constant 0 : i32
    %c0_i32_1 = arith.constant 0 : i32
    return %c0_i32, %c0_i32_0 : i32, i32
  }
  func.func @transform_6(%arg0: i32) -> (i32, i32) {
    %c0_i32 = arith.constant 0 : i32
    %c0_i32_0 = arith.constant 0 : i32
    %c0_i32_1 = arith.constant 0 : i32
    return %c0_i32, %c0_i32_0 : i32, i32
  }
  func.func @transform_7(%arg0: i32) -> (i32, i32, i32) {
    %c0_i32 = arith.constant 0 : i32
    %c0_i32_0 = arith.constant 0 : i32
    %c0_i32_1 = arith.constant 0 : i32
    return %arg0, %c0_i32, %c0_i32_0 : i32, i32, i32
  }
}

</mosaic_0001>

<llo_original>
// kernel: usrl_forward.1
$region0: #{usrl_forward.1}
  #allocation0 [shape = 'u32[]', space=smem, size = 0x4, offset = 0x4, fixed_abs, tag = 'smem constant byte address 0x4 - core index']
  #allocation1 [shape = 'u32[144,128]{1,0:T(1,128)}', space=vmem, size = 0x12000, scoped, tag = 'internal scratch']
  %s0 = inlined_call_operand.vmem [shape: bf16[2,136,128], index: 0, kind: input, shape index: {}]
  %s1 = inlined_call_operand.vmem [shape: bf16[452,64], index: 1, kind: input, shape index: {}]
  %s2 = inlined_call_operand.vmem [shape: bf16[1024,128], index: 2, kind: input, shape index: {}]
  %s3 = inlined_call_operand.hbm [shape: bf16[2048,256], index: 3, kind: input, shape index: {}]
  %s4 = inlined_call_operand.hbm [shape: bf16[1696,32], index: 4, kind: input, shape index: {}]
  %s5 = inlined_call_operand.hbm [shape: f32[12,256], index: 5, kind: input, shape index: {}]
  %s6 = inlined_call_operand.vmem [shape: f32[64,128], index: 6, kind: input, shape index: {}]
  %s7 = inlined_call_operand.hbm [shape: f32[2,1,32], index: 7, kind: output, shape index: {}]
  %s8 = sld [smem:[#allocation0]]
  $region73: #{usrl_forward.1} parent=0
    _
  %s10 = ssub.s32 1, %s8
  %s11 = scalar_select 0, %s10, %s8
  $region1: #{usrl_forward.1} parent=0
    #allocation2 [shape = 'u8[1048576]{0}', space=vmem, size = 0x100000, scoped, tag = 'input window, operand 3, single buffered']
    #allocation3 [shape = 's32[2]{0}', space=sflag, size = 0x8, scoped, tag = 'scoped memory for usrl_forward.1']
    #allocation4 [shape = 's32[2]{0}', space=sflag, size = 0x8, scoped, tag = 'scoped memory for usrl_forward.1']
    #allocation5 [shape = 'u8[434176]{0}', space=vmem, size = 0x6a000, scoped, tag = 'input window, operand 4, single buffered']
    #allocation6 [shape = 's32[1]{0}', space=sflag, size = 0x4, scoped, tag = 'scoped memory for usrl_forward.1']
    #allocation7 [shape = 'u8[16384]{0}', space=vmem, size = 0x4000, scoped, tag = 'input window, operand 5, single buffered']
    #allocation8 [shape = 'u8[1024]{0}', space=vmem, size = 0x400, scoped, tag = 'output window, operand 0']
    %12 = vsyncpa [#allocation3], 0
    %13 = vsyncpa [#allocation6], 0
    %14 = vsyncpa [#allocation4], 0
    %s15 = scalar_lea.sflag [#allocation4], 1
    %16 = vsyncpa %s15, 0
    loop: start=0, step=1, limit=4
    $region2: #{usrl_forward.1} parent=1 // loop_pre_header
      _
    $region3: #{usrl_forward.1} parent=1 // loop_header
      %s18 = sphi 0, %s22
      %p19 = scmp.ge.s32.totalorder %s18, 4
      %s28 = sphi 0, %s30
      %s31 = sphi 0, %s28
      %s32 = sphi 0, %s31
      %s48 = sphi 0, %s32
      %s52 = sphi 0, %s52
      %s54 = sphi 0, %s52
      %s55 = sphi 0, %s54
      %s69 = sphi 0, %s55
      %s73 = sphi 0, %s73
      %s75 = sphi 0, %s73
      %s76 = sphi 0, %s75
      %s90 = sphi 0, %s76
      %s94 = sphi 0, %s94
      %s96 = sphi 0, %s94
      %s97 = sphi 0, %s96
      %s111 = sphi 0, %s97
      %s115 = sphi 0, %s115
      %s117 = sphi 0, %s115
      %s118 = sphi 0, %s117
      %s132 = sphi 0, %s118
      %s136 = sphi 0, %s136
      %s138 = sphi 0, %s136
      %s139 = sphi 0, %s138
      %s153 = sphi 0, %s139
      %s157 = sphi 0, %s157
      %s159 = sphi 0, %s157
      %s160 = sphi 0, %s159
      %s174 = sphi 0, %s160
      %s180 = sphi 0, %s182
      %s183 = sphi 0, %s180
      %s184 = sphi 0, %s183
      %s200 = sphi 0, %s184
    $region4: #{usrl_forward.1} parent=1 // loop_header_branch
      %21 = sbr.rel (%p19) target = $region8
    $region5: #{usrl_forward.1} parent=1 // loop_body
      %s23 = ssub.s32 %s18, 1
      %s24 = ssub.s32 %s18, 2
      %s25 = sadd.s32 %s18, 1
      %s26 = ssub.s32 %s18, %s25
      %p27 = scmp.eq.s32.totalorder %s26, 0
      %s29 = sadd.s32 %s28, 1
      %s30 = scalar_select %p27, %s28, %s29
      %p33 = pneg %p27
      %p34 = scmp.eq.s32.totalorder %s18, 1
      %p35 = por %p33, %p34
      %p36 = scmp.ne.s32.totalorder %s28, %s31
      %p37 = scmp.eq.s32.totalorder %s18, 0
      %p38 = por %p36, %p37
      %p39 = scmp.ne.s32.totalorder %s28, %s31
      %p40 = scmp.eq.s32.totalorder %s23, 1
      %p41 = por %p39, %p40
      %p42 = scmp.ne.s32.totalorder %s31, %s32
      %p43 = scmp.eq.s32.totalorder %s23, 0
      %p44 = por %p42, %p43
      %p45 = scmp.ne.s32.totalorder %s31, %s32
      %p46 = scmp.eq.s32.totalorder %s24, 1
      %p47 = por %p45, %p46
      %p49 = scmp.ne.s32.totalorder %s32, %s48
      %p50 = scmp.eq.s32.totalorder %s24, 0
      %p51 = por %p49, %p50
      %s53 = sadd.s32 %s52, 1
      %p56 = scmp.eq.s32.totalorder %s18, 1
      %p57 = scmp.ne.s32.totalorder %s52, %s54
      %p58 = scmp.eq.s32.totalorder %s18, 0
      %p59 = por %p57, %p58
      %p60 = scmp.ne.s32.totalorder %s52, %s54
      %p61 = scmp.eq.s32.totalorder %s23, 1
      %p62 = por %p60, %p61
      %p63 = scmp.ne.s32.totalorder %s54, %s55
      %p64 = scmp.eq.s32.totalorder %s23, 0
      %p65 = por %p63, %p64
      %p66 = scmp.ne.s32.totalorder %s54, %s55
      %p67 = scmp.eq.s32.totalorder %s24, 1
      %p68 = por %p66, %p67
      %p70 = scmp.ne.s32.totalorder %s55, %s69
      %p71 = scmp.eq.s32.totalorder %s24, 0
      %p72 = por %p70, %p71
      %s74 = sadd.s32 %s73, 1
      %p77 = scmp.eq.s32.totalorder %s18, 1
      %p78 = scmp.ne.s32.totalorder %s73, %s75
      %p79 = scmp.eq.s32.totalorder %s18, 0
      %p80 = por %p78, %p79
      %p81 = scmp.ne.s32.totalorder %s73, %s75
      %p82 = scmp.eq.s32.totalorder %s23, 1
      %p83 = por %p81, %p82
      %p84 = scmp.ne.s32.totalorder %s75, %s76
      %p85 = scmp.eq.s32.totalorder %s23, 0
      %p86 = por %p84, %p85
      %p87 = scmp.ne.s32.totalorder %s75, %s76
      %p88 = scmp.eq.s32.totalorder %s24, 1
      %p89 = por %p87, %p88
      %p91 = scmp.ne.s32.totalorder %s76, %s90
      %p92 = scmp.eq.s32.totalorder %s24, 0
      %p93 = por %p91, %p92
      %s95 = sadd.s32 %s94, 1
      %p98 = scmp.eq.s32.totalorder %s18, 1
      %p99 = scmp.ne.s32.totalorder %s94, %s96
      %p100 = scmp.eq.s32.totalorder %s18, 0
      %p101 = por %p99, %p100
      %p102 = scmp.ne.s32.totalorder %s94, %s96
      %p103 = scmp.eq.s32.totalorder %s23, 1
      %p104 = por %p102, %p103
      %p105 = scmp.ne.s32.totalorder %s96, %s97
      %p106 = scmp.eq.s32.totalorder %s23, 0
      %p107 = por %p105, %p106
      %p108 = scmp.ne.s32.totalorder %s96, %s97
      %p109 = scmp.eq.s32.totalorder %s24, 1
      %p110 = por %p108, %p109
      %p112 = scmp.ne.s32.totalorder %s97, %s111
      %p113 = scmp.eq.s32.totalorder %s24, 0
      %p114 = por %p112, %p113
      %s116 = sadd.s32 %s115, 1
      %p119 = scmp.eq.s32.totalorder %s18, 1
      %p120 = scmp.ne.s32.totalorder %s115, %s117
      %p121 = scmp.eq.s32.totalorder %s18, 0
      %p122 = por %p120, %p121
      %p123 = scmp.ne.s32.totalorder %s115, %s117
      %p124 = scmp.eq.s32.totalorder %s23, 1
      %p125 = por %p123, %p124
      %p126 = scmp.ne.s32.totalorder %s117, %s118
      %p127 = scmp.eq.s32.totalorder %s23, 0
      %p128 = por %p126, %p127
      %p129 = scmp.ne.s32.totalorder %s117, %s118
      %p130 = scmp.eq.s32.totalorder %s24, 1
      %p131 = por %p129, %p130
      %p133 = scmp.ne.s32.totalorder %s118, %s132
      %p134 = scmp.eq.s32.totalorder %s24, 0
      %p135 = por %p133, %p134
      %s137 = sadd.s32 %s136, 1
      %p140 = scmp.eq.s32.totalorder %s18, 1
      %p141 = scmp.ne.s32.totalorder %s136, %s138
      %p142 = scmp.eq.s32.totalorder %s18, 0
      %p143 = por %p141, %p142
      %p144 = scmp.ne.s32.totalorder %s136, %s138
      %p145 = scmp.eq.s32.totalorder %s23, 1
      %p146 = por %p144, %p145
      %p147 = scmp.ne.s32.totalorder %s138, %s139
      %p148 = scmp.eq.s32.totalorder %s23, 0
      %p149 = por %p147, %p148
      %p150 = scmp.ne.s32.totalorder %s138, %s139
      %p151 = scmp.eq.s32.totalorder %s24, 1
      %p152 = por %p150, %p151
      %p154 = scmp.ne.s32.totalorder %s139, %s153
      %p155 = scmp.eq.s32.totalorder %s24, 0
      %p156 = por %p154, %p155
      %s158 = sadd.s32 %s157, 1
      %p161 = scmp.eq.s32.totalorder %s18, 1
      %p162 = scmp.ne.s32.totalorder %s157, %s159
      %p163 = scmp.eq.s32.totalorder %s18, 0
      %p164 = por %p162, %p163
      %p165 = scmp.ne.s32.totalorder %s157, %s159
      %p166 = scmp.eq.s32.totalorder %s23, 1
      %p167 = por %p165, %p166
      %p168 = scmp.ne.s32.totalorder %s159, %s160
      %p169 = scmp.eq.s32.totalorder %s23, 0
      %p170 = por %p168, %p169
      %p171 = scmp.ne.s32.totalorder %s159, %s160
      %p172 = scmp.eq.s32.totalorder %s24, 1
      %p173 = por %p171, %p172
      %p175 = scmp.ne.s32.totalorder %s160, %s174
      %p176 = scmp.eq.s32.totalorder %s24, 0
      %p177 = por %p175, %p176
      %s178 = ssub.s32 %s18, %s25
      %p179 = scmp.eq.s32.totalorder %s178, 0
      %s181 = sadd.s32 %s180, 1
      %s182 = scalar_select %p179, %s180, %s181
      %p185 = pneg %p179
      %p186 = scmp.eq.s32.totalorder %s18, 1
      %p187 = por %p185, %p186
      %p188 = scmp.ne.s32.totalorder %s180, %s183
      %p189 = scmp.eq.s32.totalorder %s18, 0
      %p190 = por %p188, %p189
      %p191 = scmp.ne.s32.totalorder %s180, %s183
      %p192 = scmp.eq.s32.totalorder %s23, 1
      %p193 = por %p191, %p192
      %p194 = scmp.ne.s32.totalorder %s183, %s184
      %p195 = scmp.eq.s32.totalorder %s23, 0
      %p196 = por %p194, %p195
      %p197 = scmp.ne.s32.totalorder %s183, %s184
      %p198 = scmp.eq.s32.totalorder %s24, 1
      %p199 = por %p197, %p198
      %p201 = scmp.ne.s32.totalorder %s184, %s200
      %p202 = scmp.eq.s32.totalorder %s24, 0
      %p203 = por %p201, %p202
      %p204 = scmp.le.s32.totalorder 1, %s18
      %p205 = scmp.lt.s32.totalorder %s18, 3
      %p206 = pnand %p204, %p205
      %p207 = pneg %p206
      // Predicated region
      $region9: #{usrl_forward.1} parent=5 // pred_check
        _
      $region10: #{usrl_forward.1} parent=5 // pred_check_branch
        %209 = sbr.rel (%p206) target = $region12
      $region11: #{usrl_forward.1} parent=5 // pred_region
        %s210 = ssub.s32 %s18, 1
        // Predicated region
        $region13: #{usrl_forward.1} parent=11 // pred_check
          %p211 = pneg %p65
        $region14: #{usrl_forward.1} parent=11 // pred_check_branch
          %213 = sbr.rel (%p211) target = $region16
        $region15: #{usrl_forward.1} parent=11 // pred_region
          _
        $region16: #{usrl_forward.1} parent=11 // pred_fallthru
          _
        // Predicated region
        $region17: #{usrl_forward.1} parent=11 // pred_check
          %p214 = pneg %p86
        $region18: #{usrl_forward.1} parent=11 // pred_check_branch
          %216 = sbr.rel (%p214) target = $region20
        $region19: #{usrl_forward.1} parent=11 // pred_region
          _
        $region20: #{usrl_forward.1} parent=11 // pred_fallthru
          _
        // Predicated region
        $region21: #{usrl_forward.1} parent=11 // pred_check
          %p217 = pneg %p107
        $region22: #{usrl_forward.1} parent=11 // pred_check_branch
          %219 = sbr.rel (%p217) target = $region24
        $region23: #{usrl_forward.1} parent=11 // pred_region
          %s221 = ssub.s32 32768, 32768
          %222 = vsyncadd [#allocation3], %s221
          %s223 = sshll.u32 [#allocation2], 4
          %s224 = int_to_ptr.vmem [resolvable:$true] %s223
          %229 = dma.hbm_to_vmem [thread:$0]  %s3, 32768, %s224, [#allocation3], 128, 128, 8
        $region24: #{usrl_forward.1} parent=11 // pred_fallthru
          _
        // Predicated region
        $region25: #{usrl_forward.1} parent=11 // pred_check
          %p230 = pneg %p128
        $region26: #{usrl_forward.1} parent=11 // pred_check_branch
          %232 = sbr.rel (%p230) target = $region28
        $region27: #{usrl_forward.1} parent=11 // pred_region
          %s234 = ssub.s32 13568, 13568
          %235 = vsyncadd [#allocation6], %s234
          %s236 = sshll.u32 [#allocation5], 4
          %s237 = int_to_ptr.vmem [resolvable:$true] %s236
          %242 = dma.hbm_to_vmem [thread:$0]  %s4, 13568, %s237, [#allocation6], 64, 64, 4
        $region28: #{usrl_forward.1} parent=11 // pred_fallthru
          _
        // Predicated region
        $region29: #{usrl_forward.1} parent=11 // pred_check
          %p243 = pneg %p149
        $region30: #{usrl_forward.1} parent=11 // pred_check_branch
          %245 = sbr.rel (%p243) target = $region32
        $region31: #{usrl_forward.1} parent=11 // pred_region
          %s247 = ssub.s32 512, 512
          %248 = vsyncadd [#allocation6], %s247
          %s249 = sshll.u32 [#allocation7], 4
          %s250 = int_to_ptr.vmem [resolvable:$true] %s249
          %255 = dma.hbm_to_vmem [thread:$0]  %s5, 512, %s250, [#allocation6], 256, 256, 16
        $region32: #{usrl_forward.1} parent=11 // pred_fallthru
          _
        // Predicated region
        $region33: #{usrl_forward.1} parent=11 // pred_check
          %p256 = pneg %p170
        $region34: #{usrl_forward.1} parent=11 // pred_check_branch
          %258 = sbr.rel (%p256) target = $region36
        $region35: #{usrl_forward.1} parent=11 // pred_region
          _
        $region36: #{usrl_forward.1} parent=11 // pred_fallthru
          _
      $region12: #{usrl_forward.1} parent=5 // pred_fallthru
        _
      %p259 = scmp.lt.s32.totalorder %s18, 2
      // Predicated region
      $region37: #{usrl_forward.1} parent=5 // pred_check
        %p260 = pneg %p259
      $region38: #{usrl_forward.1} parent=5 // pred_check_branch
        %262 = sbr.rel (%p260) target = $region40
      $region39: #{usrl_forward.1} parent=5 // pred_region
        // Predicated region
        $region41: #{usrl_forward.1} parent=39 // pred_check
          %p263 = pneg %p38
        $region42: #{usrl_forward.1} parent=39 // pred_check_branch
          %265 = sbr.rel (%p263) target = $region44
        $region43: #{usrl_forward.1} parent=39 // pred_region
          %p266 = scmp.lt.s32.totalorder %s18, 1
          %s267 = scalar_select %p266, %s18, 1
          %s268 = smul.addr %s267, 17
          %s269 = smul.addr %s268, 4
          %s270 = scalar_lea.vmem %s0, %s269
        $region44: #{usrl_forward.1} parent=39 // pred_fallthru
          _
      $region40: #{usrl_forward.1} parent=5 // pred_fallthru
        _
      %p271 = scmp.le.s32.totalorder 1, %s18
      %p272 = scmp.lt.s32.totalorder %s18, 3
      %p273 = pnand %p271, %p272
      %p274 = pneg %p273
      // Predicated region
      $region45: #{usrl_forward.1} parent=5 // pred_check
        _
      $region46: #{usrl_forward.1} parent=5 // pred_check_branch
        %276 = sbr.rel (%p273) target = $region48
      $region47: #{usrl_forward.1} parent=5 // pred_region
        %s277 = ssub.s32 %s18, 1
        // Predicated region
        $region49: #{usrl_forward.1} parent=47 // pred_check
          %p278 = pneg %p107
        $region50: #{usrl_forward.1} parent=47 // pred_check_branch
          %280 = sbr.rel (%p278) target = $region52
        $region51: #{usrl_forward.1} parent=47 // pred_region
          %281 = dma.done [#allocation3], 32768
        $region52: #{usrl_forward.1} parent=47 // pred_fallthru
          _
        // Predicated region
        $region53: #{usrl_forward.1} parent=47 // pred_check
          %p282 = pneg %p128
        $region54: #{usrl_forward.1} parent=47 // pred_check_branch
          %284 = sbr.rel (%p282) target = $region56
        $region55: #{usrl_forward.1} parent=47 // pred_region
          %285 = dma.done [#allocation6], 13568
        $region56: #{usrl_forward.1} parent=47 // pred_fallthru
          _
        // Predicated region
        $region57: #{usrl_forward.1} parent=47 // pred_check
          %p286 = pneg %p149
        $region58: #{usrl_forward.1} parent=47 // pred_check_branch
          %288 = sbr.rel (%p286) target = $region60
        $region59: #{usrl_forward.1} parent=47 // pred_region
          %289 = dma.done [#allocation6], 512
        $region60: #{usrl_forward.1} parent=47 // pred_fallthru
          _
        %p290 = scmp.lt.s32.totalorder %s23, 1
        %s291 = scalar_select %p290, %s23, 1
        %s292 = smul.addr %s291, 17
        %s293 = smul.addr %s292, 4
        %s294 = scalar_lea.vmem %s0, %s293
        %p295 = pneg %p44
        %p296 = pneg %p41
        %p297 = pneg %p65
        %p298 = pneg %p62
        %p299 = pneg %p86
        %p300 = pneg %p83
        %p301 = pneg %p107
        %p302 = pneg %p104
        %p303 = pneg %p128
        %p304 = pneg %p125
        %p305 = pneg %p149
        %p306 = pneg %p146
        %p307 = pneg %p170
        %p308 = pneg %p167
        %p309 = pneg %p196
        %p310 = pneg %p193
        %s311 = sand.u32 %s183, 1
        %s312 = scalar_lea.sflag [#allocation4], %s311
        %s313 = sand.u32 %s183, 1
        %s314 = scalar_lea.vmem [#allocation8], %s313
        %p315 = scmp.lt.s32.totalorder %s23, 1
        %s316 = scalar_select %p315, %s23, 1
        %s317 = smul.addr %s316, 17
        %s318 = smul.addr %s317, 4
        %s319 = scalar_lea.vmem %s0, %s318
        %v321 = vld [vmem:[%s319] sm:$0xf]
        %v322 = vld [vmem:[%s319 + $0x4] sm:$0xf]
        %v323 = vld [vmem:[%s319 + $0x8] sm:$0xf]
        %v324 = vld [vmem:[%s319 + $0xc] sm:$0xf]
        %v325 = vld [vmem:[%s319 + $0x10] sm:$0xf]
        %v326 = vld [vmem:[%s319 + $0x14] sm:$0xf]
        %v327 = vld [vmem:[%s319 + $0x18] sm:$0xf]
        %v328 = vld [vmem:[%s319 + $0x1c] sm:$0xf]
        %v329 = vld [vmem:[%s319 + $0x20] sm:$0xf]
        %v330 = vld [vmem:[%s319 + $0x24] sm:$0xf]
        %v331 = vld [vmem:[%s319 + $0x28] sm:$0xf]
        %v332 = vld [vmem:[%s319 + $0x2c] sm:$0xf]
        %v333 = vld [vmem:[%s319 + $0x30] sm:$0xf]
        %v334 = vld [vmem:[%s319 + $0x34] sm:$0xf]
        %v335 = vld [vmem:[%s319 + $0x38] sm:$0xf]
        %v336 = vld [vmem:[%s319 + $0x3c] sm:$0xf]
        %v337 = vld [vmem:[%s319 + $0x40] sm:$0xf]
        %v338 = vld [vmem:[%s1] sm:$0xf]
        %v339 = vld [vmem:[%s1 + $0x4] sm:$0xf]
        %v340 = vld [vmem:[%s1 + $0x8] sm:$0xf]
        %v341 = vld [vmem:[%s1 + $0xc] sm:$0xf]
        %v342 = vld [vmem:[%s1 + $0x10] sm:$0xf]
        %v343 = vld [vmem:[%s1 + $0x14] sm:$0xf]
        %v344 = vld [vmem:[%s1 + $0x18] sm:$0xf]
        %v345 = vld [vmem:[%s1 + $0x1c] sm:$0xf]
        %v346 = vld [vmem:[%s1 + $0x20] sm:$0xf]
        %v347 = vld [vmem:[%s1 + $0x24] sm:$0xf]
        %v348 = vld [vmem:[%s1 + $0x28] sm:$0xf]
        %v349 = vld [vmem:[%s1 + $0x2c] sm:$0xf]
        %v350 = vld [vmem:[%s1 + $0x30] sm:$0xf]
        %v351 = vld [vmem:[%s1 + $0x34] sm:$0xf]
        %v352 = vld [vmem:[%s1 + $0x38] sm:$0xf]
        %v353 = vld [vmem:[%s1 + $0x3c] sm:$0xf]
        %v354 = vld [vmem:[#allocation7] ss:$0 sm:$0xff]
        %v372 = vunpack.c.l.b16 %v321
        %v373 = vunpack.c.l.b16 %v322
        %v374 = vunpack.c.l.b16 %v323
        %v375 = vunpack.c.l.b16 %v324
        %v376 = vunpack.c.l.b16 %v325
        %v377 = vunpack.c.l.b16 %v326
        %v378 = vunpack.c.l.b16 %v327
        %v379 = vunpack.c.l.b16 %v328
        %v380 = vunpack.c.l.b16 %v329
        %v381 = vunpack.c.l.b16 %v330
        %v382 = vunpack.c.l.b16 %v331
        %v383 = vunpack.c.l.b16 %v332
        %v384 = vunpack.c.l.b16 %v333
        %v385 = vunpack.c.l.b16 %v334
        %v386 = vunpack.c.l.b16 %v335
        %v387 = vunpack.c.l.b16 %v336
        %v388 = vunpack.c.l.b16 %v337
        %v389 = vpack.c.b16 %v373, %v372
        %v390 = vpack.c.b16 %v375, %v374
        %v391 = vpack.c.b16 %v377, %v376
        %v392 = vpack.c.b16 %v379, %v378
        %v393 = vpack.c.b16 %v381, %v380
        %v394 = vpack.c.b16 %v383, %v382
        %v395 = vpack.c.b16 %v385, %v384
        %v396 = vpack.c.b16 %v387, %v386
        %v397 = vpack.c.b16 %v388, %v388
        %v423 = vunpack.c.l.b16 %v338
        %v424 = vunpack.c.l.b16 %v339
        %v425 = vunpack.c.l.b16 %v340
        %v426 = vunpack.c.l.b16 %v341
        %v427 = vunpack.c.l.b16 %v342
        %v428 = vunpack.c.l.b16 %v343
        %v429 = vunpack.c.l.b16 %v344
        %v430 = vunpack.c.l.b16 %v345
        %v431 = vunpack.c.l.b16 %v346
        %v432 = vunpack.c.l.b16 %v347
        %v433 = vunpack.c.l.b16 %v348
        %v434 = vunpack.c.l.b16 %v349
        %v435 = vunpack.c.l.b16 %v350
        %v436 = vunpack.c.l.b16 %v351
        %v437 = vunpack.c.l.b16 %v352
        %v438 = vunpack.c.l.b16 %v353
        %v439 = vpack.c.b16 %v424, %v423
        %v440 = vpack.c.b16 %v426, %v425
        %v441 = vpack.c.b16 %v428, %v427
        %v442 = vpack.c.b16 %v430, %v429
        %v443 = vpack.c.b16 %v432, %v431
        %v444 = vpack.c.b16 %v434, %v433
        %v445 = vpack.c.b16 %v436, %v435
        %v446 = vpack.c.b16 %v438, %v437
        %455 = vmatprep.subr.bf16.mxu0 0
        %456 = vmatpush1.bf16.msra.mxu0 %v446
        %457 = vmatprep.subr.bf16.mxu0 0
        %458 = vmatpush1.bf16.msra.mxu0 %v445
        %459 = vmatprep.subr.bf16.mxu0 0
        %460 = vmatpush1.bf16.msra.mxu0 %v444
        %461 = vmatprep.subr.bf16.mxu0 0
        %462 = vmatpush1.bf16.msra.mxu0 %v443
        %463 = vmatprep.subr.bf16.mxu0 0
        %464 = vmatpush1.bf16.msra.mxu0 %v442
        %465 = vmatprep.subr.bf16.mxu0 0
        %466 = vmatpush1.bf16.msra.mxu0 %v441
        %467 = vmatprep.subr.bf16.mxu0 0
        %468 = vmatpush1.bf16.msra.mxu0 %v440
        %469 = vmatprep.subr.bf16.mxu0 0
        %470 = vmatpush1.bf16.msra.mxu0 %v439
        %471 = vmatprep.subr.bf16.mxu0 0
        %472 = vmatpush2.bf16.msra.mxu0 0
        %473 = vmatprep.subr.bf16.mxu0 0
        %474 = vmatpush2.bf16.msra.mxu0 0
        %475 = vmatprep.subr.bf16.mxu0 0
        %476 = vmatpush2.bf16.msra.mxu0 0
        %477 = vmatprep.subr.bf16.mxu0 0
        %478 = vmatpush2.bf16.msra.mxu0 0
        %479 = vmatprep.subr.bf16.mxu0 0
        %480 = vmatpush2.bf16.msra.mxu0 0
        %481 = vmatprep.subr.bf16.mxu0 0
        %482 = vmatpush2.bf16.msra.mxu0 0
        %483 = vmatprep.subr.bf16.mxu0 0
        %484 = vmatpush2.bf16.msra.mxu0 0
        %485 = vmatprep.subr.bf16.mxu0 0
        %486 = vmatpush2.bf16.msra.mxu0 0
        %487 = vmatprep.mubr.bf16.mxu0 0
        %488 = vmatmul.mubr.bf16.gmra.mxu0 %v389
        %v489 = vpop.f32.mrf.mxu0
        %v490 = vadd.f32 %v354, %v489
        %v491 = vpop.f32.mrf.mxu0
        %v492 = vpop.f32.mrf.mxu0
        %v493 = vadd.f32 %v354, %v492
        %v494 = vpop.f32.mrf.mxu0
        %495 = vmatprep.mubr.bf16.mxu0 0
        %496 = vmatmul.mubr.bf16.gmra.mxu0 %v390
        %v497 = vpop.f32.mrf.mxu0
        %v498 = vadd.f32 %v354, %v497
        %v499 = vpop.f32.mrf.mxu0
        %v500 = vpop.f32.mrf.mxu0
        %v501 = vadd.f32 %v354, %v500
        %v502 = vpop.f32.mrf.mxu0
        %503 = vmatprep.mubr.bf16.mxu0 0
        %504 = vmatmul.mubr.bf16.gmra.mxu0 %v391
        %v505 = vpop.f32.mrf.mxu0
        %v506 = vadd.f32 %v354, %v505
        %v507 = vpop.f32.mrf.mxu0
        %v508 = vpop.f32.mrf.mxu0
        %v509 = vadd.f32 %v354, %v508
        %v510 = vpop.f32.mrf.mxu0
        %511 = vmatprep.mubr.bf16.mxu0 0
        %512 = vmatmul.mubr.bf16.gmra.mxu0 %v392
        %v513 = vpop.f32.mrf.mxu0
        %v514 = vadd.f32 %v354, %v513
        %v515 = vpop.f32.mrf.mxu0
        %v516 = vpop.f32.mrf.mxu0
        %v517 = vadd.f32 %v354, %v516
        %v518 = vpop.f32.mrf.mxu0
        %519 = vmatprep.mubr.bf16.mxu0 0
        %520 = vmatmul.mubr.bf16.gmra.mxu0 %v393
        %v521 = vpop.f32.mrf.mxu0
        %v522 = vadd.f32 %v354, %v521
        %v523 = vpop.f32.mrf.mxu0
        %v524 = vpop.f32.mrf.mxu0
        %v525 = vadd.f32 %v354, %v524
        %v526 = vpop.f32.mrf.mxu0
        %527 = vmatprep.mubr.bf16.mxu0 0
        %528 = vmatmul.mubr.bf16.gmra.mxu0 %v394
        %v529 = vpop.f32.mrf.mxu0
        %v530 = vadd.f32 %v354, %v529
        %v531 = vpop.f32.mrf.mxu0
        %v532 = vpop.f32.mrf.mxu0
        %v533 = vadd.f32 %v354, %v532
        %v534 = vpop.f32.mrf.mxu0
        %535 = vmatprep.mubr.bf16.mxu0 0
        %536 = vmatmul.mubr.bf16.gmra.mxu0 %v395
        %v537 = vpop.f32.mrf.mxu0
        %v538 = vadd.f32 %v354, %v537
        %v539 = vpop.f32.mrf.mxu0
        %v540 = vpop.f32.mrf.mxu0
        %v541 = vadd.f32 %v354, %v540
        %v542 = vpop.f32.mrf.mxu0
        %543 = vmatprep.mubr.bf16.mxu0 0
        %544 = vmatmul.mubr.bf16.gmra.mxu0 %v396
        %v545 = vpop.f32.mrf.mxu0
        %v546 = vadd.f32 %v354, %v545
        %v547 = vpop.f32.mrf.mxu0
        %v548 = vpop.f32.mrf.mxu0
        %v549 = vadd.f32 %v354, %v548
        %v550 = vpop.f32.mrf.mxu0
        %551 = vmatprep.mubr.bf16.mxu0 0
        %552 = vmatmul.mubr.bf16.gmra.mxu0 %v397
        %v553 = vpop.f32.mrf.mxu0
        %v554 = vadd.f32 %v354, %v553
        %v555 = vpop.f32.mrf.mxu0
        %v556 = vpop.f32.mrf.mxu0
        %v557 = vpop.f32.mrf.mxu0
        %558 = vdwg.mxu0
        %vm559 = vcmp.gt.f32.partialorder %v490, 0.0
        %vm560 = vcmp.gt.f32.partialorder %v493, 0.0
        %vm561 = vcmp.gt.f32.partialorder %v498, 0.0
        %vm562 = vcmp.gt.f32.partialorder %v501, 0.0
        %vm563 = vcmp.gt.f32.partialorder %v506, 0.0
        %vm564 = vcmp.gt.f32.partialorder %v509, 0.0
        %vm565 = vcmp.gt.f32.partialorder %v514, 0.0
        %vm566 = vcmp.gt.f32.partialorder %v517, 0.0
        %vm567 = vcmp.gt.f32.partialorder %v522, 0.0
        %vm568 = vcmp.gt.f32.partialorder %v525, 0.0
        %vm569 = vcmp.gt.f32.partialorder %v530, 0.0
        %vm570 = vcmp.gt.f32.partialorder %v533, 0.0
        %vm571 = vcmp.gt.f32.partialorder %v538, 0.0
        %vm572 = vcmp.gt.f32.partialorder %v541, 0.0
        %vm573 = vcmp.gt.f32.partialorder %v546, 0.0
        %vm574 = vcmp.gt.f32.partialorder %v549, 0.0
        %vm575 = vcmp.gt.f32.partialorder %v554, 0.0
        %v576 = vmul.f32 %v490, 0.01
        %v577 = vmul.f32 %v493, 0.01
        %v578 = vmul.f32 %v498, 0.01
        %v579 = vmul.f32 %v501, 0.01
        %v580 = vmul.f32 %v506, 0.01
        %v581 = vmul.f32 %v509, 0.01
        %v582 = vmul.f32 %v514, 0.01
        %v583 = vmul.f32 %v517, 0.01
        %v584 = vmul.f32 %v522, 0.01
        %v585 = vmul.f32 %v525, 0.01
        %v586 = vmul.f32 %v530, 0.01
        %v587 = vmul.f32 %v533, 0.01
        %v588 = vmul.f32 %v538, 0.01
        %v589 = vmul.f32 %v541, 0.01
        %v590 = vmul.f32 %v546, 0.01
        %v591 = vmul.f32 %v549, 0.01
        %v592 = vmul.f32 %v554, 0.01
        %v593 = vsel %vm559, %v490, %v576
        %v594 = vsel %vm560, %v493, %v577
        %v595 = vsel %vm561, %v498, %v578
        %v596 = vsel %vm562, %v501, %v579
        %v597 = vsel %vm563, %v506, %v580
        %v598 = vsel %vm564, %v509, %v581
        %v599 = vsel %vm565, %v514, %v582
        %v600 = vsel %vm566, %v517, %v583
        %v601 = vsel %vm567, %v522, %v584
        %v602 = vsel %vm568, %v525, %v585
        %v603 = vsel %vm569, %v530, %v586
        %v604 = vsel %vm570, %v533, %v587
        %v605 = vsel %vm571, %v538, %v588
        %v606 = vsel %vm572, %v541, %v589
        %v607 = vsel %vm573, %v546, %v590
        %v608 = vsel %vm574, %v549, %v591
        %v609 = vsel %vm575, %v554, %v592
        %v610 = vpack.c.bf16 %v594, %v593
        %v611 = vpack.c.bf16 %v596, %v595
        %v612 = vpack.c.bf16 %v598, %v597
        %v613 = vpack.c.bf16 %v600, %v599
        %v614 = vpack.c.bf16 %v602, %v601
        %v615 = vpack.c.bf16 %v604, %v603
        %v616 = vpack.c.bf16 %v606, %v605
        %v617 = vpack.c.bf16 %v608, %v607
        %v618 = vpack.c.bf16 %v609, %v609
        %v619 = vld [vmem:[%s1 + $0x40] sm:$0xf]
        %v620 = vld [vmem:[%s1 + $0x44] sm:$0xf]
        %v621 = vld [vmem:[%s1 + $0x48] sm:$0xf]
        %v622 = vld [vmem:[%s1 + $0x4c] sm:$0xf]
        %v623 = vld [vmem:[%s1 + $0x50] sm:$0xf]
        %v624 = vld [vmem:[%s1 + $0x54] sm:$0xf]
        %v625 = vld [vmem:[%s1 + $0x58] sm:$0xf]
        %v626 = vld [vmem:[%s1 + $0x5c] sm:$0xf]
        %v627 = vld [vmem:[%s1 + $0x60] sm:$0xf]
        %v628 = vld [vmem:[%s1 + $0x64] sm:$0xf]
        %v629 = vld [vmem:[%s1 + $0x68] sm:$0xf]
        %v630 = vld [vmem:[%s1 + $0x6c] sm:$0xf]
        %v631 = vld [vmem:[%s1 + $0x70] sm:$0xf]
        %v632 = vld [vmem:[%s1 + $0x74] sm:$0xf]
        %v633 = vld [vmem:[%s1 + $0x78] sm:$0xf]
        %v634 = vld [vmem:[%s1 + $0x7c] sm:$0xf]
        %vm635 = vsmask.f32 7424
        %v637 = vshrl.u32 %v610, 16
        %v639 = vshll.u32 %v610, 16
        %v641 = vrot.slane %v639, 1
        %v642 = vor.u32 %v637, %v641
        %v644 = vshll.u32 %v611, 16
        %v646 = vrot.slane %v644, 1
        %v647 = vsel %vm635, %v642, %v646
        %v648 = vshrl.u32 %v611, 16
        %v650 = vor.u32 %v648, %v646
        %v652 = vshll.u32 %v612, 16
        %v654 = vrot.slane %v652, 1
        %v655 = vsel %vm635, %v650, %v654
        %v656 = vshrl.u32 %v612, 16
        %v658 = vor.u32 %v656, %v654
        %v660 = vshll.u32 %v613, 16
        %v662 = vrot.slane %v660, 1
        %v663 = vsel %vm635, %v658, %v662
        %v664 = vshrl.u32 %v613, 16
        %v666 = vor.u32 %v664, %v662
        %v668 = vshll.u32 %v614, 16
        %v670 = vrot.slane %v668, 1
        %v671 = vsel %vm635, %v666, %v670
        %v672 = vshrl.u32 %v614, 16
        %v674 = vor.u32 %v672, %v670
        %v676 = vshll.u32 %v615, 16
        %v678 = vrot.slane %v676, 1
        %v679 = vsel %vm635, %v674, %v678
        %v680 = vshrl.u32 %v615, 16
        %v682 = vor.u32 %v680, %v678
        %v684 = vshll.u32 %v616, 16
        %v686 = vrot.slane %v684, 1
        %v687 = vsel %vm635, %v682, %v686
        %v688 = vshrl.u32 %v616, 16
        %v690 = vor.u32 %v688, %v686
        %v692 = vshll.u32 %v617, 16
        %v694 = vrot.slane %v692, 1
        %v695 = vsel %vm635, %v690, %v694
        %v696 = vshrl.u32 %v617, 16
        %v698 = vor.u32 %v696, %v694
        %v700 = vshll.u32 %v618, 16
        %v702 = vrot.slane %v700, 1
        %v703 = vsel %vm635, %v698, %v702
        %v712 = vunpack.c.l.b16 %v627
        %v713 = vunpack.c.l.b16 %v628
        %v714 = vunpack.c.l.b16 %v629
        %v715 = vunpack.c.l.b16 %v630
        %v716 = vunpack.c.l.b16 %v631
        %v717 = vunpack.c.l.b16 %v632
        %v718 = vunpack.c.l.b16 %v633
        %v719 = vunpack.c.l.b16 %v634
        %v720 = vpack.c.b16 %v713, %v712
        %v721 = vpack.c.b16 %v715, %v714
        %v722 = vpack.c.b16 %v717, %v716
        %v723 = vpack.c.b16 %v719, %v718
        %vm728 = vcmask 523264
        %v730 = vsel %vm728, %v647, 0
        %v733 = vsel %vm728, %v655, 0
        %v736 = vsel %vm728, %v663, 0
        %v739 = vsel %vm728, %v671, 0
        %v742 = vsel %vm728, %v679, 0
        %v745 = vsel %vm728, %v687, 0
        %v748 = vsel %vm728, %v695, 0
        %v751 = vsel %vm728, %v703, 0
        %753 = vmatprep.subr.bf16.mxu0 0
        %754 = vmatpush1.bf16.msra.mxu0 0
        %755 = vmatprep.subr.bf16.mxu0 0
        %756 = vmatpush1.bf16.msra.mxu0 0
        %757 = vmatprep.subr.bf16.mxu0 0
        %758 = vmatpush1.bf16.msra.mxu0 0
        %759 = vmatprep.subr.bf16.mxu0 0
        %760 = vmatpush1.bf16.msra.mxu0 0
        %761 = vmatprep.subr.bf16.mxu0 0
        %762 = vmatpush1.bf16.msra.mxu0 %v723
        %763 = vmatprep.subr.bf16.mxu0 0
        %764 = vmatpush1.bf16.msra.mxu0 %v722
        %765 = vmatprep.subr.bf16.mxu0 0
        %766 = vmatpush1.bf16.msra.mxu0 %v721
        %767 = vmatprep.subr.bf16.mxu0 0
        %768 = vmatpush1.bf16.msra.mxu0 %v720
        %769 = vmatprep.subr.bf16.mxu0 0
        %770 = vmatpush2.bf16.msra.mxu0 0
        %771 = vmatprep.subr.bf16.mxu0 0
        %772 = vmatpush2.bf16.msra.mxu0 0
        %773 = vmatprep.subr.bf16.mxu0 0
        %774 = vmatpush2.bf16.msra.mxu0 0
        %775 = vmatprep.subr.bf16.mxu0 0
        %776 = vmatpush2.bf16.msra.mxu0 0
        %777 = vmatprep.subr.bf16.mxu0 0
        %778 = vmatpush2.bf16.msra.mxu0 0
        %779 = vmatprep.subr.bf16.mxu0 0
        %780 = vmatpush2.bf16.msra.mxu0 0
        %781 = vmatprep.subr.bf16.mxu0 0
        %782 = vmatpush2.bf16.msra.mxu0 0
        %783 = vmatprep.subr.bf16.mxu0 0
        %784 = vmatpush2.bf16.msra.mxu0 0
        %785 = vmatprep.mubr.bf16.mxu0 0
        %786 = vmatmul.mubr.bf16.gmra.mxu0 %v730
        %v787 = vpop.f32.mrf.mxu0
        %v788 = vadd.f32 0.0, %v787
        %v789 = vpop.f32.mrf.mxu0
        %v790 = vpop.f32.mrf.mxu0
        %v791 = vadd.f32 0.0, %v790
        %v792 = vpop.f32.mrf.mxu0
        %793 = vmatprep.mubr.bf16.mxu0 0
        %794 = vmatmul.mubr.bf16.gmra.mxu0 %v733
        %v795 = vpop.f32.mrf.mxu0
        %v796 = vadd.f32 0.0, %v795
        %v797 = vpop.f32.mrf.mxu0
        %v798 = vpop.f32.mrf.mxu0
        %v799 = vadd.f32 0.0, %v798
        %v800 = vpop.f32.mrf.mxu0
        %801 = vmatprep.mubr.bf16.mxu0 0
        %802 = vmatmul.mubr.bf16.gmra.mxu0 %v736
        %v803 = vpop.f32.mrf.mxu0
        %v804 = vadd.f32 0.0, %v803
        %v805 = vpop.f32.mrf.mxu0
        %v806 = vpop.f32.mrf.mxu0
        %v807 = vadd.f32 0.0, %v806
        %v808 = vpop.f32.mrf.mxu0
        %809 = vmatprep.mubr.bf16.mxu0 0
        %810 = vmatmul.mubr.bf16.gmra.mxu0 %v739
        %v811 = vpop.f32.mrf.mxu0
        %v812 = vadd.f32 0.0, %v811
        %v813 = vpop.f32.mrf.mxu0
        %v814 = vpop.f32.mrf.mxu0
        %v815 = vadd.f32 0.0, %v814
        %v816 = vpop.f32.mrf.mxu0
        %817 = vmatprep.mubr.bf16.mxu0 0
        %818 = vmatmul.mubr.bf16.gmra.mxu0 %v742
        %v819 = vpop.f32.mrf.mxu0
        %v820 = vadd.f32 0.0, %v819
        %v821 = vpop.f32.mrf.mxu0
        %v822 = vpop.f32.mrf.mxu0
        %v823 = vadd.f32 0.0, %v822
        %v824 = vpop.f32.mrf.mxu0
        %825 = vmatprep.mubr.bf16.mxu0 0
        %826 = vmatmul.mubr.bf16.gmra.mxu0 %v745
        %v827 = vpop.f32.mrf.mxu0
        %v828 = vadd.f32 0.0, %v827
        %v829 = vpop.f32.mrf.mxu0
        %v830 = vpop.f32.mrf.mxu0
        %v831 = vadd.f32 0.0, %v830
        %v832 = vpop.f32.mrf.mxu0
        %833 = vmatprep.mubr.bf16.mxu0 0
        %834 = vmatmul.mubr.bf16.gmra.mxu0 %v748
        %v835 = vpop.f32.mrf.mxu0
        %v836 = vadd.f32 0.0, %v835
        %v837 = vpop.f32.mrf.mxu0
        %v838 = vpop.f32.mrf.mxu0
        %v839 = vadd.f32 0.0, %v838
        %v840 = vpop.f32.mrf.mxu0
        %841 = vmatprep.mubr.bf16.mxu0 0
        %842 = vmatmul.mubr.bf16.gmra.mxu0 %v751
        %v843 = vpop.f32.mrf.mxu0
        %v844 = vadd.f32 0.0, %v843
        %v845 = vpop.f32.mrf.mxu0
        %v846 = vpop.f32.mrf.mxu0
        %v847 = vadd.f32 0.0, %v846
        %v848 = vpop.f32.mrf.mxu0
        %849 = vdwg.mxu0
        %v858 = vunpack.c.l.b16 %v619
        %v859 = vunpack.c.l.b16 %v620
        %v860 = vunpack.c.l.b16 %v621
        %v861 = vunpack.c.l.b16 %v622
        %v862 = vunpack.c.l.b16 %v623
        %v863 = vunpack.c.l.b16 %v624
        %v864 = vunpack.c.l.b16 %v625
        %v865 = vunpack.c.l.b16 %v626
        %v866 = vpack.c.b16 %v859, %v858
        %v867 = vpack.c.b16 %v861, %v860
        %v868 = vpack.c.b16 %v863, %v862
        %v869 = vpack.c.b16 %v865, %v864
        %v874 = vsel %vm728, %v610, 0
        %v876 = vsel %vm728, %v611, 0
        %v878 = vsel %vm728, %v612, 0
        %v880 = vsel %vm728, %v613, 0
        %v882 = vsel %vm728, %v614, 0
        %v884 = vsel %vm728, %v615, 0
        %v886 = vsel %vm728, %v616, 0
        %v888 = vsel %vm728, %v617, 0
        %890 = vmatprep.subr.bf16.mxu0 0
        %891 = vmatpush1.bf16.msra.mxu0 0
        %892 = vmatprep.subr.bf16.mxu0 0
        %893 = vmatpush1.bf16.msra.mxu0 0
        %894 = vmatprep.subr.bf16.mxu0 0
        %895 = vmatpush1.bf16.msra.mxu0 0
        %896 = vmatprep.subr.bf16.mxu0 0
        %897 = vmatpush1.bf16.msra.mxu0 0
        %898 = vmatprep.subr.bf16.mxu0 0
        %899 = vmatpush1.bf16.msra.mxu0 %v869
        %900 = vmatprep.subr.bf16.mxu0 0
        %901 = vmatpush1.bf16.msra.mxu0 %v868
        %902 = vmatprep.subr.bf16.mxu0 0
        %903 = vmatpush1.bf16.msra.mxu0 %v867
        %904 = vmatprep.subr.bf16.mxu0 0
        %905 = vmatpush1.bf16.msra.mxu0 %v866
        %906 = vmatprep.subr.bf16.mxu0 0
        %907 = vmatpush2.bf16.msra.mxu0 0
        %908 = vmatprep.subr.bf16.mxu0 0
        %909 = vmatpush2.bf16.msra.mxu0 0
        %910 = vmatprep.subr.bf16.mxu0 0
        %911 = vmatpush2.bf16.msra.mxu0 0
        %912 = vmatprep.subr.bf16.mxu0 0
        %913 = vmatpush2.bf16.msra.mxu0 0
        %914 = vmatprep.subr.bf16.mxu0 0
        %915 = vmatpush2.bf16.msra.mxu0 0
        %916 = vmatprep.subr.bf16.mxu0 0
        %917 = vmatpush2.bf16.msra.mxu0 0
        %918 = vmatprep.subr.bf16.mxu0 0
        %919 = vmatpush2.bf16.msra.mxu0 0
        %920 = vmatprep.subr.bf16.mxu0 0
        %921 = vmatpush2.bf16.msra.mxu0 0
        %922 = vmatprep.mubr.bf16.mxu0 0
        %923 = vmatmul.mubr.bf16.gmra.mxu0 %v874
        %v924 = vpop.f32.mrf.mxu0
        %v925 = vadd.f32 %v788, %v924
        %v926 = vpop.f32.mrf.mxu0
        %v927 = vpop.f32.mrf.mxu0
        %v928 = vadd.f32 %v791, %v927
        %v929 = vpop.f32.mrf.mxu0
        %930 = vmatprep.mubr.bf16.mxu0 0
        %931 = vmatmul.mubr.bf16.gmra.mxu0 %v876
        %v932 = vpop.f32.mrf.mxu0
        %v933 = vadd.f32 %v796, %v932
        %v934 = vpop.f32.mrf.mxu0
        %v935 = vpop.f32.mrf.mxu0
        %v936 = vadd.f32 %v799, %v935
        %v937 = vpop.f32.mrf.mxu0
        %938 = vmatprep.mubr.bf16.mxu0 0
        %939 = vmatmul.mubr.bf16.gmra.mxu0 %v878
        %v940 = vpop.f32.mrf.mxu0
        %v941 = vadd.f32 %v804, %v940
        %v942 = vpop.f32.mrf.mxu0
        %v943 = vpop.f32.mrf.mxu0
        %v944 = vadd.f32 %v807, %v943
        %v945 = vpop.f32.mrf.mxu0
        %946 = vmatprep.mubr.bf16.mxu0 0
        %947 = vmatmul.mubr.bf16.gmra.mxu0 %v880
        %v948 = vpop.f32.mrf.mxu0
        %v949 = vadd.f32 %v812, %v948
        %v950 = vpop.f32.mrf.mxu0
        %v951 = vpop.f32.mrf.mxu0
        %v952 = vadd.f32 %v815, %v951
        %v953 = vpop.f32.mrf.mxu0
        %954 = vmatprep.mubr.bf16.mxu0 0
        %955 = vmatmul.mubr.bf16.gmra.mxu0 %v882
        %v956 = vpop.f32.mrf.mxu0
        %v957 = vadd.f32 %v820, %v956
        %v958 = vpop.f32.mrf.mxu0
        %v959 = vpop.f32.mrf.mxu0
        %v960 = vadd.f32 %v823, %v959
        %v961 = vpop.f32.mrf.mxu0
        %962 = vmatprep.mubr.bf16.mxu0 0
        %963 = vmatmul.mubr.bf16.gmra.mxu0 %v884
        %v964 = vpop.f32.mrf.mxu0
        %v965 = vadd.f32 %v828, %v964
        %v966 = vpop.f32.mrf.mxu0
        %v967 = vpop.f32.mrf.mxu0
        %v968 = vadd.f32 %v831, %v967
        %v969 = vpop.f32.mrf.mxu0
        %970 = vmatprep.mubr.bf16.mxu0 0
        %971 = vmatmul.mubr.bf16.gmra.mxu0 %v886
        %v972 = vpop.f32.mrf.mxu0
        %v973 = vadd.f32 %v836, %v972
        %v974 = vpop.f32.mrf.mxu0
        %v975 = vpop.f32.mrf.mxu0
        %v976 = vadd.f32 %v839, %v975
        %v977 = vpop.f32.mrf.mxu0
        %978 = vmatprep.mubr.bf16.mxu0 0
        %979 = vmatmul.mubr.bf16.gmra.mxu0 %v888
        %v980 = vpop.f32.mrf.mxu0
        %v981 = vadd.f32 %v844, %v980
        %v982 = vpop.f32.mrf.mxu0
        %v983 = vpop.f32.mrf.mxu0
        %v984 = vadd.f32 %v847, %v983
        %v985 = vpop.f32.mrf.mxu0
        %986 = vdwg.mxu0
        %v987 = vld [vmem:[%s1 + $0x80] sm:$0xf]
        %v988 = vld [vmem:[%s1 + $0x84] sm:$0xf]
        %v989 = vld [vmem:[%s1 + $0x88] sm:$0xf]
        %v990 = vld [vmem:[%s1 + $0x8c] sm:$0xf]
        %v991 = vld [vmem:[%s1 + $0x90] sm:$0xf]
        %v992 = vld [vmem:[%s1 + $0x94] sm:$0xf]
        %v993 = vld [vmem:[%s1 + $0x98] sm:$0xf]
        %v994 = vld [vmem:[%s1 + $0x9c] sm:$0xf]
        %vm1004 = vcmask 1046528
        %v1005 = vrot.slane %v610, 1
        %v1006 = vrot.slane %v611, 1
        %v1007 = vsel %vm1004, %v1005, %v1006
        %v1008 = vrot.slane %v612, 1
        %v1009 = vsel %vm1004, %v1006, %v1008
        %v1010 = vrot.slane %v613, 1
        %v1011 = vsel %vm1004, %v1008, %v1010
        %v1012 = vrot.slane %v614, 1
        %v1013 = vsel %vm1004, %v1010, %v1012
        %v1014 = vrot.slane %v615, 1
        %v1015 = vsel %vm1004, %v1012, %v1014
        %v1016 = vrot.slane %v616, 1
        %v1017 = vsel %vm1004, %v1014, %v1016
        %v1018 = vrot.slane %v617, 1
        %v1019 = vsel %vm1004, %v1016, %v1018
        %v1020 = vrot.slane %v618, 1
        %v1021 = vsel %vm1004, %v1018, %v1020
        %v1030 = vunpack.c.l.b16 %v987
        %v1031 = vunpack.c.l.b16 %v988
        %v1032 = vunpack.c.l.b16 %v989
        %v1033 = vunpack.c.l.b16 %v990
        %v1034 = vunpack.c.l.b16 %v991
        %v1035 = vunpack.c.l.b16 %v992
        %v1036 = vunpack.c.l.b16 %v993
        %v1037 = vunpack.c.l.b16 %v994
        %v1038 = vpack.c.b16 %v1031, %v1030
        %v1039 = vpack.c.b16 %v1033, %v1032
        %v1040 = vpack.c.b16 %v1035, %v1034
        %v1041 = vpack.c.b16 %v1037, %v1036
        %v1047 = vsel %vm728, %v1007, 0
        %v1050 = vsel %vm728, %v1009, 0
        %v1053 = vsel %vm728, %v1011, 0
        %v1056 = vsel %vm728, %v1013, 0
        %v1059 = vsel %vm728, %v1015, 0
        %v1062 = vsel %vm728, %v1017, 0
        %v1065 = vsel %vm728, %v1019, 0
        %v1068 = vsel %vm728, %v1021, 0
        %1070 = vmatprep.subr.bf16.mxu0 0
        %1071 = vmatpush1.bf16.msra.mxu0 0
        %1072 = vmatprep.subr.bf16.mxu0 0
        %1073 = vmatpush1.bf16.msra.mxu0 0
        %1074 = vmatprep.subr.bf16.mxu0 0
        %1075 = vmatpush1.bf16.msra.mxu0 0
        %1076 = vmatprep.subr.bf16.mxu0 0
        %1077 = vmatpush1.bf16.msra.mxu0 0
        %1078 = vmatprep.subr.bf16.mxu0 0
        %1079 = vmatpush1.bf16.msra.mxu0 %v1041
        %1080 = vmatprep.subr.bf16.mxu0 0
        %1081 = vmatpush1.bf16.msra.mxu0 %v1040
        %1082 = vmatprep.subr.bf16.mxu0 0
        %1083 = vmatpush1.bf16.msra.mxu0 %v1039
        %1084 = vmatprep.subr.bf16.mxu0 0
        %1085 = vmatpush1.bf16.msra.mxu0 %v1038
        %1086 = vmatprep.subr.bf16.mxu0 0
        %1087 = vmatpush2.bf16.msra.mxu0 0
        %1088 = vmatprep.subr.bf16.mxu0 0
        %1089 = vmatpush2.bf16.msra.mxu0 0
        %1090 = vmatprep.subr.bf16.mxu0 0
        %1091 = vmatpush2.bf16.msra.mxu0 0
        %1092 = vmatprep.subr.bf16.mxu0 0
        %1093 = vmatpush2.bf16.msra.mxu0 0
        %1094 = vmatprep.subr.bf16.mxu0 0
        %1095 = vmatpush2.bf16.msra.mxu0 0
        %1096 = vmatprep.subr.bf16.mxu0 0
        %1097 = vmatpush2.bf16.msra.mxu0 0
        %1098 = vmatprep.subr.bf16.mxu0 0
        %1099 = vmatpush2.bf16.msra.mxu0 0
        %1100 = vmatprep.subr.bf16.mxu0 0
        %1101 = vmatpush2.bf16.msra.mxu0 0
        %1102 = vmatprep.mubr.bf16.mxu0 0
        %1103 = vmatmul.mubr.bf16.gmra.mxu0 %v1047
        %v1104 = vpop.f32.mrf.mxu0
        %v1105 = vadd.f32 0.0, %v1104
        %v1106 = vpop.f32.mrf.mxu0
        %v1107 = vpop.f32.mrf.mxu0
        %v1108 = vadd.f32 0.0, %v1107
        %v1109 = vpop.f32.mrf.mxu0
        %1110 = vmatprep.mubr.bf16.mxu0 0
        %1111 = vmatmul.mubr.bf16.gmra.mxu0 %v1050
        %v1112 = vpop.f32.mrf.mxu0
        %v1113 = vadd.f32 0.0, %v1112
        %v1114 = vpop.f32.mrf.mxu0
        %v1115 = vpop.f32.mrf.mxu0
        %v1116 = vadd.f32 0.0, %v1115
        %v1117 = vpop.f32.mrf.mxu0
        %1118 = vmatprep.mubr.bf16.mxu0 0
        %1119 = vmatmul.mubr.bf16.gmra.mxu0 %v1053
        %v1120 = vpop.f32.mrf.mxu0
        %v1121 = vadd.f32 0.0, %v1120
        %v1122 = vpop.f32.mrf.mxu0
        %v1123 = vpop.f32.mrf.mxu0
        %v1124 = vadd.f32 0.0, %v1123
        %v1125 = vpop.f32.mrf.mxu0
        %1126 = vmatprep.mubr.bf16.mxu0 0
        %1127 = vmatmul.mubr.bf16.gmra.mxu0 %v1056
        %v1128 = vpop.f32.mrf.mxu0
        %v1129 = vadd.f32 0.0, %v1128
        %v1130 = vpop.f32.mrf.mxu0
        %v1131 = vpop.f32.mrf.mxu0
        %v1132 = vadd.f32 0.0, %v1131
        %v1133 = vpop.f32.mrf.mxu0
        %1134 = vmatprep.mubr.bf16.mxu0 0
        %1135 = vmatmul.mubr.bf16.gmra.mxu0 %v1059
        %v1136 = vpop.f32.mrf.mxu0
        %v1137 = vadd.f32 0.0, %v1136
        %v1138 = vpop.f32.mrf.mxu0
        %v1139 = vpop.f32.mrf.mxu0
        %v1140 = vadd.f32 0.0, %v1139
        %v1141 = vpop.f32.mrf.mxu0
        %1142 = vmatprep.mubr.bf16.mxu0 0
        %1143 = vmatmul.mubr.bf16.gmra.mxu0 %v1062
        %v1144 = vpop.f32.mrf.mxu0
        %v1145 = vadd.f32 0.0, %v1144
        %v1146 = vpop.f32.mrf.mxu0
        %v1147 = vpop.f32.mrf.mxu0
        %v1148 = vadd.f32 0.0, %v1147
        %v1149 = vpop.f32.mrf.mxu0
        %1150 = vmatprep.mubr.bf16.mxu0 0
        %1151 = vmatmul.mubr.bf16.gmra.mxu0 %v1065
        %v1152 = vpop.f32.mrf.mxu0
        %v1153 = vadd.f32 0.0, %v1152
        %v1154 = vpop.f32.mrf.mxu0
        %v1155 = vpop.f32.mrf.mxu0
        %v1156 = vadd.f32 0.0, %v1155
        %v1157 = vpop.f32.mrf.mxu0
        %1158 = vmatprep.mubr.bf16.mxu0 0
        %1159 = vmatmul.mubr.bf16.gmra.mxu0 %v1068
        %v1160 = vpop.f32.mrf.mxu0
        %v1161 = vadd.f32 0.0, %v1160
        %v1162 = vpop.f32.mrf.mxu0
        %v1163 = vpop.f32.mrf.mxu0
        %v1164 = vadd.f32 0.0, %v1163
        %v1165 = vpop.f32.mrf.mxu0
        %1166 = vdwg.mxu0
        %v1167 = vadd.f32 %v925, %v1105
        %v1168 = vadd.f32 %v928, %v1108
        %v1169 = vadd.f32 %v933, %v1113
        %v1170 = vadd.f32 %v936, %v1116
        %v1171 = vadd.f32 %v941, %v1121
        %v1172 = vadd.f32 %v944, %v1124
        %v1173 = vadd.f32 %v949, %v1129
        %v1174 = vadd.f32 %v952, %v1132
        %v1175 = vadd.f32 %v957, %v1137
        %v1176 = vadd.f32 %v960, %v1140
        %v1177 = vadd.f32 %v965, %v1145
        %v1178 = vadd.f32 %v968, %v1148
        %v1179 = vadd.f32 %v973, %v1153
        %v1180 = vadd.f32 %v976, %v1156
        %v1181 = vadd.f32 %v981, %v1161
        %v1182 = vadd.f32 %v984, %v1164
        %v1183 = vld [vmem:[%s1 + $0xa0] sm:$0xf]
        %v1184 = vld [vmem:[%s1 + $0xa4] sm:$0xf]
        %v1185 = vld [vmem:[%s1 + $0xa8] sm:$0xf]
        %v1186 = vld [vmem:[%s1 + $0xac] sm:$0xf]
        %v1187 = vld [vmem:[%s1 + $0xb0] sm:$0xf]
        %v1188 = vld [vmem:[%s1 + $0xb4] sm:$0xf]
        %v1189 = vld [vmem:[%s1 + $0xb8] sm:$0xf]
        %v1190 = vld [vmem:[%s1 + $0xbc] sm:$0xf]
        %vm1191 = vsmask.f32 6400
        %v1192 = vrot.slane %v637, 1
        %v1193 = vrot.slane %v639, 2
        %v1194 = vor.u32 %v1192, %v1193
        %v1195 = vrot.slane %v648, 1
        %v1196 = vrot.slane %v644, 2
        %v1197 = vor.u32 %v1195, %v1196
        %v1198 = vsel %vm1191, %v1194, %v1197
        %v1199 = vrot.slane %v656, 1
        %v1200 = vrot.slane %v652, 2
        %v1201 = vor.u32 %v1199, %v1200
        %v1202 = vsel %vm1191, %v1197, %v1201
        %v1203 = vrot.slane %v664, 1
        %v1204 = vrot.slane %v660, 2
        %v1205 = vor.u32 %v1203, %v1204
        %v1206 = vsel %vm1191, %v1201, %v1205
        %v1207 = vrot.slane %v672, 1
        %v1208 = vrot.slane %v668, 2
        %v1209 = vor.u32 %v1207, %v1208
        %v1210 = vsel %vm1191, %v1205, %v1209
        %v1211 = vrot.slane %v680, 1
        %v1212 = vrot.slane %v676, 2
        %v1213 = vor.u32 %v1211, %v1212
        %v1214 = vsel %vm1191, %v1209, %v1213
        %v1215 = vrot.slane %v688, 1
        %v1216 = vrot.slane %v684, 2
        %v1217 = vor.u32 %v1215, %v1216
        %v1218 = vsel %vm1191, %v1213, %v1217
        %v1219 = vrot.slane %v696, 1
        %v1220 = vrot.slane %v692, 2
        %v1221 = vor.u32 %v1219, %v1220
        %v1222 = vsel %vm1191, %v1217, %v1221
        %v1223 = vshrl.u32 %v618, 16
        %v1225 = vrot.slane %v1223, 1
        %v1226 = vrot.slane %v700, 2
        %v1227 = vor.u32 %v1225, %v1226
        %v1228 = vsel %vm1191, %v1221, %v1227
        %v1237 = vunpack.c.l.b16 %v1183
        %v1238 = vunpack.c.l.b16 %v1184
        %v1239 = vunpack.c.l.b16 %v1185
        %v1240 = vunpack.c.l.b16 %v1186
        %v1241 = vunpack.c.l.b16 %v1187
        %v1242 = vunpack.c.l.b16 %v1188
        %v1243 = vunpack.c.l.b16 %v1189
        %v1244 = vunpack.c.l.b16 %v1190
        %v1245 = vpack.c.b16 %v1238, %v1237
        %v1246 = vpack.c.b16 %v1240, %v1239
        %v1247 = vpack.c.b16 %v1242, %v1241
        %v1248 = vpack.c.b16 %v1244, %v1243
        %v1254 = vsel %vm728, %v1198, 0
        %v1257 = vsel %vm728, %v1202, 0
        %v1260 = vsel %vm728, %v1206, 0
        %v1263 = vsel %vm728, %v1210, 0
        %v1266 = vsel %vm728, %v1214, 0
        %v1269 = vsel %vm728, %v1218, 0
        %v1272 = vsel %vm728, %v1222, 0
        %v1275 = vsel %vm728, %v1228, 0
        %1277 = vmatprep.subr.bf16.mxu0 0
        %1278 = vmatpush1.bf16.msra.mxu0 0
        %1279 = vmatprep.subr.bf16.mxu0 0
        %1280 = vmatpush1.bf16.msra.mxu0 0
        %1281 = vmatprep.subr.bf16.mxu0 0
        %1282 = vmatpush1.bf16.msra.mxu0 0
        %1283 = vmatprep.subr.bf16.mxu0 0
        %1284 = vmatpush1.bf16.msra.mxu0 0
        %1285 = vmatprep.subr.bf16.mxu0 0
        %1286 = vmatpush1.bf16.msra.mxu0 %v1248
        %1287 = vmatprep.subr.bf16.mxu0 0
        %1288 = vmatpush1.bf16.msra.mxu0 %v1247
        %1289 = vmatprep.subr.bf16.mxu0 0
        %1290 = vmatpush1.bf16.msra.mxu0 %v1246
        %1291 = vmatprep.subr.bf16.mxu0 0
        %1292 = vmatpush1.bf16.msra.mxu0 %v1245
        %1293 = vmatprep.subr.bf16.mxu0 0
        %1294 = vmatpush2.bf16.msra.mxu0 0
        %1295 = vmatprep.subr.bf16.mxu0 0
        %1296 = vmatpush2.bf16.msra.mxu0 0
        %1297 = vmatprep.subr.bf16.mxu0 0
        %1298 = vmatpush2.bf16.msra.mxu0 0
        %1299 = vmatprep.subr.bf16.mxu0 0
        %1300 = vmatpush2.bf16.msra.mxu0 0
        %1301 = vmatprep.subr.bf16.mxu0 0
        %1302 = vmatpush2.bf16.msra.mxu0 0
        %1303 = vmatprep.subr.bf16.mxu0 0
        %1304 = vmatpush2.bf16.msra.mxu0 0
        %1305 = vmatprep.subr.bf16.mxu0 0
        %1306 = vmatpush2.bf16.msra.mxu0 0
        %1307 = vmatprep.subr.bf16.mxu0 0
        %1308 = vmatpush2.bf16.msra.mxu0 0
        %1309 = vmatprep.mubr.bf16.mxu0 0
        %1310 = vmatmul.mubr.bf16.gmra.mxu0 %v1254
        %v1311 = vpop.f32.mrf.mxu0
        %v1312 = vadd.f32 0.0, %v1311
        %v1313 = vpop.f32.mrf.mxu0
        %v1314 = vpop.f32.mrf.mxu0
        %v1315 = vadd.f32 0.0, %v1314
        %v1316 = vpop.f32.mrf.mxu0
        %1317 = vmatprep.mubr.bf16.mxu0 0
        %1318 = vmatmul.mubr.bf16.gmra.mxu0 %v1257
        %v1319 = vpop.f32.mrf.mxu0
        %v1320 = vadd.f32 0.0, %v1319
        %v1321 = vpop.f32.mrf.mxu0
        %v1322 = vpop.f32.mrf.mxu0
        %v1323 = vadd.f32 0.0, %v1322
        %v1324 = vpop.f32.mrf.mxu0
        %1325 = vmatprep.mubr.bf16.mxu0 0
        %1326 = vmatmul.mubr.bf16.gmra.mxu0 %v1260
        %v1327 = vpop.f32.mrf.mxu0
        %v1328 = vadd.f32 0.0, %v1327
        %v1329 = vpop.f32.mrf.mxu0
        %v1330 = vpop.f32.mrf.mxu0
        %v1331 = vadd.f32 0.0, %v1330
        %v1332 = vpop.f32.mrf.mxu0
        %1333 = vmatprep.mubr.bf16.mxu0 0
        %1334 = vmatmul.mubr.bf16.gmra.mxu0 %v1263
        %v1335 = vpop.f32.mrf.mxu0
        %v1336 = vadd.f32 0.0, %v1335
        %v1337 = vpop.f32.mrf.mxu0
        %v1338 = vpop.f32.mrf.mxu0
        %v1339 = vadd.f32 0.0, %v1338
        %v1340 = vpop.f32.mrf.mxu0
        %1341 = vmatprep.mubr.bf16.mxu0 0
        %1342 = vmatmul.mubr.bf16.gmra.mxu0 %v1266
        %v1343 = vpop.f32.mrf.mxu0
        %v1344 = vadd.f32 0.0, %v1343
        %v1345 = vpop.f32.mrf.mxu0
        %v1346 = vpop.f32.mrf.mxu0
        %v1347 = vadd.f32 0.0, %v1346
        %v1348 = vpop.f32.mrf.mxu0
        %1349 = vmatprep.mubr.bf16.mxu0 0
        %1350 = vmatmul.mubr.bf16.gmra.mxu0 %v1269
        %v1351 = vpop.f32.mrf.mxu0
        %v1352 = vadd.f32 0.0, %v1351
        %v1353 = vpop.f32.mrf.mxu0
        %v1354 = vpop.f32.mrf.mxu0
        %v1355 = vadd.f32 0.0, %v1354
        %v1356 = vpop.f32.mrf.mxu0
        %1357 = vmatprep.mubr.bf16.mxu0 0
        %1358 = vmatmul.mubr.bf16.gmra.mxu0 %v1272
        %v1359 = vpop.f32.mrf.mxu0
        %v1360 = vadd.f32 0.0, %v1359
        %v1361 = vpop.f32.mrf.mxu0
        %v1362 = vpop.f32.mrf.mxu0
        %v1363 = vadd.f32 0.0, %v1362
        %v1364 = vpop.f32.mrf.mxu0
        %1365 = vmatprep.mubr.bf16.mxu0 0
        %1366 = vmatmul.mubr.bf16.gmra.mxu0 %v1275
        %v1367 = vpop.f32.mrf.mxu0
        %v1368 = vadd.f32 0.0, %v1367
        %v1369 = vpop.f32.mrf.mxu0
        %v1370 = vpop.f32.mrf.mxu0
        %v1371 = vadd.f32 0.0, %v1370
        %v1372 = vpop.f32.mrf.mxu0
        %1373 = vdwg.mxu0
        %v1374 = vadd.f32 %v1167, %v1312
        %v1375 = vadd.f32 %v1168, %v1315
        %v1376 = vadd.f32 %v1169, %v1320
        %v1377 = vadd.f32 %v1170, %v1323
        %v1378 = vadd.f32 %v1171, %v1328
        %v1379 = vadd.f32 %v1172, %v1331
        %v1380 = vadd.f32 %v1173, %v1336
        %v1381 = vadd.f32 %v1174, %v1339
        %v1382 = vadd.f32 %v1175, %v1344
        %v1383 = vadd.f32 %v1176, %v1347
        %v1384 = vadd.f32 %v1177, %v1352
        %v1385 = vadd.f32 %v1178, %v1355
        %v1386 = vadd.f32 %v1179, %v1360
        %v1387 = vadd.f32 %v1180, %v1363
        %v1388 = vadd.f32 %v1181, %v1368
        %v1389 = vadd.f32 %v1182, %v1371
        %v1390 = vld [vmem:[%s1 + $0xc0] sm:$0xf]
        %v1391 = vld [vmem:[%s1 + $0xc4] sm:$0xf]
        %v1392 = vld [vmem:[%s1 + $0xc8] sm:$0xf]
        %v1393 = vld [vmem:[%s1 + $0xcc] sm:$0xf]
        %v1394 = vld [vmem:[%s1 + $0xd0] sm:$0xf]
        %v1395 = vld [vmem:[%s1 + $0xd4] sm:$0xf]
        %v1396 = vld [vmem:[%s1 + $0xd8] sm:$0xf]
        %v1397 = vld [vmem:[%s1 + $0xdc] sm:$0xf]
        %vm1398 = vcmask 1045504
        %v1399 = vrot.slane %v610, 2
        %v1400 = vrot.slane %v611, 2
        %v1401 = vsel %vm1398, %v1399, %v1400
        %v1402 = vrot.slane %v612, 2
        %v1403 = vsel %vm1398, %v1400, %v1402
        %v1404 = vrot.slane %v613, 2
        %v1405 = vsel %vm1398, %v1402, %v1404
        %v1406 = vrot.slane %v614, 2
        %v1407 = vsel %vm1398, %v1404, %v1406
        %v1408 = vrot.slane %v615, 2
        %v1409 = vsel %vm1398, %v1406, %v1408
        %v1410 = vrot.slane %v616, 2
        %v1411 = vsel %vm1398, %v1408, %v1410
        %v1412 = vrot.slane %v617, 2
        %v1413 = vsel %vm1398, %v1410, %v1412
        %v1414 = vrot.slane %v618, 2
        %v1415 = vsel %vm1398, %v1412, %v1414
        %v1424 = vunpack.c.l.b16 %v1390
        %v1425 = vunpack.c.l.b16 %v1391
        %v1426 = vunpack.c.l.b16 %v1392
        %v1427 = vunpack.c.l.b16 %v1393
        %v1428 = vunpack.c.l.b16 %v1394
        %v1429 = vunpack.c.l.b16 %v1395
        %v1430 = vunpack.c.l.b16 %v1396
        %v1431 = vunpack.c.l.b16 %v1397
        %v1432 = vpack.c.b16 %v1425, %v1424
        %v1433 = vpack.c.b16 %v1427, %v1426
        %v1434 = vpack.c.b16 %v1429, %v1428
        %v1435 = vpack.c.b16 %v1431, %v1430
        %v1441 = vsel %vm728, %v1401, 0
        %v1444 = vsel %vm728, %v1403, 0
        %v1447 = vsel %vm728, %v1405, 0
        %v1450 = vsel %vm728, %v1407, 0
        %v1453 = vsel %vm728, %v1409, 0
        %v1456 = vsel %vm728, %v1411, 0
        %v1459 = vsel %vm728, %v1413, 0
        %v1462 = vsel %vm728, %v1415, 0
        %1464 = vmatprep.subr.bf16.mxu0 0
        %1465 = vmatpush1.bf16.msra.mxu0 0
        %1466 = vmatprep.subr.bf16.mxu0 0
        %1467 = vmatpush1.bf16.msra.mxu0 0
        %1468 = vmatprep.subr.bf16.mxu0 0
        %1469 = vmatpush1.bf16.msra.mxu0 0
        %1470 = vmatprep.subr.bf16.mxu0 0
        %1471 = vmatpush1.bf16.msra.mxu0 0
        %1472 = vmatprep.subr.bf16.mxu0 0
        %1473 = vmatpush1.bf16.msra.mxu0 %v1435
        %1474 = vmatprep.subr.bf16.mxu0 0
        %1475 = vmatpush1.bf16.msra.mxu0 %v1434
        %1476 = vmatprep.subr.bf16.mxu0 0
        %1477 = vmatpush1.bf16.msra.mxu0 %v1433
        %1478 = vmatprep.subr.bf16.mxu0 0
        %1479 = vmatpush1.bf16.msra.mxu0 %v1432
        %1480 = vmatprep.subr.bf16.mxu0 0
        %1481 = vmatpush2.bf16.msra.mxu0 0
        %1482 = vmatprep.subr.bf16.mxu0 0
        %1483 = vmatpush2.bf16.msra.mxu0 0
        %1484 = vmatprep.subr.bf16.mxu0 0
        %1485 = vmatpush2.bf16.msra.mxu0 0
        %1486 = vmatprep.subr.bf16.mxu0 0
        %1487 = vmatpush2.bf16.msra.mxu0 0
        %1488 = vmatprep.subr.bf16.mxu0 0
        %1489 = vmatpush2.bf16.msra.mxu0 0
        %1490 = vmatprep.subr.bf16.mxu0 0
        %1491 = vmatpush2.bf16.msra.mxu0 0
        %1492 = vmatprep.subr.bf16.mxu0 0
        %1493 = vmatpush2.bf16.msra.mxu0 0
        %1494 = vmatprep.subr.bf16.mxu0 0
        %1495 = vmatpush2.bf16.msra.mxu0 0
        %1496 = vmatprep.mubr.bf16.mxu0 0
        %1497 = vmatmul.mubr.bf16.gmra.mxu0 %v1441
        %v1498 = vpop.f32.mrf.mxu0
        %v1499 = vadd.f32 0.0, %v1498
        %v1500 = vpop.f32.mrf.mxu0
        %v1501 = vpop.f32.mrf.mxu0
        %v1502 = vadd.f32 0.0, %v1501
        %v1503 = vpop.f32.mrf.mxu0
        %1504 = vmatprep.mubr.bf16.mxu0 0
        %1505 = vmatmul.mubr.bf16.gmra.mxu0 %v1444
        %v1506 = vpop.f32.mrf.mxu0
        %v1507 = vadd.f32 0.0, %v1506
        %v1508 = vpop.f32.mrf.mxu0
        %v1509 = vpop.f32.mrf.mxu0
        %v1510 = vadd.f32 0.0, %v1509
        %v1511 = vpop.f32.mrf.mxu0
        %1512 = vmatprep.mubr.bf16.mxu0 0
        %1513 = vmatmul.mubr.bf16.gmra.mxu0 %v1447
        %v1514 = vpop.f32.mrf.mxu0
        %v1515 = vadd.f32 0.0, %v1514
        %v1516 = vpop.f32.mrf.mxu0
        %v1517 = vpop.f32.mrf.mxu0
        %v1518 = vadd.f32 0.0, %v1517
        %v1519 = vpop.f32.mrf.mxu0
        %1520 = vmatprep.mubr.bf16.mxu0 0
        %1521 = vmatmul.mubr.bf16.gmra.mxu0 %v1450
        %v1522 = vpop.f32.mrf.mxu0
        %v1523 = vadd.f32 0.0, %v1522
        %v1524 = vpop.f32.mrf.mxu0
        %v1525 = vpop.f32.mrf.mxu0
        %v1526 = vadd.f32 0.0, %v1525
        %v1527 = vpop.f32.mrf.mxu0
        %1528 = vmatprep.mubr.bf16.mxu0 0
        %1529 = vmatmul.mubr.bf16.gmra.mxu0 %v1453
        %v1530 = vpop.f32.mrf.mxu0
        %v1531 = vadd.f32 0.0, %v1530
        %v1532 = vpop.f32.mrf.mxu0
        %v1533 = vpop.f32.mrf.mxu0
        %v1534 = vadd.f32 0.0, %v1533
        %v1535 = vpop.f32.mrf.mxu0
        %1536 = vmatprep.mubr.bf16.mxu0 0
        %1537 = vmatmul.mubr.bf16.gmra.mxu0 %v1456
        %v1538 = vpop.f32.mrf.mxu0
        %v1539 = vadd.f32 0.0, %v1538
        %v1540 = vpop.f32.mrf.mxu0
        %v1541 = vpop.f32.mrf.mxu0
        %v1542 = vadd.f32 0.0, %v1541
        %v1543 = vpop.f32.mrf.mxu0
        %1544 = vmatprep.mubr.bf16.mxu0 0
        %1545 = vmatmul.mubr.bf16.gmra.mxu0 %v1459
        %v1546 = vpop.f32.mrf.mxu0
        %v1547 = vadd.f32 0.0, %v1546
        %v1548 = vpop.f32.mrf.mxu0
        %v1549 = vpop.f32.mrf.mxu0
        %v1550 = vadd.f32 0.0, %v1549
        %v1551 = vpop.f32.mrf.mxu0
        %1552 = vmatprep.mubr.bf16.mxu0 0
        %1553 = vmatmul.mubr.bf16.gmra.mxu0 %v1462
        %v1554 = vpop.f32.mrf.mxu0
        %v1555 = vadd.f32 0.0, %v1554
        %v1556 = vpop.f32.mrf.mxu0
        %v1557 = vpop.f32.mrf.mxu0
        %v1558 = vadd.f32 0.0, %v1557
        %v1559 = vpop.f32.mrf.mxu0
        %1560 = vdwg.mxu0
        %v1561 = vadd.f32 %v1374, %v1499
        %v1562 = vadd.f32 %v1375, %v1502
        %v1563 = vadd.f32 %v1376, %v1507
        %v1564 = vadd.f32 %v1377, %v1510
        %v1565 = vadd.f32 %v1378, %v1515
        %v1566 = vadd.f32 %v1379, %v1518
        %v1567 = vadd.f32 %v1380, %v1523
        %v1568 = vadd.f32 %v1381, %v1526
        %v1569 = vadd.f32 %v1382, %v1531
        %v1570 = vadd.f32 %v1383, %v1534
        %v1571 = vadd.f32 %v1384, %v1539
        %v1572 = vadd.f32 %v1385, %v1542
        %v1573 = vadd.f32 %v1386, %v1547
        %v1574 = vadd.f32 %v1387, %v1550
        %v1575 = vadd.f32 %v1388, %v1555
        %v1576 = vadd.f32 %v1389, %v1558
        %v1577 = vld [vmem:[#allocation7 + $0x1] ss:$0 sm:$0xff]
        %v1578 = vadd.f32 %v1561, %v1577
        %v1579 = vadd.f32 %v1562, %v1577
        %v1580 = vadd.f32 %v1563, %v1577
        %v1581 = vadd.f32 %v1564, %v1577
        %v1582 = vadd.f32 %v1565, %v1577
        %v1583 = vadd.f32 %v1566, %v1577
        %v1584 = vadd.f32 %v1567, %v1577
        %v1585 = vadd.f32 %v1568, %v1577
        %v1586 = vadd.f32 %v1569, %v1577
        %v1587 = vadd.f32 %v1570, %v1577
        %v1588 = vadd.f32 %v1571, %v1577
        %v1589 = vadd.f32 %v1572, %v1577
        %v1590 = vadd.f32 %v1573, %v1577
        %v1591 = vadd.f32 %v1574, %v1577
        %v1592 = vadd.f32 %v1575, %v1577
        %v1593 = vadd.f32 %v1576, %v1577
        %vm1594 = vcmp.gt.f32.partialorder %v1578, 0.0
        %vm1595 = vcmp.gt.f32.partialorder %v1579, 0.0
        %vm1596 = vcmp.gt.f32.partialorder %v1580, 0.0
        %vm1597 = vcmp.gt.f32.partialorder %v1581, 0.0
        %vm1598 = vcmp.gt.f32.partialorder %v1582, 0.0
        %vm1599 = vcmp.gt.f32.partialorder %v1583, 0.0
        %vm1600 = vcmp.gt.f32.partialorder %v1584, 0.0
        %vm1601 = vcmp.gt.f32.partialorder %v1585, 0.0
        %vm1602 = vcmp.gt.f32.partialorder %v1586, 0.0
        %vm1603 = vcmp.gt.f32.partialorder %v1587, 0.0
        %vm1604 = vcmp.gt.f32.partialorder %v1588, 0.0
        %vm1605 = vcmp.gt.f32.partialorder %v1589, 0.0
        %vm1606 = vcmp.gt.f32.partialorder %v1590, 0.0
        %vm1607 = vcmp.gt.f32.partialorder %v1591, 0.0
        %vm1608 = vcmp.gt.f32.partialorder %v1592, 0.0
        %vm1609 = vcmp.gt.f32.partialorder %v1593, 0.0
        %v1610 = vmul.f32 %v1578, 0.01
        %v1611 = vmul.f32 %v1579, 0.01
        %v1612 = vmul.f32 %v1580, 0.01
        %v1613 = vmul.f32 %v1581, 0.01
        %v1614 = vmul.f32 %v1582, 0.01
        %v1615 = vmul.f32 %v1583, 0.01
        %v1616 = vmul.f32 %v1584, 0.01
        %v1617 = vmul.f32 %v1585, 0.01
        %v1618 = vmul.f32 %v1586, 0.01
        %v1619 = vmul.f32 %v1587, 0.01
        %v1620 = vmul.f32 %v1588, 0.01
        %v1621 = vmul.f32 %v1589, 0.01
        %v1622 = vmul.f32 %v1590, 0.01
        %v1623 = vmul.f32 %v1591, 0.01
        %v1624 = vmul.f32 %v1592, 0.01
        %v1625 = vmul.f32 %v1593, 0.01
        %v1626 = vsel %vm1594, %v1578, %v1610
        %v1627 = vsel %vm1595, %v1579, %v1611
        %v1628 = vsel %vm1596, %v1580, %v1612
        %v1629 = vsel %vm1597, %v1581, %v1613
        %v1630 = vsel %vm1598, %v1582, %v1614
        %v1631 = vsel %vm1599, %v1583, %v1615
        %v1632 = vsel %vm1600, %v1584, %v1616
        %v1633 = vsel %vm1601, %v1585, %v1617
        %v1634 = vsel %vm1602, %v1586, %v1618
        %v1635 = vsel %vm1603, %v1587, %v1619
        %v1636 = vsel %vm1604, %v1588, %v1620
        %v1637 = vsel %vm1605, %v1589, %v1621
        %v1638 = vsel %vm1606, %v1590, %v1622
        %v1639 = vsel %vm1607, %v1591, %v1623
        %v1640 = vsel %vm1608, %v1592, %v1624
        %v1641 = vsel %vm1609, %v1593, %v1625
        %v1642 = vld [vmem:[%s1 + $0xe0] sm:$0x3]
        %1643 = vrot.lane.b32.xlu0 %v389, 108
        %v1644 = vpop.permute.xlu0 %1643
        %1645 = vrot.lane.b32.xlu0 %v390, 108
        %v1646 = vpop.permute.xlu0 %1645
        %1647 = vrot.lane.b32.xlu0 %v391, 108
        %v1648 = vpop.permute.xlu0 %1647
        %1649 = vrot.lane.b32.xlu0 %v392, 108
        %v1650 = vpop.permute.xlu0 %1649
        %1651 = vrot.lane.b32.xlu0 %v393, 108
        %v1652 = vpop.permute.xlu0 %1651
        %1653 = vrot.lane.b32.xlu0 %v394, 108
        %v1654 = vpop.permute.xlu0 %1653
        %1655 = vrot.lane.b32.xlu0 %v395, 108
        %v1656 = vpop.permute.xlu0 %1655
        %1657 = vrot.lane.b32.xlu0 %v396, 108
        %v1658 = vpop.permute.xlu0 %1657
        %vm1659 = vcmask 31744
        %v1661 = vsel %vm1659, %v1644, 0
        %v1664 = vsel %vm1659, %v1646, 0
        %v1667 = vsel %vm1659, %v1648, 0
        %v1670 = vsel %vm1659, %v1650, 0
        %v1673 = vsel %vm1659, %v1652, 0
        %v1676 = vsel %vm1659, %v1654, 0
        %v1679 = vsel %vm1659, %v1656, 0
        %v1682 = vsel %vm1659, %v1658, 0
        %vm1684 = vcmask 1041408
        %v1686 = vsel %vm1684, %v1642, 0
        %1688 = vmatprep.subr.bf16.mxu0 0
        %1689 = vmatpush1.bf16.msra.mxu0 0
        %1690 = vmatprep.subr.bf16.mxu0 0
        %1691 = vmatpush1.bf16.msra.mxu0 0
        %1692 = vmatprep.subr.bf16.mxu0 0
        %1693 = vmatpush1.bf16.msra.mxu0 0
        %1694 = vmatprep.subr.bf16.mxu0 0
        %1695 = vmatpush1.bf16.msra.mxu0 0
        %1696 = vmatprep.subr.bf16.mxu0 0
        %1697 = vmatpush1.bf16.msra.mxu0 0
        %1698 = vmatprep.subr.bf16.mxu0 0
        %1699 = vmatpush1.bf16.msra.mxu0 0
        %1700 = vmatprep.subr.bf16.mxu0 0
        %1701 = vmatpush1.bf16.msra.mxu0 0
        %1702 = vmatprep.subr.bf16.mxu0 0
        %1703 = vmatpush1.bf16.msra.mxu0 %v1686
        %1704 = vmatprep.subr.bf16.mxu0 0
        %1705 = vmatpush2.bf16.msra.mxu0 0
        %1706 = vmatprep.subr.bf16.mxu0 0
        %1707 = vmatpush2.bf16.msra.mxu0 0
        %1708 = vmatprep.subr.bf16.mxu0 0
        %1709 = vmatpush2.bf16.msra.mxu0 0
        %1710 = vmatprep.subr.bf16.mxu0 0
        %1711 = vmatpush2.bf16.msra.mxu0 0
        %1712 = vmatprep.subr.bf16.mxu0 0
        %1713 = vmatpush2.bf16.msra.mxu0 0
        %1714 = vmatprep.subr.bf16.mxu0 0
        %1715 = vmatpush2.bf16.msra.mxu0 0
        %1716 = vmatprep.subr.bf16.mxu0 0
        %1717 = vmatpush2.bf16.msra.mxu0 0
        %1718 = vmatprep.subr.bf16.mxu0 0
        %1719 = vmatpush2.bf16.msra.mxu0 0
        %1720 = vmatprep.mubr.bf16.mxu0 0
        %1721 = vmatmul.mubr.bf16.gmra.mxu0 %v1661
        %v1722 = vpop.f32.mrf.mxu0
        %v1723 = vadd.f32 0.0, %v1722
        %v1724 = vpop.f32.mrf.mxu0
        %v1725 = vpop.f32.mrf.mxu0
        %v1726 = vadd.f32 0.0, %v1725
        %v1727 = vpop.f32.mrf.mxu0
        %1728 = vmatprep.mubr.bf16.mxu0 0
        %1729 = vmatmul.mubr.bf16.gmra.mxu0 %v1664
        %v1730 = vpop.f32.mrf.mxu0
        %v1731 = vadd.f32 0.0, %v1730
        %v1732 = vpop.f32.mrf.mxu0
        %v1733 = vpop.f32.mrf.mxu0
        %v1734 = vadd.f32 0.0, %v1733
        %v1735 = vpop.f32.mrf.mxu0
        %1736 = vmatprep.mubr.bf16.mxu0 0
        %1737 = vmatmul.mubr.bf16.gmra.mxu0 %v1667
        %v1738 = vpop.f32.mrf.mxu0
        %v1739 = vadd.f32 0.0, %v1738
        %v1740 = vpop.f32.mrf.mxu0
        %v1741 = vpop.f32.mrf.mxu0
        %v1742 = vadd.f32 0.0, %v1741
        %v1743 = vpop.f32.mrf.mxu0
        %1744 = vmatprep.mubr.bf16.mxu0 0
        %1745 = vmatmul.mubr.bf16.gmra.mxu0 %v1670
        %v1746 = vpop.f32.mrf.mxu0
        %v1747 = vadd.f32 0.0, %v1746
        %v1748 = vpop.f32.mrf.mxu0
        %v1749 = vpop.f32.mrf.mxu0
        %v1750 = vadd.f32 0.0, %v1749
        %v1751 = vpop.f32.mrf.mxu0
        %1752 = vmatprep.mubr.bf16.mxu0 0
        %1753 = vmatmul.mubr.bf16.gmra.mxu0 %v1673
        %v1754 = vpop.f32.mrf.mxu0
        %v1755 = vadd.f32 0.0, %v1754
        %v1756 = vpop.f32.mrf.mxu0
        %v1757 = vpop.f32.mrf.mxu0
        %v1758 = vadd.f32 0.0, %v1757
        %v1759 = vpop.f32.mrf.mxu0
        %1760 = vmatprep.mubr.bf16.mxu0 0
        %1761 = vmatmul.mubr.bf16.gmra.mxu0 %v1676
        %v1762 = vpop.f32.mrf.mxu0
        %v1763 = vadd.f32 0.0, %v1762
        %v1764 = vpop.f32.mrf.mxu0
        %v1765 = vpop.f32.mrf.mxu0
        %v1766 = vadd.f32 0.0, %v1765
        %v1767 = vpop.f32.mrf.mxu0
        %1768 = vmatprep.mubr.bf16.mxu0 0
        %1769 = vmatmul.mubr.bf16.gmra.mxu0 %v1679
        %v1770 = vpop.f32.mrf.mxu0
        %v1771 = vadd.f32 0.0, %v1770
        %v1772 = vpop.f32.mrf.mxu0
        %v1773 = vpop.f32.mrf.mxu0
        %v1774 = vadd.f32 0.0, %v1773
        %v1775 = vpop.f32.mrf.mxu0
        %1776 = vmatprep.mubr.bf16.mxu0 0
        %1777 = vmatmul.mubr.bf16.gmra.mxu0 %v1682
        %v1778 = vpop.f32.mrf.mxu0
        %v1779 = vadd.f32 0.0, %v1778
        %v1780 = vpop.f32.mrf.mxu0
        %v1781 = vpop.f32.mrf.mxu0
        %v1782 = vadd.f32 0.0, %v1781
        %v1783 = vpop.f32.mrf.mxu0
        %1784 = vdwg.mxu0
        %v1785 = vadd.f32 %v1626, %v1723
        %v1786 = vadd.f32 %v1627, %v1726
        %v1787 = vadd.f32 %v1628, %v1731
        %v1788 = vadd.f32 %v1629, %v1734
        %v1789 = vadd.f32 %v1630, %v1739
        %v1790 = vadd.f32 %v1631, %v1742
        %v1791 = vadd.f32 %v1632, %v1747
        %v1792 = vadd.f32 %v1633, %v1750
        %v1793 = vadd.f32 %v1634, %v1755
        %v1794 = vadd.f32 %v1635, %v1758
        %v1795 = vadd.f32 %v1636, %v1763
        %v1796 = vadd.f32 %v1637, %v1766
        %v1797 = vadd.f32 %v1638, %v1771
        %v1798 = vadd.f32 %v1639, %v1774
        %v1799 = vadd.f32 %v1640, %v1779
        %v1800 = vadd.f32 %v1641, %v1782
        %v1801 = vld [vmem:[#allocation7 + $0x2] ss:$0 sm:$0xff]
        %v1802 = vadd.f32 %v1785, %v1801
        %v1803 = vadd.f32 %v1786, %v1801
        %v1804 = vadd.f32 %v1787, %v1801
        %v1805 = vadd.f32 %v1788, %v1801
        %v1806 = vadd.f32 %v1789, %v1801
        %v1807 = vadd.f32 %v1790, %v1801
        %v1808 = vadd.f32 %v1791, %v1801
        %v1809 = vadd.f32 %v1792, %v1801
        %v1810 = vadd.f32 %v1793, %v1801
        %v1811 = vadd.f32 %v1794, %v1801
        %v1812 = vadd.f32 %v1795, %v1801
        %v1813 = vadd.f32 %v1796, %v1801
        %v1814 = vadd.f32 %v1797, %v1801
        %v1815 = vadd.f32 %v1798, %v1801
        %v1816 = vadd.f32 %v1799, %v1801
        %v1817 = vadd.f32 %v1800, %v1801
        %vm1834 = vcmask 1046528
        %v1835 = vrot.slane %v1802, 1
        %v1836 = vrot.slane %v1803, 1
        %v1837 = vsel %vm1834, %v1835, %v1836
        %v1838 = vrot.slane %v1804, 1
        %v1839 = vsel %vm1834, %v1836, %v1838
        %v1840 = vrot.slane %v1805, 1
        %v1841 = vsel %vm1834, %v1838, %v1840
        %v1842 = vrot.slane %v1806, 1
        %v1843 = vsel %vm1834, %v1840, %v1842
        %v1844 = vrot.slane %v1807, 1
        %v1845 = vsel %vm1834, %v1842, %v1844
        %v1846 = vrot.slane %v1808, 1
        %v1847 = vsel %vm1834, %v1844, %v1846
        %v1848 = vrot.slane %v1809, 1
        %v1849 = vsel %vm1834, %v1846, %v1848
        %v1850 = vrot.slane %v1810, 1
        %v1851 = vsel %vm1834, %v1848, %v1850
        %v1852 = vrot.slane %v1811, 1
        %v1853 = vsel %vm1834, %v1850, %v1852
        %v1854 = vrot.slane %v1812, 1
        %v1855 = vsel %vm1834, %v1852, %v1854
        %v1856 = vrot.slane %v1813, 1
        %v1857 = vsel %vm1834, %v1854, %v1856
        %v1858 = vrot.slane %v1814, 1
        %v1859 = vsel %vm1834, %v1856, %v1858
        %v1860 = vrot.slane %v1815, 1
        %v1861 = vsel %vm1834, %v1858, %v1860
        %v1862 = vrot.slane %v1816, 1
        %v1863 = vsel %vm1834, %v1860, %v1862
        %v1864 = vrot.slane %v1817, 1
        %v1865 = vsel %vm1834, %v1862, %v1864
        %v1883 = vsel %vm1834, %v1864, %v1835
        %v1884 = vmax.f32 %v1802, %v1837
        %v1885 = vmax.f32 %v1803, %v1839
        %v1886 = vmax.f32 %v1804, %v1841
        %v1887 = vmax.f32 %v1805, %v1843
        %v1888 = vmax.f32 %v1806, %v1845
        %v1889 = vmax.f32 %v1807, %v1847
        %v1890 = vmax.f32 %v1808, %v1849
        %v1891 = vmax.f32 %v1809, %v1851
        %v1892 = vmax.f32 %v1810, %v1853
        %v1893 = vmax.f32 %v1811, %v1855
        %v1894 = vmax.f32 %v1812, %v1857
        %v1895 = vmax.f32 %v1813, %v1859
        %v1896 = vmax.f32 %v1814, %v1861
        %v1897 = vmax.f32 %v1815, %v1863
        %v1898 = vmax.f32 %v1816, %v1865
        %v1899 = vmax.f32 %v1817, %v1883
        %v1900 = vld [vmem:[%s6] sm:$0xff]
        %v1901 = vld [vmem:[%s6 + $0x8] sm:$0xff]
        %v1902 = vld [vmem:[%s6 + $0x10] sm:$0xff]
        %v1903 = vld [vmem:[%s6 + $0x18] sm:$0xff]
        %v1904 = vld [vmem:[%s6 + $0x20] sm:$0xff]
        %v1905 = vld [vmem:[%s6 + $0x28] sm:$0xff]
        %v1906 = vld [vmem:[%s6 + $0x30] sm:$0xff]
        %v1907 = vld [vmem:[%s6 + $0x38] sm:$0xff]
        %1908 = vmatprep.subr.mxu0 0.0
        %1909 = vmatpush1.msra.mxu0 %v1899
        %1910 = vmatprep.subr.mxu0 0.0
        %1911 = vmatpush1.msra.mxu0 %v1898
        %1912 = vmatprep.subr.mxu0 0.0
        %1913 = vmatpush1.msra.mxu0 %v1897
        %1914 = vmatprep.subr.mxu0 0.0
        %1915 = vmatpush1.msra.mxu0 %v1896
        %1916 = vmatprep.subr.mxu0 0.0
        %1917 = vmatpush1.msra.mxu0 %v1895
        %1918 = vmatprep.subr.mxu0 0.0
        %1919 = vmatpush1.msra.mxu0 %v1894
        %1920 = vmatprep.subr.mxu0 0.0
        %1921 = vmatpush1.msra.mxu0 %v1893
        %1922 = vmatprep.subr.mxu0 0.0
        %1923 = vmatpush1.msra.mxu0 %v1892
        %1924 = vmatprep.subr.mxu0 0.0
        %1925 = vmatpush1.msra.mxu0 %v1891
        %1926 = vmatprep.subr.mxu0 0.0
        %1927 = vmatpush1.msra.mxu0 %v1890
        %1928 = vmatprep.subr.mxu0 0.0
        %1929 = vmatpush1.msra.mxu0 %v1889
        %1930 = vmatprep.subr.mxu0 0.0
        %1931 = vmatpush1.msra.mxu0 %v1888
        %1932 = vmatprep.subr.mxu0 0.0
        %1933 = vmatpush1.msra.mxu0 %v1887
        %1934 = vmatprep.subr.mxu0 0.0
        %1935 = vmatpush1.msra.mxu0 %v1886
        %1936 = vmatprep.subr.mxu0 0.0
        %1937 = vmatpush1.msra.mxu0 %v1885
        %1938 = vmatprep.subr.mxu0 0.0
        %1939 = vmatpush1.msra.mxu0 %v1884
        %1940 = vmatprep.subr.mxu0 0.0
        %1941 = vmatpush2.msra.mxu0 0.0
        %1942 = vmatprep.subr.mxu0 0.0
        %1943 = vmatpush2.msra.mxu0 0.0
        %1944 = vmatprep.subr.mxu0 0.0
        %1945 = vmatpush2.msra.mxu0 0.0
        %1946 = vmatprep.subr.mxu0 0.0
        %1947 = vmatpush2.msra.mxu0 0.0
        %1948 = vmatprep.subr.mxu0 0.0
        %1949 = vmatpush2.msra.mxu0 0.0
        %1950 = vmatprep.subr.mxu0 0.0
        %1951 = vmatpush2.msra.mxu0 0.0
        %1952 = vmatprep.subr.mxu0 0.0
        %1953 = vmatpush2.msra.mxu0 0.0
        %1954 = vmatprep.subr.mxu0 0.0
        %1955 = vmatpush2.msra.mxu0 0.0
        %1956 = vmatprep.subr.mxu0 0.0
        %1957 = vmatpush2.msra.mxu0 0.0
        %1958 = vmatprep.subr.mxu0 0.0
        %1959 = vmatpush2.msra.mxu0 0.0
        %1960 = vmatprep.subr.mxu0 0.0
        %1961 = vmatpush2.msra.mxu0 0.0
        %1962 = vmatprep.subr.mxu0 0.0
        %1963 = vmatpush2.msra.mxu0 0.0
        %1964 = vmatprep.subr.mxu0 0.0
        %1965 = vmatpush2.msra.mxu0 0.0
        %1966 = vmatprep.subr.mxu0 0.0
        %1967 = vmatpush2.msra.mxu0 0.0
        %1968 = vmatprep.subr.mxu0 0.0
        %1969 = vmatpush2.msra.mxu0 0.0
        %1970 = vmatprep.subr.mxu0 0.0
        %1971 = vmatpush2.msra.mxu0 0.0
        %1972 = vmatprep.mubr.f32.mxu0 0.0
        %1973 = vmatmul.mubr.f32.gmra.mxu0 %v1900
        %v1974 = vpop.f32.mrf.mxu0
        %v1975 = vadd.f32 0.0, %v1974
        %v1976 = vpop.f32.mrf.mxu0
        %1977 = vmatprep.mubr.f32.mxu0 0.0
        %1978 = vmatmul.mubr.f32.gmra.mxu0 %v1901
        %v1979 = vpop.f32.mrf.mxu0
        %v1980 = vadd.f32 0.0, %v1979
        %v1981 = vpop.f32.mrf.mxu0
        %1982 = vmatprep.mubr.f32.mxu0 0.0
        %1983 = vmatmul.mubr.f32.gmra.mxu0 %v1902
        %v1984 = vpop.f32.mrf.mxu0
        %v1985 = vadd.f32 0.0, %v1984
        %v1986 = vpop.f32.mrf.mxu0
        %1987 = vmatprep.mubr.f32.mxu0 0.0
        %1988 = vmatmul.mubr.f32.gmra.mxu0 %v1903
        %v1989 = vpop.f32.mrf.mxu0
        %v1990 = vadd.f32 0.0, %v1989
        %v1991 = vpop.f32.mrf.mxu0
        %1992 = vmatprep.mubr.f32.mxu0 0.0
        %1993 = vmatmul.mubr.f32.gmra.mxu0 %v1904
        %v1994 = vpop.f32.mrf.mxu0
        %v1995 = vadd.f32 0.0, %v1994
        %v1996 = vpop.f32.mrf.mxu0
        %1997 = vmatprep.mubr.f32.mxu0 0.0
        %1998 = vmatmul.mubr.f32.gmra.mxu0 %v1905
        %v1999 = vpop.f32.mrf.mxu0
        %v2000 = vadd.f32 0.0, %v1999
        %v2001 = vpop.f32.mrf.mxu0
        %2002 = vmatprep.mubr.f32.mxu0 0.0
        %2003 = vmatmul.mubr.f32.gmra.mxu0 %v1906
        %v2004 = vpop.f32.mrf.mxu0
        %v2005 = vadd.f32 0.0, %v2004
        %v2006 = vpop.f32.mrf.mxu0
        %2007 = vmatprep.mubr.f32.mxu0 0.0
        %2008 = vmatmul.mubr.f32.gmra.mxu0 %v1907
        %v2009 = vpop.f32.mrf.mxu0
        %v2010 = vadd.f32 0.0, %v2009
        %v2011 = vpop.f32.mrf.mxu0
        %2012 = vdwg.mxu0
        %v2013 = vld [vmem:[#allocation7 + $0x3] ss:$0 sm:$0xff]
        %v2014 = vld [vmem:[#allocation7 + $0x4] ss:$0 sm:$0xff]
        %v2015 = vld [vmem:[#allocation7 + $0x5] ss:$0 sm:$0xff]
        %v2016 = vpack.c.bf16 %v1980, %v1975
        %v2017 = vpack.c.bf16 %v1990, %v1985
        %v2018 = vpack.c.bf16 %v2000, %v1995
        %v2019 = vpack.c.bf16 %v2010, %v2005
        %v2020 = vld [vmem:[%s2] sm:$0xf]
        %v2021 = vld [vmem:[%s2 + $0x4] sm:$0xf]
        %v2022 = vld [vmem:[%s2 + $0x8] sm:$0xf]
        %v2023 = vld [vmem:[%s2 + $0xc] sm:$0xf]
        %v2024 = vld [vmem:[%s2 + $0x10] sm:$0xf]
        %v2025 = vld [vmem:[%s2 + $0x14] sm:$0xf]
        %v2026 = vld [vmem:[%s2 + $0x18] sm:$0xf]
        %v2027 = vld [vmem:[%s2 + $0x1c] sm:$0xf]
        %v2028 = vld [vmem:[%s2 + $0x20] sm:$0xf]
        %v2029 = vld [vmem:[%s2 + $0x24] sm:$0xf]
        %v2030 = vld [vmem:[%s2 + $0x28] sm:$0xf]
        %v2031 = vld [vmem:[%s2 + $0x2c] sm:$0xf]
        %v2032 = vld [vmem:[%s2 + $0x30] sm:$0xf]
        %v2033 = vld [vmem:[%s2 + $0x34] sm:$0xf]
        %v2034 = vld [vmem:[%s2 + $0x38] sm:$0xf]
        %v2035 = vld [vmem:[%s2 + $0x3c] sm:$0xf]
        %v2041 = vrot.slane 0, 1
        %v2042 = vrot.slane %v2016, 1
        %v2043 = vsel %vm1004, %v2041, %v2042
        %v2044 = vrot.slane %v2017, 1
        %v2045 = vsel %vm1004, %v2042, %v2044
        %v2046 = vrot.slane %v2018, 1
        %v2047 = vsel %vm1004, %v2044, %v2046
        %v2048 = vrot.slane %v2019, 1
        %v2049 = vsel %vm1004, %v2046, %v2048
        %v2058 = vunpack.c.l.b16 %v2028
        %v2059 = vunpack.c.l.b16 %v2029
        %v2060 = vunpack.c.l.b16 %v2030
        %v2061 = vunpack.c.l.b16 %v2031
        %v2062 = vunpack.c.l.b16 %v2032
        %v2063 = vunpack.c.l.b16 %v2033
        %v2064 = vunpack.c.l.b16 %v2034
        %v2065 = vunpack.c.l.b16 %v2035
        %v2066 = vpack.c.b16 %v2059, %v2058
        %v2067 = vpack.c.b16 %v2061, %v2060
        %v2068 = vpack.c.b16 %v2063, %v2062
        %v2069 = vpack.c.b16 %v2065, %v2064
        %v2075 = vsel %vm728, %v2043, 0
        %v2078 = vsel %vm728, %v2045, 0
        %v2081 = vsel %vm728, %v2047, 0
        %v2084 = vsel %vm728, %v2049, 0
        %v2087 = vsel %vm728, %v2048, 0
        %2089 = vmatprep.subr.bf16.mxu0 0
        %2090 = vmatpush1.bf16.msra.mxu0 0
        %2091 = vmatprep.subr.bf16.mxu0 0
        %2092 = vmatpush1.bf16.msra.mxu0 0
        %2093 = vmatprep.subr.bf16.mxu0 0
        %2094 = vmatpush1.bf16.msra.mxu0 0
        %2095 = vmatprep.subr.bf16.mxu0 0
        %2096 = vmatpush1.bf16.msra.mxu0 0
        %2097 = vmatprep.subr.bf16.mxu0 0
        %2098 = vmatpush1.bf16.msra.mxu0 %v2069
        %2099 = vmatprep.subr.bf16.mxu0 0
        %2100 = vmatpush1.bf16.msra.mxu0 %v2068
        %2101 = vmatprep.subr.bf16.mxu0 0
        %2102 = vmatpush1.bf16.msra.mxu0 %v2067
        %2103 = vmatprep.subr.bf16.mxu0 0
        %2104 = vmatpush1.bf16.msra.mxu0 %v2066
        %2105 = vmatprep.subr.bf16.mxu0 0
        %2106 = vmatpush2.bf16.msra.mxu0 0
        %2107 = vmatprep.subr.bf16.mxu0 0
        %2108 = vmatpush2.bf16.msra.mxu0 0
        %2109 = vmatprep.subr.bf16.mxu0 0
        %2110 = vmatpush2.bf16.msra.mxu0 0
        %2111 = vmatprep.subr.bf16.mxu0 0
        %2112 = vmatpush2.bf16.msra.mxu0 0
        %2113 = vmatprep.subr.bf16.mxu0 0
        %2114 = vmatpush2.bf16.msra.mxu0 0
        %2115 = vmatprep.subr.bf16.mxu0 0
        %2116 = vmatpush2.bf16.msra.mxu0 0
        %2117 = vmatprep.subr.bf16.mxu0 0
        %2118 = vmatpush2.bf16.msra.mxu0 0
        %2119 = vmatprep.subr.bf16.mxu0 0
        %2120 = vmatpush2.bf16.msra.mxu0 0
        %2121 = vmatprep.mubr.bf16.mxu0 0
        %2122 = vmatmul.mubr.bf16.gmra.mxu0 %v2075
        %v2123 = vpop.f32.mrf.mxu0
        %v2124 = vadd.f32 0.0, %v2123
        %v2125 = vpop.f32.mrf.mxu0
        %v2126 = vpop.f32.mrf.mxu0
        %v2127 = vadd.f32 0.0, %v2126
        %v2128 = vpop.f32.mrf.mxu0
        %2129 = vmatprep.mubr.bf16.mxu0 0
        %2130 = vmatmul.mubr.bf16.gmra.mxu0 %v2078
        %v2131 = vpop.f32.mrf.mxu0
        %v2132 = vadd.f32 0.0, %v2131
        %v2133 = vpop.f32.mrf.mxu0
        %v2134 = vpop.f32.mrf.mxu0
        %v2135 = vadd.f32 0.0, %v2134
        %v2136 = vpop.f32.mrf.mxu0
        %2137 = vmatprep.mubr.bf16.mxu0 0
        %2138 = vmatmul.mubr.bf16.gmra.mxu0 %v2081
        %v2139 = vpop.f32.mrf.mxu0
        %v2140 = vadd.f32 0.0, %v2139
        %v2141 = vpop.f32.mrf.mxu0
        %v2142 = vpop.f32.mrf.mxu0
        %v2143 = vadd.f32 0.0, %v2142
        %v2144 = vpop.f32.mrf.mxu0
        %2145 = vmatprep.mubr.bf16.mxu0 0
        %2146 = vmatmul.mubr.bf16.gmra.mxu0 %v2084
        %v2147 = vpop.f32.mrf.mxu0
        %v2148 = vadd.f32 0.0, %v2147
        %v2149 = vpop.f32.mrf.mxu0
        %v2150 = vpop.f32.mrf.mxu0
        %v2151 = vadd.f32 0.0, %v2150
        %v2152 = vpop.f32.mrf.mxu0
        %2153 = vmatprep.mubr.bf16.mxu0 0
        %2154 = vmatmul.mubr.bf16.gmra.mxu0 %v2087
        %v2155 = vpop.f32.mrf.mxu0
        %v2156 = vadd.f32 0.0, %v2155
        %v2157 = vpop.f32.mrf.mxu0
        %v2158 = vpop.f32.mrf.mxu0
        %v2159 = vpop.f32.mrf.mxu0
        %2160 = vdwg.mxu0
        %v2169 = vunpack.c.l.b16 %v2020
        %v2170 = vunpack.c.l.b16 %v2021
        %v2171 = vunpack.c.l.b16 %v2022
        %v2172 = vunpack.c.l.b16 %v2023
        %v2173 = vunpack.c.l.b16 %v2024
        %v2174 = vunpack.c.l.b16 %v2025
        %v2175 = vunpack.c.l.b16 %v2026
        %v2176 = vunpack.c.l.b16 %v2027
        %v2177 = vpack.c.b16 %v2170, %v2169
        %v2178 = vpack.c.b16 %v2172, %v2171
        %v2179 = vpack.c.b16 %v2174, %v2173
        %v2180 = vpack.c.b16 %v2176, %v2175
        %v2186 = vsel %vm728, 0, 0
        %v2189 = vsel %vm728, %v2016, 0
        %v2192 = vsel %vm728, %v2017, 0
        %v2195 = vsel %vm728, %v2018, 0
        %v2198 = vsel %vm728, %v2019, 0
        %2200 = vmatprep.subr.bf16.mxu0 0
        %2201 = vmatpush1.bf16.msra.mxu0 0
        %2202 = vmatprep.subr.bf16.mxu0 0
        %2203 = vmatpush1.bf16.msra.mxu0 0
        %2204 = vmatprep.subr.bf16.mxu0 0
        %2205 = vmatpush1.bf16.msra.mxu0 0
        %2206 = vmatprep.subr.bf16.mxu0 0
        %2207 = vmatpush1.bf16.msra.mxu0 0
        %2208 = vmatprep.subr.bf16.mxu0 0
        %2209 = vmatpush1.bf16.msra.mxu0 %v2180
        %2210 = vmatprep.subr.bf16.mxu0 0
        %2211 = vmatpush1.bf16.msra.mxu0 %v2179
        %2212 = vmatprep.subr.bf16.mxu0 0
        %2213 = vmatpush1.bf16.msra.mxu0 %v2178
        %2214 = vmatprep.subr.bf16.mxu0 0
        %2215 = vmatpush1.bf16.msra.mxu0 %v2177
        %2216 = vmatprep.subr.bf16.mxu0 0
        %2217 = vmatpush2.bf16.msra.mxu0 0
        %2218 = vmatprep.subr.bf16.mxu0 0
        %2219 = vmatpush2.bf16.msra.mxu0 0
        %2220 = vmatprep.subr.bf16.mxu0 0
        %2221 = vmatpush2.bf16.msra.mxu0 0
        %2222 = vmatprep.subr.bf16.mxu0 0
        %2223 = vmatpush2.bf16.msra.mxu0 0
        %2224 = vmatprep.subr.bf16.mxu0 0
        %2225 = vmatpush2.bf16.msra.mxu0 0
        %2226 = vmatprep.subr.bf16.mxu0 0
        %2227 = vmatpush2.bf16.msra.mxu0 0
        %2228 = vmatprep.subr.bf16.mxu0 0
        %2229 = vmatpush2.bf16.msra.mxu0 0
        %2230 = vmatprep.subr.bf16.mxu0 0
        %2231 = vmatpush2.bf16.msra.mxu0 0
        %2232 = vmatprep.mubr.bf16.mxu0 0
        %2233 = vmatmul.mubr.bf16.gmra.mxu0 %v2186
        %v2234 = vpop.f32.mrf.mxu0
        %v2235 = vadd.f32 %v2124, %v2234
        %v2236 = vpop.f32.mrf.mxu0
        %v2237 = vpop.f32.mrf.mxu0
        %v2238 = vadd.f32 %v2127, %v2237
        %v2239 = vpop.f32.mrf.mxu0
        %2240 = vmatprep.mubr.bf16.mxu0 0
        %2241 = vmatmul.mubr.bf16.gmra.mxu0 %v2189
        %v2242 = vpop.f32.mrf.mxu0
        %v2243 = vadd.f32 %v2132, %v2242
        %v2244 = vpop.f32.mrf.mxu0
        %v2245 = vpop.f32.mrf.mxu0
        %v2246 = vadd.f32 %v2135, %v2245
        %v2247 = vpop.f32.mrf.mxu0
        %2248 = vmatprep.mubr.bf16.mxu0 0
        %2249 = vmatmul.mubr.bf16.gmra.mxu0 %v2192
        %v2250 = vpop.f32.mrf.mxu0
        %v2251 = vadd.f32 %v2140, %v2250
        %v2252 = vpop.f32.mrf.mxu0
        %v2253 = vpop.f32.mrf.mxu0
        %v2254 = vadd.f32 %v2143, %v2253
        %v2255 = vpop.f32.mrf.mxu0
        %2256 = vmatprep.mubr.bf16.mxu0 0
        %2257 = vmatmul.mubr.bf16.gmra.mxu0 %v2195
        %v2258 = vpop.f32.mrf.mxu0
        %v2259 = vadd.f32 %v2148, %v2258
        %v2260 = vpop.f32.mrf.mxu0
        %v2261 = vpop.f32.mrf.mxu0
        %v2262 = vadd.f32 %v2151, %v2261
        %v2263 = vpop.f32.mrf.mxu0
        %2264 = vmatprep.mubr.bf16.mxu0 0
        %2265 = vmatmul.mubr.bf16.gmra.mxu0 %v2198
        %v2266 = vpop.f32.mrf.mxu0
        %v2267 = vadd.f32 %v2156, %v2266
        %v2268 = vpop.f32.mrf.mxu0
        %v2269 = vpop.f32.mrf.mxu0
        %v2270 = vpop.f32.mrf.mxu0
        %2271 = vdwg.mxu0
        %v2272 = vld [vmem:[%s2 + $0x40] sm:$0xf]
        %v2273 = vld [vmem:[%s2 + $0x44] sm:$0xf]
        %v2274 = vld [vmem:[%s2 + $0x48] sm:$0xf]
        %v2275 = vld [vmem:[%s2 + $0x4c] sm:$0xf]
        %v2276 = vld [vmem:[%s2 + $0x50] sm:$0xf]
        %v2277 = vld [vmem:[%s2 + $0x54] sm:$0xf]
        %v2278 = vld [vmem:[%s2 + $0x58] sm:$0xf]
        %v2279 = vld [vmem:[%s2 + $0x5c] sm:$0xf]
        %v2280 = vrot.slane 0, 2
        %v2281 = vrot.slane %v2016, 2
        %v2282 = vsel %vm1398, %v2280, %v2281
        %v2283 = vrot.slane %v2017, 2
        %v2284 = vsel %vm1398, %v2281, %v2283
        %v2285 = vrot.slane %v2018, 2
        %v2286 = vsel %vm1398, %v2283, %v2285
        %v2287 = vrot.slane %v2019, 2
        %v2288 = vsel %vm1398, %v2285, %v2287
        %v2297 = vunpack.c.l.b16 %v2272
        %v2298 = vunpack.c.l.b16 %v2273
        %v2299 = vunpack.c.l.b16 %v2274
        %v2300 = vunpack.c.l.b16 %v2275
        %v2301 = vunpack.c.l.b16 %v2276
        %v2302 = vunpack.c.l.b16 %v2277
        %v2303 = vunpack.c.l.b16 %v2278
        %v2304 = vunpack.c.l.b16 %v2279
        %v2305 = vpack.c.b16 %v2298, %v2297
        %v2306 = vpack.c.b16 %v2300, %v2299
        %v2307 = vpack.c.b16 %v2302, %v2301
        %v2308 = vpack.c.b16 %v2304, %v2303
        %v2314 = vsel %vm728, %v2282, 0
        %v2317 = vsel %vm728, %v2284, 0
        %v2320 = vsel %vm728, %v2286, 0
        %v2323 = vsel %vm728, %v2288, 0
        %v2326 = vsel %vm728, %v2287, 0
        %2328 = vmatprep.subr.bf16.mxu0 0
        %2329 = vmatpush1.bf16.msra.mxu0 0
        %2330 = vmatprep.subr.bf16.mxu0 0
        %2331 = vmatpush1.bf16.msra.mxu0 0
        %2332 = vmatprep.subr.bf16.mxu0 0
        %2333 = vmatpush1.bf16.msra.mxu0 0
        %2334 = vmatprep.subr.bf16.mxu0 0
        %2335 = vmatpush1.bf16.msra.mxu0 0
        %2336 = vmatprep.subr.bf16.mxu0 0
        %2337 = vmatpush1.bf16.msra.mxu0 %v2308
        %2338 = vmatprep.subr.bf16.mxu0 0
        %2339 = vmatpush1.bf16.msra.mxu0 %v2307
        %2340 = vmatprep.subr.bf16.mxu0 0
        %2341 = vmatpush1.bf16.msra.mxu0 %v2306
        %2342 = vmatprep.subr.bf16.mxu0 0
        %2343 = vmatpush1.bf16.msra.mxu0 %v2305
        %2344 = vmatprep.subr.bf16.mxu0 0
        %2345 = vmatpush2.bf16.msra.mxu0 0
        %2346 = vmatprep.subr.bf16.mxu0 0
        %2347 = vmatpush2.bf16.msra.mxu0 0
        %2348 = vmatprep.subr.bf16.mxu0 0
        %2349 = vmatpush2.bf16.msra.mxu0 0
        %2350 = vmatprep.subr.bf16.mxu0 0
        %2351 = vmatpush2.bf16.msra.mxu0 0
        %2352 = vmatprep.subr.bf16.mxu0 0
        %2353 = vmatpush2.bf16.msra.mxu0 0
        %2354 = vmatprep.subr.bf16.mxu0 0
        %2355 = vmatpush2.bf16.msra.mxu0 0
        %2356 = vmatprep.subr.bf16.mxu0 0
        %2357 = vmatpush2.bf16.msra.mxu0 0
        %2358 = vmatprep.subr.bf16.mxu0 0
        %2359 = vmatpush2.bf16.msra.mxu0 0
        %2360 = vmatprep.mubr.bf16.mxu0 0
        %2361 = vmatmul.mubr.bf16.gmra.mxu0 %v2314
        %v2362 = vpop.f32.mrf.mxu0
        %v2363 = vadd.f32 0.0, %v2362
        %v2364 = vpop.f32.mrf.mxu0
        %v2365 = vpop.f32.mrf.mxu0
        %v2366 = vadd.f32 0.0, %v2365
        %v2367 = vpop.f32.mrf.mxu0
        %2368 = vmatprep.mubr.bf16.mxu0 0
        %2369 = vmatmul.mubr.bf16.gmra.mxu0 %v2317
        %v2370 = vpop.f32.mrf.mxu0
        %v2371 = vadd.f32 0.0, %v2370
        %v2372 = vpop.f32.mrf.mxu0
        %v2373 = vpop.f32.mrf.mxu0
        %v2374 = vadd.f32 0.0, %v2373
        %v2375 = vpop.f32.mrf.mxu0
        %2376 = vmatprep.mubr.bf16.mxu0 0
        %2377 = vmatmul.mubr.bf16.gmra.mxu0 %v2320
        %v2378 = vpop.f32.mrf.mxu0
        %v2379 = vadd.f32 0.0, %v2378
        %v2380 = vpop.f32.mrf.mxu0
        %v2381 = vpop.f32.mrf.mxu0
        %v2382 = vadd.f32 0.0, %v2381
        %v2383 = vpop.f32.mrf.mxu0
        %2384 = vmatprep.mubr.bf16.mxu0 0
        %2385 = vmatmul.mubr.bf16.gmra.mxu0 %v2323
        %v2386 = vpop.f32.mrf.mxu0
        %v2387 = vadd.f32 0.0, %v2386
        %v2388 = vpop.f32.mrf.mxu0
        %v2389 = vpop.f32.mrf.mxu0
        %v2390 = vadd.f32 0.0, %v2389
        %v2391 = vpop.f32.mrf.mxu0
        %2392 = vmatprep.mubr.bf16.mxu0 0
        %2393 = vmatmul.mubr.bf16.gmra.mxu0 %v2326
        %v2394 = vpop.f32.mrf.mxu0
        %v2395 = vadd.f32 0.0, %v2394
        %v2396 = vpop.f32.mrf.mxu0
        %v2397 = vpop.f32.mrf.mxu0
        %v2398 = vpop.f32.mrf.mxu0
        %2399 = vdwg.mxu0
        %v2400 = vadd.f32 %v2235, %v2363
        %v2401 = vadd.f32 %v2238, %v2366
        %v2402 = vadd.f32 %v2243, %v2371
        %v2403 = vadd.f32 %v2246, %v2374
        %v2404 = vadd.f32 %v2251, %v2379
        %v2405 = vadd.f32 %v2254, %v2382
        %v2406 = vadd.f32 %v2259, %v2387
        %v2407 = vadd.f32 %v2262, %v2390
        %v2408 = vadd.f32 %v2267, %v2395
        %v2409 = vld [vmem:[%s2 + $0x60] sm:$0xf]
        %v2410 = vld [vmem:[%s2 + $0x64] sm:$0xf]
        %v2411 = vld [vmem:[%s2 + $0x68] sm:$0xf]
        %v2412 = vld [vmem:[%s2 + $0x6c] sm:$0xf]
        %v2413 = vld [vmem:[%s2 + $0x70] sm:$0xf]
        %v2414 = vld [vmem:[%s2 + $0x74] sm:$0xf]
        %v2415 = vld [vmem:[%s2 + $0x78] sm:$0xf]
        %v2416 = vld [vmem:[%s2 + $0x7c] sm:$0xf]
        %vm2417 = vcmask 1044480
        %v2418 = vrot.slane 0, 3
        %v2419 = vrot.slane %v2016, 3
        %v2420 = vsel %vm2417, %v2418, %v2419
        %v2421 = vrot.slane %v2017, 3
        %v2422 = vsel %vm2417, %v2419, %v2421
        %v2423 = vrot.slane %v2018, 3
        %v2424 = vsel %vm2417, %v2421, %v2423
        %v2425 = vrot.slane %v2019, 3
        %v2426 = vsel %vm2417, %v2423, %v2425
        %v2435 = vunpack.c.l.b16 %v2409
        %v2436 = vunpack.c.l.b16 %v2410
        %v2437 = vunpack.c.l.b16 %v2411
        %v2438 = vunpack.c.l.b16 %v2412
        %v2439 = vunpack.c.l.b16 %v2413
        %v2440 = vunpack.c.l.b16 %v2414
        %v2441 = vunpack.c.l.b16 %v2415
        %v2442 = vunpack.c.l.b16 %v2416
        %v2443 = vpack.c.b16 %v2436, %v2435
        %v2444 = vpack.c.b16 %v2438, %v2437
        %v2445 = vpack.c.b16 %v2440, %v2439
        %v2446 = vpack.c.b16 %v2442, %v2441
        %v2452 = vsel %vm728, %v2420, 0
        %v2455 = vsel %vm728, %v2422, 0
        %v2458 = vsel %vm728, %v2424, 0
        %v2461 = vsel %vm728, %v2426, 0
        %v2464 = vsel %vm728, %v2425, 0
        %2466 = vmatprep.subr.bf16.mxu0 0
        %2467 = vmatpush1.bf16.msra.mxu0 0
        %2468 = vmatprep.subr.bf16.mxu0 0
        %2469 = vmatpush1.bf16.msra.mxu0 0
        %2470 = vmatprep.subr.bf16.mxu0 0
        %2471 = vmatpush1.bf16.msra.mxu0 0
        %2472 = vmatprep.subr.bf16.mxu0 0
        %2473 = vmatpush1.bf16.msra.mxu0 0
        %2474 = vmatprep.subr.bf16.mxu0 0
        %2475 = vmatpush1.bf16.msra.mxu0 %v2446
        %2476 = vmatprep.subr.bf16.mxu0 0
        %2477 = vmatpush1.bf16.msra.mxu0 %v2445
        %2478 = vmatprep.subr.bf16.mxu0 0
        %2479 = vmatpush1.bf16.msra.mxu0 %v2444
        %2480 = vmatprep.subr.bf16.mxu0 0
        %2481 = vmatpush1.bf16.msra.mxu0 %v2443
        %2482 = vmatprep.subr.bf16.mxu0 0
        %2483 = vmatpush2.bf16.msra.mxu0 0
        %2484 = vmatprep.subr.bf16.mxu0 0
        %2485 = vmatpush2.bf16.msra.mxu0 0
        %2486 = vmatprep.subr.bf16.mxu0 0
        %2487 = vmatpush2.bf16.msra.mxu0 0
        %2488 = vmatprep.subr.bf16.mxu0 0
        %2489 = vmatpush2.bf16.msra.mxu0 0
        %2490 = vmatprep.subr.bf16.mxu0 0
        %2491 = vmatpush2.bf16.msra.mxu0 0
        %2492 = vmatprep.subr.bf16.mxu0 0
        %2493 = vmatpush2.bf16.msra.mxu0 0
        %2494 = vmatprep.subr.bf16.mxu0 0
        %2495 = vmatpush2.bf16.msra.mxu0 0
        %2496 = vmatprep.subr.bf16.mxu0 0
        %2497 = vmatpush2.bf16.msra.mxu0 0
        %2498 = vmatprep.mubr.bf16.mxu0 0
        %2499 = vmatmul.mubr.bf16.gmra.mxu0 %v2452
        %v2500 = vpop.f32.mrf.mxu0
        %v2501 = vadd.f32 0.0, %v2500
        %v2502 = vpop.f32.mrf.mxu0
        %v2503 = vpop.f32.mrf.mxu0
        %v2504 = vadd.f32 0.0, %v2503
        %v2505 = vpop.f32.mrf.mxu0
        %2506 = vmatprep.mubr.bf16.mxu0 0
        %2507 = vmatmul.mubr.bf16.gmra.mxu0 %v2455
        %v2508 = vpop.f32.mrf.mxu0
        %v2509 = vadd.f32 0.0, %v2508
        %v2510 = vpop.f32.mrf.mxu0
        %v2511 = vpop.f32.mrf.mxu0
        %v2512 = vadd.f32 0.0, %v2511
        %v2513 = vpop.f32.mrf.mxu0
        %2514 = vmatprep.mubr.bf16.mxu0 0
        %2515 = vmatmul.mubr.bf16.gmra.mxu0 %v2458
        %v2516 = vpop.f32.mrf.mxu0
        %v2517 = vadd.f32 0.0, %v2516
        %v2518 = vpop.f32.mrf.mxu0
        %v2519 = vpop.f32.mrf.mxu0
        %v2520 = vadd.f32 0.0, %v2519
        %v2521 = vpop.f32.mrf.mxu0
        %2522 = vmatprep.mubr.bf16.mxu0 0
        %2523 = vmatmul.mubr.bf16.gmra.mxu0 %v2461
        %v2524 = vpop.f32.mrf.mxu0
        %v2525 = vadd.f32 0.0, %v2524
        %v2526 = vpop.f32.mrf.mxu0
        %v2527 = vpop.f32.mrf.mxu0
        %v2528 = vadd.f32 0.0, %v2527
        %v2529 = vpop.f32.mrf.mxu0
        %2530 = vmatprep.mubr.bf16.mxu0 0
        %2531 = vmatmul.mubr.bf16.gmra.mxu0 %v2464
        %v2532 = vpop.f32.mrf.mxu0
        %v2533 = vadd.f32 0.0, %v2532
        %v2534 = vpop.f32.mrf.mxu0
        %v2535 = vpop.f32.mrf.mxu0
        %v2536 = vpop.f32.mrf.mxu0
        %2537 = vdwg.mxu0
        %v2538 = vadd.f32 %v2400, %v2501
        %v2539 = vadd.f32 %v2401, %v2504
        %v2540 = vadd.f32 %v2402, %v2509
        %v2541 = vadd.f32 %v2403, %v2512
        %v2542 = vadd.f32 %v2404, %v2517
        %v2543 = vadd.f32 %v2405, %v2520
        %v2544 = vadd.f32 %v2406, %v2525
        %v2545 = vadd.f32 %v2407, %v2528
        %v2546 = vadd.f32 %v2408, %v2533
        %v2547 = vld [vmem:[%s2 + $0x80] sm:$0xf]
        %v2548 = vld [vmem:[%s2 + $0x84] sm:$0xf]
        %v2549 = vld [vmem:[%s2 + $0x88] sm:$0xf]
        %v2550 = vld [vmem:[%s2 + $0x8c] sm:$0xf]
        %v2551 = vld [vmem:[%s2 + $0x90] sm:$0xf]
        %v2552 = vld [vmem:[%s2 + $0x94] sm:$0xf]
        %v2553 = vld [vmem:[%s2 + $0x98] sm:$0xf]
        %v2554 = vld [vmem:[%s2 + $0x9c] sm:$0xf]
        %vm2555 = vcmask 1043456
        %v2556 = vrot.slane 0, 4
        %v2557 = vrot.slane %v2016, 4
        %v2558 = vsel %vm2555, %v2556, %v2557
        %v2559 = vrot.slane %v2017, 4
        %v2560 = vsel %vm2555, %v2557, %v2559
        %v2561 = vrot.slane %v2018, 4
        %v2562 = vsel %vm2555, %v2559, %v2561
        %v2563 = vrot.slane %v2019, 4
        %v2564 = vsel %vm2555, %v2561, %v2563
        %v2573 = vunpack.c.l.b16 %v2547
        %v2574 = vunpack.c.l.b16 %v2548
        %v2575 = vunpack.c.l.b16 %v2549
        %v2576 = vunpack.c.l.b16 %v2550
        %v2577 = vunpack.c.l.b16 %v2551
        %v2578 = vunpack.c.l.b16 %v2552
        %v2579 = vunpack.c.l.b16 %v2553
        %v2580 = vunpack.c.l.b16 %v2554
        %v2581 = vpack.c.b16 %v2574, %v2573
        %v2582 = vpack.c.b16 %v2576, %v2575
        %v2583 = vpack.c.b16 %v2578, %v2577
        %v2584 = vpack.c.b16 %v2580, %v2579
        %v2590 = vsel %vm728, %v2558, 0
        %v2593 = vsel %vm728, %v2560, 0
        %v2596 = vsel %vm728, %v2562, 0
        %v2599 = vsel %vm728, %v2564, 0
        %v2602 = vsel %vm728, %v2563, 0
        %2604 = vmatprep.subr.bf16.mxu0 0
        %2605 = vmatpush1.bf16.msra.mxu0 0
        %2606 = vmatprep.subr.bf16.mxu0 0
        %2607 = vmatpush1.bf16.msra.mxu0 0
        %2608 = vmatprep.subr.bf16.mxu0 0
        %2609 = vmatpush1.bf16.msra.mxu0 0
        %2610 = vmatprep.subr.bf16.mxu0 0
        %2611 = vmatpush1.bf16.msra.mxu0 0
        %2612 = vmatprep.subr.bf16.mxu0 0
        %2613 = vmatpush1.bf16.msra.mxu0 %v2584
        %2614 = vmatprep.subr.bf16.mxu0 0
        %2615 = vmatpush1.bf16.msra.mxu0 %v2583
        %2616 = vmatprep.subr.bf16.mxu0 0
        %2617 = vmatpush1.bf16.msra.mxu0 %v2582
        %2618 = vmatprep.subr.bf16.mxu0 0
        %2619 = vmatpush1.bf16.msra.mxu0 %v2581
        %2620 = vmatprep.subr.bf16.mxu0 0
        %2621 = vmatpush2.bf16.msra.mxu0 0
        %2622 = vmatprep.subr.bf16.mxu0 0
        %2623 = vmatpush2.bf16.msra.mxu0 0
        %2624 = vmatprep.subr.bf16.mxu0 0
        %2625 = vmatpush2.bf16.msra.mxu0 0
        %2626 = vmatprep.subr.bf16.mxu0 0
        %2627 = vmatpush2.bf16.msra.mxu0 0
        %2628 = vmatprep.subr.bf16.mxu0 0
        %2629 = vmatpush2.bf16.msra.mxu0 0
        %2630 = vmatprep.subr.bf16.mxu0 0
        %2631 = vmatpush2.bf16.msra.mxu0 0
        %2632 = vmatprep.subr.bf16.mxu0 0
        %2633 = vmatpush2.bf16.msra.mxu0 0
        %2634 = vmatprep.subr.bf16.mxu0 0
        %2635 = vmatpush2.bf16.msra.mxu0 0
        %2636 = vmatprep.mubr.bf16.mxu0 0
        %2637 = vmatmul.mubr.bf16.gmra.mxu0 %v2590
        %v2638 = vpop.f32.mrf.mxu0
        %v2639 = vadd.f32 0.0, %v2638
        %v2640 = vpop.f32.mrf.mxu0
        %v2641 = vpop.f32.mrf.mxu0
        %v2642 = vadd.f32 0.0, %v2641
        %v2643 = vpop.f32.mrf.mxu0
        %2644 = vmatprep.mubr.bf16.mxu0 0
        %2645 = vmatmul.mubr.bf16.gmra.mxu0 %v2593
        %v2646 = vpop.f32.mrf.mxu0
        %v2647 = vadd.f32 0.0, %v2646
        %v2648 = vpop.f32.mrf.mxu0
        %v2649 = vpop.f32.mrf.mxu0
        %v2650 = vadd.f32 0.0, %v2649
        %v2651 = vpop.f32.mrf.mxu0
        %2652 = vmatprep.mubr.bf16.mxu0 0
        %2653 = vmatmul.mubr.bf16.gmra.mxu0 %v2596
        %v2654 = vpop.f32.mrf.mxu0
        %v2655 = vadd.f32 0.0, %v2654
        %v2656 = vpop.f32.mrf.mxu0
        %v2657 = vpop.f32.mrf.mxu0
        %v2658 = vadd.f32 0.0, %v2657
        %v2659 = vpop.f32.mrf.mxu0
        %2660 = vmatprep.mubr.bf16.mxu0 0
        %2661 = vmatmul.mubr.bf16.gmra.mxu0 %v2599
        %v2662 = vpop.f32.mrf.mxu0
        %v2663 = vadd.f32 0.0, %v2662
        %v2664 = vpop.f32.mrf.mxu0
        %v2665 = vpop.f32.mrf.mxu0
        %v2666 = vadd.f32 0.0, %v2665
        %v2667 = vpop.f32.mrf.mxu0
        %2668 = vmatprep.mubr.bf16.mxu0 0
        %2669 = vmatmul.mubr.bf16.gmra.mxu0 %v2602
        %v2670 = vpop.f32.mrf.mxu0
        %v2671 = vadd.f32 0.0, %v2670
        %v2672 = vpop.f32.mrf.mxu0
        %v2673 = vpop.f32.mrf.mxu0
        %v2674 = vpop.f32.mrf.mxu0
        %2675 = vdwg.mxu0
        %v2676 = vadd.f32 %v2538, %v2639
        %v2677 = vadd.f32 %v2539, %v2642
        %v2678 = vadd.f32 %v2540, %v2647
        %v2679 = vadd.f32 %v2541, %v2650
        %v2680 = vadd.f32 %v2542, %v2655
        %v2681 = vadd.f32 %v2543, %v2658
        %v2682 = vadd.f32 %v2544, %v2663
        %v2683 = vadd.f32 %v2545, %v2666
        %v2684 = vadd.f32 %v2546, %v2671
        %v2685 = vadd.f32 %v2676, %v2013
        %v2686 = vadd.f32 %v2677, %v2013
        %v2687 = vadd.f32 %v2678, %v2013
        %v2688 = vadd.f32 %v2679, %v2013
        %v2689 = vadd.f32 %v2680, %v2013
        %v2690 = vadd.f32 %v2681, %v2013
        %v2691 = vadd.f32 %v2682, %v2013
        %v2692 = vadd.f32 %v2683, %v2013
        %v2693 = vadd.f32 %v2684, %v2013
        %vm2694 = vcmp.gt.f32.partialorder %v2685, 0.0
        %vm2695 = vcmp.gt.f32.partialorder %v2686, 0.0
        %vm2696 = vcmp.gt.f32.partialorder %v2687, 0.0
        %vm2697 = vcmp.gt.f32.partialorder %v2688, 0.0
        %vm2698 = vcmp.gt.f32.partialorder %v2689, 0.0
        %vm2699 = vcmp.gt.f32.partialorder %v2690, 0.0
        %vm2700 = vcmp.gt.f32.partialorder %v2691, 0.0
        %vm2701 = vcmp.gt.f32.partialorder %v2692, 0.0
        %vm2702 = vcmp.gt.f32.partialorder %v2693, 0.0
        %v2703 = vmul.f32 %v2685, 0.01
        %v2704 = vmul.f32 %v2686, 0.01
        %v2705 = vmul.f32 %v2687, 0.01
        %v2706 = vmul.f32 %v2688, 0.01
        %v2707 = vmul.f32 %v2689, 0.01
        %v2708 = vmul.f32 %v2690, 0.01
        %v2709 = vmul.f32 %v2691, 0.01
        %v2710 = vmul.f32 %v2692, 0.01
        %v2711 = vmul.f32 %v2693, 0.01
        %v2712 = vsel %vm2694, %v2685, %v2703
        %v2713 = vsel %vm2695, %v2686, %v2704
        %v2714 = vsel %vm2696, %v2687, %v2705
        %v2715 = vsel %vm2697, %v2688, %v2706
        %v2716 = vsel %vm2698, %v2689, %v2707
        %v2717 = vsel %vm2699, %v2690, %v2708
        %v2718 = vsel %vm2700, %v2691, %v2709
        %v2719 = vsel %vm2701, %v2692, %v2710
        %v2720 = vsel %vm2702, %v2693, %v2711
        %v2721 = vpack.c.bf16 %v2713, %v2712
        %v2722 = vpack.c.bf16 %v2715, %v2714
        %v2723 = vpack.c.bf16 %v2717, %v2716
        %v2724 = vpack.c.bf16 %v2719, %v2718
        %v2725 = vpack.c.bf16 %v2720, %v2720
        %v2731 = vrot.slane %v2721, 1
        %v2732 = vrot.slane %v2722, 1
        %v2733 = vsel %vm1004, %v2731, %v2732
        %v2734 = vrot.slane %v2723, 1
        %v2735 = vsel %vm1004, %v2732, %v2734
        %v2736 = vrot.slane %v2724, 1
        %v2737 = vsel %vm1004, %v2734, %v2736
        %v2738 = vrot.slane %v2725, 1
        %v2739 = vsel %vm1004, %v2736, %v2738
        %v2744 = vrot.slane %v2721, 2
        %v2745 = vrot.slane %v2722, 2
        %v2746 = vsel %vm1398, %v2744, %v2745
        %v2747 = vrot.slane %v2723, 2
        %v2748 = vsel %vm1398, %v2745, %v2747
        %v2749 = vrot.slane %v2724, 2
        %v2750 = vsel %vm1398, %v2747, %v2749
        %v2751 = vrot.slane %v2725, 2
        %v2752 = vsel %vm1398, %v2749, %v2751
        %v2757 = vrot.slane %v2721, 3
        %v2758 = vrot.slane %v2722, 3
        %v2759 = vsel %vm2417, %v2757, %v2758
        %v2760 = vrot.slane %v2723, 3
        %v2761 = vsel %vm2417, %v2758, %v2760
        %v2762 = vrot.slane %v2724, 3
        %v2763 = vsel %vm2417, %v2760, %v2762
        %v2764 = vrot.slane %v2725, 3
        %v2765 = vsel %vm2417, %v2762, %v2764
        %v2770 = vrot.slane %v2721, 4
        %v2771 = vrot.slane %v2722, 4
        %v2772 = vsel %vm2555, %v2770, %v2771
        %v2773 = vrot.slane %v2723, 4
        %v2774 = vsel %vm2555, %v2771, %v2773
        %v2775 = vrot.slane %v2724, 4
        %v2776 = vsel %vm2555, %v2773, %v2775
        %v2777 = vrot.slane %v2725, 4
        %v2778 = vsel %vm2555, %v2775, %v2777
        %v2783 = vld [vmem:[%s2 + $0xa0] sm:$0xf]
        %v2784 = vld [vmem:[%s2 + $0xa4] sm:$0xf]
        %v2785 = vld [vmem:[%s2 + $0xa8] sm:$0xf]
        %v2786 = vld [vmem:[%s2 + $0xac] sm:$0xf]
        %v2787 = vld [vmem:[%s2 + $0xb0] sm:$0xf]
        %v2788 = vld [vmem:[%s2 + $0xb4] sm:$0xf]
        %v2789 = vld [vmem:[%s2 + $0xb8] sm:$0xf]
        %v2790 = vld [vmem:[%s2 + $0xbc] sm:$0xf]
        %v2791 = vld [vmem:[%s2 + $0xc0] sm:$0xf]
        %v2792 = vld [vmem:[%s2 + $0xc4] sm:$0xf]
        %v2793 = vld [vmem:[%s2 + $0xc8] sm:$0xf]
        %v2794 = vld [vmem:[%s2 + $0xcc] sm:$0xf]
        %v2795 = vld [vmem:[%s2 + $0xd0] sm:$0xf]
        %v2796 = vld [vmem:[%s2 + $0xd4] sm:$0xf]
        %v2797 = vld [vmem:[%s2 + $0xd8] sm:$0xf]
        %v2798 = vld [vmem:[%s2 + $0xdc] sm:$0xf]
        %v2799 = vld [vmem:[%s2 + $0xe0] sm:$0xf]
        %v2800 = vld [vmem:[%s2 + $0xe4] sm:$0xf]
        %v2801 = vld [vmem:[%s2 + $0xe8] sm:$0xf]
        %v2802 = vld [vmem:[%s2 + $0xec] sm:$0xf]
        %v2803 = vld [vmem:[%s2 + $0xf0] sm:$0xf]
        %v2804 = vld [vmem:[%s2 + $0xf4] sm:$0xf]
        %v2805 = vld [vmem:[%s2 + $0xf8] sm:$0xf]
        %v2806 = vld [vmem:[%s2 + $0xfc] sm:$0xf]
        %v2807 = vld [vmem:[%s2 + $0x100] sm:$0xf]
        %v2808 = vld [vmem:[%s2 + $0x104] sm:$0xf]
        %v2809 = vld [vmem:[%s2 + $0x108] sm:$0xf]
        %v2810 = vld [vmem:[%s2 + $0x10c] sm:$0xf]
        %v2811 = vld [vmem:[%s2 + $0x110] sm:$0xf]
        %v2812 = vld [vmem:[%s2 + $0x114] sm:$0xf]
        %v2813 = vld [vmem:[%s2 + $0x118] sm:$0xf]
        %v2814 = vld [vmem:[%s2 + $0x11c] sm:$0xf]
        %v2815 = vld [vmem:[%s2 + $0x120] sm:$0xf]
        %v2816 = vld [vmem:[%s2 + $0x124] sm:$0xf]
        %v2817 = vld [vmem:[%s2 + $0x128] sm:$0xf]
        %v2818 = vld [vmem:[%s2 + $0x12c] sm:$0xf]
        %v2819 = vld [vmem:[%s2 + $0x130] sm:$0xf]
        %v2820 = vld [vmem:[%s2 + $0x134] sm:$0xf]
        %v2821 = vld [vmem:[%s2 + $0x138] sm:$0xf]
        %v2822 = vld [vmem:[%s2 + $0x13c] sm:$0xf]
        %v2823 = vld [vmem:[%s2 + $0x140] sm:$0xf]
        %v2824 = vld [vmem:[%s2 + $0x144] sm:$0xf]
        %v2825 = vld [vmem:[%s2 + $0x148] sm:$0xf]
        %v2826 = vld [vmem:[%s2 + $0x14c] sm:$0xf]
        %v2827 = vld [vmem:[%s2 + $0x150] sm:$0xf]
        %v2828 = vld [vmem:[%s2 + $0x154] sm:$0xf]
        %v2829 = vld [vmem:[%s2 + $0x158] sm:$0xf]
        %v2830 = vld [vmem:[%s2 + $0x15c] sm:$0xf]
        %v2831 = vld [vmem:[%s2 + $0x160] sm:$0xf]
        %v2832 = vld [vmem:[%s2 + $0x164] sm:$0xf]
        %v2833 = vld [vmem:[%s2 + $0x168] sm:$0xf]
        %v2834 = vld [vmem:[%s2 + $0x16c] sm:$0xf]
        %v2835 = vld [vmem:[%s2 + $0x170] sm:$0xf]
        %v2836 = vld [vmem:[%s2 + $0x174] sm:$0xf]
        %v2837 = vld [vmem:[%s2 + $0x178] sm:$0xf]
        %v2838 = vld [vmem:[%s2 + $0x17c] sm:$0xf]
        %v2839 = vld [vmem:[%s2 + $0x180] sm:$0xf]
        %v2840 = vld [vmem:[%s2 + $0x184] sm:$0xf]
        %v2841 = vld [vmem:[%s2 + $0x188] sm:$0xf]
        %v2842 = vld [vmem:[%s2 + $0x18c] sm:$0xf]
        %v2843 = vld [vmem:[%s2 + $0x190] sm:$0xf]
        %v2844 = vld [vmem:[%s2 + $0x194] sm:$0xf]
        %v2845 = vld [vmem:[%s2 + $0x198] sm:$0xf]
        %v2846 = vld [vmem:[%s2 + $0x19c] sm:$0xf]
        %v2847 = vld [vmem:[%s2 + $0x1a0] sm:$0xf]
        %v2848 = vld [vmem:[%s2 + $0x1a4] sm:$0xf]
        %v2849 = vld [vmem:[%s2 + $0x1a8] sm:$0xf]
        %v2850 = vld [vmem:[%s2 + $0x1ac] sm:$0xf]
        %v2851 = vld [vmem:[%s2 + $0x1b0] sm:$0xf]
        %v2852 = vld [vmem:[%s2 + $0x1b4] sm:$0xf]
        %v2853 = vld [vmem:[%s2 + $0x1b8] sm:$0xf]
        %v2854 = vld [vmem:[%s2 + $0x1bc] sm:$0xf]
        %v2855 = vld [vmem:[%s2 + $0x1c0] sm:$0xf]
        %v2856 = vld [vmem:[%s2 + $0x1c4] sm:$0xf]
        %v2857 = vld [vmem:[%s2 + $0x1c8] sm:$0xf]
        %v2858 = vld [vmem:[%s2 + $0x1cc] sm:$0xf]
        %v2859 = vld [vmem:[%s2 + $0x1d0] sm:$0xf]
        %v2860 = vld [vmem:[%s2 + $0x1d4] sm:$0xf]
        %v2861 = vld [vmem:[%s2 + $0x1d8] sm:$0xf]
        %v2862 = vld [vmem:[%s2 + $0x1dc] sm:$0xf]
        %v2943 = vunpack.c.l.b16 %v2783
        %v2944 = vunpack.c.l.b16 %v2784
        %v2945 = vunpack.c.l.b16 %v2785
        %v2946 = vunpack.c.l.b16 %v2786
        %v2947 = vunpack.c.l.b16 %v2787
        %v2948 = vunpack.c.l.b16 %v2788
        %v2949 = vunpack.c.l.b16 %v2789
        %v2950 = vunpack.c.l.b16 %v2790
        %v2951 = vunpack.c.l.b16 %v2791
        %v2952 = vunpack.c.l.b16 %v2792
        %v2953 = vunpack.c.l.b16 %v2793
        %v2954 = vunpack.c.l.b16 %v2794
        %v2955 = vunpack.c.l.b16 %v2795
        %v2956 = vunpack.c.l.b16 %v2796
        %v2957 = vunpack.c.l.b16 %v2797
        %v2958 = vunpack.c.l.b16 %v2798
        %v2959 = vunpack.c.l.b16 %v2799
        %v2960 = vunpack.c.l.b16 %v2800
        %v2961 = vunpack.c.l.b16 %v2801
        %v2962 = vunpack.c.l.b16 %v2802
        %v2963 = vunpack.c.l.b16 %v2803
        %v2964 = vunpack.c.l.b16 %v2804
        %v2965 = vunpack.c.l.b16 %v2805
        %v2966 = vunpack.c.l.b16 %v2806
        %v2967 = vunpack.c.l.b16 %v2807
        %v2968 = vunpack.c.l.b16 %v2808
        %v2969 = vunpack.c.l.b16 %v2809
        %v2970 = vunpack.c.l.b16 %v2810
        %v2971 = vunpack.c.l.b16 %v2811
        %v2972 = vunpack.c.l.b16 %v2812
        %v2973 = vunpack.c.l.b16 %v2813
        %v2974 = vunpack.c.l.b16 %v2814
        %v2975 = vunpack.c.l.b16 %v2815
        %v2976 = vunpack.c.l.b16 %v2816
        %v2977 = vunpack.c.l.b16 %v2817
        %v2978 = vunpack.c.l.b16 %v2818
        %v2979 = vunpack.c.l.b16 %v2819
        %v2980 = vunpack.c.l.b16 %v2820
        %v2981 = vunpack.c.l.b16 %v2821
        %v2982 = vunpack.c.l.b16 %v2822
        %v2983 = vunpack.c.l.b16 %v2823
        %v2984 = vunpack.c.l.b16 %v2824
        %v2985 = vunpack.c.l.b16 %v2825
        %v2986 = vunpack.c.l.b16 %v2826
        %v2987 = vunpack.c.l.b16 %v2827
        %v2988 = vunpack.c.l.b16 %v2828
        %v2989 = vunpack.c.l.b16 %v2829
        %v2990 = vunpack.c.l.b16 %v2830
        %v2991 = vunpack.c.l.b16 %v2831
        %v2992 = vunpack.c.l.b16 %v2832
        %v2993 = vunpack.c.l.b16 %v2833
        %v2994 = vunpack.c.l.b16 %v2834
        %v2995 = vunpack.c.l.b16 %v2835
        %v2996 = vunpack.c.l.b16 %v2836
        %v2997 = vunpack.c.l.b16 %v2837
        %v2998 = vunpack.c.l.b16 %v2838
        %v2999 = vunpack.c.l.b16 %v2839
        %v3000 = vunpack.c.l.b16 %v2840
        %v3001 = vunpack.c.l.b16 %v2841
        %v3002 = vunpack.c.l.b16 %v2842
        %v3003 = vunpack.c.l.b16 %v2843
        %v3004 = vunpack.c.l.b16 %v2844
        %v3005 = vunpack.c.l.b16 %v2845
        %v3006 = vunpack.c.l.b16 %v2846
        %v3007 = vunpack.c.l.b16 %v2847
        %v3008 = vunpack.c.l.b16 %v2848
        %v3009 = vunpack.c.l.b16 %v2849
        %v3010 = vunpack.c.l.b16 %v2850
        %v3011 = vunpack.c.l.b16 %v2851
        %v3012 = vunpack.c.l.b16 %v2852
        %v3013 = vunpack.c.l.b16 %v2853
        %v3014 = vunpack.c.l.b16 %v2854
        %v3015 = vunpack.c.l.b16 %v2855
        %v3016 = vunpack.c.l.b16 %v2856
        %v3017 = vunpack.c.l.b16 %v2857
        %v3018 = vunpack.c.l.b16 %v2858
        %v3019 = vunpack.c.l.b16 %v2859
        %v3020 = vunpack.c.l.b16 %v2860
        %v3021 = vunpack.c.l.b16 %v2861
        %v3022 = vunpack.c.l.b16 %v2862
        %v3023 = vpack.c.b16 %v2944, %v2943
        %v3024 = vpack.c.b16 %v2946, %v2945
        %v3025 = vpack.c.b16 %v2948, %v2947
        %v3026 = vpack.c.b16 %v2950, %v2949
        %v3027 = vpack.c.b16 %v2952, %v2951
        %v3028 = vpack.c.b16 %v2954, %v2953
        %v3029 = vpack.c.b16 %v2956, %v2955
        %v3030 = vpack.c.b16 %v2958, %v2957
        %v3031 = vpack.c.b16 %v2960, %v2959
        %v3032 = vpack.c.b16 %v2962, %v2961
        %v3033 = vpack.c.b16 %v2964, %v2963
        %v3034 = vpack.c.b16 %v2966, %v2965
        %v3035 = vpack.c.b16 %v2968, %v2967
        %v3036 = vpack.c.b16 %v2970, %v2969
        %v3037 = vpack.c.b16 %v2972, %v2971
        %v3038 = vpack.c.b16 %v2974, %v2973
        %v3039 = vpack.c.b16 %v2976, %v2975
        %v3040 = vpack.c.b16 %v2978, %v2977
        %v3041 = vpack.c.b16 %v2980, %v2979
        %v3042 = vpack.c.b16 %v2982, %v2981
        %v3043 = vpack.c.b16 %v2984, %v2983
        %v3044 = vpack.c.b16 %v2986, %v2985
        %v3045 = vpack.c.b16 %v2988, %v2987
        %v3046 = vpack.c.b16 %v2990, %v2989
        %v3047 = vpack.c.b16 %v2992, %v2991
        %v3048 = vpack.c.b16 %v2994, %v2993
        %v3049 = vpack.c.b16 %v2996, %v2995
        %v3050 = vpack.c.b16 %v2998, %v2997
        %v3051 = vpack.c.b16 %v3000, %v2999
        %v3052 = vpack.c.b16 %v3002, %v3001
        %v3053 = vpack.c.b16 %v3004, %v3003
        %v3054 = vpack.c.b16 %v3006, %v3005
        %v3055 = vpack.c.b16 %v3008, %v3007
        %v3056 = vpack.c.b16 %v3010, %v3009
        %v3057 = vpack.c.b16 %v3012, %v3011
        %v3058 = vpack.c.b16 %v3014, %v3013
        %v3059 = vpack.c.b16 %v3016, %v3015
        %v3060 = vpack.c.b16 %v3018, %v3017
        %v3061 = vpack.c.b16 %v3020, %v3019
        %v3062 = vpack.c.b16 %v3022, %v3021
        %3103 = vmatprep.subr.bf16.mxu0 0
        %3104 = vmatpush1.bf16.msra.mxu0 %v3030
        %3105 = vmatprep.subr.bf16.mxu0 0
        %3106 = vmatpush1.bf16.msra.mxu0 %v3029
        %3107 = vmatprep.subr.bf16.mxu0 0
        %3108 = vmatpush1.bf16.msra.mxu0 %v3028
        %3109 = vmatprep.subr.bf16.mxu0 0
        %3110 = vmatpush1.bf16.msra.mxu0 %v3027
        %3111 = vmatprep.subr.bf16.mxu0 0
        %3112 = vmatpush1.bf16.msra.mxu0 %v3026
        %3113 = vmatprep.subr.bf16.mxu0 0
        %3114 = vmatpush1.bf16.msra.mxu0 %v3025
        %3115 = vmatprep.subr.bf16.mxu0 0
        %3116 = vmatpush1.bf16.msra.mxu0 %v3024
        %3117 = vmatprep.subr.bf16.mxu0 0
        %3118 = vmatpush1.bf16.msra.mxu0 %v3023
        %3119 = vmatprep.subr.bf16.mxu0 0
        %3120 = vmatpush2.bf16.msra.mxu0 %v3038
        %3121 = vmatprep.subr.bf16.mxu0 0
        %3122 = vmatpush2.bf16.msra.mxu0 %v3037
        %3123 = vmatprep.subr.bf16.mxu0 0
        %3124 = vmatpush2.bf16.msra.mxu0 %v3036
        %3125 = vmatprep.subr.bf16.mxu0 0
        %3126 = vmatpush2.bf16.msra.mxu0 %v3035
        %3127 = vmatprep.subr.bf16.mxu0 0
        %3128 = vmatpush2.bf16.msra.mxu0 %v3034
        %3129 = vmatprep.subr.bf16.mxu0 0
        %3130 = vmatpush2.bf16.msra.mxu0 %v3033
        %3131 = vmatprep.subr.bf16.mxu0 0
        %3132 = vmatpush2.bf16.msra.mxu0 %v3032
        %3133 = vmatprep.subr.bf16.mxu0 0
        %3134 = vmatpush2.bf16.msra.mxu0 %v3031
        %3135 = vmatprep.mubr.bf16.mxu0 %v2733
        %3136 = vmatmul.mubr.bf16.gmra.mxu0 %v2721
        %v3137 = vpop.f32.mrf.mxu0
        %v3138 = vadd.f32 %v2014, %v3137
        %v3139 = vpop.f32.mrf.mxu0
        %v3140 = vpop.f32.mrf.mxu0
        %v3141 = vadd.f32 %v2014, %v3140
        %v3142 = vpop.f32.mrf.mxu0
        %3143 = vmatprep.mubr.bf16.mxu0 %v2735
        %3144 = vmatmul.mubr.bf16.gmra.mxu0 %v2722
        %v3145 = vpop.f32.mrf.mxu0
        %v3146 = vadd.f32 %v2014, %v3145
        %v3147 = vpop.f32.mrf.mxu0
        %v3148 = vpop.f32.mrf.mxu0
        %v3149 = vadd.f32 %v2014, %v3148
        %v3150 = vpop.f32.mrf.mxu0
        %3151 = vmatprep.mubr.bf16.mxu0 %v2737
        %3152 = vmatmul.mubr.bf16.gmra.mxu0 %v2723
        %v3153 = vpop.f32.mrf.mxu0
        %v3154 = vadd.f32 %v2014, %v3153
        %v3155 = vpop.f32.mrf.mxu0
        %v3156 = vpop.f32.mrf.mxu0
        %v3157 = vadd.f32 %v2014, %v3156
        %v3158 = vpop.f32.mrf.mxu0
        %3159 = vmatprep.mubr.bf16.mxu0 %v2739
        %3160 = vmatmul.mubr.bf16.gmra.mxu0 %v2724
        %v3161 = vpop.f32.mrf.mxu0
        %v3162 = vadd.f32 %v2014, %v3161
        %v3163 = vpop.f32.mrf.mxu0
        %v3164 = vpop.f32.mrf.mxu0
        %v3165 = vadd.f32 %v2014, %v3164
        %v3166 = vpop.f32.mrf.mxu0
        %3167 = vdwg.mxu0
        %3168 = vmatprep.subr.bf16.mxu0 0
        %3169 = vmatpush1.bf16.msra.mxu0 %v3046
        %3170 = vmatprep.subr.bf16.mxu0 0
        %3171 = vmatpush1.bf16.msra.mxu0 %v3045
        %3172 = vmatprep.subr.bf16.mxu0 0
        %3173 = vmatpush1.bf16.msra.mxu0 %v3044
        %3174 = vmatprep.subr.bf16.mxu0 0
        %3175 = vmatpush1.bf16.msra.mxu0 %v3043
        %3176 = vmatprep.subr.bf16.mxu0 0
        %3177 = vmatpush1.bf16.msra.mxu0 %v3042
        %3178 = vmatprep.subr.bf16.mxu0 0
        %3179 = vmatpush1.bf16.msra.mxu0 %v3041
        %3180 = vmatprep.subr.bf16.mxu0 0
        %3181 = vmatpush1.bf16.msra.mxu0 %v3040
        %3182 = vmatprep.subr.bf16.mxu0 0
        %3183 = vmatpush1.bf16.msra.mxu0 %v3039
        %3184 = vmatprep.subr.bf16.mxu0 0
        %3185 = vmatpush2.bf16.msra.mxu0 %v3054
        %3186 = vmatprep.subr.bf16.mxu0 0
        %3187 = vmatpush2.bf16.msra.mxu0 %v3053
        %3188 = vmatprep.subr.bf16.mxu0 0
        %3189 = vmatpush2.bf16.msra.mxu0 %v3052
        %3190 = vmatprep.subr.bf16.mxu0 0
        %3191 = vmatpush2.bf16.msra.mxu0 %v3051
        %3192 = vmatprep.subr.bf16.mxu0 0
        %3193 = vmatpush2.bf16.msra.mxu0 %v3050
        %3194 = vmatprep.subr.bf16.mxu0 0
        %3195 = vmatpush2.bf16.msra.mxu0 %v3049
        %3196 = vmatprep.subr.bf16.mxu0 0
        %3197 = vmatpush2.bf16.msra.mxu0 %v3048
        %3198 = vmatprep.subr.bf16.mxu0 0
        %3199 = vmatpush2.bf16.msra.mxu0 %v3047
        %3200 = vmatprep.mubr.bf16.mxu0 %v2759
        %3201 = vmatmul.mubr.bf16.gmra.mxu0 %v2746
        %v3202 = vpop.f32.mrf.mxu0
        %v3203 = vadd.f32 %v3138, %v3202
        %v3204 = vpop.f32.mrf.mxu0
        %v3205 = vpop.f32.mrf.mxu0
        %v3206 = vadd.f32 %v3141, %v3205
        %v3207 = vpop.f32.mrf.mxu0
        %3208 = vmatprep.mubr.bf16.mxu0 %v2761
        %3209 = vmatmul.mubr.bf16.gmra.mxu0 %v2748
        %v3210 = vpop.f32.mrf.mxu0
        %v3211 = vadd.f32 %v3146, %v3210
        %v3212 = vpop.f32.mrf.mxu0
        %v3213 = vpop.f32.mrf.mxu0
        %v3214 = vadd.f32 %v3149, %v3213
        %v3215 = vpop.f32.mrf.mxu0
        %3216 = vmatprep.mubr.bf16.mxu0 %v2763
        %3217 = vmatmul.mubr.bf16.gmra.mxu0 %v2750
        %v3218 = vpop.f32.mrf.mxu0
        %v3219 = vadd.f32 %v3154, %v3218
        %v3220 = vpop.f32.mrf.mxu0
        %v3221 = vpop.f32.mrf.mxu0
        %v3222 = vadd.f32 %v3157, %v3221
        %v3223 = vpop.f32.mrf.mxu0
        %3224 = vmatprep.mubr.bf16.mxu0 %v2765
        %3225 = vmatmul.mubr.bf16.gmra.mxu0 %v2752
        %v3226 = vpop.f32.mrf.mxu0
        %v3227 = vadd.f32 %v3162, %v3226
        %v3228 = vpop.f32.mrf.mxu0
        %v3229 = vpop.f32.mrf.mxu0
        %v3230 = vadd.f32 %v3165, %v3229
        %v3231 = vpop.f32.mrf.mxu0
        %3232 = vdwg.mxu0
        %3233 = vmatprep.subr.bf16.mxu0 0
        %3234 = vmatpush1.bf16.msra.mxu0 %v3062
        %3235 = vmatprep.subr.bf16.mxu0 0
        %3236 = vmatpush1.bf16.msra.mxu0 %v3061
        %3237 = vmatprep.subr.bf16.mxu0 0
        %3238 = vmatpush1.bf16.msra.mxu0 %v3060
        %3239 = vmatprep.subr.bf16.mxu0 0
        %3240 = vmatpush1.bf16.msra.mxu0 %v3059
        %3241 = vmatprep.subr.bf16.mxu0 0
        %3242 = vmatpush1.bf16.msra.mxu0 %v3058
        %3243 = vmatprep.subr.bf16.mxu0 0
        %3244 = vmatpush1.bf16.msra.mxu0 %v3057
        %3245 = vmatprep.subr.bf16.mxu0 0
        %3246 = vmatpush1.bf16.msra.mxu0 %v3056
        %3247 = vmatprep.subr.bf16.mxu0 0
        %3248 = vmatpush1.bf16.msra.mxu0 %v3055
        %3249 = vmatprep.subr.bf16.mxu0 0
        %3250 = vmatpush2.bf16.msra.mxu0 0
        %3251 = vmatprep.subr.bf16.mxu0 0
        %3252 = vmatpush2.bf16.msra.mxu0 0
        %3253 = vmatprep.subr.bf16.mxu0 0
        %3254 = vmatpush2.bf16.msra.mxu0 0
        %3255 = vmatprep.subr.bf16.mxu0 0
        %3256 = vmatpush2.bf16.msra.mxu0 0
        %3257 = vmatprep.subr.bf16.mxu0 0
        %3258 = vmatpush2.bf16.msra.mxu0 0
        %3259 = vmatprep.subr.bf16.mxu0 0
        %3260 = vmatpush2.bf16.msra.mxu0 0
        %3261 = vmatprep.subr.bf16.mxu0 0
        %3262 = vmatpush2.bf16.msra.mxu0 0
        %3263 = vmatprep.subr.bf16.mxu0 0
        %3264 = vmatpush2.bf16.msra.mxu0 0
        %3265 = vmatprep.mubr.bf16.mxu0 0
        %3266 = vmatmul.mubr.bf16.gmra.mxu0 %v2772
        %v3267 = vpop.f32.mrf.mxu0
        %v3268 = vadd.f32 %v3203, %v3267
        %v3269 = vpop.f32.mrf.mxu0
        %v3270 = vpop.f32.mrf.mxu0
        %v3271 = vadd.f32 %v3206, %v3270
        %v3272 = vpop.f32.mrf.mxu0
        %3273 = vmatprep.mubr.bf16.mxu0 0
        %3274 = vmatmul.mubr.bf16.gmra.mxu0 %v2774
        %v3275 = vpop.f32.mrf.mxu0
        %v3276 = vadd.f32 %v3211, %v3275
        %v3277 = vpop.f32.mrf.mxu0
        %v3278 = vpop.f32.mrf.mxu0
        %v3279 = vadd.f32 %v3214, %v3278
        %v3280 = vpop.f32.mrf.mxu0
        %3281 = vmatprep.mubr.bf16.mxu0 0
        %3282 = vmatmul.mubr.bf16.gmra.mxu0 %v2776
        %v3283 = vpop.f32.mrf.mxu0
        %v3284 = vadd.f32 %v3219, %v3283
        %v3285 = vpop.f32.mrf.mxu0
        %v3286 = vpop.f32.mrf.mxu0
        %v3287 = vadd.f32 %v3222, %v3286
        %v3288 = vpop.f32.mrf.mxu0
        %3289 = vmatprep.mubr.bf16.mxu0 0
        %3290 = vmatmul.mubr.bf16.gmra.mxu0 %v2778
        %v3291 = vpop.f32.mrf.mxu0
        %v3292 = vadd.f32 %v3227, %v3291
        %v3293 = vpop.f32.mrf.mxu0
        %v3294 = vpop.f32.mrf.mxu0
        %v3295 = vadd.f32 %v3230, %v3294
        %v3296 = vpop.f32.mrf.mxu0
        %3297 = vdwg.mxu0
        %vm3298 = vcmp.gt.f32.partialorder %v3268, 0.0
        %vm3299 = vcmp.gt.f32.partialorder %v3271, 0.0
        %vm3300 = vcmp.gt.f32.partialorder %v3276, 0.0
        %vm3301 = vcmp.gt.f32.partialorder %v3279, 0.0
        %vm3302 = vcmp.gt.f32.partialorder %v3284, 0.0
        %vm3303 = vcmp.gt.f32.partialorder %v3287, 0.0
        %vm3304 = vcmp.gt.f32.partialorder %v3292, 0.0
        %vm3305 = vcmp.gt.f32.partialorder %v3295, 0.0
        %v3306 = vmul.f32 %v3268, 0.01
        %v3307 = vmul.f32 %v3271, 0.01
        %v3308 = vmul.f32 %v3276, 0.01
        %v3309 = vmul.f32 %v3279, 0.01
        %v3310 = vmul.f32 %v3284, 0.01
        %v3311 = vmul.f32 %v3287, 0.01
        %v3312 = vmul.f32 %v3292, 0.01
        %v3313 = vmul.f32 %v3295, 0.01
        %v3314 = vsel %vm3298, %v3268, %v3306
        %v3315 = vsel %vm3299, %v3271, %v3307
        %v3316 = vsel %vm3300, %v3276, %v3308
        %v3317 = vsel %vm3301, %v3279, %v3309
        %v3318 = vsel %vm3302, %v3284, %v3310
        %v3319 = vsel %vm3303, %v3287, %v3311
        %v3320 = vsel %vm3304, %v3292, %v3312
        %v3321 = vsel %vm3305, %v3295, %v3313
        %v3322 = vld [vmem:[%s2 + $0x1e0] sm:$0xf]
        %v3323 = vld [vmem:[%s2 + $0x1e4] sm:$0xf]
        %v3324 = vld [vmem:[%s2 + $0x1e8] sm:$0xf]
        %v3325 = vld [vmem:[%s2 + $0x1ec] sm:$0xf]
        %v3326 = vld [vmem:[%s2 + $0x1f0] sm:$0xf]
        %v3327 = vld [vmem:[%s2 + $0x1f4] sm:$0xf]
        %v3328 = vld [vmem:[%s2 + $0x1f8] sm:$0xf]
        %v3329 = vld [vmem:[%s2 + $0x1fc] sm:$0xf]
        %v3338 = vunpack.c.l.b16 %v3322
        %v3339 = vunpack.c.l.b16 %v3323
        %v3340 = vunpack.c.l.b16 %v3324
        %v3341 = vunpack.c.l.b16 %v3325
        %v3342 = vunpack.c.l.b16 %v3326
        %v3343 = vunpack.c.l.b16 %v3327
        %v3344 = vunpack.c.l.b16 %v3328
        %v3345 = vunpack.c.l.b16 %v3329
        %v3346 = vpack.c.b16 %v3339, %v3338
        %v3347 = vpack.c.b16 %v3341, %v3340
        %v3348 = vpack.c.b16 %v3343, %v3342
        %v3349 = vpack.c.b16 %v3345, %v3344
        %3354 = vmatprep.subr.bf16.mxu0 0
        %3355 = vmatpush1.bf16.msra.mxu0 0
        %3356 = vmatprep.subr.bf16.mxu0 0
        %3357 = vmatpush1.bf16.msra.mxu0 0
        %3358 = vmatprep.subr.bf16.mxu0 0
        %3359 = vmatpush1.bf16.msra.mxu0 0
        %3360 = vmatprep.subr.bf16.mxu0 0
        %3361 = vmatpush1.bf16.msra.mxu0 0
        %3362 = vmatprep.subr.bf16.mxu0 0
        %3363 = vmatpush1.bf16.msra.mxu0 %v3349
        %3364 = vmatprep.subr.bf16.mxu0 0
        %3365 = vmatpush1.bf16.msra.mxu0 %v3348
        %3366 = vmatprep.subr.bf16.mxu0 0
        %3367 = vmatpush1.bf16.msra.mxu0 %v3347
        %3368 = vmatprep.subr.bf16.mxu0 0
        %3369 = vmatpush1.bf16.msra.mxu0 %v3346
        %3370 = vmatprep.subr.bf16.mxu0 0
        %3371 = vmatpush2.bf16.msra.mxu0 0
        %3372 = vmatprep.subr.bf16.mxu0 0
        %3373 = vmatpush2.bf16.msra.mxu0 0
        %3374 = vmatprep.subr.bf16.mxu0 0
        %3375 = vmatpush2.bf16.msra.mxu0 0
        %3376 = vmatprep.subr.bf16.mxu0 0
        %3377 = vmatpush2.bf16.msra.mxu0 0
        %3378 = vmatprep.subr.bf16.mxu0 0
        %3379 = vmatpush2.bf16.msra.mxu0 0
        %3380 = vmatprep.subr.bf16.mxu0 0
        %3381 = vmatpush2.bf16.msra.mxu0 0
        %3382 = vmatprep.subr.bf16.mxu0 0
        %3383 = vmatpush2.bf16.msra.mxu0 0
        %3384 = vmatprep.subr.bf16.mxu0 0
        %3385 = vmatpush2.bf16.msra.mxu0 0
        %3386 = vmatprep.mubr.bf16.mxu0 0
        %3387 = vmatmul.mubr.bf16.gmra.mxu0 %v2189
        %v3388 = vpop.f32.mrf.mxu0
        %v3389 = vadd.f32 0.0, %v3388
        %v3390 = vpop.f32.mrf.mxu0
        %v3391 = vpop.f32.mrf.mxu0
        %v3392 = vadd.f32 0.0, %v3391
        %v3393 = vpop.f32.mrf.mxu0
        %3394 = vmatprep.mubr.bf16.mxu0 0
        %3395 = vmatmul.mubr.bf16.gmra.mxu0 %v2192
        %v3396 = vpop.f32.mrf.mxu0
        %v3397 = vadd.f32 0.0, %v3396
        %v3398 = vpop.f32.mrf.mxu0
        %v3399 = vpop.f32.mrf.mxu0
        %v3400 = vadd.f32 0.0, %v3399
        %v3401 = vpop.f32.mrf.mxu0
        %3402 = vmatprep.mubr.bf16.mxu0 0
        %3403 = vmatmul.mubr.bf16.gmra.mxu0 %v2195
        %v3404 = vpop.f32.mrf.mxu0
        %v3405 = vadd.f32 0.0, %v3404
        %v3406 = vpop.f32.mrf.mxu0
        %v3407 = vpop.f32.mrf.mxu0
        %v3408 = vadd.f32 0.0, %v3407
        %v3409 = vpop.f32.mrf.mxu0
        %3410 = vmatprep.mubr.bf16.mxu0 0
        %3411 = vmatmul.mubr.bf16.gmra.mxu0 %v2198
        %v3412 = vpop.f32.mrf.mxu0
        %v3413 = vadd.f32 0.0, %v3412
        %v3414 = vpop.f32.mrf.mxu0
        %v3415 = vpop.f32.mrf.mxu0
        %v3416 = vadd.f32 0.0, %v3415
        %v3417 = vpop.f32.mrf.mxu0
        %3418 = vdwg.mxu0
        %v3419 = vadd.f32 %v3314, %v3389
        %v3420 = vadd.f32 %v3315, %v3392
        %v3421 = vadd.f32 %v3316, %v3397
        %v3422 = vadd.f32 %v3317, %v3400
        %v3423 = vadd.f32 %v3318, %v3405
        %v3424 = vadd.f32 %v3319, %v3408
        %v3425 = vadd.f32 %v3320, %v3413
        %v3426 = vadd.f32 %v3321, %v3416
        %v3427 = vadd.f32 %v3419, %v2015
        %v3428 = vadd.f32 %v3420, %v2015
        %v3429 = vadd.f32 %v3421, %v2015
        %v3430 = vadd.f32 %v3422, %v2015
        %v3431 = vadd.f32 %v3423, %v2015
        %v3432 = vadd.f32 %v3424, %v2015
        %v3433 = vadd.f32 %v3425, %v2015
        %v3434 = vadd.f32 %v3426, %v2015
        %v3443 = vrot.slane %v3427, 1
        %v3444 = vrot.slane %v3428, 1
        %v3445 = vsel %vm1834, %v3443, %v3444
        %v3446 = vrot.slane %v3429, 1
        %v3447 = vsel %vm1834, %v3444, %v3446
        %v3448 = vrot.slane %v3430, 1
        %v3449 = vsel %vm1834, %v3446, %v3448
        %v3450 = vrot.slane %v3431, 1
        %v3451 = vsel %vm1834, %v3448, %v3450
        %v3452 = vrot.slane %v3432, 1
        %v3453 = vsel %vm1834, %v3450, %v3452
        %v3454 = vrot.slane %v3433, 1
        %v3455 = vsel %vm1834, %v3452, %v3454
        %v3456 = vrot.slane %v3434, 1
        %v3457 = vsel %vm1834, %v3454, %v3456
        %v3467 = vsel %vm1834, %v3456, %v3443
        %v3468 = vmax.f32 %v3427, %v3445
        %v3469 = vmax.f32 %v3428, %v3447
        %v3470 = vmax.f32 %v3429, %v3449
        %v3471 = vmax.f32 %v3430, %v3451
        %v3472 = vmax.f32 %v3431, %v3453
        %v3473 = vmax.f32 %v3432, %v3455
        %v3474 = vmax.f32 %v3433, %v3457
        %v3475 = vmax.f32 %v3434, %v3467
        %v3476 = vld [vmem:[%s6] sm:$0xff]
        %v3477 = vld [vmem:[%s6 + $0x8] sm:$0xff]
        %v3478 = vld [vmem:[%s6 + $0x10] sm:$0xff]
        %v3479 = vld [vmem:[%s6 + $0x18] sm:$0xff]
        %v3481 = vsel %vm728, %v3476, 0
        %v3484 = vsel %vm728, %v3477, 0
        %v3487 = vsel %vm728, %v3478, 0
        %v3490 = vsel %vm728, %v3479, 0
        %3492 = vmatprep.subr.mxu0 0.0
        %3493 = vmatpush1.msra.mxu0 0.0
        %3494 = vmatprep.subr.mxu0 0.0
        %3495 = vmatpush1.msra.mxu0 0.0
        %3496 = vmatprep.subr.mxu0 0.0
        %3497 = vmatpush1.msra.mxu0 0.0
        %3498 = vmatprep.subr.mxu0 0.0
        %3499 = vmatpush1.msra.mxu0 0.0
        %3500 = vmatprep.subr.mxu0 0.0
        %3501 = vmatpush1.msra.mxu0 0.0
        %3502 = vmatprep.subr.mxu0 0.0
        %3503 = vmatpush1.msra.mxu0 0.0
        %3504 = vmatprep.subr.mxu0 0.0
        %3505 = vmatpush1.msra.mxu0 0.0
        %3506 = vmatprep.subr.mxu0 0.0
        %3507 = vmatpush1.msra.mxu0 0.0
        %3508 = vmatprep.subr.mxu0 0.0
        %3509 = vmatpush1.msra.mxu0 %v3475
        %3510 = vmatprep.subr.mxu0 0.0
        %3511 = vmatpush1.msra.mxu0 %v3474
        %3512 = vmatprep.subr.mxu0 0.0
        %3513 = vmatpush1.msra.mxu0 %v3473
        %3514 = vmatprep.subr.mxu0 0.0
        %3515 = vmatpush1.msra.mxu0 %v3472
        %3516 = vmatprep.subr.mxu0 0.0
        %3517 = vmatpush1.msra.mxu0 %v3471
        %3518 = vmatprep.subr.mxu0 0.0
        %3519 = vmatpush1.msra.mxu0 %v3470
        %3520 = vmatprep.subr.mxu0 0.0
        %3521 = vmatpush1.msra.mxu0 %v3469
        %3522 = vmatprep.subr.mxu0 0.0
        %3523 = vmatpush1.msra.mxu0 %v3468
        %3524 = vmatprep.subr.mxu0 0.0
        %3525 = vmatpush2.msra.mxu0 0.0
        %3526 = vmatprep.subr.mxu0 0.0
        %3527 = vmatpush2.msra.mxu0 0.0
        %3528 = vmatprep.subr.mxu0 0.0
        %3529 = vmatpush2.msra.mxu0 0.0
        %3530 = vmatprep.subr.mxu0 0.0
        %3531 = vmatpush2.msra.mxu0 0.0
        %3532 = vmatprep.subr.mxu0 0.0
        %3533 = vmatpush2.msra.mxu0 0.0
        %3534 = vmatprep.subr.mxu0 0.0
        %3535 = vmatpush2.msra.mxu0 0.0
        %3536 = vmatprep.subr.mxu0 0.0
        %3537 = vmatpush2.msra.mxu0 0.0
        %3538 = vmatprep.subr.mxu0 0.0
        %3539 = vmatpush2.msra.mxu0 0.0
        %3540 = vmatprep.subr.mxu0 0.0
        %3541 = vmatpush2.msra.mxu0 0.0
        %3542 = vmatprep.subr.mxu0 0.0
        %3543 = vmatpush2.msra.mxu0 0.0
        %3544 = vmatprep.subr.mxu0 0.0
        %3545 = vmatpush2.msra.mxu0 0.0
        %3546 = vmatprep.subr.mxu0 0.0
        %3547 = vmatpush2.msra.mxu0 0.0
        %3548 = vmatprep.subr.mxu0 0.0
        %3549 = vmatpush2.msra.mxu0 0.0
        %3550 = vmatprep.subr.mxu0 0.0
        %3551 = vmatpush2.msra.mxu0 0.0
        %3552 = vmatprep.subr.mxu0 0.0
        %3553 = vmatpush2.msra.mxu0 0.0
        %3554 = vmatprep.subr.mxu0 0.0
        %3555 = vmatpush2.msra.mxu0 0.0
        %3556 = vmatprep.mubr.f32.mxu0 0.0
        %3557 = vmatmul.mubr.f32.gmra.mxu0 %v3481
        %v3558 = vpop.f32.mrf.mxu0
        %v3559 = vadd.f32 0.0, %v3558
        %v3560 = vpop.f32.mrf.mxu0
        %3561 = vmatprep.mubr.f32.mxu0 0.0
        %3562 = vmatmul.mubr.f32.gmra.mxu0 %v3484
        %v3563 = vpop.f32.mrf.mxu0
        %v3564 = vadd.f32 0.0, %v3563
        %v3565 = vpop.f32.mrf.mxu0
        %3566 = vmatprep.mubr.f32.mxu0 0.0
        %3567 = vmatmul.mubr.f32.gmra.mxu0 %v3487
        %v3568 = vpop.f32.mrf.mxu0
        %v3569 = vadd.f32 0.0, %v3568
        %v3570 = vpop.f32.mrf.mxu0
        %3571 = vmatprep.mubr.f32.mxu0 0.0
        %3572 = vmatmul.mubr.f32.gmra.mxu0 %v3490
        %v3573 = vpop.f32.mrf.mxu0
        %v3574 = vadd.f32 0.0, %v3573
        %v3575 = vpop.f32.mrf.mxu0
        %3576 = vdwg.mxu0
        %s3577 = scalar_lea.vmem [#allocation7], 6
        %v3578 = vld [vmem:[%s3577] ss:$8 sm:$0x3]
        %s3579 = scalar_lea.vmem [#allocation7], 7
        %v3580 = vld [vmem:[%s3579] ss:$8 sm:$0x3]
        %s3581 = scalar_lea.vmem [#allocation7], 16
        %v3582 = vld [vmem:[%s3581] ss:$8 sm:$0x3]
        %v3583 = vpack.c.bf16 %v3564, %v3559
        %v3584 = vpack.c.bf16 %v3574, %v3569
        %v3587 = vsel %vm1398, %v2280, %v2280
        %v3588 = vrot.slane %v3583, 2
        %v3589 = vsel %vm1398, %v2280, %v3588
        %v3590 = vrot.slane %v3584, 2
        %v3591 = vsel %vm1398, %v3588, %v3590
        %v3595 = vsel %vm2555, %v2556, %v2556
        %v3596 = vrot.slane %v3583, 4
        %v3597 = vsel %vm2555, %v2556, %v3596
        %v3598 = vrot.slane %v3584, 4
        %v3599 = vsel %vm2555, %v3596, %v3598
        %vm3603 = vcmask 1041408
        %v3604 = vrot.slane 0, 6
        %v3605 = vsel %vm3603, %v3604, %v3604
        %v3606 = vrot.slane %v3583, 6
        %v3607 = vsel %vm3603, %v3604, %v3606
        %v3608 = vrot.slane %v3584, 6
        %v3609 = vsel %vm3603, %v3606, %v3608
        %v3613 = vld [vmem:[#allocation2] sm:$0xff]
        %v3614 = vld [vmem:[#allocation2 + $0x8] sm:$0xff]
        %v3615 = vld [vmem:[#allocation2 + $0x10] sm:$0xff]
        %v3616 = vld [vmem:[#allocation2 + $0x18] sm:$0xff]
        %v3617 = vld [vmem:[#allocation2 + $0x20] sm:$0xff]
        %v3618 = vld [vmem:[#allocation2 + $0x28] sm:$0xff]
        %v3619 = vld [vmem:[#allocation2 + $0x30] sm:$0xff]
        %v3620 = vld [vmem:[#allocation2 + $0x38] sm:$0xff]
        %v3621 = vld [vmem:[#allocation2 + $0x40] sm:$0xff]
        %v3622 = vld [vmem:[#allocation2 + $0x48] sm:$0xff]
        %v3623 = vld [vmem:[#allocation2 + $0x50] sm:$0xff]
        %v3624 = vld [vmem:[#allocation2 + $0x58] sm:$0xff]
        %v3625 = vld [vmem:[#allocation2 + $0x60] sm:$0xff]
        %v3626 = vld [vmem:[#allocation2 + $0x68] sm:$0xff]
        %v3627 = vld [vmem:[#allocation2 + $0x70] sm:$0xff]
        %v3628 = vld [vmem:[#allocation2 + $0x78] sm:$0xff]
        %v3629 = vld [vmem:[#allocation2 + $0x80] sm:$0xff]
        %v3630 = vld [vmem:[#allocation2 + $0x88] sm:$0xff]
        %v3631 = vld [vmem:[#allocation2 + $0x90] sm:$0xff]
        %v3632 = vld [vmem:[#allocation2 + $0x98] sm:$0xff]
        %v3633 = vld [vmem:[#allocation2 + $0xa0] sm:$0xff]
        %v3634 = vld [vmem:[#allocation2 + $0xa8] sm:$0xff]
        %v3635 = vld [vmem:[#allocation2 + $0xb0] sm:$0xff]
        %v3636 = vld [vmem:[#allocation2 + $0xb8] sm:$0xff]
        %v3637 = vld [vmem:[#allocation2 + $0xc0] sm:$0xff]
        %v3638 = vld [vmem:[#allocation2 + $0xc8] sm:$0xff]
        %v3639 = vld [vmem:[#allocation2 + $0xd0] sm:$0xff]
        %v3640 = vld [vmem:[#allocation2 + $0xd8] sm:$0xff]
        %v3641 = vld [vmem:[#allocation2 + $0xe0] sm:$0xff]
        %v3642 = vld [vmem:[#allocation2 + $0xe8] sm:$0xff]
        %v3643 = vld [vmem:[#allocation2 + $0xf0] sm:$0xff]
        %v3644 = vld [vmem:[#allocation2 + $0xf8] sm:$0xff]
        %v3645 = vld [vmem:[#allocation2 + $0x100] sm:$0xff]
        %v3646 = vld [vmem:[#allocation2 + $0x108] sm:$0xff]
        %v3647 = vld [vmem:[#allocation2 + $0x110] sm:$0xff]
        %v3648 = vld [vmem:[#allocation2 + $0x118] sm:$0xff]
        %v3649 = vld [vmem:[#allocation2 + $0x120] sm:$0xff]
        %v3650 = vld [vmem:[#allocation2 + $0x128] sm:$0xff]
        %v3651 = vld [vmem:[#allocation2 + $0x130] sm:$0xff]
        %v3652 = vld [vmem:[#allocation2 + $0x138] sm:$0xff]
        %v3653 = vld [vmem:[#allocation2 + $0x140] sm:$0xff]
        %v3654 = vld [vmem:[#allocation2 + $0x148] sm:$0xff]
        %v3655 = vld [vmem:[#allocation2 + $0x150] sm:$0xff]
        %v3656 = vld [vmem:[#allocation2 + $0x158] sm:$0xff]
        %v3657 = vld [vmem:[#allocation2 + $0x160] sm:$0xff]
        %v3658 = vld [vmem:[#allocation2 + $0x168] sm:$0xff]
        %v3659 = vld [vmem:[#allocation2 + $0x170] sm:$0xff]
        %v3660 = vld [vmem:[#allocation2 + $0x178] sm:$0xff]
        %v3661 = vld [vmem:[#allocation2 + $0x180] sm:$0xff]
        %v3662 = vld [vmem:[#allocation2 + $0x188] sm:$0xff]
        %v3663 = vld [vmem:[#allocation2 + $0x190] sm:$0xff]
        %v3664 = vld [vmem:[#allocation2 + $0x198] sm:$0xff]
        %v3665 = vld [vmem:[#allocation2 + $0x1a0] sm:$0xff]
        %v3666 = vld [vmem:[#allocation2 + $0x1a8] sm:$0xff]
        %v3667 = vld [vmem:[#allocation2 + $0x1b0] sm:$0xff]
        %v3668 = vld [vmem:[#allocation2 + $0x1b8] sm:$0xff]
        %v3669 = vld [vmem:[#allocation2 + $0x1c0] sm:$0xff]
        %v3670 = vld [vmem:[#allocation2 + $0x1c8] sm:$0xff]
        %v3671 = vld [vmem:[#allocation2 + $0x1d0] sm:$0xff]
        %v3672 = vld [vmem:[#allocation2 + $0x1d8] sm:$0xff]
        %v3673 = vld [vmem:[#allocation2 + $0x1e0] sm:$0xff]
        %v3674 = vld [vmem:[#allocation2 + $0x1e8] sm:$0xff]
        %v3675 = vld [vmem:[#allocation2 + $0x1f0] sm:$0xff]
        %v3676 = vld [vmem:[#allocation2 + $0x1f8] sm:$0xff]
        %v3677 = vld [vmem:[#allocation2 + $0x200] sm:$0xff]
        %v3678 = vld [vmem:[#allocation2 + $0x208] sm:$0xff]
        %v3679 = vld [vmem:[#allocation2 + $0x210] sm:$0xff]
        %v3680 = vld [vmem:[#allocation2 + $0x218] sm:$0xff]
        %v3681 = vld [vmem:[#allocation2 + $0x220] sm:$0xff]
        %v3682 = vld [vmem:[#allocation2 + $0x228] sm:$0xff]
        %v3683 = vld [vmem:[#allocation2 + $0x230] sm:$0xff]
        %v3684 = vld [vmem:[#allocation2 + $0x238] sm:$0xff]
        %v3685 = vld [vmem:[#allocation2 + $0x240] sm:$0xff]
        %v3686 = vld [vmem:[#allocation2 + $0x248] sm:$0xff]
        %v3687 = vld [vmem:[#allocation2 + $0x250] sm:$0xff]
        %v3688 = vld [vmem:[#allocation2 + $0x258] sm:$0xff]
        %v3689 = vld [vmem:[#allocation2 + $0x260] sm:$0xff]
        %v3690 = vld [vmem:[#allocation2 + $0x268] sm:$0xff]
        %v3691 = vld [vmem:[#allocation2 + $0x270] sm:$0xff]
        %v3692 = vld [vmem:[#allocation2 + $0x278] sm:$0xff]
        %v3694 = vlaneseq
        %v3695 = vshrl.u32 %v3694, 7
        %v3696 = vsub.s32 0, %v3695
        %v3697 = vrot.slane %v3578, %v3696
        %v3698 = vlaneseq
        %v3699 = vshrl.u32 %v3698, 7
        %v3700 = vsub.s32 1, %v3699
        %v3701 = vrot.slane %v3578, %v3700
        %v3784 = vunpack.c.l.b16 %v3613
        %v3785 = vunpack.c.h.b16 %v3613
        %v3786 = vunpack.c.l.b16 %v3614
        %v3787 = vunpack.c.h.b16 %v3614
        %v3788 = vunpack.c.l.b16 %v3615
        %v3789 = vunpack.c.h.b16 %v3615
        %v3790 = vunpack.c.l.b16 %v3616
        %v3791 = vunpack.c.h.b16 %v3616
        %v3792 = vunpack.c.l.b16 %v3617
        %v3793 = vunpack.c.h.b16 %v3617
        %v3794 = vunpack.c.l.b16 %v3618
        %v3795 = vunpack.c.h.b16 %v3618
        %v3796 = vunpack.c.l.b16 %v3619
        %v3797 = vunpack.c.h.b16 %v3619
        %v3798 = vunpack.c.l.b16 %v3620
        %v3799 = vunpack.c.h.b16 %v3620
        %v3800 = vunpack.c.l.b16 %v3621
        %v3801 = vunpack.c.h.b16 %v3621
        %v3802 = vunpack.c.l.b16 %v3622
        %v3803 = vunpack.c.h.b16 %v3622
        %v3804 = vunpack.c.l.b16 %v3623
        %v3805 = vunpack.c.h.b16 %v3623
        %v3806 = vunpack.c.l.b16 %v3624
        %v3807 = vunpack.c.h.b16 %v3624
        %v3808 = vunpack.c.l.b16 %v3625
        %v3809 = vunpack.c.h.b16 %v3625
        %v3810 = vunpack.c.l.b16 %v3626
        %v3811 = vunpack.c.h.b16 %v3626
        %v3812 = vunpack.c.l.b16 %v3627
        %v3813 = vunpack.c.h.b16 %v3627
        %v3814 = vunpack.c.l.b16 %v3628
        %v3815 = vunpack.c.h.b16 %v3628
        %v3816 = vunpack.c.l.b16 %v3629
        %v3817 = vunpack.c.h.b16 %v3629
        %v3818 = vunpack.c.l.b16 %v3630
        %v3819 = vunpack.c.h.b16 %v3630
        %v3820 = vunpack.c.l.b16 %v3631
        %v3821 = vunpack.c.h.b16 %v3631
        %v3822 = vunpack.c.l.b16 %v3632
        %v3823 = vunpack.c.h.b16 %v3632
        %v3824 = vunpack.c.l.b16 %v3633
        %v3825 = vunpack.c.h.b16 %v3633
        %v3826 = vunpack.c.l.b16 %v3634
        %v3827 = vunpack.c.h.b16 %v3634
        %v3828 = vunpack.c.l.b16 %v3635
        %v3829 = vunpack.c.h.b16 %v3635
        %v3830 = vunpack.c.l.b16 %v3636
        %v3831 = vunpack.c.h.b16 %v3636
        %v3832 = vunpack.c.l.b16 %v3637
        %v3833 = vunpack.c.h.b16 %v3637
        %v3834 = vunpack.c.l.b16 %v3638
        %v3835 = vunpack.c.h.b16 %v3638
        %v3836 = vunpack.c.l.b16 %v3639
        %v3837 = vunpack.c.h.b16 %v3639
        %v3838 = vunpack.c.l.b16 %v3640
        %v3839 = vunpack.c.h.b16 %v3640
        %v3840 = vunpack.c.l.b16 %v3641
        %v3841 = vunpack.c.h.b16 %v3641
        %v3842 = vunpack.c.l.b16 %v3642
        %v3843 = vunpack.c.h.b16 %v3642
        %v3844 = vunpack.c.l.b16 %v3643
        %v3845 = vunpack.c.h.b16 %v3643
        %v3846 = vunpack.c.l.b16 %v3644
        %v3847 = vunpack.c.h.b16 %v3644
        %v3848 = vunpack.c.l.b16 %v3645
        %v3849 = vunpack.c.h.b16 %v3645
        %v3850 = vunpack.c.l.b16 %v3646
        %v3851 = vunpack.c.h.b16 %v3646
        %v3852 = vunpack.c.l.b16 %v3647
        %v3853 = vunpack.c.h.b16 %v3647
        %v3854 = vunpack.c.l.b16 %v3648
        %v3855 = vunpack.c.h.b16 %v3648
        %v3856 = vunpack.c.l.b16 %v3649
        %v3857 = vunpack.c.h.b16 %v3649
        %v3858 = vunpack.c.l.b16 %v3650
        %v3859 = vunpack.c.h.b16 %v3650
        %v3860 = vunpack.c.l.b16 %v3651
        %v3861 = vunpack.c.h.b16 %v3651
        %v3862 = vunpack.c.l.b16 %v3652
        %v3863 = vunpack.c.h.b16 %v3652
        %v3864 = vunpack.c.l.b16 %v3653
        %v3865 = vunpack.c.h.b16 %v3653
        %v3866 = vunpack.c.l.b16 %v3654
        %v3867 = vunpack.c.h.b16 %v3654
        %v3868 = vunpack.c.l.b16 %v3655
        %v3869 = vunpack.c.h.b16 %v3655
        %v3870 = vunpack.c.l.b16 %v3656
        %v3871 = vunpack.c.h.b16 %v3656
        %v3872 = vunpack.c.l.b16 %v3657
        %v3873 = vunpack.c.h.b16 %v3657
        %v3874 = vunpack.c.l.b16 %v3658
        %v3875 = vunpack.c.h.b16 %v3658
        %v3876 = vunpack.c.l.b16 %v3659
        %v3877 = vunpack.c.h.b16 %v3659
        %v3878 = vunpack.c.l.b16 %v3660
        %v3879 = vunpack.c.h.b16 %v3660
        %v3880 = vunpack.c.l.b16 %v3661
        %v3881 = vunpack.c.h.b16 %v3661
        %v3882 = vunpack.c.l.b16 %v3662
        %v3883 = vunpack.c.h.b16 %v3662
        %v3884 = vunpack.c.l.b16 %v3663
        %v3885 = vunpack.c.h.b16 %v3663
        %v3886 = vunpack.c.l.b16 %v3664
        %v3887 = vunpack.c.h.b16 %v3664
        %v3888 = vunpack.c.l.b16 %v3665
        %v3889 = vunpack.c.h.b16 %v3665
        %v3890 = vunpack.c.l.b16 %v3666
        %v3891 = vunpack.c.h.b16 %v3666
        %v3892 = vunpack.c.l.b16 %v3667
        %v3893 = vunpack.c.h.b16 %v3667
        %v3894 = vunpack.c.l.b16 %v3668
        %v3895 = vunpack.c.h.b16 %v3668
        %v3896 = vunpack.c.l.b16 %v3669
        %v3897 = vunpack.c.h.b16 %v3669
        %v3898 = vunpack.c.l.b16 %v3670
        %v3899 = vunpack.c.h.b16 %v3670
        %v3900 = vunpack.c.l.b16 %v3671
        %v3901 = vunpack.c.h.b16 %v3671
        %v3902 = vunpack.c.l.b16 %v3672
        %v3903 = vunpack.c.h.b16 %v3672
        %v3904 = vunpack.c.l.b16 %v3673
        %v3905 = vunpack.c.h.b16 %v3673
        %v3906 = vunpack.c.l.b16 %v3674
        %v3907 = vunpack.c.h.b16 %v3674
        %v3908 = vunpack.c.l.b16 %v3675
        %v3909 = vunpack.c.h.b16 %v3675
        %v3910 = vunpack.c.l.b16 %v3676
        %v3911 = vunpack.c.h.b16 %v3676
        %v3912 = vunpack.c.l.b16 %v3677
        %v3913 = vunpack.c.h.b16 %v3677
        %v3914 = vunpack.c.l.b16 %v3678
        %v3915 = vunpack.c.h.b16 %v3678
        %v3916 = vunpack.c.l.b16 %v3679
        %v3917 = vunpack.c.h.b16 %v3679
        %v3918 = vunpack.c.l.b16 %v3680
        %v3919 = vunpack.c.h.b16 %v3680
        %v3920 = vunpack.c.l.b16 %v3681
        %v3921 = vunpack.c.h.b16 %v3681
        %v3922 = vunpack.c.l.b16 %v3682
        %v3923 = vunpack.c.h.b16 %v3682
        %v3924 = vunpack.c.l.b16 %v3683
        %v3925 = vunpack.c.h.b16 %v3683
        %v3926 = vunpack.c.l.b16 %v3684
        %v3927 = vunpack.c.h.b16 %v3684
        %v3928 = vunpack.c.l.b16 %v3685
        %v3929 = vunpack.c.h.b16 %v3685
        %v3930 = vunpack.c.l.b16 %v3686
        %v3931 = vunpack.c.h.b16 %v3686
        %v3932 = vunpack.c.l.b16 %v3687
        %v3933 = vunpack.c.h.b16 %v3687
        %v3934 = vunpack.c.l.b16 %v3688
        %v3935 = vunpack.c.h.b16 %v3688
        %v3936 = vunpack.c.l.b16 %v3689
        %v3937 = vunpack.c.h.b16 %v3689
        %v3938 = vunpack.c.l.b16 %v3690
        %v3939 = vunpack.c.h.b16 %v3690
        %v3940 = vunpack.c.l.b16 %v3691
        %v3941 = vunpack.c.h.b16 %v3691
        %v3942 = vunpack.c.l.b16 %v3692
        %v3943 = vunpack.c.h.b16 %v3692
        %v3944 = vpack.c.b16 %v3786, %v3784
        %v3945 = vpack.c.b16 %v3787, %v3785
        %v3946 = vpack.c.b16 %v3790, %v3788
        %v3947 = vpack.c.b16 %v3791, %v3789
        %v3948 = vpack.c.b16 %v3794, %v3792
        %v3949 = vpack.c.b16 %v3795, %v3793
        %v3950 = vpack.c.b16 %v3798, %v3796
        %v3951 = vpack.c.b16 %v3799, %v3797
        %v3952 = vpack.c.b16 %v3802, %v3800
        %v3953 = vpack.c.b16 %v3803, %v3801
        %v3954 = vpack.c.b16 %v3806, %v3804
        %v3955 = vpack.c.b16 %v3807, %v3805
        %v3956 = vpack.c.b16 %v3810, %v3808
        %v3957 = vpack.c.b16 %v3811, %v3809
        %v3958 = vpack.c.b16 %v3814, %v3812
        %v3959 = vpack.c.b16 %v3815, %v3813
        %v3960 = vpack.c.b16 %v3818, %v3816
        %v3961 = vpack.c.b16 %v3819, %v3817
        %v3962 = vpack.c.b16 %v3822, %v3820
        %v3963 = vpack.c.b16 %v3823, %v3821
        %v3964 = vpack.c.b16 %v3826, %v3824
        %v3965 = vpack.c.b16 %v3827, %v3825
        %v3966 = vpack.c.b16 %v3830, %v3828
        %v3967 = vpack.c.b16 %v3831, %v3829
        %v3968 = vpack.c.b16 %v3834, %v3832
        %v3969 = vpack.c.b16 %v3835, %v3833
        %v3970 = vpack.c.b16 %v3838, %v3836
        %v3971 = vpack.c.b16 %v3839, %v3837
        %v3972 = vpack.c.b16 %v3842, %v3840
        %v3973 = vpack.c.b16 %v3843, %v3841
        %v3974 = vpack.c.b16 %v3846, %v3844
        %v3975 = vpack.c.b16 %v3847, %v3845
        %v3976 = vpack.c.b16 %v3850, %v3848
        %v3977 = vpack.c.b16 %v3851, %v3849
        %v3978 = vpack.c.b16 %v3854, %v3852
        %v3979 = vpack.c.b16 %v3855, %v3853
        %v3980 = vpack.c.b16 %v3858, %v3856
        %v3981 = vpack.c.b16 %v3859, %v3857
        %v3982 = vpack.c.b16 %v3862, %v3860
        %v3983 = vpack.c.b16 %v3863, %v3861
        %v3984 = vpack.c.b16 %v3866, %v3864
        %v3985 = vpack.c.b16 %v3867, %v3865
        %v3986 = vpack.c.b16 %v3870, %v3868
        %v3987 = vpack.c.b16 %v3871, %v3869
        %v3988 = vpack.c.b16 %v3874, %v3872
        %v3989 = vpack.c.b16 %v3875, %v3873
        %v3990 = vpack.c.b16 %v3878, %v3876
        %v3991 = vpack.c.b16 %v3879, %v3877
        %v3992 = vpack.c.b16 %v3882, %v3880
        %v3993 = vpack.c.b16 %v3883, %v3881
        %v3994 = vpack.c.b16 %v3886, %v3884
        %v3995 = vpack.c.b16 %v3887, %v3885
        %v3996 = vpack.c.b16 %v3890, %v3888
        %v3997 = vpack.c.b16 %v3891, %v3889
        %v3998 = vpack.c.b16 %v3894, %v3892
        %v3999 = vpack.c.b16 %v3895, %v3893
        %v4000 = vpack.c.b16 %v3898, %v3896
        %v4001 = vpack.c.b16 %v3899, %v3897
        %v4002 = vpack.c.b16 %v3902, %v3900
        %v4003 = vpack.c.b16 %v3903, %v3901
        %v4004 = vpack.c.b16 %v3906, %v3904
        %v4005 = vpack.c.b16 %v3907, %v3905
        %v4006 = vpack.c.b16 %v3910, %v3908
        %v4007 = vpack.c.b16 %v3911, %v3909
        %v4008 = vpack.c.b16 %v3914, %v3912
        %v4009 = vpack.c.b16 %v3915, %v3913
        %v4010 = vpack.c.b16 %v3918, %v3916
        %v4011 = vpack.c.b16 %v3919, %v3917
        %v4012 = vpack.c.b16 %v3922, %v3920
        %v4013 = vpack.c.b16 %v3923, %v3921
        %v4014 = vpack.c.b16 %v3926, %v3924
        %v4015 = vpack.c.b16 %v3927, %v3925
        %v4016 = vpack.c.b16 %v3930, %v3928
        %v4017 = vpack.c.b16 %v3931, %v3929
        %v4018 = vpack.c.b16 %v3934, %v3932
        %v4019 = vpack.c.b16 %v3935, %v3933
        %v4020 = vpack.c.b16 %v3938, %v3936
        %v4021 = vpack.c.b16 %v3939, %v3937
        %v4022 = vpack.c.b16 %v3942, %v3940
        %v4023 = vpack.c.b16 %v3943, %v3941
        %4104 = vmatprep.subr.bf16.mxu0 %v3959
        %4105 = vmatpush1.bf16.msra.mxu0 %v3958
        %4106 = vmatprep.subr.bf16.mxu0 %v3957
        %4107 = vmatpush1.bf16.msra.mxu0 %v3956
        %4108 = vmatprep.subr.bf16.mxu0 %v3955
        %4109 = vmatpush1.bf16.msra.mxu0 %v3954
        %4110 = vmatprep.subr.bf16.mxu0 %v3953
        %4111 = vmatpush1.bf16.msra.mxu0 %v3952
        %4112 = vmatprep.subr.bf16.mxu0 %v3951
        %4113 = vmatpush1.bf16.msra.mxu0 %v3950
        %4114 = vmatprep.subr.bf16.mxu0 %v3949
        %4115 = vmatpush1.bf16.msra.mxu0 %v3948
        %4116 = vmatprep.subr.bf16.mxu0 %v3947
        %4117 = vmatpush1.bf16.msra.mxu0 %v3946
        %4118 = vmatprep.subr.bf16.mxu0 %v3945
        %4119 = vmatpush1.bf16.msra.mxu0 %v3944
        %4120 = vmatprep.subr.bf16.mxu0 %v3975
        %4121 = vmatpush2.bf16.msra.mxu0 %v3974
        %4122 = vmatprep.subr.bf16.mxu0 %v3973
        %4123 = vmatpush2.bf16.msra.mxu0 %v3972
        %4124 = vmatprep.subr.bf16.mxu0 %v3971
        %4125 = vmatpush2.bf16.msra.mxu0 %v3970
        %4126 = vmatprep.subr.bf16.mxu0 %v3969
        %4127 = vmatpush2.bf16.msra.mxu0 %v3968
        %4128 = vmatprep.subr.bf16.mxu0 %v3967
        %4129 = vmatpush2.bf16.msra.mxu0 %v3966
        %4130 = vmatprep.subr.bf16.mxu0 %v3965
        %4131 = vmatpush2.bf16.msra.mxu0 %v3964
        %4132 = vmatprep.subr.bf16.mxu0 %v3963
        %4133 = vmatpush2.bf16.msra.mxu0 %v3962
        %4134 = vmatprep.subr.bf16.mxu0 %v3961
        %4135 = vmatpush2.bf16.msra.mxu0 %v3960
        %4136 = vmatprep.mubr.bf16.mxu0 %v3587
        %4137 = vmatmul.mubr.bf16.gmra.mxu0 0
        %v4138 = vpop.f32.mrf.mxu0
        %v4139 = vadd.f32 %v3697, %v4138
        %v4140 = vpop.f32.mrf.mxu0
        %v4141 = vadd.f32 %v3701, %v4140
        %v4142 = vpop.f32.mrf.mxu0
        %v4143 = vadd.f32 %v3697, %v4142
        %v4144 = vpop.f32.mrf.mxu0
        %v4145 = vadd.f32 %v3701, %v4144
        %4146 = vmatprep.mubr.bf16.mxu0 %v3589
        %4147 = vmatmul.mubr.bf16.gmra.mxu0 0
        %v4148 = vpop.f32.mrf.mxu0
        %v4149 = vadd.f32 %v3697, %v4148
        %v4150 = vpop.f32.mrf.mxu0
        %v4151 = vadd.f32 %v3701, %v4150
        %v4152 = vpop.f32.mrf.mxu0
        %v4153 = vadd.f32 %v3697, %v4152
        %v4154 = vpop.f32.mrf.mxu0
        %v4155 = vadd.f32 %v3701, %v4154
        %4156 = vmatprep.mubr.bf16.mxu0 %v3591
        %4157 = vmatmul.mubr.bf16.gmra.mxu0 %v3583
        %v4158 = vpop.f32.mrf.mxu0
        %v4159 = vadd.f32 %v3697, %v4158
        %v4160 = vpop.f32.mrf.mxu0
        %v4161 = vadd.f32 %v3701, %v4160
        %v4162 = vpop.f32.mrf.mxu0
        %v4163 = vadd.f32 %v3697, %v4162
        %v4164 = vpop.f32.mrf.mxu0
        %v4165 = vadd.f32 %v3701, %v4164
        %4166 = vdwg.mxu0
        %4167 = vmatprep.subr.bf16.mxu0 %v3991
        %4168 = vmatpush1.bf16.msra.mxu0 %v3990
        %4169 = vmatprep.subr.bf16.mxu0 %v3989
        %4170 = vmatpush1.bf16.msra.mxu0 %v3988
        %4171 = vmatprep.subr.bf16.mxu0 %v3987
        %4172 = vmatpush1.bf16.msra.mxu0 %v3986
        %4173 = vmatprep.subr.bf16.mxu0 %v3985
        %4174 = vmatpush1.bf16.msra.mxu0 %v3984
        %4175 = vmatprep.subr.bf16.mxu0 %v3983
        %4176 = vmatpush1.bf16.msra.mxu0 %v3982
        %4177 = vmatprep.subr.bf16.mxu0 %v3981
        %4178 = vmatpush1.bf16.msra.mxu0 %v3980
        %4179 = vmatprep.subr.bf16.mxu0 %v3979
        %4180 = vmatpush1.bf16.msra.mxu0 %v3978
        %4181 = vmatprep.subr.bf16.mxu0 %v3977
        %4182 = vmatpush1.bf16.msra.mxu0 %v3976
        %4183 = vmatprep.subr.bf16.mxu0 %v4007
        %4184 = vmatpush2.bf16.msra.mxu0 %v4006
        %4185 = vmatprep.subr.bf16.mxu0 %v4005
        %4186 = vmatpush2.bf16.msra.mxu0 %v4004
        %4187 = vmatprep.subr.bf16.mxu0 %v4003
        %4188 = vmatpush2.bf16.msra.mxu0 %v4002
        %4189 = vmatprep.subr.bf16.mxu0 %v4001
        %4190 = vmatpush2.bf16.msra.mxu0 %v4000
        %4191 = vmatprep.subr.bf16.mxu0 %v3999
        %4192 = vmatpush2.bf16.msra.mxu0 %v3998
        %4193 = vmatprep.subr.bf16.mxu0 %v3997
        %4194 = vmatpush2.bf16.msra.mxu0 %v3996
        %4195 = vmatprep.subr.bf16.mxu0 %v3995
        %4196 = vmatpush2.bf16.msra.mxu0 %v3994
        %4197 = vmatprep.subr.bf16.mxu0 %v3993
        %4198 = vmatpush2.bf16.msra.mxu0 %v3992
        %4199 = vmatprep.mubr.bf16.mxu0 %v3605
        %4200 = vmatmul.mubr.bf16.gmra.mxu0 %v3595
        %v4201 = vpop.f32.mrf.mxu0
        %v4202 = vadd.f32 %v4139, %v4201
        %v4203 = vpop.f32.mrf.mxu0
        %v4204 = vadd.f32 %v4141, %v4203
        %v4205 = vpop.f32.mrf.mxu0
        %v4206 = vadd.f32 %v4143, %v4205
        %v4207 = vpop.f32.mrf.mxu0
        %v4208 = vadd.f32 %v4145, %v4207
        %4209 = vmatprep.mubr.bf16.mxu0 %v3607
        %4210 = vmatmul.mubr.bf16.gmra.mxu0 %v3597
        %v4211 = vpop.f32.mrf.mxu0
        %v4212 = vadd.f32 %v4149, %v4211
        %v4213 = vpop.f32.mrf.mxu0
        %v4214 = vadd.f32 %v4151, %v4213
        %v4215 = vpop.f32.mrf.mxu0
        %v4216 = vadd.f32 %v4153, %v4215
        %v4217 = vpop.f32.mrf.mxu0
        %v4218 = vadd.f32 %v4155, %v4217
        %4219 = vmatprep.mubr.bf16.mxu0 %v3609
        %4220 = vmatmul.mubr.bf16.gmra.mxu0 %v3599
        %v4221 = vpop.f32.mrf.mxu0
        %v4222 = vadd.f32 %v4159, %v4221
        %v4223 = vpop.f32.mrf.mxu0
        %v4224 = vadd.f32 %v4161, %v4223
        %v4225 = vpop.f32.mrf.mxu0
        %v4226 = vadd.f32 %v4163, %v4225
        %v4227 = vpop.f32.mrf.mxu0
        %v4228 = vadd.f32 %v4165, %v4227
        %4229 = vdwg.mxu0
        %4230 = vmatprep.subr.bf16.mxu0 %v4023
        %4231 = vmatpush1.bf16.msra.mxu0 %v4022
        %4232 = vmatprep.subr.bf16.mxu0 %v4021
        %4233 = vmatpush1.bf16.msra.mxu0 %v4020
        %4234 = vmatprep.subr.bf16.mxu0 %v4019
        %4235 = vmatpush1.bf16.msra.mxu0 %v4018
        %4236 = vmatprep.subr.bf16.mxu0 %v4017
        %4237 = vmatpush1.bf16.msra.mxu0 %v4016
        %4238 = vmatprep.subr.bf16.mxu0 %v4015
        %4239 = vmatpush1.bf16.msra.mxu0 %v4014
        %4240 = vmatprep.subr.bf16.mxu0 %v4013
        %4241 = vmatpush1.bf16.msra.mxu0 %v4012
        %4242 = vmatprep.subr.bf16.mxu0 %v4011
        %4243 = vmatpush1.bf16.msra.mxu0 %v4010
        %4244 = vmatprep.subr.bf16.mxu0 %v4009
        %4245 = vmatpush1.bf16.msra.mxu0 %v4008
        %4246 = vmatprep.subr.bf16.mxu0 0
        %4247 = vmatpush2.bf16.msra.mxu0 0
        %4248 = vmatprep.subr.bf16.mxu0 0
        %4249 = vmatpush2.bf16.msra.mxu0 0
        %4250 = vmatprep.subr.bf16.mxu0 0
        %4251 = vmatpush2.bf16.msra.mxu0 0
        %4252 = vmatprep.subr.bf16.mxu0 0
        %4253 = vmatpush2.bf16.msra.mxu0 0
        %4254 = vmatprep.subr.bf16.mxu0 0
        %4255 = vmatpush2.bf16.msra.mxu0 0
        %4256 = vmatprep.subr.bf16.mxu0 0
        %4257 = vmatpush2.bf16.msra.mxu0 0
        %4258 = vmatprep.subr.bf16.mxu0 0
        %4259 = vmatpush2.bf16.msra.mxu0 0
        %4260 = vmatprep.subr.bf16.mxu0 0
        %4261 = vmatpush2.bf16.msra.mxu0 0
        %4262 = vmatprep.mubr.bf16.mxu0 0
        %4263 = vmatmul.mubr.bf16.gmra.mxu0 0
        %v4264 = vpop.f32.mrf.mxu0
        %v4265 = vadd.f32 %v4202, %v4264
        %v4266 = vpop.f32.mrf.mxu0
        %v4267 = vadd.f32 %v4204, %v4266
        %v4268 = vpop.f32.mrf.mxu0
        %v4269 = vadd.f32 %v4206, %v4268
        %v4270 = vpop.f32.mrf.mxu0
        %v4271 = vadd.f32 %v4208, %v4270
        %4272 = vmatprep.mubr.bf16.mxu0 0
        %4273 = vmatmul.mubr.bf16.gmra.mxu0 %v3583
        %v4274 = vpop.f32.mrf.mxu0
        %v4275 = vadd.f32 %v4212, %v4274
        %v4276 = vpop.f32.mrf.mxu0
        %v4277 = vadd.f32 %v4214, %v4276
        %v4278 = vpop.f32.mrf.mxu0
        %v4279 = vadd.f32 %v4216, %v4278
        %v4280 = vpop.f32.mrf.mxu0
        %v4281 = vadd.f32 %v4218, %v4280
        %4282 = vmatprep.mubr.bf16.mxu0 0
        %4283 = vmatmul.mubr.bf16.gmra.mxu0 %v3584
        %v4284 = vpop.f32.mrf.mxu0
        %v4285 = vadd.f32 %v4222, %v4284
        %v4286 = vpop.f32.mrf.mxu0
        %v4287 = vadd.f32 %v4224, %v4286
        %v4288 = vpop.f32.mrf.mxu0
        %v4289 = vadd.f32 %v4226, %v4288
        %v4290 = vpop.f32.mrf.mxu0
        %v4291 = vadd.f32 %v4228, %v4290
        %4292 = vdwg.mxu0
        %vm4293 = vcmp.gt.f32.partialorder %v4265, 0.0
        %vm4294 = vcmp.gt.f32.partialorder %v4267, 0.0
        %vm4295 = vcmp.gt.f32.partialorder %v4269, 0.0
        %vm4296 = vcmp.gt.f32.partialorder %v4271, 0.0
        %vm4297 = vcmp.gt.f32.partialorder %v4275, 0.0
        %vm4298 = vcmp.gt.f32.partialorder %v4277, 0.0
        %vm4299 = vcmp.gt.f32.partialorder %v4279, 0.0
        %vm4300 = vcmp.gt.f32.partialorder %v4281, 0.0
        %vm4301 = vcmp.gt.f32.partialorder %v4285, 0.0
        %vm4302 = vcmp.gt.f32.partialorder %v4287, 0.0
        %vm4303 = vcmp.gt.f32.partialorder %v4289, 0.0
        %vm4304 = vcmp.gt.f32.partialorder %v4291, 0.0
        %v4305 = vmul.f32 %v4265, 0.01
        %v4306 = vmul.f32 %v4267, 0.01
        %v4307 = vmul.f32 %v4269, 0.01
        %v4308 = vmul.f32 %v4271, 0.01
        %v4309 = vmul.f32 %v4275, 0.01
        %v4310 = vmul.f32 %v4277, 0.01
        %v4311 = vmul.f32 %v4279, 0.01
        %v4312 = vmul.f32 %v4281, 0.01
        %v4313 = vmul.f32 %v4285, 0.01
        %v4314 = vmul.f32 %v4287, 0.01
        %v4315 = vmul.f32 %v4289, 0.01
        %v4316 = vmul.f32 %v4291, 0.01
        %v4317 = vsel %vm4293, %v4265, %v4305
        %v4318 = vsel %vm4294, %v4267, %v4306
        %v4319 = vsel %vm4295, %v4269, %v4307
        %v4320 = vsel %vm4296, %v4271, %v4308
        %v4321 = vsel %vm4297, %v4275, %v4309
        %v4322 = vsel %vm4298, %v4277, %v4310
        %v4323 = vsel %vm4299, %v4279, %v4311
        %v4324 = vsel %vm4300, %v4281, %v4312
        %v4325 = vsel %vm4301, %v4285, %v4313
        %v4326 = vsel %vm4302, %v4287, %v4314
        %v4327 = vsel %vm4303, %v4289, %v4315
        %v4328 = vsel %vm4304, %v4291, %v4316
        %v4329 = vpack.c.bf16 %v4319, %v4317
        %v4330 = vpack.c.bf16 %v4320, %v4318
        %v4331 = vpack.c.bf16 %v4323, %v4321
        %v4332 = vpack.c.bf16 %v4324, %v4322
        %v4333 = vpack.c.bf16 %v4327, %v4325
        %v4334 = vpack.c.bf16 %v4328, %v4326
        %v4341 = vrot.slane %v4329, 2
        %v4342 = vrot.slane %v4331, 2
        %v4343 = vsel %vm1398, %v4341, %v4342
        %v4344 = vrot.slane %v4330, 2
        %v4345 = vrot.slane %v4332, 2
        %v4346 = vsel %vm1398, %v4344, %v4345
        %v4347 = vrot.slane %v4333, 2
        %v4348 = vsel %vm1398, %v4342, %v4347
        %v4349 = vrot.slane %v4334, 2
        %v4350 = vsel %vm1398, %v4345, %v4349
        %v4355 = vrot.slane %v4329, 4
        %v4356 = vrot.slane %v4331, 4
        %v4357 = vsel %vm2555, %v4355, %v4356
        %v4358 = vrot.slane %v4330, 4
        %v4359 = vrot.slane %v4332, 4
        %v4360 = vsel %vm2555, %v4358, %v4359
        %v4361 = vrot.slane %v4333, 4
        %v4362 = vsel %vm2555, %v4356, %v4361
        %v4363 = vrot.slane %v4334, 4
        %v4364 = vsel %vm2555, %v4359, %v4363
        %v4369 = vrot.slane %v4329, 6
        %v4370 = vrot.slane %v4331, 6
        %v4371 = vsel %vm3603, %v4369, %v4370
        %v4372 = vrot.slane %v4330, 6
        %v4373 = vrot.slane %v4332, 6
        %v4374 = vsel %vm3603, %v4372, %v4373
        %v4375 = vrot.slane %v4333, 6
        %v4376 = vsel %vm3603, %v4370, %v4375
        %v4377 = vrot.slane %v4334, 6
        %v4378 = vsel %vm3603, %v4373, %v4377
        %v4383 = vld [vmem:[#allocation2 + $0x280] sm:$0xff]
        %v4384 = vld [vmem:[#allocation2 + $0x288] sm:$0xff]
        %v4385 = vld [vmem:[#allocation2 + $0x290] sm:$0xff]
        %v4386 = vld [vmem:[#allocation2 + $0x298] sm:$0xff]
        %v4387 = vld [vmem:[#allocation2 + $0x2a0] sm:$0xff]
        %v4388 = vld [vmem:[#allocation2 + $0x2a8] sm:$0xff]
        %v4389 = vld [vmem:[#allocation2 + $0x2b0] sm:$0xff]
        %v4390 = vld [vmem:[#allocation2 + $0x2b8] sm:$0xff]
        %v4391 = vld [vmem:[#allocation2 + $0x2c0] sm:$0xff]
        %v4392 = vld [vmem:[#allocation2 + $0x2c8] sm:$0xff]
        %v4393 = vld [vmem:[#allocation2 + $0x2d0] sm:$0xff]
        %v4394 = vld [vmem:[#allocation2 + $0x2d8] sm:$0xff]
        %v4395 = vld [vmem:[#allocation2 + $0x2e0] sm:$0xff]
        %v4396 = vld [vmem:[#allocation2 + $0x2e8] sm:$0xff]
        %v4397 = vld [vmem:[#allocation2 + $0x2f0] sm:$0xff]
        %v4398 = vld [vmem:[#allocation2 + $0x2f8] sm:$0xff]
        %v4399 = vld [vmem:[#allocation2 + $0x300] sm:$0xff]
        %v4400 = vld [vmem:[#allocation2 + $0x308] sm:$0xff]
        %v4401 = vld [vmem:[#allocation2 + $0x310] sm:$0xff]
        %v4402 = vld [vmem:[#allocation2 + $0x318] sm:$0xff]
        %v4403 = vld [vmem:[#allocation2 + $0x320] sm:$0xff]
        %v4404 = vld [vmem:[#allocation2 + $0x328] sm:$0xff]
        %v4405 = vld [vmem:[#allocation2 + $0x330] sm:$0xff]
        %v4406 = vld [vmem:[#allocation2 + $0x338] sm:$0xff]
        %v4407 = vld [vmem:[#allocation2 + $0x340] sm:$0xff]
        %v4408 = vld [vmem:[#allocation2 + $0x348] sm:$0xff]
        %v4409 = vld [vmem:[#allocation2 + $0x350] sm:$0xff]
        %v4410 = vld [vmem:[#allocation2 + $0x358] sm:$0xff]
        %v4411 = vld [vmem:[#allocation2 + $0x360] sm:$0xff]
        %v4412 = vld [vmem:[#allocation2 + $0x368] sm:$0xff]
        %v4413 = vld [vmem:[#allocation2 + $0x370] sm:$0xff]
        %v4414 = vld [vmem:[#allocation2 + $0x378] sm:$0xff]
        %v4415 = vld [vmem:[#allocation2 + $0x380] sm:$0xff]
        %v4416 = vld [vmem:[#allocation2 + $0x388] sm:$0xff]
        %v4417 = vld [vmem:[#allocation2 + $0x390] sm:$0xff]
        %v4418 = vld [vmem:[#allocation2 + $0x398] sm:$0xff]
        %v4419 = vld [vmem:[#allocation2 + $0x3a0] sm:$0xff]
        %v4420 = vld [vmem:[#allocation2 + $0x3a8] sm:$0xff]
        %v4421 = vld [vmem:[#allocation2 + $0x3b0] sm:$0xff]
        %v4422 = vld [vmem:[#allocation2 + $0x3b8] sm:$0xff]
        %v4423 = vld [vmem:[#allocation2 + $0x3c0] sm:$0xff]
        %v4424 = vld [vmem:[#allocation2 + $0x3c8] sm:$0xff]
        %v4425 = vld [vmem:[#allocation2 + $0x3d0] sm:$0xff]
        %v4426 = vld [vmem:[#allocation2 + $0x3d8] sm:$0xff]
        %v4427 = vld [vmem:[#allocation2 + $0x3e0] sm:$0xff]
        %v4428 = vld [vmem:[#allocation2 + $0x3e8] sm:$0xff]
        %v4429 = vld [vmem:[#allocation2 + $0x3f0] sm:$0xff]
        %v4430 = vld [vmem:[#allocation2 + $0x3f8] sm:$0xff]
        %v4431 = vld [vmem:[#allocation2 + $0x400] sm:$0xff]
        %v4432 = vld [vmem:[#allocation2 + $0x408] sm:$0xff]
        %v4433 = vld [vmem:[#allocation2 + $0x410] sm:$0xff]
        %v4434 = vld [vmem:[#allocation2 + $0x418] sm:$0xff]
        %v4435 = vld [vmem:[#allocation2 + $0x420] sm:$0xff]
        %v4436 = vld [vmem:[#allocation2 + $0x428] sm:$0xff]
        %v4437 = vld [vmem:[#allocation2 + $0x430] sm:$0xff]
        %v4438 = vld [vmem:[#allocation2 + $0x438] sm:$0xff]
        %v4439 = vld [vmem:[#allocation2 + $0x440] sm:$0xff]
        %v4440 = vld [vmem:[#allocation2 + $0x448] sm:$0xff]
        %v4441 = vld [vmem:[#allocation2 + $0x450] sm:$0xff]
        %v4442 = vld [vmem:[#allocation2 + $0x458] sm:$0xff]
        %v4443 = vld [vmem:[#allocation2 + $0x460] sm:$0xff]
        %v4444 = vld [vmem:[#allocation2 + $0x468] sm:$0xff]
        %v4445 = vld [vmem:[#allocation2 + $0x470] sm:$0xff]
        %v4446 = vld [vmem:[#allocation2 + $0x478] sm:$0xff]
        %v4447 = vld [vmem:[#allocation2 + $0x480] sm:$0xff]
        %v4448 = vld [vmem:[#allocation2 + $0x488] sm:$0xff]
        %v4449 = vld [vmem:[#allocation2 + $0x490] sm:$0xff]
        %v4450 = vld [vmem:[#allocation2 + $0x498] sm:$0xff]
        %v4451 = vld [vmem:[#allocation2 + $0x4a0] sm:$0xff]
        %v4452 = vld [vmem:[#allocation2 + $0x4a8] sm:$0xff]
        %v4453 = vld [vmem:[#allocation2 + $0x4b0] sm:$0xff]
        %v4454 = vld [vmem:[#allocation2 + $0x4b8] sm:$0xff]
        %v4455 = vld [vmem:[#allocation2 + $0x4c0] sm:$0xff]
        %v4456 = vld [vmem:[#allocation2 + $0x4c8] sm:$0xff]
        %v4457 = vld [vmem:[#allocation2 + $0x4d0] sm:$0xff]
        %v4458 = vld [vmem:[#allocation2 + $0x4d8] sm:$0xff]
        %v4459 = vld [vmem:[#allocation2 + $0x4e0] sm:$0xff]
        %v4460 = vld [vmem:[#allocation2 + $0x4e8] sm:$0xff]
        %v4461 = vld [vmem:[#allocation2 + $0x4f0] sm:$0xff]
        %v4462 = vld [vmem:[#allocation2 + $0x4f8] sm:$0xff]
        %v4463 = vld [vmem:[#allocation2 + $0x500] sm:$0xff]
        %v4464 = vld [vmem:[#allocation2 + $0x508] sm:$0xff]
        %v4465 = vld [vmem:[#allocation2 + $0x510] sm:$0xff]
        %v4466 = vld [vmem:[#allocation2 + $0x518] sm:$0xff]
        %v4467 = vld [vmem:[#allocation2 + $0x520] sm:$0xff]
        %v4468 = vld [vmem:[#allocation2 + $0x528] sm:$0xff]
        %v4469 = vld [vmem:[#allocation2 + $0x530] sm:$0xff]
        %v4470 = vld [vmem:[#allocation2 + $0x538] sm:$0xff]
        %v4471 = vld [vmem:[#allocation2 + $0x540] sm:$0xff]
        %v4472 = vld [vmem:[#allocation2 + $0x548] sm:$0xff]
        %v4473 = vld [vmem:[#allocation2 + $0x550] sm:$0xff]
        %v4474 = vld [vmem:[#allocation2 + $0x558] sm:$0xff]
        %v4475 = vld [vmem:[#allocation2 + $0x560] sm:$0xff]
        %v4476 = vld [vmem:[#allocation2 + $0x568] sm:$0xff]
        %v4477 = vld [vmem:[#allocation2 + $0x570] sm:$0xff]
        %v4478 = vld [vmem:[#allocation2 + $0x578] sm:$0xff]
        %v4479 = vld [vmem:[#allocation2 + $0x580] sm:$0xff]
        %v4480 = vld [vmem:[#allocation2 + $0x588] sm:$0xff]
        %v4481 = vld [vmem:[#allocation2 + $0x590] sm:$0xff]
        %v4482 = vld [vmem:[#allocation2 + $0x598] sm:$0xff]
        %v4483 = vld [vmem:[#allocation2 + $0x5a0] sm:$0xff]
        %v4484 = vld [vmem:[#allocation2 + $0x5a8] sm:$0xff]
        %v4485 = vld [vmem:[#allocation2 + $0x5b0] sm:$0xff]
        %v4486 = vld [vmem:[#allocation2 + $0x5b8] sm:$0xff]
        %v4487 = vld [vmem:[#allocation2 + $0x5c0] sm:$0xff]
        %v4488 = vld [vmem:[#allocation2 + $0x5c8] sm:$0xff]
        %v4489 = vld [vmem:[#allocation2 + $0x5d0] sm:$0xff]
        %v4490 = vld [vmem:[#allocation2 + $0x5d8] sm:$0xff]
        %v4491 = vld [vmem:[#allocation2 + $0x5e0] sm:$0xff]
        %v4492 = vld [vmem:[#allocation2 + $0x5e8] sm:$0xff]
        %v4493 = vld [vmem:[#allocation2 + $0x5f0] sm:$0xff]
        %v4494 = vld [vmem:[#allocation2 + $0x5f8] sm:$0xff]
        %v4495 = vld [vmem:[#allocation2 + $0x600] sm:$0xff]
        %v4496 = vld [vmem:[#allocation2 + $0x608] sm:$0xff]
        %v4497 = vld [vmem:[#allocation2 + $0x610] sm:$0xff]
        %v4498 = vld [vmem:[#allocation2 + $0x618] sm:$0xff]
        %v4499 = vld [vmem:[#allocation2 + $0x620] sm:$0xff]
        %v4500 = vld [vmem:[#allocation2 + $0x628] sm:$0xff]
        %v4501 = vld [vmem:[#allocation2 + $0x630] sm:$0xff]
        %v4502 = vld [vmem:[#allocation2 + $0x638] sm:$0xff]
        %v4503 = vld [vmem:[#allocation2 + $0x640] sm:$0xff]
        %v4504 = vld [vmem:[#allocation2 + $0x648] sm:$0xff]
        %v4505 = vld [vmem:[#allocation2 + $0x650] sm:$0xff]
        %v4506 = vld [vmem:[#allocation2 + $0x658] sm:$0xff]
        %v4507 = vld [vmem:[#allocation2 + $0x660] sm:$0xff]
        %v4508 = vld [vmem:[#allocation2 + $0x668] sm:$0xff]
        %v4509 = vld [vmem:[#allocation2 + $0x670] sm:$0xff]
        %v4510 = vld [vmem:[#allocation2 + $0x678] sm:$0xff]
        %v4511 = vld [vmem:[#allocation2 + $0x680] sm:$0xff]
        %v4512 = vld [vmem:[#allocation2 + $0x688] sm:$0xff]
        %v4513 = vld [vmem:[#allocation2 + $0x690] sm:$0xff]
        %v4514 = vld [vmem:[#allocation2 + $0x698] sm:$0xff]
        %v4515 = vld [vmem:[#allocation2 + $0x6a0] sm:$0xff]
        %v4516 = vld [vmem:[#allocation2 + $0x6a8] sm:$0xff]
        %v4517 = vld [vmem:[#allocation2 + $0x6b0] sm:$0xff]
        %v4518 = vld [vmem:[#allocation2 + $0x6b8] sm:$0xff]
        %v4519 = vld [vmem:[#allocation2 + $0x6c0] sm:$0xff]
        %v4520 = vld [vmem:[#allocation2 + $0x6c8] sm:$0xff]
        %v4521 = vld [vmem:[#allocation2 + $0x6d0] sm:$0xff]
        %v4522 = vld [vmem:[#allocation2 + $0x6d8] sm:$0xff]
        %v4523 = vld [vmem:[#allocation2 + $0x6e0] sm:$0xff]
        %v4524 = vld [vmem:[#allocation2 + $0x6e8] sm:$0xff]
        %v4525 = vld [vmem:[#allocation2 + $0x6f0] sm:$0xff]
        %v4526 = vld [vmem:[#allocation2 + $0x6f8] sm:$0xff]
        %v4527 = vld [vmem:[#allocation2 + $0x700] sm:$0xff]
        %v4528 = vld [vmem:[#allocation2 + $0x708] sm:$0xff]
        %v4529 = vld [vmem:[#allocation2 + $0x710] sm:$0xff]
        %v4530 = vld [vmem:[#allocation2 + $0x718] sm:$0xff]
        %v4531 = vld [vmem:[#allocation2 + $0x720] sm:$0xff]
        %v4532 = vld [vmem:[#allocation2 + $0x728] sm:$0xff]
        %v4533 = vld [vmem:[#allocation2 + $0x730] sm:$0xff]
        %v4534 = vld [vmem:[#allocation2 + $0x738] sm:$0xff]
        %v4535 = vld [vmem:[#allocation2 + $0x740] sm:$0xff]
        %v4536 = vld [vmem:[#allocation2 + $0x748] sm:$0xff]
        %v4537 = vld [vmem:[#allocation2 + $0x750] sm:$0xff]
        %v4538 = vld [vmem:[#allocation2 + $0x758] sm:$0xff]
        %v4539 = vld [vmem:[#allocation2 + $0x760] sm:$0xff]
        %v4540 = vld [vmem:[#allocation2 + $0x768] sm:$0xff]
        %v4541 = vld [vmem:[#allocation2 + $0x770] sm:$0xff]
        %v4542 = vld [vmem:[#allocation2 + $0x778] sm:$0xff]
        %v4544 = vlaneseq
        %v4545 = vshrl.u32 %v4544, 7
        %v4546 = vsub.s32 0, %v4545
        %v4547 = vrot.slane %v3580, %v4546
        %v4548 = vlaneseq
        %v4549 = vshrl.u32 %v4548, 7
        %v4550 = vsub.s32 1, %v4549
        %v4551 = vrot.slane %v3580, %v4550
        %v4714 = vunpack.c.l.b16 %v4383
        %v4715 = vunpack.c.h.b16 %v4383
        %v4716 = vunpack.c.l.b16 %v4384
        %v4717 = vunpack.c.h.b16 %v4384
        %v4718 = vunpack.c.l.b16 %v4385
        %v4719 = vunpack.c.h.b16 %v4385
        %v4720 = vunpack.c.l.b16 %v4386
        %v4721 = vunpack.c.h.b16 %v4386
        %v4722 = vunpack.c.l.b16 %v4387
        %v4723 = vunpack.c.h.b16 %v4387
        %v4724 = vunpack.c.l.b16 %v4388
        %v4725 = vunpack.c.h.b16 %v4388
        %v4726 = vunpack.c.l.b16 %v4389
        %v4727 = vunpack.c.h.b16 %v4389
        %v4728 = vunpack.c.l.b16 %v4390
        %v4729 = vunpack.c.h.b16 %v4390
        %v4730 = vunpack.c.l.b16 %v4391
        %v4731 = vunpack.c.h.b16 %v4391
        %v4732 = vunpack.c.l.b16 %v4392
        %v4733 = vunpack.c.h.b16 %v4392
        %v4734 = vunpack.c.l.b16 %v4393
        %v4735 = vunpack.c.h.b16 %v4393
        %v4736 = vunpack.c.l.b16 %v4394
        %v4737 = vunpack.c.h.b16 %v4394
        %v4738 = vunpack.c.l.b16 %v4395
        %v4739 = vunpack.c.h.b16 %v4395
        %v4740 = vunpack.c.l.b16 %v4396
        %v4741 = vunpack.c.h.b16 %v4396
        %v4742 = vunpack.c.l.b16 %v4397
        %v4743 = vunpack.c.h.b16 %v4397
        %v4744 = vunpack.c.l.b16 %v4398
        %v4745 = vunpack.c.h.b16 %v4398
        %v4746 = vunpack.c.l.b16 %v4399
        %v4747 = vunpack.c.h.b16 %v4399
        %v4748 = vunpack.c.l.b16 %v4400
        %v4749 = vunpack.c.h.b16 %v4400
        %v4750 = vunpack.c.l.b16 %v4401
        %v4751 = vunpack.c.h.b16 %v4401
        %v4752 = vunpack.c.l.b16 %v4402
        %v4753 = vunpack.c.h.b16 %v4402
        %v4754 = vunpack.c.l.b16 %v4403
        %v4755 = vunpack.c.h.b16 %v4403
        %v4756 = vunpack.c.l.b16 %v4404
        %v4757 = vunpack.c.h.b16 %v4404
        %v4758 = vunpack.c.l.b16 %v4405
        %v4759 = vunpack.c.h.b16 %v4405
        %v4760 = vunpack.c.l.b16 %v4406
        %v4761 = vunpack.c.h.b16 %v4406
        %v4762 = vunpack.c.l.b16 %v4407
        %v4763 = vunpack.c.h.b16 %v4407
        %v4764 = vunpack.c.l.b16 %v4408
        %v4765 = vunpack.c.h.b16 %v4408
        %v4766 = vunpack.c.l.b16 %v4409
        %v4767 = vunpack.c.h.b16 %v4409
        %v4768 = vunpack.c.l.b16 %v4410
        %v4769 = vunpack.c.h.b16 %v4410
        %v4770 = vunpack.c.l.b16 %v4411
        %v4771 = vunpack.c.h.b16 %v4411
        %v4772 = vunpack.c.l.b16 %v4412
        %v4773 = vunpack.c.h.b16 %v4412
        %v4774 = vunpack.c.l.b16 %v4413
        %v4775 = vunpack.c.h.b16 %v4413
        %v4776 = vunpack.c.l.b16 %v4414
        %v4777 = vunpack.c.h.b16 %v4414
        %v4778 = vunpack.c.l.b16 %v4415
        %v4779 = vunpack.c.h.b16 %v4415
        %v4780 = vunpack.c.l.b16 %v4416
        %v4781 = vunpack.c.h.b16 %v4416
        %v4782 = vunpack.c.l.b16 %v4417
        %v4783 = vunpack.c.h.b16 %v4417
        %v4784 = vunpack.c.l.b16 %v4418
        %v4785 = vunpack.c.h.b16 %v4418
        %v4786 = vunpack.c.l.b16 %v4419
        %v4787 = vunpack.c.h.b16 %v4419
        %v4788 = vunpack.c.l.b16 %v4420
        %v4789 = vunpack.c.h.b16 %v4420
        %v4790 = vunpack.c.l.b16 %v4421
        %v4791 = vunpack.c.h.b16 %v4421
        %v4792 = vunpack.c.l.b16 %v4422
        %v4793 = vunpack.c.h.b16 %v4422
        %v4794 = vunpack.c.l.b16 %v4423
        %v4795 = vunpack.c.h.b16 %v4423
        %v4796 = vunpack.c.l.b16 %v4424
        %v4797 = vunpack.c.h.b16 %v4424
        %v4798 = vunpack.c.l.b16 %v4425
        %v4799 = vunpack.c.h.b16 %v4425
        %v4800 = vunpack.c.l.b16 %v4426
        %v4801 = vunpack.c.h.b16 %v4426
        %v4802 = vunpack.c.l.b16 %v4427
        %v4803 = vunpack.c.h.b16 %v4427
        %v4804 = vunpack.c.l.b16 %v4428
        %v4805 = vunpack.c.h.b16 %v4428
        %v4806 = vunpack.c.l.b16 %v4429
        %v4807 = vunpack.c.h.b16 %v4429
        %v4808 = vunpack.c.l.b16 %v4430
        %v4809 = vunpack.c.h.b16 %v4430
        %v4810 = vunpack.c.l.b16 %v4431
        %v4811 = vunpack.c.h.b16 %v4431
        %v4812 = vunpack.c.l.b16 %v4432
        %v4813 = vunpack.c.h.b16 %v4432
        %v4814 = vunpack.c.l.b16 %v4433
        %v4815 = vunpack.c.h.b16 %v4433
        %v4816 = vunpack.c.l.b16 %v4434
        %v4817 = vunpack.c.h.b16 %v4434
        %v4818 = vunpack.c.l.b16 %v4435
        %v4819 = vunpack.c.h.b16 %v4435
        %v4820 = vunpack.c.l.b16 %v4436
        %v4821 = vunpack.c.h.b16 %v4436
        %v4822 = vunpack.c.l.b16 %v4437
        %v4823 = vunpack.c.h.b16 %v4437
        %v4824 = vunpack.c.l.b16 %v4438
        %v4825 = vunpack.c.h.b16 %v4438
        %v4826 = vunpack.c.l.b16 %v4439
        %v4827 = vunpack.c.h.b16 %v4439
        %v4828 = vunpack.c.l.b16 %v4440
        %v4829 = vunpack.c.h.b16 %v4440
        %v4830 = vunpack.c.l.b16 %v4441
        %v4831 = vunpack.c.h.b16 %v4441
        %v4832 = vunpack.c.l.b16 %v4442
        %v4833 = vunpack.c.h.b16 %v4442
        %v4834 = vunpack.c.l.b16 %v4443
        %v4835 = vunpack.c.h.b16 %v4443
        %v4836 = vunpack.c.l.b16 %v4444
        %v4837 = vunpack.c.h.b16 %v4444
        %v4838 = vunpack.c.l.b16 %v4445
        %v4839 = vunpack.c.h.b16 %v4445
        %v4840 = vunpack.c.l.b16 %v4446
        %v4841 = vunpack.c.h.b16 %v4446
        %v4842 = vunpack.c.l.b16 %v4447
        %v4843 = vunpack.c.h.b16 %v4447
        %v4844 = vunpack.c.l.b16 %v4448
        %v4845 = vunpack.c.h.b16 %v4448
        %v4846 = vunpack.c.l.b16 %v4449
        %v4847 = vunpack.c.h.b16 %v4449
        %v4848 = vunpack.c.l.b16 %v4450
        %v4849 = vunpack.c.h.b16 %v4450
        %v4850 = vunpack.c.l.b16 %v4451
        %v4851 = vunpack.c.h.b16 %v4451
        %v4852 = vunpack.c.l.b16 %v4452
        %v4853 = vunpack.c.h.b16 %v4452
        %v4854 = vunpack.c.l.b16 %v4453
        %v4855 = vunpack.c.h.b16 %v4453
        %v4856 = vunpack.c.l.b16 %v4454
        %v4857 = vunpack.c.h.b16 %v4454
        %v4858 = vunpack.c.l.b16 %v4455
        %v4859 = vunpack.c.h.b16 %v4455
        %v4860 = vunpack.c.l.b16 %v4456
        %v4861 = vunpack.c.h.b16 %v4456
        %v4862 = vunpack.c.l.b16 %v4457
        %v4863 = vunpack.c.h.b16 %v4457
        %v4864 = vunpack.c.l.b16 %v4458
        %v4865 = vunpack.c.h.b16 %v4458
        %v4866 = vunpack.c.l.b16 %v4459
        %v4867 = vunpack.c.h.b16 %v4459
        %v4868 = vunpack.c.l.b16 %v4460
        %v4869 = vunpack.c.h.b16 %v4460
        %v4870 = vunpack.c.l.b16 %v4461
        %v4871 = vunpack.c.h.b16 %v4461
        %v4872 = vunpack.c.l.b16 %v4462
        %v4873 = vunpack.c.h.b16 %v4462
        %v4874 = vunpack.c.l.b16 %v4463
        %v4875 = vunpack.c.h.b16 %v4463
        %v4876 = vunpack.c.l.b16 %v4464
        %v4877 = vunpack.c.h.b16 %v4464
        %v4878 = vunpack.c.l.b16 %v4465
        %v4879 = vunpack.c.h.b16 %v4465
        %v4880 = vunpack.c.l.b16 %v4466
        %v4881 = vunpack.c.h.b16 %v4466
        %v4882 = vunpack.c.l.b16 %v4467
        %v4883 = vunpack.c.h.b16 %v4467
        %v4884 = vunpack.c.l.b16 %v4468
        %v4885 = vunpack.c.h.b16 %v4468
        %v4886 = vunpack.c.l.b16 %v4469
        %v4887 = vunpack.c.h.b16 %v4469
        %v4888 = vunpack.c.l.b16 %v4470
        %v4889 = vunpack.c.h.b16 %v4470
        %v4890 = vunpack.c.l.b16 %v4471
        %v4891 = vunpack.c.h.b16 %v4471
        %v4892 = vunpack.c.l.b16 %v4472
        %v4893 = vunpack.c.h.b16 %v4472
        %v4894 = vunpack.c.l.b16 %v4473
        %v4895 = vunpack.c.h.b16 %v4473
        %v4896 = vunpack.c.l.b16 %v4474
        %v4897 = vunpack.c.h.b16 %v4474
        %v4898 = vunpack.c.l.b16 %v4475
        %v4899 = vunpack.c.h.b16 %v4475
        %v4900 = vunpack.c.l.b16 %v4476
        %v4901 = vunpack.c.h.b16 %v4476
        %v4902 = vunpack.c.l.b16 %v4477
        %v4903 = vunpack.c.h.b16 %v4477
        %v4904 = vunpack.c.l.b16 %v4478
        %v4905 = vunpack.c.h.b16 %v4478
        %v4906 = vunpack.c.l.b16 %v4479
        %v4907 = vunpack.c.h.b16 %v4479
        %v4908 = vunpack.c.l.b16 %v4480
        %v4909 = vunpack.c.h.b16 %v4480
        %v4910 = vunpack.c.l.b16 %v4481
        %v4911 = vunpack.c.h.b16 %v4481
        %v4912 = vunpack.c.l.b16 %v4482
        %v4913 = vunpack.c.h.b16 %v4482
        %v4914 = vunpack.c.l.b16 %v4483
        %v4915 = vunpack.c.h.b16 %v4483
        %v4916 = vunpack.c.l.b16 %v4484
        %v4917 = vunpack.c.h.b16 %v4484
        %v4918 = vunpack.c.l.b16 %v4485
        %v4919 = vunpack.c.h.b16 %v4485
        %v4920 = vunpack.c.l.b16 %v4486
        %v4921 = vunpack.c.h.b16 %v4486
        %v4922 = vunpack.c.l.b16 %v4487
        %v4923 = vunpack.c.h.b16 %v4487
        %v4924 = vunpack.c.l.b16 %v4488
        %v4925 = vunpack.c.h.b16 %v4488
        %v4926 = vunpack.c.l.b16 %v4489
        %v4927 = vunpack.c.h.b16 %v4489
        %v4928 = vunpack.c.l.b16 %v4490
        %v4929 = vunpack.c.h.b16 %v4490
        %v4930 = vunpack.c.l.b16 %v4491
        %v4931 = vunpack.c.h.b16 %v4491
        %v4932 = vunpack.c.l.b16 %v4492
        %v4933 = vunpack.c.h.b16 %v4492
        %v4934 = vunpack.c.l.b16 %v4493
        %v4935 = vunpack.c.h.b16 %v4493
        %v4936 = vunpack.c.l.b16 %v4494
        %v4937 = vunpack.c.h.b16 %v4494
        %v4938 = vunpack.c.l.b16 %v4495
        %v4939 = vunpack.c.h.b16 %v4495
        %v4940 = vunpack.c.l.b16 %v4496
        %v4941 = vunpack.c.h.b16 %v4496
        %v4942 = vunpack.c.l.b16 %v4497
        %v4943 = vunpack.c.h.b16 %v4497
        %v4944 = vunpack.c.l.b16 %v4498
        %v4945 = vunpack.c.h.b16 %v4498
        %v4946 = vunpack.c.l.b16 %v4499
        %v4947 = vunpack.c.h.b16 %v4499
        %v4948 = vunpack.c.l.b16 %v4500
        %v4949 = vunpack.c.h.b16 %v4500
        %v4950 = vunpack.c.l.b16 %v4501
        %v4951 = vunpack.c.h.b16 %v4501
        %v4952 = vunpack.c.l.b16 %v4502
        %v4953 = vunpack.c.h.b16 %v4502
        %v4954 = vunpack.c.l.b16 %v4503
        %v4955 = vunpack.c.h.b16 %v4503
        %v4956 = vunpack.c.l.b16 %v4504
        %v4957 = vunpack.c.h.b16 %v4504
        %v4958 = vunpack.c.l.b16 %v4505
        %v4959 = vunpack.c.h.b16 %v4505
        %v4960 = vunpack.c.l.b16 %v4506
        %v4961 = vunpack.c.h.b16 %v4506
        %v4962 = vunpack.c.l.b16 %v4507
        %v4963 = vunpack.c.h.b16 %v4507
        %v4964 = vunpack.c.l.b16 %v4508
        %v4965 = vunpack.c.h.b16 %v4508
        %v4966 = vunpack.c.l.b16 %v4509
        %v4967 = vunpack.c.h.b16 %v4509
        %v4968 = vunpack.c.l.b16 %v4510
        %v4969 = vunpack.c.h.b16 %v4510
        %v4970 = vunpack.c.l.b16 %v4511
        %v4971 = vunpack.c.h.b16 %v4511
        %v4972 = vunpack.c.l.b16 %v4512
        %v4973 = vunpack.c.h.b16 %v4512
        %v4974 = vunpack.c.l.b16 %v4513
        %v4975 = vunpack.c.h.b16 %v4513
        %v4976 = vunpack.c.l.b16 %v4514
        %v4977 = vunpack.c.h.b16 %v4514
        %v4978 = vunpack.c.l.b16 %v4515
        %v4979 = vunpack.c.h.b16 %v4515
        %v4980 = vunpack.c.l.b16 %v4516
        %v4981 = vunpack.c.h.b16 %v4516
        %v4982 = vunpack.c.l.b16 %v4517
        %v4983 = vunpack.c.h.b16 %v4517
        %v4984 = vunpack.c.l.b16 %v4518
        %v4985 = vunpack.c.h.b16 %v4518
        %v4986 = vunpack.c.l.b16 %v4519
        %v4987 = vunpack.c.h.b16 %v4519
        %v4988 = vunpack.c.l.b16 %v4520
        %v4989 = vunpack.c.h.b16 %v4520
        %v4990 = vunpack.c.l.b16 %v4521
        %v4991 = vunpack.c.h.b16 %v4521
        %v4992 = vunpack.c.l.b16 %v4522
        %v4993 = vunpack.c.h.b16 %v4522
        %v4994 = vunpack.c.l.b16 %v4523
        %v4995 = vunpack.c.h.b16 %v4523
        %v4996 = vunpack.c.l.b16 %v4524
        %v4997 = vunpack.c.h.b16 %v4524
        %v4998 = vunpack.c.l.b16 %v4525
        %v4999 = vunpack.c.h.b16 %v4525
        %v5000 = vunpack.c.l.b16 %v4526
        %v5001 = vunpack.c.h.b16 %v4526
        %v5002 = vunpack.c.l.b16 %v4527
        %v5003 = vunpack.c.h.b16 %v4527
        %v5004 = vunpack.c.l.b16 %v4528
        %v5005 = vunpack.c.h.b16 %v4528
        %v5006 = vunpack.c.l.b16 %v4529
        %v5007 = vunpack.c.h.b16 %v4529
        %v5008 = vunpack.c.l.b16 %v4530
        %v5009 = vunpack.c.h.b16 %v4530
        %v5010 = vunpack.c.l.b16 %v4531
        %v5011 = vunpack.c.h.b16 %v4531
        %v5012 = vunpack.c.l.b16 %v4532
        %v5013 = vunpack.c.h.b16 %v4532
        %v5014 = vunpack.c.l.b16 %v4533
        %v5015 = vunpack.c.h.b16 %v4533
        %v5016 = vunpack.c.l.b16 %v4534
        %v5017 = vunpack.c.h.b16 %v4534
        %v5018 = vunpack.c.l.b16 %v4535
        %v5019 = vunpack.c.h.b16 %v4535
        %v5020 = vunpack.c.l.b16 %v4536
        %v5021 = vunpack.c.h.b16 %v4536
        %v5022 = vunpack.c.l.b16 %v4537
        %v5023 = vunpack.c.h.b16 %v4537
        %v5024 = vunpack.c.l.b16 %v4538
        %v5025 = vunpack.c.h.b16 %v4538
        %v5026 = vunpack.c.l.b16 %v4539
        %v5027 = vunpack.c.h.b16 %v4539
        %v5028 = vunpack.c.l.b16 %v4540
        %v5029 = vunpack.c.h.b16 %v4540
        %v5030 = vunpack.c.l.b16 %v4541
        %v5031 = vunpack.c.h.b16 %v4541
        %v5032 = vunpack.c.l.b16 %v4542
        %v5033 = vunpack.c.h.b16 %v4542
        %v5034 = vpack.c.b16 %v4716, %v4714
        %v5035 = vpack.c.b16 %v4717, %v4715
        %v5036 = vpack.c.b16 %v4720, %v4718
        %v5037 = vpack.c.b16 %v4721, %v4719
        %v5038 = vpack.c.b16 %v4724, %v4722
        %v5039 = vpack.c.b16 %v4725, %v4723
        %v5040 = vpack.c.b16 %v4728, %v4726
        %v5041 = vpack.c.b16 %v4729, %v4727
        %v5042 = vpack.c.b16 %v4732, %v4730
        %v5043 = vpack.c.b16 %v4733, %v4731
        %v5044 = vpack.c.b16 %v4736, %v4734
        %v5045 = vpack.c.b16 %v4737, %v4735
        %v5046 = vpack.c.b16 %v4740, %v4738
        %v5047 = vpack.c.b16 %v4741, %v4739
        %v5048 = vpack.c.b16 %v4744, %v4742
        %v5049 = vpack.c.b16 %v4745, %v4743
        %v5050 = vpack.c.b16 %v4748, %v4746
        %v5051 = vpack.c.b16 %v4749, %v4747
        %v5052 = vpack.c.b16 %v4752, %v4750
        %v5053 = vpack.c.b16 %v4753, %v4751
        %v5054 = vpack.c.b16 %v4756, %v4754
        %v5055 = vpack.c.b16 %v4757, %v4755
        %v5056 = vpack.c.b16 %v4760, %v4758
        %v5057 = vpack.c.b16 %v4761, %v4759
        %v5058 = vpack.c.b16 %v4764, %v4762
        %v5059 = vpack.c.b16 %v4765, %v4763
        %v5060 = vpack.c.b16 %v4768, %v4766
        %v5061 = vpack.c.b16 %v4769, %v4767
        %v5062 = vpack.c.b16 %v4772, %v4770
        %v5063 = vpack.c.b16 %v4773, %v4771
        %v5064 = vpack.c.b16 %v4776, %v4774
        %v5065 = vpack.c.b16 %v4777, %v4775
        %v5066 = vpack.c.b16 %v4780, %v4778
        %v5067 = vpack.c.b16 %v4781, %v4779
        %v5068 = vpack.c.b16 %v4784, %v4782
        %v5069 = vpack.c.b16 %v4785, %v4783
        %v5070 = vpack.c.b16 %v4788, %v4786
        %v5071 = vpack.c.b16 %v4789, %v4787
        %v5072 = vpack.c.b16 %v4792, %v4790
        %v5073 = vpack.c.b16 %v4793, %v4791
        %v5074 = vpack.c.b16 %v4796, %v4794
        %v5075 = vpack.c.b16 %v4797, %v4795
        %v5076 = vpack.c.b16 %v4800, %v4798
        %v5077 = vpack.c.b16 %v4801, %v4799
        %v5078 = vpack.c.b16 %v4804, %v4802
        %v5079 = vpack.c.b16 %v4805, %v4803
        %v5080 = vpack.c.b16 %v4808, %v4806
        %v5081 = vpack.c.b16 %v4809, %v4807
        %v5082 = vpack.c.b16 %v4812, %v4810
        %v5083 = vpack.c.b16 %v4813, %v4811
        %v5084 = vpack.c.b16 %v4816, %v4814
        %v5085 = vpack.c.b16 %v4817, %v4815
        %v5086 = vpack.c.b16 %v4820, %v4818
        %v5087 = vpack.c.b16 %v4821, %v4819
        %v5088 = vpack.c.b16 %v4824, %v4822
        %v5089 = vpack.c.b16 %v4825, %v4823
        %v5090 = vpack.c.b16 %v4828, %v4826
        %v5091 = vpack.c.b16 %v4829, %v4827
        %v5092 = vpack.c.b16 %v4832, %v4830
        %v5093 = vpack.c.b16 %v4833, %v4831
        %v5094 = vpack.c.b16 %v4836, %v4834
        %v5095 = vpack.c.b16 %v4837, %v4835
        %v5096 = vpack.c.b16 %v4840, %v4838
        %v5097 = vpack.c.b16 %v4841, %v4839
        %v5098 = vpack.c.b16 %v4844, %v4842
        %v5099 = vpack.c.b16 %v4845, %v4843
        %v5100 = vpack.c.b16 %v4848, %v4846
        %v5101 = vpack.c.b16 %v4849, %v4847
        %v5102 = vpack.c.b16 %v4852, %v4850
        %v5103 = vpack.c.b16 %v4853, %v4851
        %v5104 = vpack.c.b16 %v4856, %v4854
        %v5105 = vpack.c.b16 %v4857, %v4855
        %v5106 = vpack.c.b16 %v4860, %v4858
        %v5107 = vpack.c.b16 %v4861, %v4859
        %v5108 = vpack.c.b16 %v4864, %v4862
        %v5109 = vpack.c.b16 %v4865, %v4863
        %v5110 = vpack.c.b16 %v4868, %v4866
        %v5111 = vpack.c.b16 %v4869, %v4867
        %v5112 = vpack.c.b16 %v4872, %v4870
        %v5113 = vpack.c.b16 %v4873, %v4871
        %v5114 = vpack.c.b16 %v4876, %v4874
        %v5115 = vpack.c.b16 %v4877, %v4875
        %v5116 = vpack.c.b16 %v4880, %v4878
        %v5117 = vpack.c.b16 %v4881, %v4879
        %v5118 = vpack.c.b16 %v4884, %v4882
        %v5119 = vpack.c.b16 %v4885, %v4883
        %v5120 = vpack.c.b16 %v4888, %v4886
        %v5121 = vpack.c.b16 %v4889, %v4887
        %v5122 = vpack.c.b16 %v4892, %v4890
        %v5123 = vpack.c.b16 %v4893, %v4891
        %v5124 = vpack.c.b16 %v4896, %v4894
        %v5125 = vpack.c.b16 %v4897, %v4895
        %v5126 = vpack.c.b16 %v4900, %v4898
        %v5127 = vpack.c.b16 %v4901, %v4899
        %v5128 = vpack.c.b16 %v4904, %v4902
        %v5129 = vpack.c.b16 %v4905, %v4903
        %v5130 = vpack.c.b16 %v4908, %v4906
        %v5131 = vpack.c.b16 %v4909, %v4907
        %v5132 = vpack.c.b16 %v4912, %v4910
        %v5133 = vpack.c.b16 %v4913, %v4911
        %v5134 = vpack.c.b16 %v4916, %v4914
        %v5135 = vpack.c.b16 %v4917, %v4915
        %v5136 = vpack.c.b16 %v4920, %v4918
        %v5137 = vpack.c.b16 %v4921, %v4919
        %v5138 = vpack.c.b16 %v4924, %v4922
        %v5139 = vpack.c.b16 %v4925, %v4923
        %v5140 = vpack.c.b16 %v4928, %v4926
        %v5141 = vpack.c.b16 %v4929, %v4927
        %v5142 = vpack.c.b16 %v4932, %v4930
        %v5143 = vpack.c.b16 %v4933, %v4931
        %v5144 = vpack.c.b16 %v4936, %v4934
        %v5145 = vpack.c.b16 %v4937, %v4935
        %v5146 = vpack.c.b16 %v4940, %v4938
        %v5147 = vpack.c.b16 %v4941, %v4939
        %v5148 = vpack.c.b16 %v4944, %v4942
        %v5149 = vpack.c.b16 %v4945, %v4943
        %v5150 = vpack.c.b16 %v4948, %v4946
        %v5151 = vpack.c.b16 %v4949, %v4947
        %v5152 = vpack.c.b16 %v4952, %v4950
        %v5153 = vpack.c.b16 %v4953, %v4951
        %v5154 = vpack.c.b16 %v4956, %v4954
        %v5155 = vpack.c.b16 %v4957, %v4955
        %v5156 = vpack.c.b16 %v4960, %v4958
        %v5157 = vpack.c.b16 %v4961, %v4959
        %v5158 = vpack.c.b16 %v4964, %v4962
        %v5159 = vpack.c.b16 %v4965, %v4963
        %v5160 = vpack.c.b16 %v4968, %v4966
        %v5161 = vpack.c.b16 %v4969, %v4967
        %v5162 = vpack.c.b16 %v4972, %v4970
        %v5163 = vpack.c.b16 %v4973, %v4971
        %v5164 = vpack.c.b16 %v4976, %v4974
        %v5165 = vpack.c.b16 %v4977, %v4975
        %v5166 = vpack.c.b16 %v4980, %v4978
        %v5167 = vpack.c.b16 %v4981, %v4979
        %v5168 = vpack.c.b16 %v4984, %v4982
        %v5169 = vpack.c.b16 %v4985, %v4983
        %v5170 = vpack.c.b16 %v4988, %v4986
        %v5171 = vpack.c.b16 %v4989, %v4987
        %v5172 = vpack.c.b16 %v4992, %v4990
        %v5173 = vpack.c.b16 %v4993, %v4991
        %v5174 = vpack.c.b16 %v4996, %v4994
        %v5175 = vpack.c.b16 %v4997, %v4995
        %v5176 = vpack.c.b16 %v5000, %v4998
        %v5177 = vpack.c.b16 %v5001, %v4999
        %v5178 = vpack.c.b16 %v5004, %v5002
        %v5179 = vpack.c.b16 %v5005, %v5003
        %v5180 = vpack.c.b16 %v5008, %v5006
        %v5181 = vpack.c.b16 %v5009, %v5007
        %v5182 = vpack.c.b16 %v5012, %v5010
        %v5183 = vpack.c.b16 %v5013, %v5011
        %v5184 = vpack.c.b16 %v5016, %v5014
        %v5185 = vpack.c.b16 %v5017, %v5015
        %v5186 = vpack.c.b16 %v5020, %v5018
        %v5187 = vpack.c.b16 %v5021, %v5019
        %v5188 = vpack.c.b16 %v5024, %v5022
        %v5189 = vpack.c.b16 %v5025, %v5023
        %v5190 = vpack.c.b16 %v5028, %v5026
        %v5191 = vpack.c.b16 %v5029, %v5027
        %v5192 = vpack.c.b16 %v5032, %v5030
        %v5193 = vpack.c.b16 %v5033, %v5031
        %5354 = vmatprep.subr.bf16.mxu0 %v5049
        %5355 = vmatpush1.bf16.msra.mxu0 %v5048
        %5356 = vmatprep.subr.bf16.mxu0 %v5047
        %5357 = vmatpush1.bf16.msra.mxu0 %v5046
        %5358 = vmatprep.subr.bf16.mxu0 %v5045
        %5359 = vmatpush1.bf16.msra.mxu0 %v5044
        %5360 = vmatprep.subr.bf16.mxu0 %v5043
        %5361 = vmatpush1.bf16.msra.mxu0 %v5042
        %5362 = vmatprep.subr.bf16.mxu0 %v5041
        %5363 = vmatpush1.bf16.msra.mxu0 %v5040
        %5364 = vmatprep.subr.bf16.mxu0 %v5039
        %5365 = vmatpush1.bf16.msra.mxu0 %v5038
        %5366 = vmatprep.subr.bf16.mxu0 %v5037
        %5367 = vmatpush1.bf16.msra.mxu0 %v5036
        %5368 = vmatprep.subr.bf16.mxu0 %v5035
        %5369 = vmatpush1.bf16.msra.mxu0 %v5034
        %5370 = vmatprep.subr.bf16.mxu0 %v5065
        %5371 = vmatpush2.bf16.msra.mxu0 %v5064
        %5372 = vmatprep.subr.bf16.mxu0 %v5063
        %5373 = vmatpush2.bf16.msra.mxu0 %v5062
        %5374 = vmatprep.subr.bf16.mxu0 %v5061
        %5375 = vmatpush2.bf16.msra.mxu0 %v5060
        %5376 = vmatprep.subr.bf16.mxu0 %v5059
        %5377 = vmatpush2.bf16.msra.mxu0 %v5058
        %5378 = vmatprep.subr.bf16.mxu0 %v5057
        %5379 = vmatpush2.bf16.msra.mxu0 %v5056
        %5380 = vmatprep.subr.bf16.mxu0 %v5055
        %5381 = vmatpush2.bf16.msra.mxu0 %v5054
        %5382 = vmatprep.subr.bf16.mxu0 %v5053
        %5383 = vmatpush2.bf16.msra.mxu0 %v5052
        %5384 = vmatprep.subr.bf16.mxu0 %v5051
        %5385 = vmatpush2.bf16.msra.mxu0 %v5050
        %5386 = vmatprep.mubr.bf16.mxu0 %v4330
        %5387 = vmatmul.mubr.bf16.gmra.mxu0 %v4329
        %v5388 = vpop.f32.mrf.mxu0
        %v5389 = vadd.f32 %v4547, %v5388
        %v5390 = vpop.f32.mrf.mxu0
        %v5391 = vadd.f32 %v4551, %v5390
        %v5392 = vpop.f32.mrf.mxu0
        %v5393 = vadd.f32 %v4547, %v5392
        %v5394 = vpop.f32.mrf.mxu0
        %v5395 = vadd.f32 %v4551, %v5394
        %5396 = vmatprep.mubr.bf16.mxu0 %v4332
        %5397 = vmatmul.mubr.bf16.gmra.mxu0 %v4331
        %v5398 = vpop.f32.mrf.mxu0
        %v5399 = vadd.f32 %v4547, %v5398
        %v5400 = vpop.f32.mrf.mxu0
        %v5401 = vadd.f32 %v4551, %v5400
        %v5402 = vpop.f32.mrf.mxu0
        %v5403 = vadd.f32 %v4547, %v5402
        %v5404 = vpop.f32.mrf.mxu0
        %v5405 = vadd.f32 %v4551, %v5404
        %5406 = vdwg.mxu0
        %5407 = vmatprep.subr.bf16.mxu0 %v5081
        %5408 = vmatpush1.bf16.msra.mxu0 %v5080
        %5409 = vmatprep.subr.bf16.mxu0 %v5079
        %5410 = vmatpush1.bf16.msra.mxu0 %v5078
        %5411 = vmatprep.subr.bf16.mxu0 %v5077
        %5412 = vmatpush1.bf16.msra.mxu0 %v5076
        %5413 = vmatprep.subr.bf16.mxu0 %v5075
        %5414 = vmatpush1.bf16.msra.mxu0 %v5074
        %5415 = vmatprep.subr.bf16.mxu0 %v5073
        %5416 = vmatpush1.bf16.msra.mxu0 %v5072
        %5417 = vmatprep.subr.bf16.mxu0 %v5071
        %5418 = vmatpush1.bf16.msra.mxu0 %v5070
        %5419 = vmatprep.subr.bf16.mxu0 %v5069
        %5420 = vmatpush1.bf16.msra.mxu0 %v5068
        %5421 = vmatprep.subr.bf16.mxu0 %v5067
        %5422 = vmatpush1.bf16.msra.mxu0 %v5066
        %5423 = vmatprep.subr.bf16.mxu0 %v5097
        %5424 = vmatpush2.bf16.msra.mxu0 %v5096
        %5425 = vmatprep.subr.bf16.mxu0 %v5095
        %5426 = vmatpush2.bf16.msra.mxu0 %v5094
        %5427 = vmatprep.subr.bf16.mxu0 %v5093
        %5428 = vmatpush2.bf16.msra.mxu0 %v5092
        %5429 = vmatprep.subr.bf16.mxu0 %v5091
        %5430 = vmatpush2.bf16.msra.mxu0 %v5090
        %5431 = vmatprep.subr.bf16.mxu0 %v5089
        %5432 = vmatpush2.bf16.msra.mxu0 %v5088
        %5433 = vmatprep.subr.bf16.mxu0 %v5087
        %5434 = vmatpush2.bf16.msra.mxu0 %v5086
        %5435 = vmatprep.subr.bf16.mxu0 %v5085
        %5436 = vmatpush2.bf16.msra.mxu0 %v5084
        %5437 = vmatprep.subr.bf16.mxu0 %v5083
        %5438 = vmatpush2.bf16.msra.mxu0 %v5082
        %5439 = vmatprep.mubr.bf16.mxu0 %v4346
        %5440 = vmatmul.mubr.bf16.gmra.mxu0 %v4343
        %v5441 = vpop.f32.mrf.mxu0
        %v5442 = vadd.f32 %v5389, %v5441
        %v5443 = vpop.f32.mrf.mxu0
        %v5444 = vadd.f32 %v5391, %v5443
        %v5445 = vpop.f32.mrf.mxu0
        %v5446 = vadd.f32 %v5393, %v5445
        %v5447 = vpop.f32.mrf.mxu0
        %v5448 = vadd.f32 %v5395, %v5447
        %5449 = vmatprep.mubr.bf16.mxu0 %v4350
        %5450 = vmatmul.mubr.bf16.gmra.mxu0 %v4348
        %v5451 = vpop.f32.mrf.mxu0
        %v5452 = vadd.f32 %v5399, %v5451
        %v5453 = vpop.f32.mrf.mxu0
        %v5454 = vadd.f32 %v5401, %v5453
        %v5455 = vpop.f32.mrf.mxu0
        %v5456 = vadd.f32 %v5403, %v5455
        %v5457 = vpop.f32.mrf.mxu0
        %v5458 = vadd.f32 %v5405, %v5457
        %5459 = vdwg.mxu0
        %5460 = vmatprep.subr.bf16.mxu0 %v5113
        %5461 = vmatpush1.bf16.msra.mxu0 %v5112
        %5462 = vmatprep.subr.bf16.mxu0 %v5111
        %5463 = vmatpush1.bf16.msra.mxu0 %v5110
        %5464 = vmatprep.subr.bf16.mxu0 %v5109
        %5465 = vmatpush1.bf16.msra.mxu0 %v5108
        %5466 = vmatprep.subr.bf16.mxu0 %v5107
        %5467 = vmatpush1.bf16.msra.mxu0 %v5106
        %5468 = vmatprep.subr.bf16.mxu0 %v5105
        %5469 = vmatpush1.bf16.msra.mxu0 %v5104
        %5470 = vmatprep.subr.bf16.mxu0 %v5103
        %5471 = vmatpush1.bf16.msra.mxu0 %v5102
        %5472 = vmatprep.subr.bf16.mxu0 %v5101
        %5473 = vmatpush1.bf16.msra.mxu0 %v5100
        %5474 = vmatprep.subr.bf16.mxu0 %v5099
        %5475 = vmatpush1.bf16.msra.mxu0 %v5098
        %5476 = vmatprep.subr.bf16.mxu0 %v5129
        %5477 = vmatpush2.bf16.msra.mxu0 %v5128
        %5478 = vmatprep.subr.bf16.mxu0 %v5127
        %5479 = vmatpush2.bf16.msra.mxu0 %v5126
        %5480 = vmatprep.subr.bf16.mxu0 %v5125
        %5481 = vmatpush2.bf16.msra.mxu0 %v5124
        %5482 = vmatprep.subr.bf16.mxu0 %v5123
        %5483 = vmatpush2.bf16.msra.mxu0 %v5122
        %5484 = vmatprep.subr.bf16.mxu0 %v5121
        %5485 = vmatpush2.bf16.msra.mxu0 %v5120
        %5486 = vmatprep.subr.bf16.mxu0 %v5119
        %5487 = vmatpush2.bf16.msra.mxu0 %v5118
        %5488 = vmatprep.subr.bf16.mxu0 %v5117
        %5489 = vmatpush2.bf16.msra.mxu0 %v5116
        %5490 = vmatprep.subr.bf16.mxu0 %v5115
        %5491 = vmatpush2.bf16.msra.mxu0 %v5114
        %5492 = vmatprep.mubr.bf16.mxu0 %v4360
        %5493 = vmatmul.mubr.bf16.gmra.mxu0 %v4357
        %v5494 = vpop.f32.mrf.mxu0
        %v5495 = vadd.f32 %v5442, %v5494
        %v5496 = vpop.f32.mrf.mxu0
        %v5497 = vadd.f32 %v5444, %v5496
        %v5498 = vpop.f32.mrf.mxu0
        %v5499 = vadd.f32 %v5446, %v5498
        %v5500 = vpop.f32.mrf.mxu0
        %v5501 = vadd.f32 %v5448, %v5500
        %5502 = vmatprep.mubr.bf16.mxu0 %v4364
        %5503 = vmatmul.mubr.bf16.gmra.mxu0 %v4362
        %v5504 = vpop.f32.mrf.mxu0
        %v5505 = vadd.f32 %v5452, %v5504
        %v5506 = vpop.f32.mrf.mxu0
        %v5507 = vadd.f32 %v5454, %v5506
        %v5508 = vpop.f32.mrf.mxu0
        %v5509 = vadd.f32 %v5456, %v5508
        %v5510 = vpop.f32.mrf.mxu0
        %v5511 = vadd.f32 %v5458, %v5510
        %5512 = vdwg.mxu0
        %5513 = vmatprep.subr.bf16.mxu0 %v5145
        %5514 = vmatpush1.bf16.msra.mxu0 %v5144
        %5515 = vmatprep.subr.bf16.mxu0 %v5143
        %5516 = vmatpush1.bf16.msra.mxu0 %v5142
        %5517 = vmatprep.subr.bf16.mxu0 %v5141
        %5518 = vmatpush1.bf16.msra.mxu0 %v5140
        %5519 = vmatprep.subr.bf16.mxu0 %v5139
        %5520 = vmatpush1.bf16.msra.mxu0 %v5138
        %5521 = vmatprep.subr.bf16.mxu0 %v5137
        %5522 = vmatpush1.bf16.msra.mxu0 %v5136
        %5523 = vmatprep.subr.bf16.mxu0 %v5135
        %5524 = vmatpush1.bf16.msra.mxu0 %v5134
        %5525 = vmatprep.subr.bf16.mxu0 %v5133
        %5526 = vmatpush1.bf16.msra.mxu0 %v5132
        %5527 = vmatprep.subr.bf16.mxu0 %v5131
        %5528 = vmatpush1.bf16.msra.mxu0 %v5130
        %5529 = vmatprep.subr.bf16.mxu0 %v5161
        %5530 = vmatpush2.bf16.msra.mxu0 %v5160
        %5531 = vmatprep.subr.bf16.mxu0 %v5159
        %5532 = vmatpush2.bf16.msra.mxu0 %v5158
        %5533 = vmatprep.subr.bf16.mxu0 %v5157
        %5534 = vmatpush2.bf16.msra.mxu0 %v5156
        %5535 = vmatprep.subr.bf16.mxu0 %v5155
        %5536 = vmatpush2.bf16.msra.mxu0 %v5154
        %5537 = vmatprep.subr.bf16.mxu0 %v5153
        %5538 = vmatpush2.bf16.msra.mxu0 %v5152
        %5539 = vmatprep.subr.bf16.mxu0 %v5151
        %5540 = vmatpush2.bf16.msra.mxu0 %v5150
        %5541 = vmatprep.subr.bf16.mxu0 %v5149
        %5542 = vmatpush2.bf16.msra.mxu0 %v5148
        %5543 = vmatprep.subr.bf16.mxu0 %v5147
        %5544 = vmatpush2.bf16.msra.mxu0 %v5146
        %5545 = vmatprep.mubr.bf16.mxu0 %v4374
        %5546 = vmatmul.mubr.bf16.gmra.mxu0 %v4371
        %v5547 = vpop.f32.mrf.mxu0
        %v5548 = vadd.f32 %v5495, %v5547
        %v5549 = vpop.f32.mrf.mxu0
        %v5550 = vadd.f32 %v5497, %v5549
        %v5551 = vpop.f32.mrf.mxu0
        %v5552 = vadd.f32 %v5499, %v5551
        %v5553 = vpop.f32.mrf.mxu0
        %v5554 = vadd.f32 %v5501, %v5553
        %5555 = vmatprep.mubr.bf16.mxu0 %v4378
        %5556 = vmatmul.mubr.bf16.gmra.mxu0 %v4376
        %v5557 = vpop.f32.mrf.mxu0
        %v5558 = vadd.f32 %v5505, %v5557
        %v5559 = vpop.f32.mrf.mxu0
        %v5560 = vadd.f32 %v5507, %v5559
        %v5561 = vpop.f32.mrf.mxu0
        %v5562 = vadd.f32 %v5509, %v5561
        %v5563 = vpop.f32.mrf.mxu0
        %v5564 = vadd.f32 %v5511, %v5563
        %5565 = vdwg.mxu0
        %5566 = vmatprep.subr.bf16.mxu0 %v5177
        %5567 = vmatpush1.bf16.msra.mxu0 %v5176
        %5568 = vmatprep.subr.bf16.mxu0 %v5175
        %5569 = vmatpush1.bf16.msra.mxu0 %v5174
        %5570 = vmatprep.subr.bf16.mxu0 %v5173
        %5571 = vmatpush1.bf16.msra.mxu0 %v5172
        %5572 = vmatprep.subr.bf16.mxu0 %v5171
        %5573 = vmatpush1.bf16.msra.mxu0 %v5170
        %5574 = vmatprep.subr.bf16.mxu0 %v5169
        %5575 = vmatpush1.bf16.msra.mxu0 %v5168
        %5576 = vmatprep.subr.bf16.mxu0 %v5167
        %5577 = vmatpush1.bf16.msra.mxu0 %v5166
        %5578 = vmatprep.subr.bf16.mxu0 %v5165
        %5579 = vmatpush1.bf16.msra.mxu0 %v5164
        %5580 = vmatprep.subr.bf16.mxu0 %v5163
        %5581 = vmatpush1.bf16.msra.mxu0 %v5162
        %5582 = vmatprep.subr.bf16.mxu0 %v5193
        %5583 = vmatpush2.bf16.msra.mxu0 %v5192
        %5584 = vmatprep.subr.bf16.mxu0 %v5191
        %5585 = vmatpush2.bf16.msra.mxu0 %v5190
        %5586 = vmatprep.subr.bf16.mxu0 %v5189
        %5587 = vmatpush2.bf16.msra.mxu0 %v5188
        %5588 = vmatprep.subr.bf16.mxu0 %v5187
        %5589 = vmatpush2.bf16.msra.mxu0 %v5186
        %5590 = vmatprep.subr.bf16.mxu0 %v5185
        %5591 = vmatpush2.bf16.msra.mxu0 %v5184
        %5592 = vmatprep.subr.bf16.mxu0 %v5183
        %5593 = vmatpush2.bf16.msra.mxu0 %v5182
        %5594 = vmatprep.subr.bf16.mxu0 %v5181
        %5595 = vmatpush2.bf16.msra.mxu0 %v5180
        %5596 = vmatprep.subr.bf16.mxu0 %v5179
        %5597 = vmatpush2.bf16.msra.mxu0 %v5178
        %5598 = vmatprep.mubr.bf16.mxu0 %v4332
        %5599 = vmatmul.mubr.bf16.gmra.mxu0 %v4331
        %v5600 = vpop.f32.mrf.mxu0
        %v5601 = vadd.f32 %v5548, %v5600
        %v5602 = vpop.f32.mrf.mxu0
        %v5603 = vadd.f32 %v5550, %v5602
        %v5604 = vpop.f32.mrf.mxu0
        %v5605 = vadd.f32 %v5552, %v5604
        %v5606 = vpop.f32.mrf.mxu0
        %v5607 = vadd.f32 %v5554, %v5606
        %5608 = vmatprep.mubr.bf16.mxu0 %v4334
        %5609 = vmatmul.mubr.bf16.gmra.mxu0 %v4333
        %v5610 = vpop.f32.mrf.mxu0
        %v5611 = vadd.f32 %v5558, %v5610
        %v5612 = vpop.f32.mrf.mxu0
        %v5613 = vadd.f32 %v5560, %v5612
        %v5614 = vpop.f32.mrf.mxu0
        %v5615 = vadd.f32 %v5562, %v5614
        %v5616 = vpop.f32.mrf.mxu0
        %v5617 = vadd.f32 %v5564, %v5616
        %5618 = vdwg.mxu0
        %vm5619 = vcmp.gt.f32.partialorder %v5601, 0.0
        %vm5620 = vcmp.gt.f32.partialorder %v5603, 0.0
        %vm5621 = vcmp.gt.f32.partialorder %v5605, 0.0
        %vm5622 = vcmp.gt.f32.partialorder %v5607, 0.0
        %vm5623 = vcmp.gt.f32.partialorder %v5611, 0.0
        %vm5624 = vcmp.gt.f32.partialorder %v5613, 0.0
        %vm5625 = vcmp.gt.f32.partialorder %v5615, 0.0
        %vm5626 = vcmp.gt.f32.partialorder %v5617, 0.0
        %v5627 = vmul.f32 %v5601, 0.01
        %v5628 = vmul.f32 %v5603, 0.01
        %v5629 = vmul.f32 %v5605, 0.01
        %v5630 = vmul.f32 %v5607, 0.01
        %v5631 = vmul.f32 %v5611, 0.01
        %v5632 = vmul.f32 %v5613, 0.01
        %v5633 = vmul.f32 %v5615, 0.01
        %v5634 = vmul.f32 %v5617, 0.01
        %v5635 = vsel %vm5619, %v5601, %v5627
        %v5636 = vsel %vm5620, %v5603, %v5628
        %v5637 = vsel %vm5621, %v5605, %v5629
        %v5638 = vsel %vm5622, %v5607, %v5630
        %v5639 = vsel %vm5623, %v5611, %v5631
        %v5640 = vsel %vm5624, %v5613, %v5632
        %v5641 = vsel %vm5625, %v5615, %v5633
        %v5642 = vsel %vm5626, %v5617, %v5634
        %v5643 = vld [vmem:[#allocation2 + $0x780] sm:$0xff]
        %v5644 = vld [vmem:[#allocation2 + $0x788] sm:$0xff]
        %v5645 = vld [vmem:[#allocation2 + $0x790] sm:$0xff]
        %v5646 = vld [vmem:[#allocation2 + $0x798] sm:$0xff]
        %v5647 = vld [vmem:[#allocation2 + $0x7a0] sm:$0xff]
        %v5648 = vld [vmem:[#allocation2 + $0x7a8] sm:$0xff]
        %v5649 = vld [vmem:[#allocation2 + $0x7b0] sm:$0xff]
        %v5650 = vld [vmem:[#allocation2 + $0x7b8] sm:$0xff]
        %v5651 = vld [vmem:[#allocation2 + $0x7c0] sm:$0xff]
        %v5652 = vld [vmem:[#allocation2 + $0x7c8] sm:$0xff]
        %v5653 = vld [vmem:[#allocation2 + $0x7d0] sm:$0xff]
        %v5654 = vld [vmem:[#allocation2 + $0x7d8] sm:$0xff]
        %v5655 = vld [vmem:[#allocation2 + $0x7e0] sm:$0xff]
        %v5656 = vld [vmem:[#allocation2 + $0x7e8] sm:$0xff]
        %v5657 = vld [vmem:[#allocation2 + $0x7f0] sm:$0xff]
        %v5658 = vld [vmem:[#allocation2 + $0x7f8] sm:$0xff]
        %v5675 = vunpack.c.l.b16 %v5643
        %v5676 = vunpack.c.h.b16 %v5643
        %v5677 = vunpack.c.l.b16 %v5644
        %v5678 = vunpack.c.h.b16 %v5644
        %v5679 = vunpack.c.l.b16 %v5645
        %v5680 = vunpack.c.h.b16 %v5645
        %v5681 = vunpack.c.l.b16 %v5646
        %v5682 = vunpack.c.h.b16 %v5646
        %v5683 = vunpack.c.l.b16 %v5647
        %v5684 = vunpack.c.h.b16 %v5647
        %v5685 = vunpack.c.l.b16 %v5648
        %v5686 = vunpack.c.h.b16 %v5648
        %v5687 = vunpack.c.l.b16 %v5649
        %v5688 = vunpack.c.h.b16 %v5649
        %v5689 = vunpack.c.l.b16 %v5650
        %v5690 = vunpack.c.h.b16 %v5650
        %v5691 = vunpack.c.l.b16 %v5651
        %v5692 = vunpack.c.h.b16 %v5651
        %v5693 = vunpack.c.l.b16 %v5652
        %v5694 = vunpack.c.h.b16 %v5652
        %v5695 = vunpack.c.l.b16 %v5653
        %v5696 = vunpack.c.h.b16 %v5653
        %v5697 = vunpack.c.l.b16 %v5654
        %v5698 = vunpack.c.h.b16 %v5654
        %v5699 = vunpack.c.l.b16 %v5655
        %v5700 = vunpack.c.h.b16 %v5655
        %v5701 = vunpack.c.l.b16 %v5656
        %v5702 = vunpack.c.h.b16 %v5656
        %v5703 = vunpack.c.l.b16 %v5657
        %v5704 = vunpack.c.h.b16 %v5657
        %v5705 = vunpack.c.l.b16 %v5658
        %v5706 = vunpack.c.h.b16 %v5658
        %v5707 = vpack.c.b16 %v5677, %v5675
        %v5708 = vpack.c.b16 %v5678, %v5676
        %v5709 = vpack.c.b16 %v5681, %v5679
        %v5710 = vpack.c.b16 %v5682, %v5680
        %v5711 = vpack.c.b16 %v5685, %v5683
        %v5712 = vpack.c.b16 %v5686, %v5684
        %v5713 = vpack.c.b16 %v5689, %v5687
        %v5714 = vpack.c.b16 %v5690, %v5688
        %v5715 = vpack.c.b16 %v5693, %v5691
        %v5716 = vpack.c.b16 %v5694, %v5692
        %v5717 = vpack.c.b16 %v5697, %v5695
        %v5718 = vpack.c.b16 %v5698, %v5696
        %v5719 = vpack.c.b16 %v5701, %v5699
        %v5720 = vpack.c.b16 %v5702, %v5700
        %v5721 = vpack.c.b16 %v5705, %v5703
        %v5722 = vpack.c.b16 %v5706, %v5704
        %5739 = vmatprep.subr.bf16.mxu0 %v5722
        %5740 = vmatpush1.bf16.msra.mxu0 %v5721
        %5741 = vmatprep.subr.bf16.mxu0 %v5720
        %5742 = vmatpush1.bf16.msra.mxu0 %v5719
        %5743 = vmatprep.subr.bf16.mxu0 %v5718
        %5744 = vmatpush1.bf16.msra.mxu0 %v5717
        %5745 = vmatprep.subr.bf16.mxu0 %v5716
        %5746 = vmatpush1.bf16.msra.mxu0 %v5715
        %5747 = vmatprep.subr.bf16.mxu0 %v5714
        %5748 = vmatpush1.bf16.msra.mxu0 %v5713
        %5749 = vmatprep.subr.bf16.mxu0 %v5712
        %5750 = vmatpush1.bf16.msra.mxu0 %v5711
        %5751 = vmatprep.subr.bf16.mxu0 %v5710
        %5752 = vmatpush1.bf16.msra.mxu0 %v5709
        %5753 = vmatprep.subr.bf16.mxu0 %v5708
        %5754 = vmatpush1.bf16.msra.mxu0 %v5707
        %5755 = vmatprep.subr.bf16.mxu0 0
        %5756 = vmatpush2.bf16.msra.mxu0 0
        %5757 = vmatprep.subr.bf16.mxu0 0
        %5758 = vmatpush2.bf16.msra.mxu0 0
        %5759 = vmatprep.subr.bf16.mxu0 0
        %5760 = vmatpush2.bf16.msra.mxu0 0
        %5761 = vmatprep.subr.bf16.mxu0 0
        %5762 = vmatpush2.bf16.msra.mxu0 0
        %5763 = vmatprep.subr.bf16.mxu0 0
        %5764 = vmatpush2.bf16.msra.mxu0 0
        %5765 = vmatprep.subr.bf16.mxu0 0
        %5766 = vmatpush2.bf16.msra.mxu0 0
        %5767 = vmatprep.subr.bf16.mxu0 0
        %5768 = vmatpush2.bf16.msra.mxu0 0
        %5769 = vmatprep.subr.bf16.mxu0 0
        %5770 = vmatpush2.bf16.msra.mxu0 0
        %5771 = vmatprep.mubr.bf16.mxu0 0
        %5772 = vmatmul.mubr.bf16.gmra.mxu0 %v3583
        %v5773 = vpop.f32.mrf.mxu0
        %v5774 = vadd.f32 0.0, %v5773
        %v5775 = vpop.f32.mrf.mxu0
        %v5776 = vadd.f32 0.0, %v5775
        %v5777 = vpop.f32.mrf.mxu0
        %v5778 = vadd.f32 0.0, %v5777
        %v5779 = vpop.f32.mrf.mxu0
        %v5780 = vadd.f32 0.0, %v5779
        %5781 = vmatprep.mubr.bf16.mxu0 0
        %5782 = vmatmul.mubr.bf16.gmra.mxu0 %v3584
        %v5783 = vpop.f32.mrf.mxu0
        %v5784 = vadd.f32 0.0, %v5783
        %v5785 = vpop.f32.mrf.mxu0
        %v5786 = vadd.f32 0.0, %v5785
        %v5787 = vpop.f32.mrf.mxu0
        %v5788 = vadd.f32 0.0, %v5787
        %v5789 = vpop.f32.mrf.mxu0
        %v5790 = vadd.f32 0.0, %v5789
        %5791 = vdwg.mxu0
        %v5792 = vadd.f32 %v5635, %v5774
        %v5793 = vadd.f32 %v5636, %v5776
        %v5794 = vadd.f32 %v5637, %v5778
        %v5795 = vadd.f32 %v5638, %v5780
        %v5796 = vadd.f32 %v5639, %v5784
        %v5797 = vadd.f32 %v5640, %v5786
        %v5798 = vadd.f32 %v5641, %v5788
        %v5799 = vadd.f32 %v5642, %v5790
        %v5801 = vlaneseq
        %v5802 = vshrl.u32 %v5801, 7
        %v5803 = vsub.s32 0, %v5802
        %v5804 = vrot.slane %v3582, %v5803
        %v5805 = vlaneseq
        %v5806 = vshrl.u32 %v5805, 7
        %v5807 = vsub.s32 1, %v5806
        %v5808 = vrot.slane %v3582, %v5807
        %v5811 = vadd.f32 %v5792, %v5804
        %v5812 = vadd.f32 %v5793, %v5808
        %v5813 = vadd.f32 %v5794, %v5804
        %v5814 = vadd.f32 %v5795, %v5808
        %v5815 = vadd.f32 %v5796, %v5804
        %v5816 = vadd.f32 %v5797, %v5808
        %v5817 = vadd.f32 %v5798, %v5804
        %v5818 = vadd.f32 %v5799, %v5808
        %v5827 = vrot.slane %v5811, 1
        %v5828 = vrot.slane %v5813, 1
        %v5829 = vsel %vm1834, %v5827, %v5828
        %v5830 = vrot.slane %v5812, 1
        %v5831 = vrot.slane %v5814, 1
        %v5832 = vsel %vm1834, %v5830, %v5831
        %v5833 = vrot.slane %v5815, 1
        %v5834 = vsel %vm1834, %v5828, %v5833
        %v5835 = vrot.slane %v5816, 1
        %v5836 = vsel %vm1834, %v5831, %v5835
        %v5837 = vrot.slane %v5817, 1
        %v5838 = vsel %vm1834, %v5833, %v5837
        %v5839 = vrot.slane %v5818, 1
        %v5840 = vsel %vm1834, %v5835, %v5839
        %v5851 = vsel %vm1834, %v5837, %v5827
        %v5852 = vsel %vm1834, %v5839, %v5830
        %v5853 = vmax.f32 %v5811, %v5829
        %v5854 = vmax.f32 %v5812, %v5832
        %v5855 = vmax.f32 %v5813, %v5834
        %v5856 = vmax.f32 %v5814, %v5836
        %v5857 = vmax.f32 %v5815, %v5838
        %v5858 = vmax.f32 %v5816, %v5840
        %v5859 = vmax.f32 %v5817, %v5851
        %v5860 = vmax.f32 %v5818, %v5852
        %v5861 = vld [vmem:[%s6] sm:$0xff]
        %v5862 = vld [vmem:[%s6 + $0x8] sm:$0xff]
        %vm5863 = vcmask 261120
        %v5865 = vsel %vm5863, %v5861, 0
        %v5868 = vsel %vm5863, %v5862, 0
        %5870 = vmatprep.subr.mxu0 0.0
        %5871 = vmatpush1.msra.mxu0 0.0
        %5872 = vmatprep.subr.mxu0 0.0
        %5873 = vmatpush1.msra.mxu0 0.0
        %5874 = vmatprep.subr.mxu0 0.0
        %5875 = vmatpush1.msra.mxu0 0.0
        %5876 = vmatprep.subr.mxu0 0.0
        %5877 = vmatpush1.msra.mxu0 0.0
        %5878 = vmatprep.subr.mxu0 0.0
        %5879 = vmatpush1.msra.mxu0 0.0
        %5880 = vmatprep.subr.mxu0 0.0
        %5881 = vmatpush1.msra.mxu0 0.0
        %5882 = vmatprep.subr.mxu0 0.0
        %5883 = vmatpush1.msra.mxu0 0.0
        %5884 = vmatprep.subr.mxu0 0.0
        %5885 = vmatpush1.msra.mxu0 0.0
        %5886 = vmatprep.subr.mxu0 0.0
        %5887 = vmatpush1.msra.mxu0 0.0
        %5888 = vmatprep.subr.mxu0 0.0
        %5889 = vmatpush1.msra.mxu0 0.0
        %5890 = vmatprep.subr.mxu0 0.0
        %5891 = vmatpush1.msra.mxu0 0.0
        %5892 = vmatprep.subr.mxu0 0.0
        %5893 = vmatpush1.msra.mxu0 0.0
        %5894 = vmatprep.subr.mxu0 %v5860
        %5895 = vmatpush1.msra.mxu0 %v5859
        %5896 = vmatprep.subr.mxu0 %v5858
        %5897 = vmatpush1.msra.mxu0 %v5857
        %5898 = vmatprep.subr.mxu0 %v5856
        %5899 = vmatpush1.msra.mxu0 %v5855
        %5900 = vmatprep.subr.mxu0 %v5854
        %5901 = vmatpush1.msra.mxu0 %v5853
        %5902 = vmatprep.subr.mxu0 0.0
        %5903 = vmatpush2.msra.mxu0 0.0
        %5904 = vmatprep.subr.mxu0 0.0
        %5905 = vmatpush2.msra.mxu0 0.0
        %5906 = vmatprep.subr.mxu0 0.0
        %5907 = vmatpush2.msra.mxu0 0.0
        %5908 = vmatprep.subr.mxu0 0.0
        %5909 = vmatpush2.msra.mxu0 0.0
        %5910 = vmatprep.subr.mxu0 0.0
        %5911 = vmatpush2.msra.mxu0 0.0
        %5912 = vmatprep.subr.mxu0 0.0
        %5913 = vmatpush2.msra.mxu0 0.0
        %5914 = vmatprep.subr.mxu0 0.0
        %5915 = vmatpush2.msra.mxu0 0.0
        %5916 = vmatprep.subr.mxu0 0.0
        %5917 = vmatpush2.msra.mxu0 0.0
        %5918 = vmatprep.subr.mxu0 0.0
        %5919 = vmatpush2.msra.mxu0 0.0
        %5920 = vmatprep.subr.mxu0 0.0
        %5921 = vmatpush2.msra.mxu0 0.0
        %5922 = vmatprep.subr.mxu0 0.0
        %5923 = vmatpush2.msra.mxu0 0.0
        %5924 = vmatprep.subr.mxu0 0.0
        %5925 = vmatpush2.msra.mxu0 0.0
        %5926 = vmatprep.subr.mxu0 0.0
        %5927 = vmatpush2.msra.mxu0 0.0
        %5928 = vmatprep.subr.mxu0 0.0
        %5929 = vmatpush2.msra.mxu0 0.0
        %5930 = vmatprep.subr.mxu0 0.0
        %5931 = vmatpush2.msra.mxu0 0.0
        %5932 = vmatprep.subr.mxu0 0.0
        %5933 = vmatpush2.msra.mxu0 0.0
        %5934 = vmatprep.mubr.f32.mxu0 0.0
        %5935 = vmatmul.mubr.f32.gmra.mxu0 %v5865
        %v5936 = vpop.f32.mrf.mxu0
        %v5937 = vadd.f32 0.0, %v5936
        %v5938 = vpop.f32.mrf.mxu0
        %v5939 = vadd.f32 0.0, %v5938
        %5940 = vmatprep.mubr.f32.mxu0 0.0
        %5941 = vmatmul.mubr.f32.gmra.mxu0 %v5868
        %v5942 = vpop.f32.mrf.mxu0
        %v5943 = vadd.f32 0.0, %v5942
        %v5944 = vpop.f32.mrf.mxu0
        %v5945 = vadd.f32 0.0, %v5944
        %5946 = vdwg.mxu0
        %v5947 = vld [vmem:[#allocation7 + $0x11] ss:$0 sm:$0xff]
        %v5948 = vld [vmem:[#allocation7 + $0x12] ss:$0 sm:$0xff]
        %v5949 = vld [vmem:[#allocation7 + $0x13] ss:$0 sm:$0xff]
        %v5950 = vpack.c.bf16 %v5943, %v5937
        %v5951 = vpack.c.bf16 %v5945, %v5939
        %v5954 = vrot.slane %v5950, 4
        %v5955 = vsel %vm2555, %v2556, %v5954
        %v5956 = vrot.slane %v5951, 4
        %v5957 = vsel %vm2555, %v2556, %v5956
        %v5960 = vld [vmem:[#allocation5] sm:$0xf]
        %v5961 = vld [vmem:[#allocation5 + $0x4] sm:$0xf]
        %v5962 = vld [vmem:[#allocation5 + $0x8] sm:$0xf]
        %v5963 = vld [vmem:[#allocation5 + $0xc] sm:$0xf]
        %v5964 = vld [vmem:[#allocation5 + $0x10] sm:$0xf]
        %v5965 = vld [vmem:[#allocation5 + $0x14] sm:$0xf]
        %v5966 = vld [vmem:[#allocation5 + $0x18] sm:$0xf]
        %v5967 = vld [vmem:[#allocation5 + $0x1c] sm:$0xf]
        %v5968 = vld [vmem:[#allocation5 + $0x20] sm:$0xf]
        %v5969 = vld [vmem:[#allocation5 + $0x24] sm:$0xf]
        %v5970 = vld [vmem:[#allocation5 + $0x28] sm:$0xf]
        %v5971 = vld [vmem:[#allocation5 + $0x2c] sm:$0xf]
        %v5972 = vld [vmem:[#allocation5 + $0x30] sm:$0xf]
        %v5973 = vld [vmem:[#allocation5 + $0x34] sm:$0xf]
        %v5974 = vld [vmem:[#allocation5 + $0x38] sm:$0xf]
        %v5975 = vld [vmem:[#allocation5 + $0x3c] sm:$0xf]
        %v5976 = vld [vmem:[#allocation5 + $0x40] sm:$0xf]
        %v5977 = vld [vmem:[#allocation5 + $0x44] sm:$0xf]
        %v5978 = vld [vmem:[#allocation5 + $0x48] sm:$0xf]
        %v5979 = vld [vmem:[#allocation5 + $0x4c] sm:$0xf]
        %v5980 = vld [vmem:[#allocation5 + $0x50] sm:$0xf]
        %v5981 = vld [vmem:[#allocation5 + $0x54] sm:$0xf]
        %v5982 = vld [vmem:[#allocation5 + $0x58] sm:$0xf]
        %v5983 = vld [vmem:[#allocation5 + $0x5c] sm:$0xf]
        %v5984 = vld [vmem:[#allocation5 + $0x60] sm:$0xf]
        %v5985 = vld [vmem:[#allocation5 + $0x64] sm:$0xf]
        %v5986 = vld [vmem:[#allocation5 + $0x68] sm:$0xf]
        %v5987 = vld [vmem:[#allocation5 + $0x6c] sm:$0xf]
        %v5988 = vld [vmem:[#allocation5 + $0x70] sm:$0xf]
        %v5989 = vld [vmem:[#allocation5 + $0x74] sm:$0xf]
        %v5990 = vld [vmem:[#allocation5 + $0x78] sm:$0xf]
        %v5991 = vld [vmem:[#allocation5 + $0x7c] sm:$0xf]
        %v5992 = vld [vmem:[#allocation5 + $0x80] sm:$0xf]
        %v5993 = vld [vmem:[#allocation5 + $0x84] sm:$0xf]
        %v5994 = vld [vmem:[#allocation5 + $0x88] sm:$0xf]
        %v5995 = vld [vmem:[#allocation5 + $0x8c] sm:$0xf]
        %v5996 = vld [vmem:[#allocation5 + $0x90] sm:$0xf]
        %v5997 = vld [vmem:[#allocation5 + $0x94] sm:$0xf]
        %v5998 = vld [vmem:[#allocation5 + $0x98] sm:$0xf]
        %v5999 = vld [vmem:[#allocation5 + $0x9c] sm:$0xf]
        %v6000 = vld [vmem:[#allocation5 + $0xa0] sm:$0xf]
        %v6001 = vld [vmem:[#allocation5 + $0xa4] sm:$0xf]
        %v6002 = vld [vmem:[#allocation5 + $0xa8] sm:$0xf]
        %v6003 = vld [vmem:[#allocation5 + $0xac] sm:$0xf]
        %v6004 = vld [vmem:[#allocation5 + $0xb0] sm:$0xf]
        %v6005 = vld [vmem:[#allocation5 + $0xb4] sm:$0xf]
        %v6006 = vld [vmem:[#allocation5 + $0xb8] sm:$0xf]
        %v6007 = vld [vmem:[#allocation5 + $0xbc] sm:$0xf]
        %v6008 = vld [vmem:[#allocation5 + $0xc0] sm:$0xf]
        %v6009 = vld [vmem:[#allocation5 + $0xc4] sm:$0xf]
        %v6010 = vld [vmem:[#allocation5 + $0xc8] sm:$0xf]
        %v6011 = vld [vmem:[#allocation5 + $0xcc] sm:$0xf]
        %v6012 = vld [vmem:[#allocation5 + $0xd0] sm:$0xf]
        %v6013 = vld [vmem:[#allocation5 + $0xd4] sm:$0xf]
        %v6014 = vld [vmem:[#allocation5 + $0xd8] sm:$0xf]
        %v6015 = vld [vmem:[#allocation5 + $0xdc] sm:$0xf]
        %v6016 = vld [vmem:[#allocation5 + $0xe0] sm:$0xf]
        %v6017 = vld [vmem:[#allocation5 + $0xe4] sm:$0xf]
        %v6018 = vld [vmem:[#allocation5 + $0xe8] sm:$0xf]
        %v6019 = vld [vmem:[#allocation5 + $0xec] sm:$0xf]
        %v6020 = vld [vmem:[#allocation5 + $0xf0] sm:$0xf]
        %v6021 = vld [vmem:[#allocation5 + $0xf4] sm:$0xf]
        %v6022 = vld [vmem:[#allocation5 + $0xf8] sm:$0xf]
        %v6023 = vld [vmem:[#allocation5 + $0xfc] sm:$0xf]
        %v6024 = vld [vmem:[#allocation5 + $0x100] sm:$0xf]
        %v6025 = vld [vmem:[#allocation5 + $0x104] sm:$0xf]
        %v6026 = vld [vmem:[#allocation5 + $0x108] sm:$0xf]
        %v6027 = vld [vmem:[#allocation5 + $0x10c] sm:$0xf]
        %v6028 = vld [vmem:[#allocation5 + $0x110] sm:$0xf]
        %v6029 = vld [vmem:[#allocation5 + $0x114] sm:$0xf]
        %v6030 = vld [vmem:[#allocation5 + $0x118] sm:$0xf]
        %v6031 = vld [vmem:[#allocation5 + $0x11c] sm:$0xf]
        %v6032 = vld [vmem:[#allocation5 + $0x120] sm:$0xf]
        %v6033 = vld [vmem:[#allocation5 + $0x124] sm:$0xf]
        %v6034 = vld [vmem:[#allocation5 + $0x128] sm:$0xf]
        %v6035 = vld [vmem:[#allocation5 + $0x12c] sm:$0xf]
        %v6036 = vld [vmem:[#allocation5 + $0x130] sm:$0xf]
        %v6037 = vld [vmem:[#allocation5 + $0x134] sm:$0xf]
        %v6038 = vld [vmem:[#allocation5 + $0x138] sm:$0xf]
        %v6039 = vld [vmem:[#allocation5 + $0x13c] sm:$0xf]
        %v6040 = vld [vmem:[#allocation5 + $0x140] sm:$0xf]
        %v6041 = vld [vmem:[#allocation5 + $0x144] sm:$0xf]
        %v6042 = vld [vmem:[#allocation5 + $0x148] sm:$0xf]
        %v6043 = vld [vmem:[#allocation5 + $0x14c] sm:$0xf]
        %v6044 = vld [vmem:[#allocation5 + $0x150] sm:$0xf]
        %v6045 = vld [vmem:[#allocation5 + $0x154] sm:$0xf]
        %v6046 = vld [vmem:[#allocation5 + $0x158] sm:$0xf]
        %v6047 = vld [vmem:[#allocation5 + $0x15c] sm:$0xf]
        %v6048 = vld [vmem:[#allocation5 + $0x160] sm:$0xf]
        %v6049 = vld [vmem:[#allocation5 + $0x164] sm:$0xf]
        %v6050 = vld [vmem:[#allocation5 + $0x168] sm:$0xf]
        %v6051 = vld [vmem:[#allocation5 + $0x16c] sm:$0xf]
        %v6052 = vld [vmem:[#allocation5 + $0x170] sm:$0xf]
        %v6053 = vld [vmem:[#allocation5 + $0x174] sm:$0xf]
        %v6054 = vld [vmem:[#allocation5 + $0x178] sm:$0xf]
        %v6055 = vld [vmem:[#allocation5 + $0x17c] sm:$0xf]
        %v6056 = vld [vmem:[#allocation5 + $0x180] sm:$0xf]
        %v6057 = vld [vmem:[#allocation5 + $0x184] sm:$0xf]
        %v6058 = vld [vmem:[#allocation5 + $0x188] sm:$0xf]
        %v6059 = vld [vmem:[#allocation5 + $0x18c] sm:$0xf]
        %v6060 = vld [vmem:[#allocation5 + $0x190] sm:$0xf]
        %v6061 = vld [vmem:[#allocation5 + $0x194] sm:$0xf]
        %v6062 = vld [vmem:[#allocation5 + $0x198] sm:$0xf]
        %v6063 = vld [vmem:[#allocation5 + $0x19c] sm:$0xf]
        %v6064 = vld [vmem:[#allocation5 + $0x1a0] sm:$0xf]
        %v6065 = vld [vmem:[#allocation5 + $0x1a4] sm:$0xf]
        %v6066 = vld [vmem:[#allocation5 + $0x1a8] sm:$0xf]
        %v6067 = vld [vmem:[#allocation5 + $0x1ac] sm:$0xf]
        %v6068 = vld [vmem:[#allocation5 + $0x1b0] sm:$0xf]
        %v6069 = vld [vmem:[#allocation5 + $0x1b4] sm:$0xf]
        %v6070 = vld [vmem:[#allocation5 + $0x1b8] sm:$0xf]
        %v6071 = vld [vmem:[#allocation5 + $0x1bc] sm:$0xf]
        %v6072 = vld [vmem:[#allocation5 + $0x1c0] sm:$0xf]
        %v6073 = vld [vmem:[#allocation5 + $0x1c4] sm:$0xf]
        %v6074 = vld [vmem:[#allocation5 + $0x1c8] sm:$0xf]
        %v6075 = vld [vmem:[#allocation5 + $0x1cc] sm:$0xf]
        %v6076 = vld [vmem:[#allocation5 + $0x1d0] sm:$0xf]
        %v6077 = vld [vmem:[#allocation5 + $0x1d4] sm:$0xf]
        %v6078 = vld [vmem:[#allocation5 + $0x1d8] sm:$0xf]
        %v6079 = vld [vmem:[#allocation5 + $0x1dc] sm:$0xf]
        %v6080 = vld [vmem:[#allocation5 + $0x1e0] sm:$0xf]
        %v6081 = vld [vmem:[#allocation5 + $0x1e4] sm:$0xf]
        %v6082 = vld [vmem:[#allocation5 + $0x1e8] sm:$0xf]
        %v6083 = vld [vmem:[#allocation5 + $0x1ec] sm:$0xf]
        %v6084 = vld [vmem:[#allocation5 + $0x1f0] sm:$0xf]
        %v6085 = vld [vmem:[#allocation5 + $0x1f4] sm:$0xf]
        %v6086 = vld [vmem:[#allocation5 + $0x1f8] sm:$0xf]
        %v6087 = vld [vmem:[#allocation5 + $0x1fc] sm:$0xf]
        %v6088 = vld [vmem:[#allocation5 + $0x200] sm:$0xf]
        %v6089 = vld [vmem:[#allocation5 + $0x204] sm:$0xf]
        %v6090 = vld [vmem:[#allocation5 + $0x208] sm:$0xf]
        %v6091 = vld [vmem:[#allocation5 + $0x20c] sm:$0xf]
        %v6092 = vld [vmem:[#allocation5 + $0x210] sm:$0xf]
        %v6093 = vld [vmem:[#allocation5 + $0x214] sm:$0xf]
        %v6094 = vld [vmem:[#allocation5 + $0x218] sm:$0xf]
        %v6095 = vld [vmem:[#allocation5 + $0x21c] sm:$0xf]
        %v6096 = vld [vmem:[#allocation5 + $0x220] sm:$0xf]
        %v6097 = vld [vmem:[#allocation5 + $0x224] sm:$0xf]
        %v6098 = vld [vmem:[#allocation5 + $0x228] sm:$0xf]
        %v6099 = vld [vmem:[#allocation5 + $0x22c] sm:$0xf]
        %v6100 = vld [vmem:[#allocation5 + $0x230] sm:$0xf]
        %v6101 = vld [vmem:[#allocation5 + $0x234] sm:$0xf]
        %v6102 = vld [vmem:[#allocation5 + $0x238] sm:$0xf]
        %v6103 = vld [vmem:[#allocation5 + $0x23c] sm:$0xf]
        %v6104 = vld [vmem:[#allocation5 + $0x240] sm:$0xf]
        %v6105 = vld [vmem:[#allocation5 + $0x244] sm:$0xf]
        %v6106 = vld [vmem:[#allocation5 + $0x248] sm:$0xf]
        %v6107 = vld [vmem:[#allocation5 + $0x24c] sm:$0xf]
        %v6108 = vld [vmem:[#allocation5 + $0x250] sm:$0xf]
        %v6109 = vld [vmem:[#allocation5 + $0x254] sm:$0xf]
        %v6110 = vld [vmem:[#allocation5 + $0x258] sm:$0xf]
        %v6111 = vld [vmem:[#allocation5 + $0x25c] sm:$0xf]
        %v6112 = vld [vmem:[#allocation5 + $0x260] sm:$0xf]
        %v6113 = vld [vmem:[#allocation5 + $0x264] sm:$0xf]
        %v6114 = vld [vmem:[#allocation5 + $0x268] sm:$0xf]
        %v6115 = vld [vmem:[#allocation5 + $0x26c] sm:$0xf]
        %v6116 = vld [vmem:[#allocation5 + $0x270] sm:$0xf]
        %v6117 = vld [vmem:[#allocation5 + $0x274] sm:$0xf]
        %v6118 = vld [vmem:[#allocation5 + $0x278] sm:$0xf]
        %v6119 = vld [vmem:[#allocation5 + $0x27c] sm:$0xf]
        %v6280 = vunpack.c.l.b16 %v5960
        %v6281 = vunpack.c.l.b16 %v5961
        %v6282 = vunpack.c.l.b16 %v5962
        %v6283 = vunpack.c.l.b16 %v5963
        %v6284 = vunpack.c.l.b16 %v5964
        %v6285 = vunpack.c.l.b16 %v5965
        %v6286 = vunpack.c.l.b16 %v5966
        %v6287 = vunpack.c.l.b16 %v5967
        %v6288 = vunpack.c.l.b16 %v5968
        %v6289 = vunpack.c.l.b16 %v5969
        %v6290 = vunpack.c.l.b16 %v5970
        %v6291 = vunpack.c.l.b16 %v5971
        %v6292 = vunpack.c.l.b16 %v5972
        %v6293 = vunpack.c.l.b16 %v5973
        %v6294 = vunpack.c.l.b16 %v5974
        %v6295 = vunpack.c.l.b16 %v5975
        %v6296 = vunpack.c.l.b16 %v5976
        %v6297 = vunpack.c.l.b16 %v5977
        %v6298 = vunpack.c.l.b16 %v5978
        %v6299 = vunpack.c.l.b16 %v5979
        %v6300 = vunpack.c.l.b16 %v5980
        %v6301 = vunpack.c.l.b16 %v5981
        %v6302 = vunpack.c.l.b16 %v5982
        %v6303 = vunpack.c.l.b16 %v5983
        %v6304 = vunpack.c.l.b16 %v5984
        %v6305 = vunpack.c.l.b16 %v5985
        %v6306 = vunpack.c.l.b16 %v5986
        %v6307 = vunpack.c.l.b16 %v5987
        %v6308 = vunpack.c.l.b16 %v5988
        %v6309 = vunpack.c.l.b16 %v5989
        %v6310 = vunpack.c.l.b16 %v5990
        %v6311 = vunpack.c.l.b16 %v5991
        %v6312 = vunpack.c.l.b16 %v5992
        %v6313 = vunpack.c.l.b16 %v5993
        %v6314 = vunpack.c.l.b16 %v5994
        %v6315 = vunpack.c.l.b16 %v5995
        %v6316 = vunpack.c.l.b16 %v5996
        %v6317 = vunpack.c.l.b16 %v5997
        %v6318 = vunpack.c.l.b16 %v5998
        %v6319 = vunpack.c.l.b16 %v5999
        %v6320 = vunpack.c.l.b16 %v6000
        %v6321 = vunpack.c.l.b16 %v6001
        %v6322 = vunpack.c.l.b16 %v6002
        %v6323 = vunpack.c.l.b16 %v6003
        %v6324 = vunpack.c.l.b16 %v6004
        %v6325 = vunpack.c.l.b16 %v6005
        %v6326 = vunpack.c.l.b16 %v6006
        %v6327 = vunpack.c.l.b16 %v6007
        %v6328 = vunpack.c.l.b16 %v6008
        %v6329 = vunpack.c.l.b16 %v6009
        %v6330 = vunpack.c.l.b16 %v6010
        %v6331 = vunpack.c.l.b16 %v6011
        %v6332 = vunpack.c.l.b16 %v6012
        %v6333 = vunpack.c.l.b16 %v6013
        %v6334 = vunpack.c.l.b16 %v6014
        %v6335 = vunpack.c.l.b16 %v6015
        %v6336 = vunpack.c.l.b16 %v6016
        %v6337 = vunpack.c.l.b16 %v6017
        %v6338 = vunpack.c.l.b16 %v6018
        %v6339 = vunpack.c.l.b16 %v6019
        %v6340 = vunpack.c.l.b16 %v6020
        %v6341 = vunpack.c.l.b16 %v6021
        %v6342 = vunpack.c.l.b16 %v6022
        %v6343 = vunpack.c.l.b16 %v6023
        %v6344 = vunpack.c.l.b16 %v6024
        %v6345 = vunpack.c.l.b16 %v6025
        %v6346 = vunpack.c.l.b16 %v6026
        %v6347 = vunpack.c.l.b16 %v6027
        %v6348 = vunpack.c.l.b16 %v6028
        %v6349 = vunpack.c.l.b16 %v6029
        %v6350 = vunpack.c.l.b16 %v6030
        %v6351 = vunpack.c.l.b16 %v6031
        %v6352 = vunpack.c.l.b16 %v6032
        %v6353 = vunpack.c.l.b16 %v6033
        %v6354 = vunpack.c.l.b16 %v6034
        %v6355 = vunpack.c.l.b16 %v6035
        %v6356 = vunpack.c.l.b16 %v6036
        %v6357 = vunpack.c.l.b16 %v6037
        %v6358 = vunpack.c.l.b16 %v6038
        %v6359 = vunpack.c.l.b16 %v6039
        %v6360 = vunpack.c.l.b16 %v6040
        %v6361 = vunpack.c.l.b16 %v6041
        %v6362 = vunpack.c.l.b16 %v6042
        %v6363 = vunpack.c.l.b16 %v6043
        %v6364 = vunpack.c.l.b16 %v6044
        %v6365 = vunpack.c.l.b16 %v6045
        %v6366 = vunpack.c.l.b16 %v6046
        %v6367 = vunpack.c.l.b16 %v6047
        %v6368 = vunpack.c.l.b16 %v6048
        %v6369 = vunpack.c.l.b16 %v6049
        %v6370 = vunpack.c.l.b16 %v6050
        %v6371 = vunpack.c.l.b16 %v6051
        %v6372 = vunpack.c.l.b16 %v6052
        %v6373 = vunpack.c.l.b16 %v6053
        %v6374 = vunpack.c.l.b16 %v6054
        %v6375 = vunpack.c.l.b16 %v6055
        %v6376 = vunpack.c.l.b16 %v6056
        %v6377 = vunpack.c.l.b16 %v6057
        %v6378 = vunpack.c.l.b16 %v6058
        %v6379 = vunpack.c.l.b16 %v6059
        %v6380 = vunpack.c.l.b16 %v6060
        %v6381 = vunpack.c.l.b16 %v6061
        %v6382 = vunpack.c.l.b16 %v6062
        %v6383 = vunpack.c.l.b16 %v6063
        %v6384 = vunpack.c.l.b16 %v6064
        %v6385 = vunpack.c.l.b16 %v6065
        %v6386 = vunpack.c.l.b16 %v6066
        %v6387 = vunpack.c.l.b16 %v6067
        %v6388 = vunpack.c.l.b16 %v6068
        %v6389 = vunpack.c.l.b16 %v6069
        %v6390 = vunpack.c.l.b16 %v6070
        %v6391 = vunpack.c.l.b16 %v6071
        %v6392 = vunpack.c.l.b16 %v6072
        %v6393 = vunpack.c.l.b16 %v6073
        %v6394 = vunpack.c.l.b16 %v6074
        %v6395 = vunpack.c.l.b16 %v6075
        %v6396 = vunpack.c.l.b16 %v6076
        %v6397 = vunpack.c.l.b16 %v6077
        %v6398 = vunpack.c.l.b16 %v6078
        %v6399 = vunpack.c.l.b16 %v6079
        %v6400 = vunpack.c.l.b16 %v6080
        %v6401 = vunpack.c.l.b16 %v6081
        %v6402 = vunpack.c.l.b16 %v6082
        %v6403 = vunpack.c.l.b16 %v6083
        %v6404 = vunpack.c.l.b16 %v6084
        %v6405 = vunpack.c.l.b16 %v6085
        %v6406 = vunpack.c.l.b16 %v6086
        %v6407 = vunpack.c.l.b16 %v6087
        %v6408 = vunpack.c.l.b16 %v6088
        %v6409 = vunpack.c.l.b16 %v6089
        %v6410 = vunpack.c.l.b16 %v6090
        %v6411 = vunpack.c.l.b16 %v6091
        %v6412 = vunpack.c.l.b16 %v6092
        %v6413 = vunpack.c.l.b16 %v6093
        %v6414 = vunpack.c.l.b16 %v6094
        %v6415 = vunpack.c.l.b16 %v6095
        %v6416 = vunpack.c.l.b16 %v6096
        %v6417 = vunpack.c.l.b16 %v6097
        %v6418 = vunpack.c.l.b16 %v6098
        %v6419 = vunpack.c.l.b16 %v6099
        %v6420 = vunpack.c.l.b16 %v6100
        %v6421 = vunpack.c.l.b16 %v6101
        %v6422 = vunpack.c.l.b16 %v6102
        %v6423 = vunpack.c.l.b16 %v6103
        %v6424 = vunpack.c.l.b16 %v6104
        %v6425 = vunpack.c.l.b16 %v6105
        %v6426 = vunpack.c.l.b16 %v6106
        %v6427 = vunpack.c.l.b16 %v6107
        %v6428 = vunpack.c.l.b16 %v6108
        %v6429 = vunpack.c.l.b16 %v6109
        %v6430 = vunpack.c.l.b16 %v6110
        %v6431 = vunpack.c.l.b16 %v6111
        %v6432 = vunpack.c.l.b16 %v6112
        %v6433 = vunpack.c.l.b16 %v6113
        %v6434 = vunpack.c.l.b16 %v6114
        %v6435 = vunpack.c.l.b16 %v6115
        %v6436 = vunpack.c.l.b16 %v6116
        %v6437 = vunpack.c.l.b16 %v6117
        %v6438 = vunpack.c.l.b16 %v6118
        %v6439 = vunpack.c.l.b16 %v6119
        %v6440 = vpack.c.b16 %v6281, %v6280
        %v6441 = vpack.c.b16 %v6283, %v6282
        %v6442 = vpack.c.b16 %v6285, %v6284
        %v6443 = vpack.c.b16 %v6287, %v6286
        %v6444 = vpack.c.b16 %v6289, %v6288
        %v6445 = vpack.c.b16 %v6291, %v6290
        %v6446 = vpack.c.b16 %v6293, %v6292
        %v6447 = vpack.c.b16 %v6295, %v6294
        %v6448 = vpack.c.b16 %v6297, %v6296
        %v6449 = vpack.c.b16 %v6299, %v6298
        %v6450 = vpack.c.b16 %v6301, %v6300
        %v6451 = vpack.c.b16 %v6303, %v6302
        %v6452 = vpack.c.b16 %v6305, %v6304
        %v6453 = vpack.c.b16 %v6307, %v6306
        %v6454 = vpack.c.b16 %v6309, %v6308
        %v6455 = vpack.c.b16 %v6311, %v6310
        %v6456 = vpack.c.b16 %v6313, %v6312
        %v6457 = vpack.c.b16 %v6315, %v6314
        %v6458 = vpack.c.b16 %v6317, %v6316
        %v6459 = vpack.c.b16 %v6319, %v6318
        %v6460 = vpack.c.b16 %v6321, %v6320
        %v6461 = vpack.c.b16 %v6323, %v6322
        %v6462 = vpack.c.b16 %v6325, %v6324
        %v6463 = vpack.c.b16 %v6327, %v6326
        %v6464 = vpack.c.b16 %v6329, %v6328
        %v6465 = vpack.c.b16 %v6331, %v6330
        %v6466 = vpack.c.b16 %v6333, %v6332
        %v6467 = vpack.c.b16 %v6335, %v6334
        %v6468 = vpack.c.b16 %v6337, %v6336
        %v6469 = vpack.c.b16 %v6339, %v6338
        %v6470 = vpack.c.b16 %v6341, %v6340
        %v6471 = vpack.c.b16 %v6343, %v6342
        %v6472 = vpack.c.b16 %v6345, %v6344
        %v6473 = vpack.c.b16 %v6347, %v6346
        %v6474 = vpack.c.b16 %v6349, %v6348
        %v6475 = vpack.c.b16 %v6351, %v6350
        %v6476 = vpack.c.b16 %v6353, %v6352
        %v6477 = vpack.c.b16 %v6355, %v6354
        %v6478 = vpack.c.b16 %v6357, %v6356
        %v6479 = vpack.c.b16 %v6359, %v6358
        %v6480 = vpack.c.b16 %v6361, %v6360
        %v6481 = vpack.c.b16 %v6363, %v6362
        %v6482 = vpack.c.b16 %v6365, %v6364
        %v6483 = vpack.c.b16 %v6367, %v6366
        %v6484 = vpack.c.b16 %v6369, %v6368
        %v6485 = vpack.c.b16 %v6371, %v6370
        %v6486 = vpack.c.b16 %v6373, %v6372
        %v6487 = vpack.c.b16 %v6375, %v6374
        %v6488 = vpack.c.b16 %v6377, %v6376
        %v6489 = vpack.c.b16 %v6379, %v6378
        %v6490 = vpack.c.b16 %v6381, %v6380
        %v6491 = vpack.c.b16 %v6383, %v6382
        %v6492 = vpack.c.b16 %v6385, %v6384
        %v6493 = vpack.c.b16 %v6387, %v6386
        %v6494 = vpack.c.b16 %v6389, %v6388
        %v6495 = vpack.c.b16 %v6391, %v6390
        %v6496 = vpack.c.b16 %v6393, %v6392
        %v6497 = vpack.c.b16 %v6395, %v6394
        %v6498 = vpack.c.b16 %v6397, %v6396
        %v6499 = vpack.c.b16 %v6399, %v6398
        %v6500 = vpack.c.b16 %v6401, %v6400
        %v6501 = vpack.c.b16 %v6403, %v6402
        %v6502 = vpack.c.b16 %v6405, %v6404
        %v6503 = vpack.c.b16 %v6407, %v6406
        %v6504 = vpack.c.b16 %v6409, %v6408
        %v6505 = vpack.c.b16 %v6411, %v6410
        %v6506 = vpack.c.b16 %v6413, %v6412
        %v6507 = vpack.c.b16 %v6415, %v6414
        %v6508 = vpack.c.b16 %v6417, %v6416
        %v6509 = vpack.c.b16 %v6419, %v6418
        %v6510 = vpack.c.b16 %v6421, %v6420
        %v6511 = vpack.c.b16 %v6423, %v6422
        %v6512 = vpack.c.b16 %v6425, %v6424
        %v6513 = vpack.c.b16 %v6427, %v6426
        %v6514 = vpack.c.b16 %v6429, %v6428
        %v6515 = vpack.c.b16 %v6431, %v6430
        %v6516 = vpack.c.b16 %v6433, %v6432
        %v6517 = vpack.c.b16 %v6435, %v6434
        %v6518 = vpack.c.b16 %v6437, %v6436
        %v6519 = vpack.c.b16 %v6439, %v6438
        %6600 = vmatprep.subr.bf16.mxu0 0
        %6601 = vmatpush1.bf16.msra.mxu0 %v6447
        %6602 = vmatprep.subr.bf16.mxu0 0
        %6603 = vmatpush1.bf16.msra.mxu0 %v6446
        %6604 = vmatprep.subr.bf16.mxu0 0
        %6605 = vmatpush1.bf16.msra.mxu0 %v6445
        %6606 = vmatprep.subr.bf16.mxu0 0
        %6607 = vmatpush1.bf16.msra.mxu0 %v6444
        %6608 = vmatprep.subr.bf16.mxu0 0
        %6609 = vmatpush1.bf16.msra.mxu0 %v6443
        %6610 = vmatprep.subr.bf16.mxu0 0
        %6611 = vmatpush1.bf16.msra.mxu0 %v6442
        %6612 = vmatprep.subr.bf16.mxu0 0
        %6613 = vmatpush1.bf16.msra.mxu0 %v6441
        %6614 = vmatprep.subr.bf16.mxu0 0
        %6615 = vmatpush1.bf16.msra.mxu0 %v6440
        %6616 = vmatprep.subr.bf16.mxu0 0
        %6617 = vmatpush2.bf16.msra.mxu0 %v6455
        %6618 = vmatprep.subr.bf16.mxu0 0
        %6619 = vmatpush2.bf16.msra.mxu0 %v6454
        %6620 = vmatprep.subr.bf16.mxu0 0
        %6621 = vmatpush2.bf16.msra.mxu0 %v6453
        %6622 = vmatprep.subr.bf16.mxu0 0
        %6623 = vmatpush2.bf16.msra.mxu0 %v6452
        %6624 = vmatprep.subr.bf16.mxu0 0
        %6625 = vmatpush2.bf16.msra.mxu0 %v6451
        %6626 = vmatprep.subr.bf16.mxu0 0
        %6627 = vmatpush2.bf16.msra.mxu0 %v6450
        %6628 = vmatprep.subr.bf16.mxu0 0
        %6629 = vmatpush2.bf16.msra.mxu0 %v6449
        %6630 = vmatprep.subr.bf16.mxu0 0
        %6631 = vmatpush2.bf16.msra.mxu0 %v6448
        %6632 = vmatprep.mubr.bf16.mxu0 0
        %6633 = vmatmul.mubr.bf16.gmra.mxu0 0
        %v6634 = vpop.f32.mrf.mxu0
        %v6635 = vadd.f32 %v5947, %v6634
        %v6636 = vpop.f32.mrf.mxu0
        %v6637 = vpop.f32.mrf.mxu0
        %v6638 = vadd.f32 %v5947, %v6637
        %v6639 = vpop.f32.mrf.mxu0
        %6640 = vmatprep.mubr.bf16.mxu0 0
        %6641 = vmatmul.mubr.bf16.gmra.mxu0 0
        %v6642 = vpop.f32.mrf.mxu0
        %v6643 = vadd.f32 %v5947, %v6642
        %v6644 = vpop.f32.mrf.mxu0
        %v6645 = vpop.f32.mrf.mxu0
        %v6646 = vadd.f32 %v5947, %v6645
        %v6647 = vpop.f32.mrf.mxu0
        %6648 = vmatprep.mubr.bf16.mxu0 0
        %6649 = vmatmul.mubr.bf16.gmra.mxu0 0
        %v6650 = vpop.f32.mrf.mxu0
        %v6651 = vadd.f32 %v5947, %v6650
        %v6652 = vpop.f32.mrf.mxu0
        %v6653 = vpop.f32.mrf.mxu0
        %v6654 = vadd.f32 %v5947, %v6653
        %v6655 = vpop.f32.mrf.mxu0
        %6656 = vdwg.mxu0
        %6657 = vmatprep.subr.bf16.mxu0 0
        %6658 = vmatpush1.bf16.msra.mxu0 %v6463
        %6659 = vmatprep.subr.bf16.mxu0 0
        %6660 = vmatpush1.bf16.msra.mxu0 %v6462
        %6661 = vmatprep.subr.bf16.mxu0 0
        %6662 = vmatpush1.bf16.msra.mxu0 %v6461
        %6663 = vmatprep.subr.bf16.mxu0 0
        %6664 = vmatpush1.bf16.msra.mxu0 %v6460
        %6665 = vmatprep.subr.bf16.mxu0 0
        %6666 = vmatpush1.bf16.msra.mxu0 %v6459
        %6667 = vmatprep.subr.bf16.mxu0 0
        %6668 = vmatpush1.bf16.msra.mxu0 %v6458
        %6669 = vmatprep.subr.bf16.mxu0 0
        %6670 = vmatpush1.bf16.msra.mxu0 %v6457
        %6671 = vmatprep.subr.bf16.mxu0 0
        %6672 = vmatpush1.bf16.msra.mxu0 %v6456
        %6673 = vmatprep.subr.bf16.mxu0 0
        %6674 = vmatpush2.bf16.msra.mxu0 %v6471
        %6675 = vmatprep.subr.bf16.mxu0 0
        %6676 = vmatpush2.bf16.msra.mxu0 %v6470
        %6677 = vmatprep.subr.bf16.mxu0 0
        %6678 = vmatpush2.bf16.msra.mxu0 %v6469
        %6679 = vmatprep.subr.bf16.mxu0 0
        %6680 = vmatpush2.bf16.msra.mxu0 %v6468
        %6681 = vmatprep.subr.bf16.mxu0 0
        %6682 = vmatpush2.bf16.msra.mxu0 %v6467
        %6683 = vmatprep.subr.bf16.mxu0 0
        %6684 = vmatpush2.bf16.msra.mxu0 %v6466
        %6685 = vmatprep.subr.bf16.mxu0 0
        %6686 = vmatpush2.bf16.msra.mxu0 %v6465
        %6687 = vmatprep.subr.bf16.mxu0 0
        %6688 = vmatpush2.bf16.msra.mxu0 %v6464
        %6689 = vmatprep.mubr.bf16.mxu0 %v3595
        %6690 = vmatmul.mubr.bf16.gmra.mxu0 %v3595
        %v6691 = vpop.f32.mrf.mxu0
        %v6692 = vadd.f32 %v6635, %v6691
        %v6693 = vpop.f32.mrf.mxu0
        %v6694 = vpop.f32.mrf.mxu0
        %v6695 = vadd.f32 %v6638, %v6694
        %v6696 = vpop.f32.mrf.mxu0
        %6697 = vmatprep.mubr.bf16.mxu0 %v3595
        %6698 = vmatmul.mubr.bf16.gmra.mxu0 %v3595
        %v6699 = vpop.f32.mrf.mxu0
        %v6700 = vadd.f32 %v6643, %v6699
        %v6701 = vpop.f32.mrf.mxu0
        %v6702 = vpop.f32.mrf.mxu0
        %v6703 = vadd.f32 %v6646, %v6702
        %v6704 = vpop.f32.mrf.mxu0
        %6705 = vmatprep.mubr.bf16.mxu0 %v3595
        %6706 = vmatmul.mubr.bf16.gmra.mxu0 %v3595
        %v6707 = vpop.f32.mrf.mxu0
        %v6708 = vadd.f32 %v6651, %v6707
        %v6709 = vpop.f32.mrf.mxu0
        %v6710 = vpop.f32.mrf.mxu0
        %v6711 = vadd.f32 %v6654, %v6710
        %v6712 = vpop.f32.mrf.mxu0
        %6713 = vdwg.mxu0
        %6714 = vmatprep.subr.bf16.mxu0 0
        %6715 = vmatpush1.bf16.msra.mxu0 %v6479
        %6716 = vmatprep.subr.bf16.mxu0 0
        %6717 = vmatpush1.bf16.msra.mxu0 %v6478
        %6718 = vmatprep.subr.bf16.mxu0 0
        %6719 = vmatpush1.bf16.msra.mxu0 %v6477
        %6720 = vmatprep.subr.bf16.mxu0 0
        %6721 = vmatpush1.bf16.msra.mxu0 %v6476
        %6722 = vmatprep.subr.bf16.mxu0 0
        %6723 = vmatpush1.bf16.msra.mxu0 %v6475
        %6724 = vmatprep.subr.bf16.mxu0 0
        %6725 = vmatpush1.bf16.msra.mxu0 %v6474
        %6726 = vmatprep.subr.bf16.mxu0 0
        %6727 = vmatpush1.bf16.msra.mxu0 %v6473
        %6728 = vmatprep.subr.bf16.mxu0 0
        %6729 = vmatpush1.bf16.msra.mxu0 %v6472
        %6730 = vmatprep.subr.bf16.mxu0 0
        %6731 = vmatpush2.bf16.msra.mxu0 %v6487
        %6732 = vmatprep.subr.bf16.mxu0 0
        %6733 = vmatpush2.bf16.msra.mxu0 %v6486
        %6734 = vmatprep.subr.bf16.mxu0 0
        %6735 = vmatpush2.bf16.msra.mxu0 %v6485
        %6736 = vmatprep.subr.bf16.mxu0 0
        %6737 = vmatpush2.bf16.msra.mxu0 %v6484
        %6738 = vmatprep.subr.bf16.mxu0 0
        %6739 = vmatpush2.bf16.msra.mxu0 %v6483
        %6740 = vmatprep.subr.bf16.mxu0 0
        %6741 = vmatpush2.bf16.msra.mxu0 %v6482
        %6742 = vmatprep.subr.bf16.mxu0 0
        %6743 = vmatpush2.bf16.msra.mxu0 %v6481
        %6744 = vmatprep.subr.bf16.mxu0 0
        %6745 = vmatpush2.bf16.msra.mxu0 %v6480
        %6746 = vmatprep.mubr.bf16.mxu0 0
        %6747 = vmatmul.mubr.bf16.gmra.mxu0 0
        %v6748 = vpop.f32.mrf.mxu0
        %v6749 = vadd.f32 %v6692, %v6748
        %v6750 = vpop.f32.mrf.mxu0
        %v6751 = vpop.f32.mrf.mxu0
        %v6752 = vadd.f32 %v6695, %v6751
        %v6753 = vpop.f32.mrf.mxu0
        %6754 = vmatprep.mubr.bf16.mxu0 0
        %6755 = vmatmul.mubr.bf16.gmra.mxu0 0
        %v6756 = vpop.f32.mrf.mxu0
        %v6757 = vadd.f32 %v6700, %v6756
        %v6758 = vpop.f32.mrf.mxu0
        %v6759 = vpop.f32.mrf.mxu0
        %v6760 = vadd.f32 %v6703, %v6759
        %v6761 = vpop.f32.mrf.mxu0
        %6762 = vmatprep.mubr.bf16.mxu0 0
        %6763 = vmatmul.mubr.bf16.gmra.mxu0 0
        %v6764 = vpop.f32.mrf.mxu0
        %v6765 = vadd.f32 %v6708, %v6764
        %v6766 = vpop.f32.mrf.mxu0
        %v6767 = vpop.f32.mrf.mxu0
        %v6768 = vadd.f32 %v6711, %v6767
        %v6769 = vpop.f32.mrf.mxu0
        %6770 = vdwg.mxu0
        %6771 = vmatprep.subr.bf16.mxu0 0
        %6772 = vmatpush1.bf16.msra.mxu0 %v6495
        %6773 = vmatprep.subr.bf16.mxu0 0
        %6774 = vmatpush1.bf16.msra.mxu0 %v6494
        %6775 = vmatprep.subr.bf16.mxu0 0
        %6776 = vmatpush1.bf16.msra.mxu0 %v6493
        %6777 = vmatprep.subr.bf16.mxu0 0
        %6778 = vmatpush1.bf16.msra.mxu0 %v6492
        %6779 = vmatprep.subr.bf16.mxu0 0
        %6780 = vmatpush1.bf16.msra.mxu0 %v6491
        %6781 = vmatprep.subr.bf16.mxu0 0
        %6782 = vmatpush1.bf16.msra.mxu0 %v6490
        %6783 = vmatprep.subr.bf16.mxu0 0
        %6784 = vmatpush1.bf16.msra.mxu0 %v6489
        %6785 = vmatprep.subr.bf16.mxu0 0
        %6786 = vmatpush1.bf16.msra.mxu0 %v6488
        %6787 = vmatprep.subr.bf16.mxu0 0
        %6788 = vmatpush2.bf16.msra.mxu0 %v6503
        %6789 = vmatprep.subr.bf16.mxu0 0
        %6790 = vmatpush2.bf16.msra.mxu0 %v6502
        %6791 = vmatprep.subr.bf16.mxu0 0
        %6792 = vmatpush2.bf16.msra.mxu0 %v6501
        %6793 = vmatprep.subr.bf16.mxu0 0
        %6794 = vmatpush2.bf16.msra.mxu0 %v6500
        %6795 = vmatprep.subr.bf16.mxu0 0
        %6796 = vmatpush2.bf16.msra.mxu0 %v6499
        %6797 = vmatprep.subr.bf16.mxu0 0
        %6798 = vmatpush2.bf16.msra.mxu0 %v6498
        %6799 = vmatprep.subr.bf16.mxu0 0
        %6800 = vmatpush2.bf16.msra.mxu0 %v6497
        %6801 = vmatprep.subr.bf16.mxu0 0
        %6802 = vmatpush2.bf16.msra.mxu0 %v6496
        %6803 = vmatprep.mubr.bf16.mxu0 %v3595
        %6804 = vmatmul.mubr.bf16.gmra.mxu0 %v3595
        %v6805 = vpop.f32.mrf.mxu0
        %v6806 = vadd.f32 %v6749, %v6805
        %v6807 = vpop.f32.mrf.mxu0
        %v6808 = vpop.f32.mrf.mxu0
        %v6809 = vadd.f32 %v6752, %v6808
        %v6810 = vpop.f32.mrf.mxu0
        %6811 = vmatprep.mubr.bf16.mxu0 %v3595
        %6812 = vmatmul.mubr.bf16.gmra.mxu0 %v3595
        %v6813 = vpop.f32.mrf.mxu0
        %v6814 = vadd.f32 %v6757, %v6813
        %v6815 = vpop.f32.mrf.mxu0
        %v6816 = vpop.f32.mrf.mxu0
        %v6817 = vadd.f32 %v6760, %v6816
        %v6818 = vpop.f32.mrf.mxu0
        %6819 = vmatprep.mubr.bf16.mxu0 %v5957
        %6820 = vmatmul.mubr.bf16.gmra.mxu0 %v5955
        %v6821 = vpop.f32.mrf.mxu0
        %v6822 = vadd.f32 %v6765, %v6821
        %v6823 = vpop.f32.mrf.mxu0
        %v6824 = vpop.f32.mrf.mxu0
        %v6825 = vadd.f32 %v6768, %v6824
        %v6826 = vpop.f32.mrf.mxu0
        %6827 = vdwg.mxu0
        %6828 = vmatprep.subr.bf16.mxu0 0
        %6829 = vmatpush1.bf16.msra.mxu0 %v6511
        %6830 = vmatprep.subr.bf16.mxu0 0
        %6831 = vmatpush1.bf16.msra.mxu0 %v6510
        %6832 = vmatprep.subr.bf16.mxu0 0
        %6833 = vmatpush1.bf16.msra.mxu0 %v6509
        %6834 = vmatprep.subr.bf16.mxu0 0
        %6835 = vmatpush1.bf16.msra.mxu0 %v6508
        %6836 = vmatprep.subr.bf16.mxu0 0
        %6837 = vmatpush1.bf16.msra.mxu0 %v6507
        %6838 = vmatprep.subr.bf16.mxu0 0
        %6839 = vmatpush1.bf16.msra.mxu0 %v6506
        %6840 = vmatprep.subr.bf16.mxu0 0
        %6841 = vmatpush1.bf16.msra.mxu0 %v6505
        %6842 = vmatprep.subr.bf16.mxu0 0
        %6843 = vmatpush1.bf16.msra.mxu0 %v6504
        %6844 = vmatprep.subr.bf16.mxu0 0
        %6845 = vmatpush2.bf16.msra.mxu0 %v6519
        %6846 = vmatprep.subr.bf16.mxu0 0
        %6847 = vmatpush2.bf16.msra.mxu0 %v6518
        %6848 = vmatprep.subr.bf16.mxu0 0
        %6849 = vmatpush2.bf16.msra.mxu0 %v6517
        %6850 = vmatprep.subr.bf16.mxu0 0
        %6851 = vmatpush2.bf16.msra.mxu0 %v6516
        %6852 = vmatprep.subr.bf16.mxu0 0
        %6853 = vmatpush2.bf16.msra.mxu0 %v6515
        %6854 = vmatprep.subr.bf16.mxu0 0
        %6855 = vmatpush2.bf16.msra.mxu0 %v6514
        %6856 = vmatprep.subr.bf16.mxu0 0
        %6857 = vmatpush2.bf16.msra.mxu0 %v6513
        %6858 = vmatprep.subr.bf16.mxu0 0
        %6859 = vmatpush2.bf16.msra.mxu0 %v6512
        %6860 = vmatprep.mubr.bf16.mxu0 0
        %6861 = vmatmul.mubr.bf16.gmra.mxu0 0
        %v6862 = vpop.f32.mrf.mxu0
        %v6863 = vadd.f32 %v6806, %v6862
        %v6864 = vpop.f32.mrf.mxu0
        %v6865 = vpop.f32.mrf.mxu0
        %v6866 = vadd.f32 %v6809, %v6865
        %v6867 = vpop.f32.mrf.mxu0
        %6868 = vmatprep.mubr.bf16.mxu0 0
        %6869 = vmatmul.mubr.bf16.gmra.mxu0 0
        %v6870 = vpop.f32.mrf.mxu0
        %v6871 = vadd.f32 %v6814, %v6870
        %v6872 = vpop.f32.mrf.mxu0
        %v6873 = vpop.f32.mrf.mxu0
        %v6874 = vadd.f32 %v6817, %v6873
        %v6875 = vpop.f32.mrf.mxu0
        %6876 = vmatprep.mubr.bf16.mxu0 %v5951
        %6877 = vmatmul.mubr.bf16.gmra.mxu0 %v5950
        %v6878 = vpop.f32.mrf.mxu0
        %v6879 = vadd.f32 %v6822, %v6878
        %v6880 = vpop.f32.mrf.mxu0
        %v6881 = vpop.f32.mrf.mxu0
        %v6882 = vadd.f32 %v6825, %v6881
        %v6883 = vpop.f32.mrf.mxu0
        %6884 = vdwg.mxu0
        %vm6885 = vcmp.gt.f32.partialorder %v6863, 0.0
        %vm6886 = vcmp.gt.f32.partialorder %v6866, 0.0
        %vm6887 = vcmp.gt.f32.partialorder %v6871, 0.0
        %vm6888 = vcmp.gt.f32.partialorder %v6874, 0.0
        %vm6889 = vcmp.gt.f32.partialorder %v6879, 0.0
        %vm6890 = vcmp.gt.f32.partialorder %v6882, 0.0
        %v6891 = vmul.f32 %v6863, 0.01
        %v6892 = vmul.f32 %v6866, 0.01
        %v6893 = vmul.f32 %v6871, 0.01
        %v6894 = vmul.f32 %v6874, 0.01
        %v6895 = vmul.f32 %v6879, 0.01
        %v6896 = vmul.f32 %v6882, 0.01
        %v6897 = vsel %vm6885, %v6863, %v6891
        %v6898 = vsel %vm6886, %v6866, %v6892
        %v6899 = vsel %vm6887, %v6871, %v6893
        %v6900 = vsel %vm6888, %v6874, %v6894
        %v6901 = vsel %vm6889, %v6879, %v6895
        %v6902 = vsel %vm6890, %v6882, %v6896
        %v6903 = vpack.c.bf16 %v6898, %v6897
        %v6904 = vpack.c.bf16 %v6900, %v6899
        %v6905 = vpack.c.bf16 %v6902, %v6901
        %v6906 = vld [vmem:[#allocation5 + $0x280] sm:$0xf]
        %v6907 = vld [vmem:[#allocation5 + $0x284] sm:$0xf]
        %v6908 = vld [vmem:[#allocation5 + $0x288] sm:$0xf]
        %v6909 = vld [vmem:[#allocation5 + $0x28c] sm:$0xf]
        %v6910 = vld [vmem:[#allocation5 + $0x290] sm:$0xf]
        %v6911 = vld [vmem:[#allocation5 + $0x294] sm:$0xf]
        %v6912 = vld [vmem:[#allocation5 + $0x298] sm:$0xf]
        %v6913 = vld [vmem:[#allocation5 + $0x29c] sm:$0xf]
        %v6916 = vrot.slane %v6903, 4
        %v6917 = vrot.slane %v6904, 4
        %v6918 = vsel %vm2555, %v6916, %v6917
        %v6923 = vunpack.c.l.b16 %v6910
        %v6924 = vunpack.c.l.b16 %v6911
        %v6925 = vunpack.c.l.b16 %v6912
        %v6926 = vunpack.c.l.b16 %v6913
        %v6927 = vpack.c.b16 %v6924, %v6923
        %v6928 = vpack.c.b16 %v6926, %v6925
        %v6932 = vsel %vm5863, %v6918, 0
        %6934 = vmatprep.subr.bf16.mxu0 0
        %6935 = vmatpush1.bf16.msra.mxu0 0
        %6936 = vmatprep.subr.bf16.mxu0 0
        %6937 = vmatpush1.bf16.msra.mxu0 0
        %6938 = vmatprep.subr.bf16.mxu0 0
        %6939 = vmatpush1.bf16.msra.mxu0 0
        %6940 = vmatprep.subr.bf16.mxu0 0
        %6941 = vmatpush1.bf16.msra.mxu0 0
        %6942 = vmatprep.subr.bf16.mxu0 0
        %6943 = vmatpush1.bf16.msra.mxu0 0
        %6944 = vmatprep.subr.bf16.mxu0 0
        %6945 = vmatpush1.bf16.msra.mxu0 0
        %6946 = vmatprep.subr.bf16.mxu0 0
        %6947 = vmatpush1.bf16.msra.mxu0 %v6928
        %6948 = vmatprep.subr.bf16.mxu0 0
        %6949 = vmatpush1.bf16.msra.mxu0 %v6927
        %6950 = vmatprep.subr.bf16.mxu0 0
        %6951 = vmatpush2.bf16.msra.mxu0 0
        %6952 = vmatprep.subr.bf16.mxu0 0
        %6953 = vmatpush2.bf16.msra.mxu0 0
        %6954 = vmatprep.subr.bf16.mxu0 0
        %6955 = vmatpush2.bf16.msra.mxu0 0
        %6956 = vmatprep.subr.bf16.mxu0 0
        %6957 = vmatpush2.bf16.msra.mxu0 0
        %6958 = vmatprep.subr.bf16.mxu0 0
        %6959 = vmatpush2.bf16.msra.mxu0 0
        %6960 = vmatprep.subr.bf16.mxu0 0
        %6961 = vmatpush2.bf16.msra.mxu0 0
        %6962 = vmatprep.subr.bf16.mxu0 0
        %6963 = vmatpush2.bf16.msra.mxu0 0
        %6964 = vmatprep.subr.bf16.mxu0 0
        %6965 = vmatpush2.bf16.msra.mxu0 0
        %6966 = vmatprep.mubr.bf16.mxu0 0
        %6967 = vmatmul.mubr.bf16.gmra.mxu0 %v6932
        %v6968 = vpop.f32.mrf.mxu0
        %v6969 = vadd.f32 0.0, %v6968
        %v6970 = vpop.f32.mrf.mxu0
        %v6971 = vpop.f32.mrf.mxu0
        %v6972 = vadd.f32 0.0, %v6971
        %v6973 = vpop.f32.mrf.mxu0
        %6974 = vdwg.mxu0
        %v6979 = vunpack.c.l.b16 %v6906
        %v6980 = vunpack.c.l.b16 %v6907
        %v6981 = vunpack.c.l.b16 %v6908
        %v6982 = vunpack.c.l.b16 %v6909
        %v6983 = vpack.c.b16 %v6980, %v6979
        %v6984 = vpack.c.b16 %v6982, %v6981
        %v6988 = vsel %vm5863, %v6903, 0
        %6990 = vmatprep.subr.bf16.mxu0 0
        %6991 = vmatpush1.bf16.msra.mxu0 0
        %6992 = vmatprep.subr.bf16.mxu0 0
        %6993 = vmatpush1.bf16.msra.mxu0 0
        %6994 = vmatprep.subr.bf16.mxu0 0
        %6995 = vmatpush1.bf16.msra.mxu0 0
        %6996 = vmatprep.subr.bf16.mxu0 0
        %6997 = vmatpush1.bf16.msra.mxu0 0
        %6998 = vmatprep.subr.bf16.mxu0 0
        %6999 = vmatpush1.bf16.msra.mxu0 0
        %7000 = vmatprep.subr.bf16.mxu0 0
        %7001 = vmatpush1.bf16.msra.mxu0 0
        %7002 = vmatprep.subr.bf16.mxu0 0
        %7003 = vmatpush1.bf16.msra.mxu0 %v6984
        %7004 = vmatprep.subr.bf16.mxu0 0
        %7005 = vmatpush1.bf16.msra.mxu0 %v6983
        %7006 = vmatprep.subr.bf16.mxu0 0
        %7007 = vmatpush2.bf16.msra.mxu0 0
        %7008 = vmatprep.subr.bf16.mxu0 0
        %7009 = vmatpush2.bf16.msra.mxu0 0
        %7010 = vmatprep.subr.bf16.mxu0 0
        %7011 = vmatpush2.bf16.msra.mxu0 0
        %7012 = vmatprep.subr.bf16.mxu0 0
        %7013 = vmatpush2.bf16.msra.mxu0 0
        %7014 = vmatprep.subr.bf16.mxu0 0
        %7015 = vmatpush2.bf16.msra.mxu0 0
        %7016 = vmatprep.subr.bf16.mxu0 0
        %7017 = vmatpush2.bf16.msra.mxu0 0
        %7018 = vmatprep.subr.bf16.mxu0 0
        %7019 = vmatpush2.bf16.msra.mxu0 0
        %7020 = vmatprep.subr.bf16.mxu0 0
        %7021 = vmatpush2.bf16.msra.mxu0 0
        %7022 = vmatprep.mubr.bf16.mxu0 0
        %7023 = vmatmul.mubr.bf16.gmra.mxu0 %v6988
        %v7024 = vpop.f32.mrf.mxu0
        %v7025 = vadd.f32 %v6969, %v7024
        %v7026 = vpop.f32.mrf.mxu0
        %v7027 = vpop.f32.mrf.mxu0
        %v7028 = vadd.f32 %v6972, %v7027
        %v7029 = vpop.f32.mrf.mxu0
        %7030 = vdwg.mxu0
        %v7031 = vld [vmem:[#allocation5 + $0x2a0] sm:$0xf]
        %v7032 = vld [vmem:[#allocation5 + $0x2a4] sm:$0xf]
        %v7033 = vld [vmem:[#allocation5 + $0x2a8] sm:$0xf]
        %v7034 = vld [vmem:[#allocation5 + $0x2ac] sm:$0xf]
        %v7039 = vunpack.c.l.b16 %v7031
        %v7040 = vunpack.c.l.b16 %v7032
        %v7041 = vunpack.c.l.b16 %v7033
        %v7042 = vunpack.c.l.b16 %v7034
        %v7043 = vpack.c.b16 %v7040, %v7039
        %v7044 = vpack.c.b16 %v7042, %v7041
        %v7048 = vsel %vm5863, %v6904, 0
        %7050 = vmatprep.subr.bf16.mxu0 0
        %7051 = vmatpush1.bf16.msra.mxu0 0
        %7052 = vmatprep.subr.bf16.mxu0 0
        %7053 = vmatpush1.bf16.msra.mxu0 0
        %7054 = vmatprep.subr.bf16.mxu0 0
        %7055 = vmatpush1.bf16.msra.mxu0 0
        %7056 = vmatprep.subr.bf16.mxu0 0
        %7057 = vmatpush1.bf16.msra.mxu0 0
        %7058 = vmatprep.subr.bf16.mxu0 0
        %7059 = vmatpush1.bf16.msra.mxu0 0
        %7060 = vmatprep.subr.bf16.mxu0 0
        %7061 = vmatpush1.bf16.msra.mxu0 0
        %7062 = vmatprep.subr.bf16.mxu0 0
        %7063 = vmatpush1.bf16.msra.mxu0 %v7044
        %7064 = vmatprep.subr.bf16.mxu0 0
        %7065 = vmatpush1.bf16.msra.mxu0 %v7043
        %7066 = vmatprep.subr.bf16.mxu0 0
        %7067 = vmatpush2.bf16.msra.mxu0 0
        %7068 = vmatprep.subr.bf16.mxu0 0
        %7069 = vmatpush2.bf16.msra.mxu0 0
        %7070 = vmatprep.subr.bf16.mxu0 0
        %7071 = vmatpush2.bf16.msra.mxu0 0
        %7072 = vmatprep.subr.bf16.mxu0 0
        %7073 = vmatpush2.bf16.msra.mxu0 0
        %7074 = vmatprep.subr.bf16.mxu0 0
        %7075 = vmatpush2.bf16.msra.mxu0 0
        %7076 = vmatprep.subr.bf16.mxu0 0
        %7077 = vmatpush2.bf16.msra.mxu0 0
        %7078 = vmatprep.subr.bf16.mxu0 0
        %7079 = vmatpush2.bf16.msra.mxu0 0
        %7080 = vmatprep.subr.bf16.mxu0 0
        %7081 = vmatpush2.bf16.msra.mxu0 0
        %7082 = vmatprep.mubr.bf16.mxu0 0
        %7083 = vmatmul.mubr.bf16.gmra.mxu0 %v7048
        %v7084 = vpop.f32.mrf.mxu0
        %v7085 = vadd.f32 0.0, %v7084
        %v7086 = vpop.f32.mrf.mxu0
        %v7087 = vpop.f32.mrf.mxu0
        %v7088 = vadd.f32 0.0, %v7087
        %v7089 = vpop.f32.mrf.mxu0
        %7090 = vdwg.mxu0
        %v7091 = vadd.f32 %v7025, %v7085
        %v7092 = vadd.f32 %v7028, %v7088
        %v7093 = vld [vmem:[#allocation5 + $0x2b0] sm:$0xf]
        %v7094 = vld [vmem:[#allocation5 + $0x2b4] sm:$0xf]
        %v7095 = vld [vmem:[#allocation5 + $0x2b8] sm:$0xf]
        %v7096 = vld [vmem:[#allocation5 + $0x2bc] sm:$0xf]
        %v7098 = vrot.slane %v6905, 4
        %v7099 = vsel %vm2555, %v6917, %v7098
        %v7104 = vunpack.c.l.b16 %v7093
        %v7105 = vunpack.c.l.b16 %v7094
        %v7106 = vunpack.c.l.b16 %v7095
        %v7107 = vunpack.c.l.b16 %v7096
        %v7108 = vpack.c.b16 %v7105, %v7104
        %v7109 = vpack.c.b16 %v7107, %v7106
        %v7113 = vsel %vm5863, %v7099, 0
        %7115 = vmatprep.subr.bf16.mxu0 0
        %7116 = vmatpush1.bf16.msra.mxu0 0
        %7117 = vmatprep.subr.bf16.mxu0 0
        %7118 = vmatpush1.bf16.msra.mxu0 0
        %7119 = vmatprep.subr.bf16.mxu0 0
        %7120 = vmatpush1.bf16.msra.mxu0 0
        %7121 = vmatprep.subr.bf16.mxu0 0
        %7122 = vmatpush1.bf16.msra.mxu0 0
        %7123 = vmatprep.subr.bf16.mxu0 0
        %7124 = vmatpush1.bf16.msra.mxu0 0
        %7125 = vmatprep.subr.bf16.mxu0 0
        %7126 = vmatpush1.bf16.msra.mxu0 0
        %7127 = vmatprep.subr.bf16.mxu0 0
        %7128 = vmatpush1.bf16.msra.mxu0 %v7109
        %7129 = vmatprep.subr.bf16.mxu0 0
        %7130 = vmatpush1.bf16.msra.mxu0 %v7108
        %7131 = vmatprep.subr.bf16.mxu0 0
        %7132 = vmatpush2.bf16.msra.mxu0 0
        %7133 = vmatprep.subr.bf16.mxu0 0
        %7134 = vmatpush2.bf16.msra.mxu0 0
        %7135 = vmatprep.subr.bf16.mxu0 0
        %7136 = vmatpush2.bf16.msra.mxu0 0
        %7137 = vmatprep.subr.bf16.mxu0 0
        %7138 = vmatpush2.bf16.msra.mxu0 0
        %7139 = vmatprep.subr.bf16.mxu0 0
        %7140 = vmatpush2.bf16.msra.mxu0 0
        %7141 = vmatprep.subr.bf16.mxu0 0
        %7142 = vmatpush2.bf16.msra.mxu0 0
        %7143 = vmatprep.subr.bf16.mxu0 0
        %7144 = vmatpush2.bf16.msra.mxu0 0
        %7145 = vmatprep.subr.bf16.mxu0 0
        %7146 = vmatpush2.bf16.msra.mxu0 0
        %7147 = vmatprep.mubr.bf16.mxu0 0
        %7148 = vmatmul.mubr.bf16.gmra.mxu0 %v7113
        %v7149 = vpop.f32.mrf.mxu0
        %v7150 = vadd.f32 0.0, %v7149
        %v7151 = vpop.f32.mrf.mxu0
        %v7152 = vpop.f32.mrf.mxu0
        %v7153 = vadd.f32 0.0, %v7152
        %v7154 = vpop.f32.mrf.mxu0
        %7155 = vdwg.mxu0
        %v7156 = vadd.f32 %v7091, %v7150
        %v7157 = vadd.f32 %v7092, %v7153
        %v7158 = vld [vmem:[#allocation5 + $0x2c0] sm:$0xf]
        %v7159 = vld [vmem:[#allocation5 + $0x2c4] sm:$0xf]
        %v7160 = vld [vmem:[#allocation5 + $0x2c8] sm:$0xf]
        %v7161 = vld [vmem:[#allocation5 + $0x2cc] sm:$0xf]
        %v7166 = vunpack.c.l.b16 %v7158
        %v7167 = vunpack.c.l.b16 %v7159
        %v7168 = vunpack.c.l.b16 %v7160
        %v7169 = vunpack.c.l.b16 %v7161
        %v7170 = vpack.c.b16 %v7167, %v7166
        %v7171 = vpack.c.b16 %v7169, %v7168
        %v7175 = vsel %vm5863, %v6905, 0
        %7177 = vmatprep.subr.bf16.mxu0 0
        %7178 = vmatpush1.bf16.msra.mxu0 0
        %7179 = vmatprep.subr.bf16.mxu0 0
        %7180 = vmatpush1.bf16.msra.mxu0 0
        %7181 = vmatprep.subr.bf16.mxu0 0
        %7182 = vmatpush1.bf16.msra.mxu0 0
        %7183 = vmatprep.subr.bf16.mxu0 0
        %7184 = vmatpush1.bf16.msra.mxu0 0
        %7185 = vmatprep.subr.bf16.mxu0 0
        %7186 = vmatpush1.bf16.msra.mxu0 0
        %7187 = vmatprep.subr.bf16.mxu0 0
        %7188 = vmatpush1.bf16.msra.mxu0 0
        %7189 = vmatprep.subr.bf16.mxu0 0
        %7190 = vmatpush1.bf16.msra.mxu0 %v7171
        %7191 = vmatprep.subr.bf16.mxu0 0
        %7192 = vmatpush1.bf16.msra.mxu0 %v7170
        %7193 = vmatprep.subr.bf16.mxu0 0
        %7194 = vmatpush2.bf16.msra.mxu0 0
        %7195 = vmatprep.subr.bf16.mxu0 0
        %7196 = vmatpush2.bf16.msra.mxu0 0
        %7197 = vmatprep.subr.bf16.mxu0 0
        %7198 = vmatpush2.bf16.msra.mxu0 0
        %7199 = vmatprep.subr.bf16.mxu0 0
        %7200 = vmatpush2.bf16.msra.mxu0 0
        %7201 = vmatprep.subr.bf16.mxu0 0
        %7202 = vmatpush2.bf16.msra.mxu0 0
        %7203 = vmatprep.subr.bf16.mxu0 0
        %7204 = vmatpush2.bf16.msra.mxu0 0
        %7205 = vmatprep.subr.bf16.mxu0 0
        %7206 = vmatpush2.bf16.msra.mxu0 0
        %7207 = vmatprep.subr.bf16.mxu0 0
        %7208 = vmatpush2.bf16.msra.mxu0 0
        %7209 = vmatprep.mubr.bf16.mxu0 0
        %7210 = vmatmul.mubr.bf16.gmra.mxu0 %v7175
        %v7211 = vpop.f32.mrf.mxu0
        %v7212 = vadd.f32 0.0, %v7211
        %v7213 = vpop.f32.mrf.mxu0
        %v7214 = vpop.f32.mrf.mxu0
        %v7215 = vadd.f32 0.0, %v7214
        %v7216 = vpop.f32.mrf.mxu0
        %7217 = vdwg.mxu0
        %v7218 = vadd.f32 %v7156, %v7212
        %v7219 = vadd.f32 %v7157, %v7215
        %v7220 = vadd.f32 %v7218, %v5948
        %v7221 = vadd.f32 %v7219, %v5948
        %vm7222 = vcmp.gt.f32.partialorder %v7220, 0.0
        %vm7223 = vcmp.gt.f32.partialorder %v7221, 0.0
        %v7224 = vmul.f32 %v7220, 0.01
        %v7225 = vmul.f32 %v7221, 0.01
        %v7226 = vsel %vm7222, %v7220, %v7224
        %v7227 = vsel %vm7223, %v7221, %v7225
        %v7228 = vld [vmem:[#allocation5 + $0x2d0] sm:$0xf]
        %v7229 = vld [vmem:[#allocation5 + $0x2d4] sm:$0xf]
        %v7230 = vld [vmem:[#allocation5 + $0x2d8] sm:$0xf]
        %v7231 = vld [vmem:[#allocation5 + $0x2dc] sm:$0xf]
        %v7232 = vld [vmem:[#allocation5 + $0x2e0] sm:$0xf]
        %v7233 = vld [vmem:[#allocation5 + $0x2e4] sm:$0xf]
        %v7234 = vld [vmem:[#allocation5 + $0x2e8] sm:$0xf]
        %v7235 = vld [vmem:[#allocation5 + $0x2ec] sm:$0xf]
        %v7236 = vld [vmem:[#allocation5 + $0x2f0] sm:$0xf]
        %v7237 = vld [vmem:[#allocation5 + $0x2f4] sm:$0xf]
        %v7238 = vld [vmem:[#allocation5 + $0x2f8] sm:$0xf]
        %v7239 = vld [vmem:[#allocation5 + $0x2fc] sm:$0xf]
        %v7240 = vld [vmem:[#allocation5 + $0x300] sm:$0xf]
        %v7241 = vld [vmem:[#allocation5 + $0x304] sm:$0xf]
        %v7242 = vld [vmem:[#allocation5 + $0x308] sm:$0xf]
        %v7243 = vld [vmem:[#allocation5 + $0x30c] sm:$0xf]
        %v7244 = vld [vmem:[#allocation5 + $0x310] sm:$0xf]
        %v7245 = vld [vmem:[#allocation5 + $0x314] sm:$0xf]
        %v7246 = vld [vmem:[#allocation5 + $0x318] sm:$0xf]
        %v7247 = vld [vmem:[#allocation5 + $0x31c] sm:$0xf]
        %v7248 = vld [vmem:[#allocation5 + $0x320] sm:$0xf]
        %v7249 = vld [vmem:[#allocation5 + $0x324] sm:$0xf]
        %v7250 = vld [vmem:[#allocation5 + $0x328] sm:$0xf]
        %v7251 = vld [vmem:[#allocation5 + $0x32c] sm:$0xf]
        %v7252 = vld [vmem:[#allocation5 + $0x330] sm:$0xf]
        %v7253 = vld [vmem:[#allocation5 + $0x334] sm:$0xf]
        %v7254 = vld [vmem:[#allocation5 + $0x338] sm:$0xf]
        %v7255 = vld [vmem:[#allocation5 + $0x33c] sm:$0xf]
        %v7256 = vld [vmem:[#allocation5 + $0x340] sm:$0xf]
        %v7257 = vld [vmem:[#allocation5 + $0x344] sm:$0xf]
        %v7258 = vld [vmem:[#allocation5 + $0x348] sm:$0xf]
        %v7259 = vld [vmem:[#allocation5 + $0x34c] sm:$0xf]
        %v7292 = vunpack.c.l.b16 %v7228
        %v7293 = vunpack.c.l.b16 %v7229
        %v7294 = vunpack.c.l.b16 %v7230
        %v7295 = vunpack.c.l.b16 %v7231
        %v7296 = vunpack.c.l.b16 %v7232
        %v7297 = vunpack.c.l.b16 %v7233
        %v7298 = vunpack.c.l.b16 %v7234
        %v7299 = vunpack.c.l.b16 %v7235
        %v7300 = vunpack.c.l.b16 %v7236
        %v7301 = vunpack.c.l.b16 %v7237
        %v7302 = vunpack.c.l.b16 %v7238
        %v7303 = vunpack.c.l.b16 %v7239
        %v7304 = vunpack.c.l.b16 %v7240
        %v7305 = vunpack.c.l.b16 %v7241
        %v7306 = vunpack.c.l.b16 %v7242
        %v7307 = vunpack.c.l.b16 %v7243
        %v7308 = vunpack.c.l.b16 %v7244
        %v7309 = vunpack.c.l.b16 %v7245
        %v7310 = vunpack.c.l.b16 %v7246
        %v7311 = vunpack.c.l.b16 %v7247
        %v7312 = vunpack.c.l.b16 %v7248
        %v7313 = vunpack.c.l.b16 %v7249
        %v7314 = vunpack.c.l.b16 %v7250
        %v7315 = vunpack.c.l.b16 %v7251
        %v7316 = vunpack.c.l.b16 %v7252
        %v7317 = vunpack.c.l.b16 %v7253
        %v7318 = vunpack.c.l.b16 %v7254
        %v7319 = vunpack.c.l.b16 %v7255
        %v7320 = vunpack.c.l.b16 %v7256
        %v7321 = vunpack.c.l.b16 %v7257
        %v7322 = vunpack.c.l.b16 %v7258
        %v7323 = vunpack.c.l.b16 %v7259
        %v7324 = vpack.c.b16 %v7293, %v7292
        %v7325 = vpack.c.b16 %v7295, %v7294
        %v7326 = vpack.c.b16 %v7297, %v7296
        %v7327 = vpack.c.b16 %v7299, %v7298
        %v7328 = vpack.c.b16 %v7301, %v7300
        %v7329 = vpack.c.b16 %v7303, %v7302
        %v7330 = vpack.c.b16 %v7305, %v7304
        %v7331 = vpack.c.b16 %v7307, %v7306
        %v7332 = vpack.c.b16 %v7309, %v7308
        %v7333 = vpack.c.b16 %v7311, %v7310
        %v7334 = vpack.c.b16 %v7313, %v7312
        %v7335 = vpack.c.b16 %v7315, %v7314
        %v7336 = vpack.c.b16 %v7317, %v7316
        %v7337 = vpack.c.b16 %v7319, %v7318
        %v7338 = vpack.c.b16 %v7321, %v7320
        %v7339 = vpack.c.b16 %v7323, %v7322
        %7356 = vmatprep.subr.bf16.mxu0 0
        %7357 = vmatpush1.bf16.msra.mxu0 %v7331
        %7358 = vmatprep.subr.bf16.mxu0 0
        %7359 = vmatpush1.bf16.msra.mxu0 %v7330
        %7360 = vmatprep.subr.bf16.mxu0 0
        %7361 = vmatpush1.bf16.msra.mxu0 %v7329
        %7362 = vmatprep.subr.bf16.mxu0 0
        %7363 = vmatpush1.bf16.msra.mxu0 %v7328
        %7364 = vmatprep.subr.bf16.mxu0 0
        %7365 = vmatpush1.bf16.msra.mxu0 %v7327
        %7366 = vmatprep.subr.bf16.mxu0 0
        %7367 = vmatpush1.bf16.msra.mxu0 %v7326
        %7368 = vmatprep.subr.bf16.mxu0 0
        %7369 = vmatpush1.bf16.msra.mxu0 %v7325
        %7370 = vmatprep.subr.bf16.mxu0 0
        %7371 = vmatpush1.bf16.msra.mxu0 %v7324
        %7372 = vmatprep.subr.bf16.mxu0 0
        %7373 = vmatpush2.bf16.msra.mxu0 %v7339
        %7374 = vmatprep.subr.bf16.mxu0 0
        %7375 = vmatpush2.bf16.msra.mxu0 %v7338
        %7376 = vmatprep.subr.bf16.mxu0 0
        %7377 = vmatpush2.bf16.msra.mxu0 %v7337
        %7378 = vmatprep.subr.bf16.mxu0 0
        %7379 = vmatpush2.bf16.msra.mxu0 %v7336
        %7380 = vmatprep.subr.bf16.mxu0 0
        %7381 = vmatpush2.bf16.msra.mxu0 %v7335
        %7382 = vmatprep.subr.bf16.mxu0 0
        %7383 = vmatpush2.bf16.msra.mxu0 %v7334
        %7384 = vmatprep.subr.bf16.mxu0 0
        %7385 = vmatpush2.bf16.msra.mxu0 %v7333
        %7386 = vmatprep.subr.bf16.mxu0 0
        %7387 = vmatpush2.bf16.msra.mxu0 %v7332
        %7388 = vmatprep.mubr.bf16.mxu0 %v5951
        %7389 = vmatmul.mubr.bf16.gmra.mxu0 %v5950
        %v7390 = vpop.f32.mrf.mxu0
        %v7391 = vadd.f32 0.0, %v7390
        %v7392 = vpop.f32.mrf.mxu0
        %v7393 = vpop.f32.mrf.mxu0
        %v7394 = vadd.f32 0.0, %v7393
        %v7395 = vpop.f32.mrf.mxu0
        %7396 = vdwg.mxu0
        %v7397 = vadd.f32 %v7226, %v7391
        %v7398 = vadd.f32 %v7227, %v7394
        %v7399 = vadd.f32 %v7397, %v5949
        %v7400 = vadd.f32 %v7398, %v5949
        %v7401 = vsel %vm5863, %v7399, -inf
        %v7402 = vsel %vm5863, %v7400, -inf
        %v7403 = vmax.f32 %v7401, %v7402
        %v7404 = vrot.slane %v7403, 4
        %v7405 = vmax.f32 %v7403, %v7404
        %v7406 = vrot.slane %v7405, 2
        %v7407 = vmax.f32 %v7405, %v7406
        %v7408 = vrot.slane %v7407, 1
        %v7409 = vmax.f32 %v7407, %v7408
        %vm7410 = vcmask 253952
        %7411 = vst.msk [vmem:[%s314] sm:$0x1] %vm7410, %v7409
        %s7412 = sand.u32 %s183, 1
        %s7413 = scalar_lea.sflag [#allocation4], %s7412
        %s7414 = sand.u32 %s183, 1
        %s7415 = scalar_lea.vmem [#allocation8], %s7414
        // Predicated region
        $region61: #{usrl_forward.1} parent=47 // pred_check
          %p7416 = pneg %p193
        $region62: #{usrl_forward.1} parent=47 // pred_check_branch
          %7418 = sbr.rel (%p7416) target = $region64
        $region63: #{usrl_forward.1} parent=47 // pred_region
          %s7420 = ssub.s32 16, 16
          %7421 = vsyncadd %s7413, %s7420
          %s7422 = smul.addr %s23, 16
          %s7423 = scalar_lea.hbm %s7, %s7422
          %s7425 = sshll.u32 %s7415, 4
          %s7426 = int_to_ptr.vmem [resolvable:$true] %s7425
          %7428 = dma.vmem_to_hbm [thread:$0]  %s7426, 16, %s7423, %s7413
        $region64: #{usrl_forward.1} parent=47 // pred_fallthru
          _
      $region48: #{usrl_forward.1} parent=5 // pred_fallthru
        _
      %p7429 = scmp.le.s32.totalorder 2, %s18
      // Predicated region
      $region65: #{usrl_forward.1} parent=5 // pred_check
        %p7430 = pneg %p7429
      $region66: #{usrl_forward.1} parent=5 // pred_check_branch
        %7432 = sbr.rel (%p7430) target = $region68
      $region67: #{usrl_forward.1} parent=5 // pred_region
        %s7433 = ssub.s32 %s18, 2
        // Predicated region
        $region69: #{usrl_forward.1} parent=67 // pred_check
          %p7434 = pneg %p199
        $region70: #{usrl_forward.1} parent=67 // pred_check_branch
          %7436 = sbr.rel (%p7434) target = $region72
        $region71: #{usrl_forward.1} parent=67 // pred_region
          %s7437 = sand.u32 %s184, 1
          %s7438 = scalar_lea.sflag [#allocation4], %s7437
          %s7439 = sand.u32 %s184, 1
          %s7440 = scalar_lea.vmem [#allocation8], %s7439
          %7441 = dma.done %s7438, 16
        $region72: #{usrl_forward.1} parent=67 // pred_fallthru
          _
      $region68: #{usrl_forward.1} parent=5 // pred_fallthru
        _
    $region6: #{usrl_forward.1} parent=1 // loop_footer
      %s22 = sadd.s32 1, %s18
    $region7: #{usrl_forward.1} parent=1 // loop_footer_branch
      %17 = sbr.rel target = $region3
    $region8: #{usrl_forward.1} parent=1 // loop_exit
      _
    %7442 = vsyncpa [#allocation3], 1
    %s7443 = scalar_lea.sflag [#allocation3], 1
    %7444 = vsyncpa %s7443, 1
    %7445 = vsyncpa [#allocation6], 1
    %7446 = vsyncpa [#allocation4], 1
    %s7447 = scalar_lea.sflag [#allocation4], 1
    %7448 = vsyncpa %s7447, 1

</llo_original>
